<compile_context>
chip_gen: v5e
topology: v5e:2x2
jax: 0.10.0
libtpu: 0.0.40
codegen_flags: <defaults>
</compile_context>

<pallas_src>
import numpy as np
import jax
import jax.numpy as jnp
from jax.experimental import pallas as pl
from jax.experimental.pallas import tpu as pltpu


# Layer schedule fixed by the PyTorch module: (Cout, is_deconv, antirectifier)
_LAYERS = [
    (16, False, True),    # conv1:   tau -> 16, AntiRectifier -> 32 channels
    (32, False, True),    # conv2:   32  -> 32, AntiRectifier -> 64
    (64, False, True),    # conv3:   64  -> 64, AntiRectifier -> 128
    (32, True,  True),    # deconv2: 128 -> 32, AntiRectifier -> 64
    (16, True,  True),    # deconv3: 64  -> 16, AntiRectifier -> 32
    (1,  True,  False),   # deconv4: 32  -> 1   (Dropout = inference identity)
]


def _round_up(x, m):
    return ((x + m - 1) // m) * m


def _hsp(N):
    # Per-sample slab rows: 1 top zero-margin row + 2N content rows + >=1
    # bottom zero row, rounded up to a sublane multiple so the stacked
    # per-batch blocks stay (8,128)-tile aligned.
    return _round_up(2 * N + 2, 8)


def _layer_geometry(tau, N):
    """Static shapes / padded lane layout of every layer of the fused kernel."""
    H0, W0 = 2 * N, N
    geo = []
    h, w = H0, W0
    cin = tau
    in_blocks = [(0, 0, tau)]                 # (lane_start, ch_offset, ch_count)
    k_pad = _round_up(W0 * tau, 128)          # padded lanes read per vertical tap
    for (cout, is_deconv, antirect) in _LAYERS:
        h_out = h + 1 if is_deconv else h - 1
        w_out = w + 1 if is_deconv else w - 1
        n_mm = w_out * cout                                   # real output lanes
        n_pad = _round_up(n_mm, 128) if antirect else n_mm    # 128-aligned width
        geo.append(dict(cin=cin, cout=cout, h_in=h, w_in=w, h_out=h_out,
                        w_out=w_out, deconv=is_deconv, antirect=antirect,
                        k_pad=k_pad, in_blocks=list(in_blocks),
                        n_mm=n_mm, n_pad=n_pad))
        if antirect:
            cin = 2 * cout
            in_blocks = [(0, 0, cout), (n_pad, cout, cout)]
            k_pad = 2 * n_pad
        else:
            cin = cout
            in_blocks = [(0, 0, cout)]
            k_pad = n_pad
        h, w = h_out, w_out
    return geo


# ----------------------------------------------------------------------------
# Weight precompute: fold the 2x2 taps / horizontal padding / channel layout
# into two block-banded (k_pad, n_pad) matrices per layer (one per vertical
# shift).  Padding rows/cols are zero so padded activation lanes stay zero.
# ----------------------------------------------------------------------------
def _build_rhs(w_eq, g, cout):
    # w_eq: (2, 2, Cin_total, Cout) equivalent-conv weights (numpy f32)
    w_in, w_out = g["w_in"], g["w_out"]
    shift = 1 if g["deconv"] else 0
    mats = []
    for di in range(2):
        R = np.zeros((g["k_pad"], g["n_pad"]), np.float32)
        for (lane0, c_off, cp) in g["in_blocks"]:
            blk = np.zeros((w_in, cp, w_out, cout), np.float32)
            for dj in range(2):
                for j in range(w_out):
                    yp = j + dj - shift          # input column feeding output col j
                    if 0 <= yp < w_in:
                        blk[yp, :, j, :] = w_eq[di, dj, c_off:c_off + cp, :]
            R[lane0:lane0 + w_in * cp, :g["n_mm"]] = blk.reshape(
                w_in * cp, w_out * cout)
        mats.append(R)
    return mats                                   # [R_di0, R_di1]


def init_params(key, tau, N):
    geo = _layer_geometry(tau, N)
    keys = jax.random.split(key, len(geo))
    flat, raw = [], []
    for li, (g, k) in enumerate(zip(geo, keys)):
        k1, k2 = jax.random.split(k)
        cin, cout = g["cin"], g["cout"]
        bound = 1.0 / np.sqrt(cin * 4)
        if g["deconv"]:
            w_t = np.asarray(jax.random.uniform(k1, (cin, cout, 2, 2),
                                                jnp.float32, -bound, bound))
            # ConvTranspose2d(k=2, s=1) == zero-pad-by-1 + conv with flipped kernel
            w_eq = np.ascontiguousarray(
                np.transpose(w_t[:, :, ::-1, ::-1], (2, 3, 0, 1)))
        else:
            w_t = np.asarray(jax.random.uniform(k1, (cout, cin, 2, 2),
                                                jnp.float32, -bound, bound))
            w_eq = np.ascontiguousarray(np.transpose(w_t, (2, 3, 1, 0)))
        b = np.asarray(jax.random.uniform(k2, (cout,), jnp.float32, -bound, bound))
        r0, r1 = _build_rhs(w_eq, g, cout)
        bias = np.zeros((1, g["n_pad"]), np.float32)
        bias[0, :g["n_mm"]] = np.tile(b, g["w_out"])
        # bf16 MXU operands for all layers except deconv4 (feeds the Gramian).
        wdt = jnp.float32 if li == len(geo) - 1 else jnp.bfloat16
        flat += [jnp.asarray(r0, wdt), jnp.asarray(r1, wdt), jnp.asarray(bias)]
        raw.append((w_eq, b))
    return geo, flat, raw


def _pick_btile(bs, hsp, target_rows=256):
    """Largest divisor of bs giving ~target_rows stacked LHS rows per step,
    preferring >= 2 grid steps so both v7x TensorCores get work."""
    cap = max(1, target_rows // hsp)
    bt = 1
    for d in range(1, bs + 1):
        if bs % d == 0 and d <= cap:
            bt = d
    if bs // bt < 2:
        for d in range(bt - 1, 0, -1):
            if bs % d == 0 and bs // d >= 2:
                bt = d
                break
    return bt


# ----------------------------------------------------------------------------
# Fused Pallas kernel: full conv/deconv chain + AntiRectifier + Gramian
# ----------------------------------------------------------------------------
def make_fused_net(geo, N, batch, b_tile):
    assert batch % b_tile == 0
    HSP = _hsp(N)
    BH = b_tile * HSP
    LW_IN = geo[0]["k_pad"]
    n_layers = len(geo)

    # Ping-pong slab widths (layer 0 writes slab A, layer 1 -> B, 2 -> A, ...)
    wa, wb = 128, 128
    idx = 0
    for g in geo:
        if g["antirect"]:
            if idx == 0:
                wa = max(wa, 2 * g["n_pad"])
            else:
                wb = max(wb, 2 * g["n_pad"])
            idx ^= 1

    def kernel(x_ref, local_ref, eye_ref, *rest):
        w_refs = rest[:3 * n_layers]
        out_ref = rest[3 * n_layers]
        slabs = [rest[3 * n_layers + 1], rest[3 * n_layers + 2]]

        # Per-row "local row within the sample's HSP-row block" index
        # (precomputed host-side; no per-step iota / mod).
        local = local_ref[...]                  # (BH, 1) int32
        ge1 = local >= 1

        # Invariant (no slab zero-init needed, safe across grid steps):
        # every layer stores ALL BH rows and ALL 2*n_pad lanes of the region
        # the next layer reads.  Invalid rows (margins + rows >= 1+h_out) are
        # multiplied to exact zero, padded lanes are zero because the padded
        # RHS columns / bias entries are zero, and the input block arrives
        # pre-padded with zero margin rows / lanes.
        cur = x_ref
        slab_idx = 0
        rx = None
        for li, g in enumerate(geo):
            K, n_pad = g["k_pad"], g["n_pad"]
            r0 = w_refs[3 * li][...]
            r1 = w_refs[3 * li + 1][...]
            bias = w_refs[3 * li + 2][...]
            lhs = cur[:, 0:K]                   # lane-dense (K % 128 == 0)
            if li < n_layers - 1:
                lhs = lhs.astype(jnp.bfloat16)  # bf16 MXU operands, f32 accum
            acc0 = jnp.dot(lhs, r0, preferred_element_type=jnp.float32)
            acc1 = jnp.dot(lhs, r1, preferred_element_type=jnp.float32)
            # Vertical 2-tap combine via a whole-slab sublane rotation (XLU)
            # instead of sublane-misaligned row slices of the slab.
            if g["deconv"] and g["antirect"]:
                # output content row r lives at local row 1+r:
                # out[s] = acc0[s-1] + acc1[s]
                comb = pltpu.roll(acc0, 1, axis=0) + acc1 + bias
            else:
                # conv layers (content at local 1+r), and the final deconv4
                # which is deliberately placed at local rows 0..2N-1 so the
                # Gramian slices below are 8-row aligned:
                # out[s] = acc0[s] + acc1[s+1]
                comb = acc0 + pltpu.roll(acc1, BH - 1, axis=0) + bias
            if g["antirect"]:
                mask = jnp.logical_and(ge1, local < 1 + g["h_out"])
                comb = comb * mask.astype(jnp.float32)
                out_slab = slabs[slab_idx]
                # AntiRectifier: two lane-dense, 128-aligned block stores.
                out_slab[:, 0:n_pad] = jnp.maximum(comb, 0.0)
                out_slab[:, n_pad:2 * n_pad] = jnp.maximum(-comb, 0.0)
                cur = out_slab
                slab_idx ^= 1
            else:
                rx = comb                       # (BH, N): deconv4 output, f32

        # Gramian per sample: Rz = Kx^H Kx + eps*I with Kx = A + iB,
        # Re = A^T A + B^T B  (one fused contraction of [A;B]),
        # Im = A^T B - B^T A.
        eye = eye_ref[...]                      # eps * I, precomputed
        dn = (((0,), (0,)), ((), ()))           # contract the leading dim
        for b in range(b_tile):
            base = b * HSP
            C = rx[base:base + 2 * N, :]        # (2N, N) = [A; B]
            A = rx[base:base + N, :]
            Bm = rx[base + N:base + 2 * N, :]
            ctc = jax.lax.dot_general(C, C, dn,
                                      preferred_element_type=jnp.float32)
            atb = jax.lax.dot_general(A, Bm, dn,
                                      preferred_element_type=jnp.float32)
            bta = jax.lax.dot_general(Bm, A, dn,
                                      preferred_element_type=jnp.float32)
            out_ref[b, 0:N, :] = ctc + eye
            out_ref[b, N:2 * N, :] = atb - bta

    in_specs = [
        pl.BlockSpec((BH, LW_IN), lambda b: (b, 0)),   # stacked, pre-padded input
        pl.BlockSpec((BH, 1), lambda b: (0, 0)),       # local row indices
        pl.BlockSpec((N, N), lambda b: (0, 0)),        # eps * I
    ]
    for g in geo:
        in_specs.append(pl.BlockSpec((g["k_pad"], g["n_pad"]), lambda b: (0, 0)))
        in_specs.append(pl.BlockSpec((g["k_pad"], g["n_pad"]), lambda b: (0, 0)))
        in_specs.append(pl.BlockSpec((1, g["n_pad"]), lambda b: (0, 0)))

    out_specs = pl.BlockSpec((b_tile, 2 * N, N), lambda b: (b, 0, 0))

    return pl.pallas_call(
        kernel,
        grid=(batch // b_tile,),
        in_specs=in_specs,
        out_specs=out_specs,
        out_shape=jax.ShapeDtypeStruct((batch, 2 * N, N), jnp.float32),
        scratch_shapes=[pltpu.VMEM((BH, wa), jnp.float32),
                        pltpu.VMEM((BH, wb), jnp.float32)],
        compiler_params=pltpu.CompilerParams(
            dimension_semantics=("parallel",),
            vmem_limit_bytes=32 * 1024 * 1024),
    )


# ----------------------------------------------------------------------------
# Root-MUSIC (host-side NumPy; general complex eig has no TPU/Pallas lowering)
# ----------------------------------------------------------------------------
# TODO(synk): torch.linalg.eig / eigvals (Root_MUSIC) cannot be expressed as a
# Pallas TPU kernel; reproduced here on host with NumPy on tiny NxN matrices.
def root_music_np(Rz, M):
    BS, N, _ = Rz.shape
    dist, f = 0.5, 1.0
    scale = 1.0 / (2.0 * np.pi * dist * f)
    DOA_list, DOA_all_list = [], []
    roots_to_return = None
    for it in range(BS):
        R = Rz[it]
        eigenvalues, eigenvectors = np.linalg.eig(R)
        order = np.argsort(np.abs(eigenvalues))[::-1]
        Un = eigenvectors[:, order][:, M:]
        F = Un @ Un.conj().T
        coeff = np.array([np.trace(F, offset=k) for k in range(-(N - 1), N)])
        A = np.diag(np.ones(len(coeff) - 2, dtype=coeff.dtype), -1)
        A[0, :] = -coeff[1:] / coeff[0]
        roots = np.linalg.eigvals(A)
        DOA_all_list.append(np.arcsin(scale * np.angle(roots)))
        roots_to_return = roots
        idx = sorted(range(roots.shape[0]), key=lambda k: abs(abs(roots[k]) - 1))
        roots_s = roots[idx]
        mask = (np.abs(roots_s) - 1) < 0
        roots_m = roots_s[mask][:M]
        DOA_list.append(np.arcsin(scale * np.angle(roots_m)))
    return np.stack(DOA_list, 0), np.stack(DOA_all_list, 0), roots_to_return


# ----------------------------------------------------------------------------
# Full forward (mirrors Deep_Root_Net_AntiRectifier.forward)
# ----------------------------------------------------------------------------
def forward(kernel_weights, geo, New_Rx_tau, M, N, tau, b_tile=None):
    BS = New_Rx_tau.shape[0]
    HSP = _hsp(N)
    if b_tile is None:
        b_tile = _pick_btile(BS, HSP)
    BH = b_tile * HSP
    lw_in = geo[0]["k_pad"]
    fused = make_fused_net(geo, N, BS, b_tile)

    local = jnp.asarray((np.arange(BH) % HSP).reshape(BH, 1), jnp.int32)
    eye = jnp.asarray(1.0 * np.eye(N, dtype=np.float32))       # eps = 1

    @jax.jit
    def run(inp, ws):
        x = jnp.transpose(inp, (0, 2, 3, 1)).astype(jnp.float32)  # NCHW -> NHWC
        x = x.reshape(BS, 2 * N, N * tau)                          # lane = w*tau + c
        # 1 top zero-margin row, zero rows up to HSP, zero lanes up to 128-mult
        x = jnp.pad(x, ((0, 0), (1, HSP - 1 - 2 * N), (0, lw_in - N * tau)))
        x2d = x.reshape(BS * HSP, lw_in)
        out = fused(x2d, local, eye, *ws)                          # (BS, 2N, N)
        return jax.lax.complex(out[:, :N, :], out[:, N:, :])       # complex64

    Rz = run(New_Rx_tau, kernel_weights)
    DOA, DOA_all, roots = root_music_np(np.asarray(Rz), M)
    return DOA, DOA_all, roots, Rz


# ----------------------------------------------------------------------------
# Pure-JAX reference (same folded weights, same bf16 rounding) for validation
# ----------------------------------------------------------------------------
def reference_rz(x_nchw, raw_weights, geo, N, eps=1.0):
    x = jnp.transpose(jnp.asarray(x_nchw, jnp.float32), (0, 2, 3, 1))  # NHWC
    n_layers = len(geo)
    for li, (g, (w_eq, bvec)) in enumerate(zip(geo, raw_weights)):
        lowp = li < n_layers - 1
        if g["deconv"]:
            x = jnp.pad(x, ((0, 0), (1, 1), (1, 1), (0, 0)))
        xin = x.astype(jnp.bfloat16) if lowp else x
        w = jnp.asarray(w_eq, jnp.bfloat16 if lowp else jnp.float32)
        Ho, Wo = g["h_out"], g["w_out"]
        acc = jnp.zeros((x.shape[0], Ho, Wo, g["cout"]), jnp.float32)
        for di in range(2):
            for dj in range(2):
                acc = acc + jnp.einsum(
                    "bhwc,co->bhwo",
                    xin[:, di:di + Ho, dj:dj + Wo, :], w[di, dj],
                    preferred_element_type=jnp.float32)
        acc = acc + jnp.asarray(bvec, jnp.float32)
        if g["antirect"]:
            x = jnp.concatenate(
                [jnp.maximum(acc, 0.0), jnp.maximum(-acc, 0.0)], axis=-1)
        else:
            x = acc
    rx = x[..., 0]                                   # (BS, 2N, N)
    A = rx[:, :N, :]
    B = rx[:, N:, :]
    K = A + 1j * B
    return (jnp.einsum("bki,bkj->bij", jnp.conj(K), K)
            + eps * jnp.eye(N, dtype=jnp.float32))


if __name__ == "__main__":
    BS, tau, N, M = 8, 4, 8, 2
    key = jax.random.PRNGKey(0)
    kx, kw = jax.random.split(key)
    x = jax.random.normal(kx, (BS, tau, 2 * N, N), dtype=jnp.float32)
    geo, kernel_weights, raw_weights = init_params(kw, tau, N)

    DOA, DOA_all, roots, Rz = forward(kernel_weights, geo, x, M, N, tau)
    jax.block_until_ready(Rz)

    # Validate the fused kernel against a pure-JAX reference that uses the
    # same equivalent-conv weights and the same bf16 rounding.
    Rz_ref = np.asarray(reference_rz(x, raw_weights, geo, N))
    err = float(np.max(np.abs(np.asarray(Rz) - Rz_ref)))
    scale = float(np.max(np.abs(Rz_ref)))
    assert err <= 5e-2 * scale + 5e-2, \
        f"Rz mismatch vs reference: max|diff|={err:.4e}, scale={scale:.4e}"

    assert Rz.shape == (BS, N, N) and Rz.dtype == jnp.complex64
    assert DOA.shape == (BS, M)
    assert DOA_all.shape == (BS, 2 * N - 2)
    print("KERNEL_OK")
</pallas_src>

<mosaic_0001>
module attributes {stable_mosaic.version = 11 : i64} {
  func.func @kernel(%arg0: i32, %arg1: memref<96x128xf32, #tpu.memory_space<vmem>>, %arg2: memref<96x1xi32, #tpu.memory_space<vmem>>, %arg3: memref<8x8xf32, #tpu.memory_space<vmem>>, %arg4: memref<128x128xbf16, #tpu.memory_space<vmem>>, %arg5: memref<128x128xbf16, #tpu.memory_space<vmem>>, %arg6: memref<1x128xf32, #tpu.memory_space<vmem>>, %arg7: memref<256x256xbf16, #tpu.memory_space<vmem>>, %arg8: memref<256x256xbf16, #tpu.memory_space<vmem>>, %arg9: memref<1x256xf32, #tpu.memory_space<vmem>>, %arg10: memref<512x384xbf16, #tpu.memory_space<vmem>>, %arg11: memref<512x384xbf16, #tpu.memory_space<vmem>>, %arg12: memref<1x384xf32, #tpu.memory_space<vmem>>, %arg13: memref<768x256xbf16, #tpu.memory_space<vmem>>, %arg14: memref<768x256xbf16, #tpu.memory_space<vmem>>, %arg15: memref<1x256xf32, #tpu.memory_space<vmem>>, %arg16: memref<512x128xbf16, #tpu.memory_space<vmem>>, %arg17: memref<512x128xbf16, #tpu.memory_space<vmem>>, %arg18: memref<1x128xf32, #tpu.memory_space<vmem>>, %arg19: memref<256x8xf32, #tpu.memory_space<vmem>>, %arg20: memref<256x8xf32, #tpu.memory_space<vmem>>, %arg21: memref<1x8xf32, #tpu.memory_space<vmem>>, %arg22: memref<4x16x8xf32, #tpu.memory_space<vmem>>, %arg23: memref<96x768xf32, #tpu.memory_space<vmem>>, %arg24: memref<96x512xf32, #tpu.memory_space<vmem>>) attributes {dimension_semantics = [#tpu.dimension_semantics<parallel>], iteration_bounds = array<i64: 2>, scalar_prefetch = 0 : i64, scratch_operands = 2 : i64, tpu.core_type = #tpu.core_type<tc>, window_params = [{transform_indices = @transform_0, window_bounds = array<i64: 96, 128>}, {pipeline_mode = #tpu.pipeline_mode<synchronous>, transform_indices = @transform_1, window_bounds = array<i64: 96, 1>}, {pipeline_mode = #tpu.pipeline_mode<synchronous>, transform_indices = @transform_2, window_bounds = array<i64: 8, 8>}, {pipeline_mode = #tpu.pipeline_mode<synchronous>, transform_indices = @transform_3, window_bounds = array<i64: 128, 128>}, {pipeline_mode = #tpu.pipeline_mode<synchronous>, transform_indices = @transform_4, window_bounds = array<i64: 128, 128>}, {pipeline_mode = #tpu.pipeline_mode<synchronous>, transform_indices = @transform_5, window_bounds = array<i64: 1, 128>}, {pipeline_mode = #tpu.pipeline_mode<synchronous>, transform_indices = @transform_6, window_bounds = array<i64: 256, 256>}, {pipeline_mode = #tpu.pipeline_mode<synchronous>, transform_indices = @transform_7, window_bounds = array<i64: 256, 256>}, {pipeline_mode = #tpu.pipeline_mode<synchronous>, transform_indices = @transform_8, window_bounds = array<i64: 1, 256>}, {pipeline_mode = #tpu.pipeline_mode<synchronous>, transform_indices = @transform_9, window_bounds = array<i64: 512, 384>}, {pipeline_mode = #tpu.pipeline_mode<synchronous>, transform_indices = @transform_10, window_bounds = array<i64: 512, 384>}, {pipeline_mode = #tpu.pipeline_mode<synchronous>, transform_indices = @transform_11, window_bounds = array<i64: 1, 384>}, {pipeline_mode = #tpu.pipeline_mode<synchronous>, transform_indices = @transform_12, window_bounds = array<i64: 768, 256>}, {pipeline_mode = #tpu.pipeline_mode<synchronous>, transform_indices = @transform_13, window_bounds = array<i64: 768, 256>}, {pipeline_mode = #tpu.pipeline_mode<synchronous>, transform_indices = @transform_14, window_bounds = array<i64: 1, 256>}, {pipeline_mode = #tpu.pipeline_mode<synchronous>, transform_indices = @transform_15, window_bounds = array<i64: 512, 128>}, {pipeline_mode = #tpu.pipeline_mode<synchronous>, transform_indices = @transform_16, window_bounds = array<i64: 512, 128>}, {pipeline_mode = #tpu.pipeline_mode<synchronous>, transform_indices = @transform_17, window_bounds = array<i64: 1, 128>}, {pipeline_mode = #tpu.pipeline_mode<synchronous>, transform_indices = @transform_18, window_bounds = array<i64: 256, 8>}, {pipeline_mode = #tpu.pipeline_mode<synchronous>, transform_indices = @transform_19, window_bounds = array<i64: 256, 8>}, {pipeline_mode = #tpu.pipeline_mode<synchronous>, transform_indices = @transform_20, window_bounds = array<i64: 1, 8>}, {transform_indices = @transform_21, window_bounds = array<i64: 4, 16, 8>}]} {
    %c0 = arith.constant 0 : index
    %c0_0 = arith.constant 0 : index
    %0 = vector.load %arg2[%c0, %c0_0] : memref<96x1xi32, #tpu.memory_space<vmem>>, vector<96x1xi32>
    %c1_i32 = arith.constant 1 : i32
    %1 = vector.broadcast %c1_i32 : i32 to vector<96x1xi32>
    %2 = arith.cmpi sge, %0, %1 : vector<96x1xi32>
    %c0_1 = arith.constant 0 : index
    %c0_2 = arith.constant 0 : index
    %3 = vector.load %arg4[%c0_1, %c0_2] : memref<128x128xbf16, #tpu.memory_space<vmem>>, vector<128x128xbf16>
    %c0_3 = arith.constant 0 : index
    %c0_4 = arith.constant 0 : index
    %4 = vector.load %arg5[%c0_3, %c0_4] : memref<128x128xbf16, #tpu.memory_space<vmem>>, vector<128x128xbf16>
    %c0_5 = arith.constant 0 : index
    %c0_6 = arith.constant 0 : index
    %5 = vector.load %arg6[%c0_5, %c0_6] : memref<1x128xf32, #tpu.memory_space<vmem>>, vector<1x128xf32>
    %c0_7 = arith.constant 0 : index
    %c0_8 = arith.constant 0 : index
    %6 = vector.load %arg1[%c0_7, %c0_8] : memref<96x128xf32, #tpu.memory_space<vmem>>, vector<96x128xf32>
    %7 = arith.truncf %6 : vector<96x128xf32> to vector<96x128xbf16>
    %cst = arith.constant dense<0.000000e+00> : vector<96x128xf32>
    %8 = tpu.matmul %7, %3, %cst {dimension_numbers = #tpu.dot_dimension_numbers<[1], [0], [0], [1], [0, 0, 1, 1], [], []>} : vector<96x128xbf16>, vector<128x128xbf16>, vector<96x128xf32> -> vector<96x128xf32>
    %cst_9 = arith.constant dense<0.000000e+00> : vector<96x128xf32>
    %9 = tpu.matmul %7, %4, %cst_9 {dimension_numbers = #tpu.dot_dimension_numbers<[1], [0], [0], [1], [0, 0, 1, 1], [], []>} : vector<96x128xbf16>, vector<128x128xbf16>, vector<96x128xf32> -> vector<96x128xf32>
    %c95_i32 = arith.constant 95 : i32
    %10 = tpu.dynamic_rotate %9 by %c95_i32 dim 0 : vector<96x128xf32>, i32 -> vector<96x128xf32>
    %11 = arith.addf %8, %10 : vector<96x128xf32>
    %12 = vector.broadcast %5 : vector<1x128xf32> to vector<96x128xf32>
    %13 = arith.addf %11, %12 : vector<96x128xf32>
    %c16_i32 = arith.constant 16 : i32
    %14 = vector.broadcast %c16_i32 : i32 to vector<96x1xi32>
    %15 = arith.cmpi slt, %0, %14 : vector<96x1xi32>
    %16 = arith.andi %2, %15 : vector<96x1xi1>
    %17 = arith.extui %16 : vector<96x1xi1> to vector<96x1xi32>
    %18 = arith.sitofp %17 : vector<96x1xi32> to vector<96x1xf32>
    %19 = vector.broadcast %18 : vector<96x1xf32> to vector<96x128xf32>
    %20 = arith.mulf %13, %19 : vector<96x128xf32>
    %cst_10 = arith.constant 0.000000e+00 : f32
    %21 = vector.broadcast %cst_10 : f32 to vector<96x128xf32>
    %22 = arith.maximumf %20, %21 : vector<96x128xf32>
    %c0_11 = arith.constant 0 : index
    %c0_12 = arith.constant 0 : index
    %23 = vector.load %arg23[%c0_11, %c0_12] : memref<96x768xf32, #tpu.memory_space<vmem>>, vector<96x128xf32>
    tpu.vector_store %arg23[%c0_11, %c0_12], %22 {strides = array<i32>} : memref<96x768xf32, #tpu.memory_space<vmem>>, vector<96x128xf32>,
    %cst_13 = arith.constant 0.000000e+00 : f32
    %24 = vector.broadcast %cst_13 : f32 to vector<96x128xf32>
    %25 = arith.subf %24, %20 : vector<96x128xf32>
    %cst_14 = arith.constant 0.000000e+00 : f32
    %26 = vector.broadcast %cst_14 : f32 to vector<96x128xf32>
    %27 = arith.maximumf %25, %26 : vector<96x128xf32>
    %c0_15 = arith.constant 0 : index
    %c128 = arith.constant 128 : index
    %28 = vector.load %arg23[%c0_15, %c128] : memref<96x768xf32, #tpu.memory_space<vmem>>, vector<96x128xf32>
    tpu.vector_store %arg23[%c0_15, %c128], %27 {strides = array<i32>} : memref<96x768xf32, #tpu.memory_space<vmem>>, vector<96x128xf32>,
    %c0_16 = arith.constant 0 : index
    %c0_17 = arith.constant 0 : index
    %29 = vector.load %arg7[%c0_16, %c0_17] : memref<256x256xbf16, #tpu.memory_space<vmem>>, vector<256x256xbf16>
    %c0_18 = arith.constant 0 : index
    %c0_19 = arith.constant 0 : index
    %30 = vector.load %arg8[%c0_18, %c0_19] : memref<256x256xbf16, #tpu.memory_space<vmem>>, vector<256x256xbf16>
    %c0_20 = arith.constant 0 : index
    %c0_21 = arith.constant 0 : index
    %31 = vector.load %arg9[%c0_20, %c0_21] : memref<1x256xf32, #tpu.memory_space<vmem>>, vector<1x256xf32>
    %c0_22 = arith.constant 0 : index
    %c0_23 = arith.constant 0 : index
    %32 = vector.load %arg23[%c0_22, %c0_23] : memref<96x768xf32, #tpu.memory_space<vmem>>, vector<96x256xf32>
    %33 = arith.truncf %32 : vector<96x256xf32> to vector<96x256xbf16>
    %cst_24 = arith.constant dense<0.000000e+00> : vector<96x256xf32>
    %34 = tpu.matmul %33, %29, %cst_24 {dimension_numbers = #tpu.dot_dimension_numbers<[1], [0], [0], [1], [0, 0, 1, 1], [], []>} : vector<96x256xbf16>, vector<256x256xbf16>, vector<96x256xf32> -> vector<96x256xf32>
    %cst_25 = arith.constant dense<0.000000e+00> : vector<96x256xf32>
    %35 = tpu.matmul %33, %30, %cst_25 {dimension_numbers = #tpu.dot_dimension_numbers<[1], [0], [0], [1], [0, 0, 1, 1], [], []>} : vector<96x256xbf16>, vector<256x256xbf16>, vector<96x256xf32> -> vector<96x256xf32>
    %c95_i32_26 = arith.constant 95 : i32
    %36 = tpu.dynamic_rotate %35 by %c95_i32_26 dim 0 : vector<96x256xf32>, i32 -> vector<96x256xf32>
    %37 = arith.addf %34, %36 : vector<96x256xf32>
    %38 = vector.broadcast %31 : vector<1x256xf32> to vector<96x256xf32>
    %39 = arith.addf %37, %38 : vector<96x256xf32>
    %c15_i32 = arith.constant 15 : i32
    %40 = vector.broadcast %c15_i32 : i32 to vector<96x1xi32>
    %41 = arith.cmpi slt, %0, %40 : vector<96x1xi32>
    %42 = arith.andi %2, %41 : vector<96x1xi1>
    %43 = arith.extui %42 : vector<96x1xi1> to vector<96x1xi32>
    %44 = arith.sitofp %43 : vector<96x1xi32> to vector<96x1xf32>
    %45 = vector.broadcast %44 : vector<96x1xf32> to vector<96x256xf32>
    %46 = arith.mulf %39, %45 : vector<96x256xf32>
    %cst_27 = arith.constant 0.000000e+00 : f32
    %47 = vector.broadcast %cst_27 : f32 to vector<96x256xf32>
    %48 = arith.maximumf %46, %47 : vector<96x256xf32>
    %c0_28 = arith.constant 0 : index
    %c0_29 = arith.constant 0 : index
    %49 = vector.load %arg24[%c0_28, %c0_29] : memref<96x512xf32, #tpu.memory_space<vmem>>, vector<96x256xf32>
    tpu.vector_store %arg24[%c0_28, %c0_29], %48 {strides = array<i32>} : memref<96x512xf32, #tpu.memory_space<vmem>>, vector<96x256xf32>,
    %cst_30 = arith.constant 0.000000e+00 : f32
    %50 = vector.broadcast %cst_30 : f32 to vector<96x256xf32>
    %51 = arith.subf %50, %46 : vector<96x256xf32>
    %cst_31 = arith.constant 0.000000e+00 : f32
    %52 = vector.broadcast %cst_31 : f32 to vector<96x256xf32>
    %53 = arith.maximumf %51, %52 : vector<96x256xf32>
    %c0_32 = arith.constant 0 : index
    %c256 = arith.constant 256 : index
    %54 = vector.load %arg24[%c0_32, %c256] : memref<96x512xf32, #tpu.memory_space<vmem>>, vector<96x256xf32>
    tpu.vector_store %arg24[%c0_32, %c256], %53 {strides = array<i32>} : memref<96x512xf32, #tpu.memory_space<vmem>>, vector<96x256xf32>,
    %c0_33 = arith.constant 0 : index
    %c0_34 = arith.constant 0 : index
    %55 = vector.load %arg10[%c0_33, %c0_34] : memref<512x384xbf16, #tpu.memory_space<vmem>>, vector<512x384xbf16>
    %c0_35 = arith.constant 0 : index
    %c0_36 = arith.constant 0 : index
    %56 = vector.load %arg11[%c0_35, %c0_36] : memref<512x384xbf16, #tpu.memory_space<vmem>>, vector<512x384xbf16>
    %c0_37 = arith.constant 0 : index
    %c0_38 = arith.constant 0 : index
    %57 = vector.load %arg12[%c0_37, %c0_38] : memref<1x384xf32, #tpu.memory_space<vmem>>, vector<1x384xf32>
    %c0_39 = arith.constant 0 : index
    %c0_40 = arith.constant 0 : index
    %58 = vector.load %arg24[%c0_39, %c0_40] : memref<96x512xf32, #tpu.memory_space<vmem>>, vector<96x512xf32>
    %59 = arith.truncf %58 : vector<96x512xf32> to vector<96x512xbf16>
    %cst_41 = arith.constant dense<0.000000e+00> : vector<96x384xf32>
    %60 = tpu.matmul %59, %55, %cst_41 {dimension_numbers = #tpu.dot_dimension_numbers<[1], [0], [0], [1], [0, 0, 1, 1], [], []>} : vector<96x512xbf16>, vector<512x384xbf16>, vector<96x384xf32> -> vector<96x384xf32>
    %cst_42 = arith.constant dense<0.000000e+00> : vector<96x384xf32>
    %61 = tpu.matmul %59, %56, %cst_42 {dimension_numbers = #tpu.dot_dimension_numbers<[1], [0], [0], [1], [0, 0, 1, 1], [], []>} : vector<96x512xbf16>, vector<512x384xbf16>, vector<96x384xf32> -> vector<96x384xf32>
    %c95_i32_43 = arith.constant 95 : i32
    %62 = tpu.dynamic_rotate %61 by %c95_i32_43 dim 0 : vector<96x384xf32>, i32 -> vector<96x384xf32>
    %63 = arith.addf %60, %62 : vector<96x384xf32>
    %64 = vector.broadcast %57 : vector<1x384xf32> to vector<96x384xf32>
    %65 = arith.addf %63, %64 : vector<96x384xf32>
    %c14_i32 = arith.constant 14 : i32
    %66 = vector.broadcast %c14_i32 : i32 to vector<96x1xi32>
    %67 = arith.cmpi slt, %0, %66 : vector<96x1xi32>
    %68 = arith.andi %2, %67 : vector<96x1xi1>
    %69 = arith.extui %68 : vector<96x1xi1> to vector<96x1xi32>
    %70 = arith.sitofp %69 : vector<96x1xi32> to vector<96x1xf32>
    %71 = vector.broadcast %70 : vector<96x1xf32> to vector<96x384xf32>
    %72 = arith.mulf %65, %71 : vector<96x384xf32>
    %cst_44 = arith.constant 0.000000e+00 : f32
    %73 = vector.broadcast %cst_44 : f32 to vector<96x384xf32>
    %74 = arith.maximumf %72, %73 : vector<96x384xf32>
    %c0_45 = arith.constant 0 : index
    %c0_46 = arith.constant 0 : index
    %75 = vector.load %arg23[%c0_45, %c0_46] : memref<96x768xf32, #tpu.memory_space<vmem>>, vector<96x384xf32>
    tpu.vector_store %arg23[%c0_45, %c0_46], %74 {strides = array<i32>} : memref<96x768xf32, #tpu.memory_space<vmem>>, vector<96x384xf32>,
    %cst_47 = arith.constant 0.000000e+00 : f32
    %76 = vector.broadcast %cst_47 : f32 to vector<96x384xf32>
    %77 = arith.subf %76, %72 : vector<96x384xf32>
    %cst_48 = arith.constant 0.000000e+00 : f32
    %78 = vector.broadcast %cst_48 : f32 to vector<96x384xf32>
    %79 = arith.maximumf %77, %78 : vector<96x384xf32>
    %c0_49 = arith.constant 0 : index
    %c384 = arith.constant 384 : index
    %80 = vector.load %arg23[%c0_49, %c384] : memref<96x768xf32, #tpu.memory_space<vmem>>, vector<96x384xf32>
    tpu.vector_store %arg23[%c0_49, %c384], %79 {strides = array<i32>} : memref<96x768xf32, #tpu.memory_space<vmem>>, vector<96x384xf32>,
    %c0_50 = arith.constant 0 : index
    %c0_51 = arith.constant 0 : index
    %81 = vector.load %arg13[%c0_50, %c0_51] : memref<768x256xbf16, #tpu.memory_space<vmem>>, vector<768x256xbf16>
    %c0_52 = arith.constant 0 : index
    %c0_53 = arith.constant 0 : index
    %82 = vector.load %arg14[%c0_52, %c0_53] : memref<768x256xbf16, #tpu.memory_space<vmem>>, vector<768x256xbf16>
    %c0_54 = arith.constant 0 : index
    %c0_55 = arith.constant 0 : index
    %83 = vector.load %arg15[%c0_54, %c0_55] : memref<1x256xf32, #tpu.memory_space<vmem>>, vector<1x256xf32>
    %c0_56 = arith.constant 0 : index
    %c0_57 = arith.constant 0 : index
    %84 = vector.load %arg23[%c0_56, %c0_57] : memref<96x768xf32, #tpu.memory_space<vmem>>, vector<96x768xf32>
    %85 = arith.truncf %84 : vector<96x768xf32> to vector<96x768xbf16>
    %cst_58 = arith.constant dense<0.000000e+00> : vector<96x256xf32>
    %86 = tpu.matmul %85, %81, %cst_58 {dimension_numbers = #tpu.dot_dimension_numbers<[1], [0], [0], [1], [0, 0, 1, 1], [], []>} : vector<96x768xbf16>, vector<768x256xbf16>, vector<96x256xf32> -> vector<96x256xf32>
    %cst_59 = arith.constant dense<0.000000e+00> : vector<96x256xf32>
    %87 = tpu.matmul %85, %82, %cst_59 {dimension_numbers = #tpu.dot_dimension_numbers<[1], [0], [0], [1], [0, 0, 1, 1], [], []>} : vector<96x768xbf16>, vector<768x256xbf16>, vector<96x256xf32> -> vector<96x256xf32>
    %c1_i32_60 = arith.constant 1 : i32
    %88 = tpu.dynamic_rotate %86 by %c1_i32_60 dim 0 : vector<96x256xf32>, i32 -> vector<96x256xf32>
    %89 = arith.addf %88, %87 : vector<96x256xf32>
    %90 = vector.broadcast %83 : vector<1x256xf32> to vector<96x256xf32>
    %91 = arith.addf %89, %90 : vector<96x256xf32>
    %c15_i32_61 = arith.constant 15 : i32
    %92 = vector.broadcast %c15_i32_61 : i32 to vector<96x1xi32>
    %93 = arith.cmpi slt, %0, %92 : vector<96x1xi32>
    %94 = arith.andi %2, %93 : vector<96x1xi1>
    %95 = arith.extui %94 : vector<96x1xi1> to vector<96x1xi32>
    %96 = arith.sitofp %95 : vector<96x1xi32> to vector<96x1xf32>
    %97 = vector.broadcast %96 : vector<96x1xf32> to vector<96x256xf32>
    %98 = arith.mulf %91, %97 : vector<96x256xf32>
    %cst_62 = arith.constant 0.000000e+00 : f32
    %99 = vector.broadcast %cst_62 : f32 to vector<96x256xf32>
    %100 = arith.maximumf %98, %99 : vector<96x256xf32>
    %c0_63 = arith.constant 0 : index
    %c0_64 = arith.constant 0 : index
    %101 = vector.load %arg24[%c0_63, %c0_64] : memref<96x512xf32, #tpu.memory_space<vmem>>, vector<96x256xf32>
    tpu.vector_store %arg24[%c0_63, %c0_64], %100 {strides = array<i32>} : memref<96x512xf32, #tpu.memory_space<vmem>>, vector<96x256xf32>,
    %cst_65 = arith.constant 0.000000e+00 : f32
    %102 = vector.broadcast %cst_65 : f32 to vector<96x256xf32>
    %103 = arith.subf %102, %98 : vector<96x256xf32>
    %cst_66 = arith.constant 0.000000e+00 : f32
    %104 = vector.broadcast %cst_66 : f32 to vector<96x256xf32>
    %105 = arith.maximumf %103, %104 : vector<96x256xf32>
    %c0_67 = arith.constant 0 : index
    %c256_68 = arith.constant 256 : index
    %106 = vector.load %arg24[%c0_67, %c256_68] : memref<96x512xf32, #tpu.memory_space<vmem>>, vector<96x256xf32>
    tpu.vector_store %arg24[%c0_67, %c256_68], %105 {strides = array<i32>} : memref<96x512xf32, #tpu.memory_space<vmem>>, vector<96x256xf32>,
    %c0_69 = arith.constant 0 : index
    %c0_70 = arith.constant 0 : index
    %107 = vector.load %arg16[%c0_69, %c0_70] : memref<512x128xbf16, #tpu.memory_space<vmem>>, vector<512x128xbf16>
    %c0_71 = arith.constant 0 : index
    %c0_72 = arith.constant 0 : index
    %108 = vector.load %arg17[%c0_71, %c0_72] : memref<512x128xbf16, #tpu.memory_space<vmem>>, vector<512x128xbf16>
    %c0_73 = arith.constant 0 : index
    %c0_74 = arith.constant 0 : index
    %109 = vector.load %arg18[%c0_73, %c0_74] : memref<1x128xf32, #tpu.memory_space<vmem>>, vector<1x128xf32>
    %c0_75 = arith.constant 0 : index
    %c0_76 = arith.constant 0 : index
    %110 = vector.load %arg24[%c0_75, %c0_76] : memref<96x512xf32, #tpu.memory_space<vmem>>, vector<96x512xf32>
    %111 = arith.truncf %110 : vector<96x512xf32> to vector<96x512xbf16>
    %cst_77 = arith.constant dense<0.000000e+00> : vector<96x128xf32>
    %112 = tpu.matmul %111, %107, %cst_77 {dimension_numbers = #tpu.dot_dimension_numbers<[1], [0], [0], [1], [0, 0, 1, 1], [], []>} : vector<96x512xbf16>, vector<512x128xbf16>, vector<96x128xf32> -> vector<96x128xf32>
    %cst_78 = arith.constant dense<0.000000e+00> : vector<96x128xf32>
    %113 = tpu.matmul %111, %108, %cst_78 {dimension_numbers = #tpu.dot_dimension_numbers<[1], [0], [0], [1], [0, 0, 1, 1], [], []>} : vector<96x512xbf16>, vector<512x128xbf16>, vector<96x128xf32> -> vector<96x128xf32>
    %c1_i32_79 = arith.constant 1 : i32
    %114 = tpu.dynamic_rotate %112 by %c1_i32_79 dim 0 : vector<96x128xf32>, i32 -> vector<96x128xf32>
    %115 = arith.addf %114, %113 : vector<96x128xf32>
    %116 = vector.broadcast %109 : vector<1x128xf32> to vector<96x128xf32>
    %117 = arith.addf %115, %116 : vector<96x128xf32>
    %c16_i32_80 = arith.constant 16 : i32
    %118 = vector.broadcast %c16_i32_80 : i32 to vector<96x1xi32>
    %119 = arith.cmpi slt, %0, %118 : vector<96x1xi32>
    %120 = arith.andi %2, %119 : vector<96x1xi1>
    %121 = arith.extui %120 : vector<96x1xi1> to vector<96x1xi32>
    %122 = arith.sitofp %121 : vector<96x1xi32> to vector<96x1xf32>
    %123 = vector.broadcast %122 : vector<96x1xf32> to vector<96x128xf32>
    %124 = arith.mulf %117, %123 : vector<96x128xf32>
    %cst_81 = arith.constant 0.000000e+00 : f32
    %125 = vector.broadcast %cst_81 : f32 to vector<96x128xf32>
    %126 = arith.maximumf %124, %125 : vector<96x128xf32>
    %c0_82 = arith.constant 0 : index
    %c0_83 = arith.constant 0 : index
    %127 = vector.load %arg23[%c0_82, %c0_83] : memref<96x768xf32, #tpu.memory_space<vmem>>, vector<96x128xf32>
    tpu.vector_store %arg23[%c0_82, %c0_83], %126 {strides = array<i32>} : memref<96x768xf32, #tpu.memory_space<vmem>>, vector<96x128xf32>,
    %cst_84 = arith.constant 0.000000e+00 : f32
    %128 = vector.broadcast %cst_84 : f32 to vector<96x128xf32>
    %129 = arith.subf %128, %124 : vector<96x128xf32>
    %cst_85 = arith.constant 0.000000e+00 : f32
    %130 = vector.broadcast %cst_85 : f32 to vector<96x128xf32>
    %131 = arith.maximumf %129, %130 : vector<96x128xf32>
    %c0_86 = arith.constant 0 : index
    %c128_87 = arith.constant 128 : index
    %132 = vector.load %arg23[%c0_86, %c128_87] : memref<96x768xf32, #tpu.memory_space<vmem>>, vector<96x128xf32>
    tpu.vector_store %arg23[%c0_86, %c128_87], %131 {strides = array<i32>} : memref<96x768xf32, #tpu.memory_space<vmem>>, vector<96x128xf32>,
    %c0_88 = arith.constant 0 : index
    %c0_89 = arith.constant 0 : index
    %133 = vector.load %arg19[%c0_88, %c0_89] : memref<256x8xf32, #tpu.memory_space<vmem>>, vector<256x8xf32>
    %c0_90 = arith.constant 0 : index
    %c0_91 = arith.constant 0 : index
    %134 = vector.load %arg20[%c0_90, %c0_91] : memref<256x8xf32, #tpu.memory_space<vmem>>, vector<256x8xf32>
    %c0_92 = arith.constant 0 : index
    %c0_93 = arith.constant 0 : index
    %135 = vector.load %arg21[%c0_92, %c0_93] : memref<1x8xf32, #tpu.memory_space<vmem>>, vector<1x8xf32>
    %c0_94 = arith.constant 0 : index
    %c0_95 = arith.constant 0 : index
    %136 = vector.load %arg23[%c0_94, %c0_95] : memref<96x768xf32, #tpu.memory_space<vmem>>, vector<96x256xf32>
    %cst_96 = arith.constant dense<0.000000e+00> : vector<96x8xf32>
    %137 = tpu.matmul %136, %133, %cst_96 {dimension_numbers = #tpu.dot_dimension_numbers<[1], [0], [0], [1], [0, 0, 1, 1], [], []>} : vector<96x256xf32>, vector<256x8xf32>, vector<96x8xf32> -> vector<96x8xf32>
    %cst_97 = arith.constant dense<0.000000e+00> : vector<96x8xf32>
    %138 = tpu.matmul %136, %134, %cst_97 {dimension_numbers = #tpu.dot_dimension_numbers<[1], [0], [0], [1], [0, 0, 1, 1], [], []>} : vector<96x256xf32>, vector<256x8xf32>, vector<96x8xf32> -> vector<96x8xf32>
    %c95_i32_98 = arith.constant 95 : i32
    %139 = tpu.dynamic_rotate %138 by %c95_i32_98 dim 0 : vector<96x8xf32>, i32 -> vector<96x8xf32>
    %140 = arith.addf %137, %139 : vector<96x8xf32>
    %141 = vector.broadcast %135 : vector<1x8xf32> to vector<96x8xf32>
    %142 = arith.addf %140, %141 : vector<96x8xf32>
    %c0_99 = arith.constant 0 : index
    %c0_100 = arith.constant 0 : index
    %143 = vector.load %arg3[%c0_99, %c0_100] : memref<8x8xf32, #tpu.memory_space<vmem>>, vector<8x8xf32>
    %144 = vector.extract_strided_slice %142 {offsets = [0, 0], sizes = [16, 8], strides = [1, 1]} : vector<96x8xf32> to vector<16x8xf32>
    %145 = vector.extract_strided_slice %142 {offsets = [0, 0], sizes = [8, 8], strides = [1, 1]} : vector<96x8xf32> to vector<8x8xf32>
    %146 = vector.extract_strided_slice %142 {offsets = [8, 0], sizes = [8, 8], strides = [1, 1]} : vector<96x8xf32> to vector<8x8xf32>
    %cst_101 = arith.constant dense<0.000000e+00> : vector<8x8xf32>
    %147 = tpu.matmul %144, %144, %cst_101 {dimension_numbers = #tpu.dot_dimension_numbers<[0], [0], [1], [1], [0, 1, 1, 1], [], []>} : vector<16x8xf32>, vector<16x8xf32>, vector<8x8xf32> -> vector<8x8xf32>
    %cst_102 = arith.constant dense<0.000000e+00> : vector<8x8xf32>
    %148 = tpu.matmul %145, %146, %cst_102 {dimension_numbers = #tpu.dot_dimension_numbers<[0], [0], [1], [1], [0, 1, 1, 1], [], []>} : vector<8x8xf32>, vector<8x8xf32>, vector<8x8xf32> -> vector<8x8xf32>
    %cst_103 = arith.constant dense<0.000000e+00> : vector<8x8xf32>
    %149 = tpu.matmul %146, %145, %cst_103 {dimension_numbers = #tpu.dot_dimension_numbers<[0], [0], [1], [1], [0, 1, 1, 1], [], []>} : vector<8x8xf32>, vector<8x8xf32>, vector<8x8xf32> -> vector<8x8xf32>
    %150 = arith.addf %147, %143 : vector<8x8xf32>
    %c0_104 = arith.constant 0 : index
    %c0_105 = arith.constant 0 : index
    %c0_106 = arith.constant 0 : index
    %151 = vector.load %arg22[%c0_104, %c0_105, %c0_106] : memref<4x16x8xf32, #tpu.memory_space<vmem>>, vector<1x8x8xf32>
    %152 = vector.shape_cast %151 : vector<1x8x8xf32> to vector<8x8xf32>
    %153 = vector.shape_cast %150 : vector<8x8xf32> to vector<1x8x8xf32>
    tpu.vector_store %arg22[%c0_104, %c0_105, %c0_106], %153 {strides = array<i32>} : memref<4x16x8xf32, #tpu.memory_space<vmem>>, vector<1x8x8xf32>,
    %154 = arith.subf %148, %149 : vector<8x8xf32>
    %c0_107 = arith.constant 0 : index
    %c8 = arith.constant 8 : index
    %c0_108 = arith.constant 0 : index
    %155 = vector.load %arg22[%c0_107, %c8, %c0_108] : memref<4x16x8xf32, #tpu.memory_space<vmem>>, vector<1x8x8xf32>
    %156 = vector.shape_cast %155 : vector<1x8x8xf32> to vector<8x8xf32>
    %157 = vector.shape_cast %154 : vector<8x8xf32> to vector<1x8x8xf32>
    tpu.vector_store %arg22[%c0_107, %c8, %c0_108], %157 {strides = array<i32>} : memref<4x16x8xf32, #tpu.memory_space<vmem>>, vector<1x8x8xf32>,
    %158 = vector.extract_strided_slice %142 {offsets = [24, 0], sizes = [16, 8], strides = [1, 1]} : vector<96x8xf32> to vector<16x8xf32>
    %159 = vector.extract_strided_slice %142 {offsets = [24, 0], sizes = [8, 8], strides = [1, 1]} : vector<96x8xf32> to vector<8x8xf32>
    %160 = vector.extract_strided_slice %142 {offsets = [32, 0], sizes = [8, 8], strides = [1, 1]} : vector<96x8xf32> to vector<8x8xf32>
    %cst_109 = arith.constant dense<0.000000e+00> : vector<8x8xf32>
    %161 = tpu.matmul %158, %158, %cst_109 {dimension_numbers = #tpu.dot_dimension_numbers<[0], [0], [1], [1], [0, 1, 1, 1], [], []>} : vector<16x8xf32>, vector<16x8xf32>, vector<8x8xf32> -> vector<8x8xf32>
    %cst_110 = arith.constant dense<0.000000e+00> : vector<8x8xf32>
    %162 = tpu.matmul %159, %160, %cst_110 {dimension_numbers = #tpu.dot_dimension_numbers<[0], [0], [1], [1], [0, 1, 1, 1], [], []>} : vector<8x8xf32>, vector<8x8xf32>, vector<8x8xf32> -> vector<8x8xf32>
    %cst_111 = arith.constant dense<0.000000e+00> : vector<8x8xf32>
    %163 = tpu.matmul %160, %159, %cst_111 {dimension_numbers = #tpu.dot_dimension_numbers<[0], [0], [1], [1], [0, 1, 1, 1], [], []>} : vector<8x8xf32>, vector<8x8xf32>, vector<8x8xf32> -> vector<8x8xf32>
    %164 = arith.addf %161, %143 : vector<8x8xf32>
    %c1 = arith.constant 1 : index
    %c0_112 = arith.constant 0 : index
    %c0_113 = arith.constant 0 : index
    %165 = vector.load %arg22[%c1, %c0_112, %c0_113] : memref<4x16x8xf32, #tpu.memory_space<vmem>>, vector<1x8x8xf32>
    %166 = vector.shape_cast %165 : vector<1x8x8xf32> to vector<8x8xf32>
    %167 = vector.shape_cast %164 : vector<8x8xf32> to vector<1x8x8xf32>
    tpu.vector_store %arg22[%c1, %c0_112, %c0_113], %167 {strides = array<i32>} : memref<4x16x8xf32, #tpu.memory_space<vmem>>, vector<1x8x8xf32>,
    %168 = arith.subf %162, %163 : vector<8x8xf32>
    %c1_114 = arith.constant 1 : index
    %c8_115 = arith.constant 8 : index
    %c0_116 = arith.constant 0 : index
    %169 = vector.load %arg22[%c1_114, %c8_115, %c0_116] : memref<4x16x8xf32, #tpu.memory_space<vmem>>, vector<1x8x8xf32>
    %170 = vector.shape_cast %169 : vector<1x8x8xf32> to vector<8x8xf32>
    %171 = vector.shape_cast %168 : vector<8x8xf32> to vector<1x8x8xf32>
    tpu.vector_store %arg22[%c1_114, %c8_115, %c0_116], %171 {strides = array<i32>} : memref<4x16x8xf32, #tpu.memory_space<vmem>>, vector<1x8x8xf32>,
    %172 = vector.extract_strided_slice %142 {offsets = [48, 0], sizes = [16, 8], strides = [1, 1]} : vector<96x8xf32> to vector<16x8xf32>
    %173 = vector.extract_strided_slice %142 {offsets = [48, 0], sizes = [8, 8], strides = [1, 1]} : vector<96x8xf32> to vector<8x8xf32>
    %174 = vector.extract_strided_slice %142 {offsets = [56, 0], sizes = [8, 8], strides = [1, 1]} : vector<96x8xf32> to vector<8x8xf32>
    %cst_117 = arith.constant dense<0.000000e+00> : vector<8x8xf32>
    %175 = tpu.matmul %172, %172, %cst_117 {dimension_numbers = #tpu.dot_dimension_numbers<[0], [0], [1], [1], [0, 1, 1, 1], [], []>} : vector<16x8xf32>, vector<16x8xf32>, vector<8x8xf32> -> vector<8x8xf32>
    %cst_118 = arith.constant dense<0.000000e+00> : vector<8x8xf32>
    %176 = tpu.matmul %173, %174, %cst_118 {dimension_numbers = #tpu.dot_dimension_numbers<[0], [0], [1], [1], [0, 1, 1, 1], [], []>} : vector<8x8xf32>, vector<8x8xf32>, vector<8x8xf32> -> vector<8x8xf32>
    %cst_119 = arith.constant dense<0.000000e+00> : vector<8x8xf32>
    %177 = tpu.matmul %174, %173, %cst_119 {dimension_numbers = #tpu.dot_dimension_numbers<[0], [0], [1], [1], [0, 1, 1, 1], [], []>} : vector<8x8xf32>, vector<8x8xf32>, vector<8x8xf32> -> vector<8x8xf32>
    %178 = arith.addf %175, %143 : vector<8x8xf32>
    %c2 = arith.constant 2 : index
    %c0_120 = arith.constant 0 : index
    %c0_121 = arith.constant 0 : index
    %179 = vector.load %arg22[%c2, %c0_120, %c0_121] : memref<4x16x8xf32, #tpu.memory_space<vmem>>, vector<1x8x8xf32>
    %180 = vector.shape_cast %179 : vector<1x8x8xf32> to vector<8x8xf32>
    %181 = vector.shape_cast %178 : vector<8x8xf32> to vector<1x8x8xf32>
    tpu.vector_store %arg22[%c2, %c0_120, %c0_121], %181 {strides = array<i32>} : memref<4x16x8xf32, #tpu.memory_space<vmem>>, vector<1x8x8xf32>,
    %182 = arith.subf %176, %177 : vector<8x8xf32>
    %c2_122 = arith.constant 2 : index
    %c8_123 = arith.constant 8 : index
    %c0_124 = arith.constant 0 : index
    %183 = vector.load %arg22[%c2_122, %c8_123, %c0_124] : memref<4x16x8xf32, #tpu.memory_space<vmem>>, vector<1x8x8xf32>
    %184 = vector.shape_cast %183 : vector<1x8x8xf32> to vector<8x8xf32>
    %185 = vector.shape_cast %182 : vector<8x8xf32> to vector<1x8x8xf32>
    tpu.vector_store %arg22[%c2_122, %c8_123, %c0_124], %185 {strides = array<i32>} : memref<4x16x8xf32, #tpu.memory_space<vmem>>, vector<1x8x8xf32>,
    %186 = vector.extract_strided_slice %142 {offsets = [72, 0], sizes = [16, 8], strides = [1, 1]} : vector<96x8xf32> to vector<16x8xf32>
    %187 = vector.extract_strided_slice %142 {offsets = [72, 0], sizes = [8, 8], strides = [1, 1]} : vector<96x8xf32> to vector<8x8xf32>
    %188 = vector.extract_strided_slice %142 {offsets = [80, 0], sizes = [8, 8], strides = [1, 1]} : vector<96x8xf32> to vector<8x8xf32>
    %cst_125 = arith.constant dense<0.000000e+00> : vector<8x8xf32>
    %189 = tpu.matmul %186, %186, %cst_125 {dimension_numbers = #tpu.dot_dimension_numbers<[0], [0], [1], [1], [0, 1, 1, 1], [], []>} : vector<16x8xf32>, vector<16x8xf32>, vector<8x8xf32> -> vector<8x8xf32>
    %cst_126 = arith.constant dense<0.000000e+00> : vector<8x8xf32>
    %190 = tpu.matmul %187, %188, %cst_126 {dimension_numbers = #tpu.dot_dimension_numbers<[0], [0], [1], [1], [0, 1, 1, 1], [], []>} : vector<8x8xf32>, vector<8x8xf32>, vector<8x8xf32> -> vector<8x8xf32>
    %cst_127 = arith.constant dense<0.000000e+00> : vector<8x8xf32>
    %191 = tpu.matmul %188, %187, %cst_127 {dimension_numbers = #tpu.dot_dimension_numbers<[0], [0], [1], [1], [0, 1, 1, 1], [], []>} : vector<8x8xf32>, vector<8x8xf32>, vector<8x8xf32> -> vector<8x8xf32>
    %192 = arith.addf %189, %143 : vector<8x8xf32>
    %c3 = arith.constant 3 : index
    %c0_128 = arith.constant 0 : index
    %c0_129 = arith.constant 0 : index
    %193 = vector.load %arg22[%c3, %c0_128, %c0_129] : memref<4x16x8xf32, #tpu.memory_space<vmem>>, vector<1x8x8xf32>
    %194 = vector.shape_cast %193 : vector<1x8x8xf32> to vector<8x8xf32>
    %195 = vector.shape_cast %192 : vector<8x8xf32> to vector<1x8x8xf32>
    tpu.vector_store %arg22[%c3, %c0_128, %c0_129], %195 {strides = array<i32>} : memref<4x16x8xf32, #tpu.memory_space<vmem>>, vector<1x8x8xf32>,
    %196 = arith.subf %190, %191 : vector<8x8xf32>
    %c3_130 = arith.constant 3 : index
    %c8_131 = arith.constant 8 : index
    %c0_132 = arith.constant 0 : index
    %197 = vector.load %arg22[%c3_130, %c8_131, %c0_132] : memref<4x16x8xf32, #tpu.memory_space<vmem>>, vector<1x8x8xf32>
    %198 = vector.shape_cast %197 : vector<1x8x8xf32> to vector<8x8xf32>
    %199 = vector.shape_cast %196 : vector<8x8xf32> to vector<1x8x8xf32>
    tpu.vector_store %arg22[%c3_130, %c8_131, %c0_132], %199 {strides = array<i32>} : memref<4x16x8xf32, #tpu.memory_space<vmem>>, vector<1x8x8xf32>,
    return
  }
  func.func @transform_0(%arg0: i32) -> (i32, i32) {
    %c0_i32 = arith.constant 0 : i32
    %c0_i32_0 = arith.constant 0 : i32
    return %arg0, %c0_i32 : i32, i32
  }
  func.func @transform_1(%arg0: i32) -> (i32, i32) {
    %c0_i32 = arith.constant 0 : i32
    %c0_i32_0 = arith.constant 0 : i32
    %c0_i32_1 = arith.constant 0 : i32
    return %c0_i32, %c0_i32_0 : i32, i32
  }
  func.func @transform_2(%arg0: i32) -> (i32, i32) {
    %c0_i32 = arith.constant 0 : i32
    %c0_i32_0 = arith.constant 0 : i32
    %c0_i32_1 = arith.constant 0 : i32
    return %c0_i32, %c0_i32_0 : i32, i32
  }
  func.func @transform_3(%arg0: i32) -> (i32, i32) {
    %c0_i32 = arith.constant 0 : i32
    %c0_i32_0 = arith.constant 0 : i32
    %c0_i32_1 = arith.constant 0 : i32
    return %c0_i32, %c0_i32_0 : i32, i32
  }
  func.func @transform_4(%arg0: i32) -> (i32, i32) {
    %c0_i32 = arith.constant 0 : i32
    %c0_i32_0 = arith.constant 0 : i32
    %c0_i32_1 = arith.constant 0 : i32
    return %c0_i32, %c0_i32_0 : i32, i32
  }
  func.func @transform_5(%arg0: i32) -> (i32, i32) {
    %c0_i32 = arith.constant 0 : i32
    %c0_i32_0 = arith.constant 0 : i32
    %c0_i32_1 = arith.constant 0 : i32
    return %c0_i32, %c0_i32_0 : i32, i32
  }
  func.func @transform_6(%arg0: i32) -> (i32, i32) {
    %c0_i32 = arith.constant 0 : i32
    %c0_i32_0 = arith.constant 0 : i32
    %c0_i32_1 = arith.constant 0 : i32
    return %c0_i32, %c0_i32_0 : i32, i32
  }
  func.func @transform_7(%arg0: i32) -> (i32, i32) {
    %c0_i32 = arith.constant 0 : i32
    %c0_i32_0 = arith.constant 0 : i32
    %c0_i32_1 = arith.constant 0 : i32
    return %c0_i32, %c0_i32_0 : i32, i32
  }
  func.func @transform_8(%arg0: i32) -> (i32, i32) {
    %c0_i32 = arith.constant 0 : i32
    %c0_i32_0 = arith.constant 0 : i32
    %c0_i32_1 = arith.constant 0 : i32
    return %c0_i32, %c0_i32_0 : i32, i32
  }
  func.func @transform_9(%arg0: i32) -> (i32, i32) {
    %c0_i32 = arith.constant 0 : i32
    %c0_i32_0 = arith.constant 0 : i32
    %c0_i32_1 = arith.constant 0 : i32
    return %c0_i32, %c0_i32_0 : i32, i32
  }
  func.func @transform_10(%arg0: i32) -> (i32, i32) {
    %c0_i32 = arith.constant 0 : i32
    %c0_i32_0 = arith.constant 0 : i32
    %c0_i32_1 = arith.constant 0 : i32
    return %c0_i32, %c0_i32_0 : i32, i32
  }
  func.func @transform_11(%arg0: i32) -> (i32, i32) {
    %c0_i32 = arith.constant 0 : i32
    %c0_i32_0 = arith.constant 0 : i32
    %c0_i32_1 = arith.constant 0 : i32
    return %c0_i32, %c0_i32_0 : i32, i32
  }
  func.func @transform_12(%arg0: i32) -> (i32, i32) {
    %c0_i32 = arith.constant 0 : i32
    %c0_i32_0 = arith.constant 0 : i32
    %c0_i32_1 = arith.constant 0 : i32
    return %c0_i32, %c0_i32_0 : i32, i32
  }
  func.func @transform_13(%arg0: i32) -> (i32, i32) {
    %c0_i32 = arith.constant 0 : i32
    %c0_i32_0 = arith.constant 0 : i32
    %c0_i32_1 = arith.constant 0 : i32
    return %c0_i32, %c0_i32_0 : i32, i32
  }
  func.func @transform_14(%arg0: i32) -> (i32, i32) {
    %c0_i32 = arith.constant 0 : i32
    %c0_i32_0 = arith.constant 0 : i32
    %c0_i32_1 = arith.constant 0 : i32
    return %c0_i32, %c0_i32_0 : i32, i32
  }
  func.func @transform_15(%arg0: i32) -> (i32, i32) {
    %c0_i32 = arith.constant 0 : i32
    %c0_i32_0 = arith.constant 0 : i32
    %c0_i32_1 = arith.constant 0 : i32
    return %c0_i32, %c0_i32_0 : i32, i32
  }
  func.func @transform_16(%arg0: i32) -> (i32, i32) {
    %c0_i32 = arith.constant 0 : i32
    %c0_i32_0 = arith.constant 0 : i32
    %c0_i32_1 = arith.constant 0 : i32
    return %c0_i32, %c0_i32_0 : i32, i32
  }
  func.func @transform_17(%arg0: i32) -> (i32, i32) {
    %c0_i32 = arith.constant 0 : i32
    %c0_i32_0 = arith.constant 0 : i32
    %c0_i32_1 = arith.constant 0 : i32
    return %c0_i32, %c0_i32_0 : i32, i32
  }
  func.func @transform_18(%arg0: i32) -> (i32, i32) {
    %c0_i32 = arith.constant 0 : i32
    %c0_i32_0 = arith.constant 0 : i32
    %c0_i32_1 = arith.constant 0 : i32
    return %c0_i32, %c0_i32_0 : i32, i32
  }
  func.func @transform_19(%arg0: i32) -> (i32, i32) {
    %c0_i32 = arith.constant 0 : i32
    %c0_i32_0 = arith.constant 0 : i32
    %c0_i32_1 = arith.constant 0 : i32
    return %c0_i32, %c0_i32_0 : i32, i32
  }
  func.func @transform_20(%arg0: i32) -> (i32, i32) {
    %c0_i32 = arith.constant 0 : i32
    %c0_i32_0 = arith.constant 0 : i32
    %c0_i32_1 = arith.constant 0 : i32
    return %c0_i32, %c0_i32_0 : i32, i32
  }
  func.func @transform_21(%arg0: i32) -> (i32, i32, i32) {
    %c0_i32 = arith.constant 0 : i32
    %c0_i32_0 = arith.constant 0 : i32
    %c0_i32_1 = arith.constant 0 : i32
    return %arg0, %c0_i32, %c0_i32_0 : i32, i32, i32
  }
}

</mosaic_0001>

<llo_original>
// kernel: custom-call
$region0: #{custom-call}
  %s0 = inlined_call_operand.vmem [shape: f32[8,8,8], index: 0, kind: input, shape index: {}]
  %s1 = inlined_call_operand.vmem [shape: f32[8,8,8], index: 1, kind: input, shape index: {}]
  %s2 = inlined_call_operand.hbm [shape: c64[8,8,8], index: 2, kind: output, shape index: {}]
  %s3 = scalar_lea.hbm %s2, 64
  $region1: #{custom-call} parent=0
    #allocation0 [shape = 's32[1]{0}', space=sflag, size = 0x4, scoped, tag = 'scoped memory for custom-call']
    %4 = vsyncpa [#allocation0], 0
    %s6 = sshll.u32 %s0, 4
    %s7 = int_to_ptr.vmem [resolvable:$true] %s6
    %s8 = sshll.u32 %s2, 4
    %s9 = int_to_ptr.hbm [resolvable:$true] %s8
    %11 = dma.vmem_to_hbm [thread:$0]  %s7, 1024, %s9, [#allocation0]
    %13 = dma.done [#allocation0], 1024
    %14 = vsyncpa [#allocation0], 1
  $region2: #{custom-call} parent=0
    #allocation1 [shape = 's32[1]{0}', space=sflag, size = 0x4, scoped, tag = 'scoped memory for custom-call']
    %15 = vsyncpa [#allocation1], 0
    %s17 = sshll.u32 %s1, 4
    %s18 = int_to_ptr.vmem [resolvable:$true] %s17
    %s19 = sshll.u32 %s3, 4
    %s20 = int_to_ptr.hbm [resolvable:$true] %s19
    %22 = dma.vmem_to_hbm [thread:$0]  %s18, 1024, %s20, [#allocation1]
    %24 = dma.done [#allocation1], 1024
    %25 = vsyncpa [#allocation1], 1

// kernel: run.1
$region0: #{run.1}
  #allocation0 [shape = 'u32[]', space=smem, size = 0x4, offset = 0x4, fixed_abs, tag = 'smem constant byte address 0x4 - core index']
  #allocation1 [shape = 'u32[72,128]{1,0:T(1,128)}', space=vmem, size = 0x9000, scoped, tag = 'internal scratch']
  #allocation2 [shape = 'f32[96,768]{1,0:T(8,128)}', space=vmem, size = 0x48000, scoped, tag = 'scratch operand']
  #allocation3 [shape = 'f32[96,512]{1,0:T(8,128)}', space=vmem, size = 0x30000, scoped, tag = 'scratch operand']
  %s0 = inlined_call_operand.vmem [shape: f32[192,128], index: 0, kind: input, shape index: {}]
  %s1 = inlined_call_operand.vmem [shape: s32[96,1], index: 1, kind: input, shape index: {}]
  %s2 = inlined_call_operand.vmem [shape: f32[8,8], index: 2, kind: input, shape index: {}]
  %s3 = inlined_call_operand.vmem [shape: bf16[128,128], index: 3, kind: input, shape index: {}]
  %s4 = inlined_call_operand.hbm [shape: bf16[128,128], index: 4, kind: input, shape index: {}]
  %s5 = inlined_call_operand.vmem [shape: f32[1,128], index: 5, kind: input, shape index: {}]
  %s6 = inlined_call_operand.vmem [shape: bf16[256,256], index: 6, kind: input, shape index: {}]
  %s7 = inlined_call_operand.vmem [shape: bf16[256,256], index: 7, kind: input, shape index: {}]
  %s8 = inlined_call_operand.vmem [shape: f32[1,256], index: 8, kind: input, shape index: {}]
  %s9 = inlined_call_operand.vmem [shape: bf16[512,384], index: 9, kind: input, shape index: {}]
  %s10 = inlined_call_operand.hbm [shape: bf16[512,384], index: 10, kind: input, shape index: {}]
  %s11 = inlined_call_operand.vmem [shape: f32[1,384], index: 11, kind: input, shape index: {}]
  %s12 = inlined_call_operand.hbm [shape: bf16[768,256], index: 12, kind: input, shape index: {}]
  %s13 = inlined_call_operand.hbm [shape: bf16[768,256], index: 13, kind: input, shape index: {}]
  %s14 = inlined_call_operand.vmem [shape: f32[1,256], index: 14, kind: input, shape index: {}]
  %s15 = inlined_call_operand.vmem [shape: bf16[512,128], index: 15, kind: input, shape index: {}]
  %s16 = inlined_call_operand.hbm [shape: bf16[512,128], index: 16, kind: input, shape index: {}]
  %s17 = inlined_call_operand.vmem [shape: f32[1,128], index: 17, kind: input, shape index: {}]
  %s18 = inlined_call_operand.vmem [shape: f32[256,8], index: 18, kind: input, shape index: {}]
  %s19 = inlined_call_operand.vmem [shape: f32[256,8], index: 19, kind: input, shape index: {}]
  %s20 = inlined_call_operand.vmem [shape: f32[1,8], index: 20, kind: input, shape index: {}]
  %s21 = inlined_call_operand.vmem [shape: f32[8,16,8], index: 21, kind: output, shape index: {}]
  %s22 = sld [smem:[#allocation0]]
  $region137: #{run.1} parent=0
    _
  %s24 = ssub.s32 1, %s22
  %s25 = scalar_select 0, %s24, %s22
  $region1: #{run.1} parent=0
    #allocation4 [shape = 'u8[32768]{0}', space=vmem, size = 0x8000, scoped, tag = 'input window, operand 4, single buffered']
    #allocation5 [shape = 's32[2]{0}', space=sflag, size = 0x8, scoped, tag = 'scoped memory for run.1']
    #allocation6 [shape = 'u8[393216]{0}', space=vmem, size = 0x60000, scoped, tag = 'input window, operand 10, single buffered']
    #allocation7 [shape = 's32[1]{0}', space=sflag, size = 0x4, scoped, tag = 'scoped memory for run.1']
    #allocation8 [shape = 'u8[393216]{0}', space=vmem, size = 0x60000, scoped, tag = 'input window, operand 12, single buffered']
    #allocation9 [shape = 'u8[393216]{0}', space=vmem, size = 0x60000, scoped, tag = 'input window, operand 13, single buffered']
    #allocation10 [shape = 's32[1]{0}', space=sflag, size = 0x4, scoped, tag = 'scoped memory for run.1']
    #allocation11 [shape = 'u8[131072]{0}', space=vmem, size = 0x20000, scoped, tag = 'input window, operand 16, single buffered']
    %26 = vsyncpa [#allocation5], 0
    %27 = vsyncpa [#allocation7], 0
    %28 = vsyncpa [#allocation10], 0
    loop: start=0, step=1, limit=4
    $region2: #{run.1} parent=1 // loop_pre_header
      _
    $region3: #{run.1} parent=1 // loop_header
      %s30 = sphi 0, %s34
      %p31 = scmp.ge.s32.totalorder %s30, 4
      %s40 = sphi 0, %s42
      %s43 = sphi 0, %s40
      %s44 = sphi 0, %s43
      %s60 = sphi 0, %s44
      %s64 = sphi 0, %s64
      %s66 = sphi 0, %s64
      %s67 = sphi 0, %s66
      %s81 = sphi 0, %s67
      %s85 = sphi 0, %s85
      %s87 = sphi 0, %s85
      %s88 = sphi 0, %s87
      %s102 = sphi 0, %s88
      %s106 = sphi 0, %s106
      %s108 = sphi 0, %s106
      %s109 = sphi 0, %s108
      %s123 = sphi 0, %s109
      %s127 = sphi 0, %s127
      %s129 = sphi 0, %s127
      %s130 = sphi 0, %s129
      %s144 = sphi 0, %s130
      %s148 = sphi 0, %s148
      %s150 = sphi 0, %s148
      %s151 = sphi 0, %s150
      %s165 = sphi 0, %s151
      %s169 = sphi 0, %s169
      %s171 = sphi 0, %s169
      %s172 = sphi 0, %s171
      %s186 = sphi 0, %s172
      %s190 = sphi 0, %s190
      %s192 = sphi 0, %s190
      %s193 = sphi 0, %s192
      %s207 = sphi 0, %s193
      %s211 = sphi 0, %s211
      %s213 = sphi 0, %s211
      %s214 = sphi 0, %s213
      %s228 = sphi 0, %s214
      %s232 = sphi 0, %s232
      %s234 = sphi 0, %s232
      %s235 = sphi 0, %s234
      %s249 = sphi 0, %s235
      %s253 = sphi 0, %s253
      %s255 = sphi 0, %s253
      %s256 = sphi 0, %s255
      %s270 = sphi 0, %s256
      %s274 = sphi 0, %s274
      %s276 = sphi 0, %s274
      %s277 = sphi 0, %s276
      %s291 = sphi 0, %s277
      %s295 = sphi 0, %s295
      %s297 = sphi 0, %s295
      %s298 = sphi 0, %s297
      %s312 = sphi 0, %s298
      %s316 = sphi 0, %s316
      %s318 = sphi 0, %s316
      %s319 = sphi 0, %s318
      %s333 = sphi 0, %s319
      %s337 = sphi 0, %s337
      %s339 = sphi 0, %s337
      %s340 = sphi 0, %s339
      %s354 = sphi 0, %s340
      %s358 = sphi 0, %s358
      %s360 = sphi 0, %s358
      %s361 = sphi 0, %s360
      %s375 = sphi 0, %s361
      %s379 = sphi 0, %s379
      %s381 = sphi 0, %s379
      %s382 = sphi 0, %s381
      %s396 = sphi 0, %s382
      %s400 = sphi 0, %s400
      %s402 = sphi 0, %s400
      %s403 = sphi 0, %s402
      %s417 = sphi 0, %s403
      %s421 = sphi 0, %s421
      %s423 = sphi 0, %s421
      %s424 = sphi 0, %s423
      %s438 = sphi 0, %s424
      %s442 = sphi 0, %s442
      %s444 = sphi 0, %s442
      %s445 = sphi 0, %s444
      %s459 = sphi 0, %s445
      %s463 = sphi 0, %s463
      %s465 = sphi 0, %s463
      %s466 = sphi 0, %s465
      %s480 = sphi 0, %s466
      %s486 = sphi 0, %s488
      %s489 = sphi 0, %s486
      %s490 = sphi 0, %s489
      %s506 = sphi 0, %s490
    $region4: #{run.1} parent=1 // loop_header_branch
      %33 = sbr.rel (%p31) target = $region8
    $region5: #{run.1} parent=1 // loop_body
      %s35 = ssub.s32 %s30, 1
      %s36 = ssub.s32 %s30, 2
      %s37 = sadd.s32 %s30, 1
      %s38 = ssub.s32 %s30, %s37
      %p39 = scmp.eq.s32.totalorder %s38, 0
      %s41 = sadd.s32 %s40, 1
      %s42 = scalar_select %p39, %s40, %s41
      %p45 = pneg %p39
      %p46 = scmp.eq.s32.totalorder %s30, 1
      %p47 = por %p45, %p46
      %p48 = scmp.ne.s32.totalorder %s40, %s43
      %p49 = scmp.eq.s32.totalorder %s30, 0
      %p50 = por %p48, %p49
      %p51 = scmp.ne.s32.totalorder %s40, %s43
      %p52 = scmp.eq.s32.totalorder %s35, 1
      %p53 = por %p51, %p52
      %p54 = scmp.ne.s32.totalorder %s43, %s44
      %p55 = scmp.eq.s32.totalorder %s35, 0
      %p56 = por %p54, %p55
      %p57 = scmp.ne.s32.totalorder %s43, %s44
      %p58 = scmp.eq.s32.totalorder %s36, 1
      %p59 = por %p57, %p58
      %p61 = scmp.ne.s32.totalorder %s44, %s60
      %p62 = scmp.eq.s32.totalorder %s36, 0
      %p63 = por %p61, %p62
      %s65 = sadd.s32 %s64, 1
      %p68 = scmp.eq.s32.totalorder %s30, 1
      %p69 = scmp.ne.s32.totalorder %s64, %s66
      %p70 = scmp.eq.s32.totalorder %s30, 0
      %p71 = por %p69, %p70
      %p72 = scmp.ne.s32.totalorder %s64, %s66
      %p73 = scmp.eq.s32.totalorder %s35, 1
      %p74 = por %p72, %p73
      %p75 = scmp.ne.s32.totalorder %s66, %s67
      %p76 = scmp.eq.s32.totalorder %s35, 0
      %p77 = por %p75, %p76
      %p78 = scmp.ne.s32.totalorder %s66, %s67
      %p79 = scmp.eq.s32.totalorder %s36, 1
      %p80 = por %p78, %p79
      %p82 = scmp.ne.s32.totalorder %s67, %s81
      %p83 = scmp.eq.s32.totalorder %s36, 0
      %p84 = por %p82, %p83
      %s86 = sadd.s32 %s85, 1
      %p89 = scmp.eq.s32.totalorder %s30, 1
      %p90 = scmp.ne.s32.totalorder %s85, %s87
      %p91 = scmp.eq.s32.totalorder %s30, 0
      %p92 = por %p90, %p91
      %p93 = scmp.ne.s32.totalorder %s85, %s87
      %p94 = scmp.eq.s32.totalorder %s35, 1
      %p95 = por %p93, %p94
      %p96 = scmp.ne.s32.totalorder %s87, %s88
      %p97 = scmp.eq.s32.totalorder %s35, 0
      %p98 = por %p96, %p97
      %p99 = scmp.ne.s32.totalorder %s87, %s88
      %p100 = scmp.eq.s32.totalorder %s36, 1
      %p101 = por %p99, %p100
      %p103 = scmp.ne.s32.totalorder %s88, %s102
      %p104 = scmp.eq.s32.totalorder %s36, 0
      %p105 = por %p103, %p104
      %s107 = sadd.s32 %s106, 1
      %p110 = scmp.eq.s32.totalorder %s30, 1
      %p111 = scmp.ne.s32.totalorder %s106, %s108
      %p112 = scmp.eq.s32.totalorder %s30, 0
      %p113 = por %p111, %p112
      %p114 = scmp.ne.s32.totalorder %s106, %s108
      %p115 = scmp.eq.s32.totalorder %s35, 1
      %p116 = por %p114, %p115
      %p117 = scmp.ne.s32.totalorder %s108, %s109
      %p118 = scmp.eq.s32.totalorder %s35, 0
      %p119 = por %p117, %p118
      %p120 = scmp.ne.s32.totalorder %s108, %s109
      %p121 = scmp.eq.s32.totalorder %s36, 1
      %p122 = por %p120, %p121
      %p124 = scmp.ne.s32.totalorder %s109, %s123
      %p125 = scmp.eq.s32.totalorder %s36, 0
      %p126 = por %p124, %p125
      %s128 = sadd.s32 %s127, 1
      %p131 = scmp.eq.s32.totalorder %s30, 1
      %p132 = scmp.ne.s32.totalorder %s127, %s129
      %p133 = scmp.eq.s32.totalorder %s30, 0
      %p134 = por %p132, %p133
      %p135 = scmp.ne.s32.totalorder %s127, %s129
      %p136 = scmp.eq.s32.totalorder %s35, 1
      %p137 = por %p135, %p136
      %p138 = scmp.ne.s32.totalorder %s129, %s130
      %p139 = scmp.eq.s32.totalorder %s35, 0
      %p140 = por %p138, %p139
      %p141 = scmp.ne.s32.totalorder %s129, %s130
      %p142 = scmp.eq.s32.totalorder %s36, 1
      %p143 = por %p141, %p142
      %p145 = scmp.ne.s32.totalorder %s130, %s144
      %p146 = scmp.eq.s32.totalorder %s36, 0
      %p147 = por %p145, %p146
      %s149 = sadd.s32 %s148, 1
      %p152 = scmp.eq.s32.totalorder %s30, 1
      %p153 = scmp.ne.s32.totalorder %s148, %s150
      %p154 = scmp.eq.s32.totalorder %s30, 0
      %p155 = por %p153, %p154
      %p156 = scmp.ne.s32.totalorder %s148, %s150
      %p157 = scmp.eq.s32.totalorder %s35, 1
      %p158 = por %p156, %p157
      %p159 = scmp.ne.s32.totalorder %s150, %s151
      %p160 = scmp.eq.s32.totalorder %s35, 0
      %p161 = por %p159, %p160
      %p162 = scmp.ne.s32.totalorder %s150, %s151
      %p163 = scmp.eq.s32.totalorder %s36, 1
      %p164 = por %p162, %p163
      %p166 = scmp.ne.s32.totalorder %s151, %s165
      %p167 = scmp.eq.s32.totalorder %s36, 0
      %p168 = por %p166, %p167
      %s170 = sadd.s32 %s169, 1
      %p173 = scmp.eq.s32.totalorder %s30, 1
      %p174 = scmp.ne.s32.totalorder %s169, %s171
      %p175 = scmp.eq.s32.totalorder %s30, 0
      %p176 = por %p174, %p175
      %p177 = scmp.ne.s32.totalorder %s169, %s171
      %p178 = scmp.eq.s32.totalorder %s35, 1
      %p179 = por %p177, %p178
      %p180 = scmp.ne.s32.totalorder %s171, %s172
      %p181 = scmp.eq.s32.totalorder %s35, 0
      %p182 = por %p180, %p181
      %p183 = scmp.ne.s32.totalorder %s171, %s172
      %p184 = scmp.eq.s32.totalorder %s36, 1
      %p185 = por %p183, %p184
      %p187 = scmp.ne.s32.totalorder %s172, %s186
      %p188 = scmp.eq.s32.totalorder %s36, 0
      %p189 = por %p187, %p188
      %s191 = sadd.s32 %s190, 1
      %p194 = scmp.eq.s32.totalorder %s30, 1
      %p195 = scmp.ne.s32.totalorder %s190, %s192
      %p196 = scmp.eq.s32.totalorder %s30, 0
      %p197 = por %p195, %p196
      %p198 = scmp.ne.s32.totalorder %s190, %s192
      %p199 = scmp.eq.s32.totalorder %s35, 1
      %p200 = por %p198, %p199
      %p201 = scmp.ne.s32.totalorder %s192, %s193
      %p202 = scmp.eq.s32.totalorder %s35, 0
      %p203 = por %p201, %p202
      %p204 = scmp.ne.s32.totalorder %s192, %s193
      %p205 = scmp.eq.s32.totalorder %s36, 1
      %p206 = por %p204, %p205
      %p208 = scmp.ne.s32.totalorder %s193, %s207
      %p209 = scmp.eq.s32.totalorder %s36, 0
      %p210 = por %p208, %p209
      %s212 = sadd.s32 %s211, 1
      %p215 = scmp.eq.s32.totalorder %s30, 1
      %p216 = scmp.ne.s32.totalorder %s211, %s213
      %p217 = scmp.eq.s32.totalorder %s30, 0
      %p218 = por %p216, %p217
      %p219 = scmp.ne.s32.totalorder %s211, %s213
      %p220 = scmp.eq.s32.totalorder %s35, 1
      %p221 = por %p219, %p220
      %p222 = scmp.ne.s32.totalorder %s213, %s214
      %p223 = scmp.eq.s32.totalorder %s35, 0
      %p224 = por %p222, %p223
      %p225 = scmp.ne.s32.totalorder %s213, %s214
      %p226 = scmp.eq.s32.totalorder %s36, 1
      %p227 = por %p225, %p226
      %p229 = scmp.ne.s32.totalorder %s214, %s228
      %p230 = scmp.eq.s32.totalorder %s36, 0
      %p231 = por %p229, %p230
      %s233 = sadd.s32 %s232, 1
      %p236 = scmp.eq.s32.totalorder %s30, 1
      %p237 = scmp.ne.s32.totalorder %s232, %s234
      %p238 = scmp.eq.s32.totalorder %s30, 0
      %p239 = por %p237, %p238
      %p240 = scmp.ne.s32.totalorder %s232, %s234
      %p241 = scmp.eq.s32.totalorder %s35, 1
      %p242 = por %p240, %p241
      %p243 = scmp.ne.s32.totalorder %s234, %s235
      %p244 = scmp.eq.s32.totalorder %s35, 0
      %p245 = por %p243, %p244
      %p246 = scmp.ne.s32.totalorder %s234, %s235
      %p247 = scmp.eq.s32.totalorder %s36, 1
      %p248 = por %p246, %p247
      %p250 = scmp.ne.s32.totalorder %s235, %s249
      %p251 = scmp.eq.s32.totalorder %s36, 0
      %p252 = por %p250, %p251
      %s254 = sadd.s32 %s253, 1
      %p257 = scmp.eq.s32.totalorder %s30, 1
      %p258 = scmp.ne.s32.totalorder %s253, %s255
      %p259 = scmp.eq.s32.totalorder %s30, 0
      %p260 = por %p258, %p259
      %p261 = scmp.ne.s32.totalorder %s253, %s255
      %p262 = scmp.eq.s32.totalorder %s35, 1
      %p263 = por %p261, %p262
      %p264 = scmp.ne.s32.totalorder %s255, %s256
      %p265 = scmp.eq.s32.totalorder %s35, 0
      %p266 = por %p264, %p265
      %p267 = scmp.ne.s32.totalorder %s255, %s256
      %p268 = scmp.eq.s32.totalorder %s36, 1
      %p269 = por %p267, %p268
      %p271 = scmp.ne.s32.totalorder %s256, %s270
      %p272 = scmp.eq.s32.totalorder %s36, 0
      %p273 = por %p271, %p272
      %s275 = sadd.s32 %s274, 1
      %p278 = scmp.eq.s32.totalorder %s30, 1
      %p279 = scmp.ne.s32.totalorder %s274, %s276
      %p280 = scmp.eq.s32.totalorder %s30, 0
      %p281 = por %p279, %p280
      %p282 = scmp.ne.s32.totalorder %s274, %s276
      %p283 = scmp.eq.s32.totalorder %s35, 1
      %p284 = por %p282, %p283
      %p285 = scmp.ne.s32.totalorder %s276, %s277
      %p286 = scmp.eq.s32.totalorder %s35, 0
      %p287 = por %p285, %p286
      %p288 = scmp.ne.s32.totalorder %s276, %s277
      %p289 = scmp.eq.s32.totalorder %s36, 1
      %p290 = por %p288, %p289
      %p292 = scmp.ne.s32.totalorder %s277, %s291
      %p293 = scmp.eq.s32.totalorder %s36, 0
      %p294 = por %p292, %p293
      %s296 = sadd.s32 %s295, 1
      %p299 = scmp.eq.s32.totalorder %s30, 1
      %p300 = scmp.ne.s32.totalorder %s295, %s297
      %p301 = scmp.eq.s32.totalorder %s30, 0
      %p302 = por %p300, %p301
      %p303 = scmp.ne.s32.totalorder %s295, %s297
      %p304 = scmp.eq.s32.totalorder %s35, 1
      %p305 = por %p303, %p304
      %p306 = scmp.ne.s32.totalorder %s297, %s298
      %p307 = scmp.eq.s32.totalorder %s35, 0
      %p308 = por %p306, %p307
      %p309 = scmp.ne.s32.totalorder %s297, %s298
      %p310 = scmp.eq.s32.totalorder %s36, 1
      %p311 = por %p309, %p310
      %p313 = scmp.ne.s32.totalorder %s298, %s312
      %p314 = scmp.eq.s32.totalorder %s36, 0
      %p315 = por %p313, %p314
      %s317 = sadd.s32 %s316, 1
      %p320 = scmp.eq.s32.totalorder %s30, 1
      %p321 = scmp.ne.s32.totalorder %s316, %s318
      %p322 = scmp.eq.s32.totalorder %s30, 0
      %p323 = por %p321, %p322
      %p324 = scmp.ne.s32.totalorder %s316, %s318
      %p325 = scmp.eq.s32.totalorder %s35, 1
      %p326 = por %p324, %p325
      %p327 = scmp.ne.s32.totalorder %s318, %s319
      %p328 = scmp.eq.s32.totalorder %s35, 0
      %p329 = por %p327, %p328
      %p330 = scmp.ne.s32.totalorder %s318, %s319
      %p331 = scmp.eq.s32.totalorder %s36, 1
      %p332 = por %p330, %p331
      %p334 = scmp.ne.s32.totalorder %s319, %s333
      %p335 = scmp.eq.s32.totalorder %s36, 0
      %p336 = por %p334, %p335
      %s338 = sadd.s32 %s337, 1
      %p341 = scmp.eq.s32.totalorder %s30, 1
      %p342 = scmp.ne.s32.totalorder %s337, %s339
      %p343 = scmp.eq.s32.totalorder %s30, 0
      %p344 = por %p342, %p343
      %p345 = scmp.ne.s32.totalorder %s337, %s339
      %p346 = scmp.eq.s32.totalorder %s35, 1
      %p347 = por %p345, %p346
      %p348 = scmp.ne.s32.totalorder %s339, %s340
      %p349 = scmp.eq.s32.totalorder %s35, 0
      %p350 = por %p348, %p349
      %p351 = scmp.ne.s32.totalorder %s339, %s340
      %p352 = scmp.eq.s32.totalorder %s36, 1
      %p353 = por %p351, %p352
      %p355 = scmp.ne.s32.totalorder %s340, %s354
      %p356 = scmp.eq.s32.totalorder %s36, 0
      %p357 = por %p355, %p356
      %s359 = sadd.s32 %s358, 1
      %p362 = scmp.eq.s32.totalorder %s30, 1
      %p363 = scmp.ne.s32.totalorder %s358, %s360
      %p364 = scmp.eq.s32.totalorder %s30, 0
      %p365 = por %p363, %p364
      %p366 = scmp.ne.s32.totalorder %s358, %s360
      %p367 = scmp.eq.s32.totalorder %s35, 1
      %p368 = por %p366, %p367
      %p369 = scmp.ne.s32.totalorder %s360, %s361
      %p370 = scmp.eq.s32.totalorder %s35, 0
      %p371 = por %p369, %p370
      %p372 = scmp.ne.s32.totalorder %s360, %s361
      %p373 = scmp.eq.s32.totalorder %s36, 1
      %p374 = por %p372, %p373
      %p376 = scmp.ne.s32.totalorder %s361, %s375
      %p377 = scmp.eq.s32.totalorder %s36, 0
      %p378 = por %p376, %p377
      %s380 = sadd.s32 %s379, 1
      %p383 = scmp.eq.s32.totalorder %s30, 1
      %p384 = scmp.ne.s32.totalorder %s379, %s381
      %p385 = scmp.eq.s32.totalorder %s30, 0
      %p386 = por %p384, %p385
      %p387 = scmp.ne.s32.totalorder %s379, %s381
      %p388 = scmp.eq.s32.totalorder %s35, 1
      %p389 = por %p387, %p388
      %p390 = scmp.ne.s32.totalorder %s381, %s382
      %p391 = scmp.eq.s32.totalorder %s35, 0
      %p392 = por %p390, %p391
      %p393 = scmp.ne.s32.totalorder %s381, %s382
      %p394 = scmp.eq.s32.totalorder %s36, 1
      %p395 = por %p393, %p394
      %p397 = scmp.ne.s32.totalorder %s382, %s396
      %p398 = scmp.eq.s32.totalorder %s36, 0
      %p399 = por %p397, %p398
      %s401 = sadd.s32 %s400, 1
      %p404 = scmp.eq.s32.totalorder %s30, 1
      %p405 = scmp.ne.s32.totalorder %s400, %s402
      %p406 = scmp.eq.s32.totalorder %s30, 0
      %p407 = por %p405, %p406
      %p408 = scmp.ne.s32.totalorder %s400, %s402
      %p409 = scmp.eq.s32.totalorder %s35, 1
      %p410 = por %p408, %p409
      %p411 = scmp.ne.s32.totalorder %s402, %s403
      %p412 = scmp.eq.s32.totalorder %s35, 0
      %p413 = por %p411, %p412
      %p414 = scmp.ne.s32.totalorder %s402, %s403
      %p415 = scmp.eq.s32.totalorder %s36, 1
      %p416 = por %p414, %p415
      %p418 = scmp.ne.s32.totalorder %s403, %s417
      %p419 = scmp.eq.s32.totalorder %s36, 0
      %p420 = por %p418, %p419
      %s422 = sadd.s32 %s421, 1
      %p425 = scmp.eq.s32.totalorder %s30, 1
      %p426 = scmp.ne.s32.totalorder %s421, %s423
      %p427 = scmp.eq.s32.totalorder %s30, 0
      %p428 = por %p426, %p427
      %p429 = scmp.ne.s32.totalorder %s421, %s423
      %p430 = scmp.eq.s32.totalorder %s35, 1
      %p431 = por %p429, %p430
      %p432 = scmp.ne.s32.totalorder %s423, %s424
      %p433 = scmp.eq.s32.totalorder %s35, 0
      %p434 = por %p432, %p433
      %p435 = scmp.ne.s32.totalorder %s423, %s424
      %p436 = scmp.eq.s32.totalorder %s36, 1
      %p437 = por %p435, %p436
      %p439 = scmp.ne.s32.totalorder %s424, %s438
      %p440 = scmp.eq.s32.totalorder %s36, 0
      %p441 = por %p439, %p440
      %s443 = sadd.s32 %s442, 1
      %p446 = scmp.eq.s32.totalorder %s30, 1
      %p447 = scmp.ne.s32.totalorder %s442, %s444
      %p448 = scmp.eq.s32.totalorder %s30, 0
      %p449 = por %p447, %p448
      %p450 = scmp.ne.s32.totalorder %s442, %s444
      %p451 = scmp.eq.s32.totalorder %s35, 1
      %p452 = por %p450, %p451
      %p453 = scmp.ne.s32.totalorder %s444, %s445
      %p454 = scmp.eq.s32.totalorder %s35, 0
      %p455 = por %p453, %p454
      %p456 = scmp.ne.s32.totalorder %s444, %s445
      %p457 = scmp.eq.s32.totalorder %s36, 1
      %p458 = por %p456, %p457
      %p460 = scmp.ne.s32.totalorder %s445, %s459
      %p461 = scmp.eq.s32.totalorder %s36, 0
      %p462 = por %p460, %p461
      %s464 = sadd.s32 %s463, 1
      %p467 = scmp.eq.s32.totalorder %s30, 1
      %p468 = scmp.ne.s32.totalorder %s463, %s465
      %p469 = scmp.eq.s32.totalorder %s30, 0
      %p470 = por %p468, %p469
      %p471 = scmp.ne.s32.totalorder %s463, %s465
      %p472 = scmp.eq.s32.totalorder %s35, 1
      %p473 = por %p471, %p472
      %p474 = scmp.ne.s32.totalorder %s465, %s466
      %p475 = scmp.eq.s32.totalorder %s35, 0
      %p476 = por %p474, %p475
      %p477 = scmp.ne.s32.totalorder %s465, %s466
      %p478 = scmp.eq.s32.totalorder %s36, 1
      %p479 = por %p477, %p478
      %p481 = scmp.ne.s32.totalorder %s466, %s480
      %p482 = scmp.eq.s32.totalorder %s36, 0
      %p483 = por %p481, %p482
      %s484 = ssub.s32 %s30, %s37
      %p485 = scmp.eq.s32.totalorder %s484, 0
      %s487 = sadd.s32 %s486, 1
      %s488 = scalar_select %p485, %s486, %s487
      %p491 = pneg %p485
      %p492 = scmp.eq.s32.totalorder %s30, 1
      %p493 = por %p491, %p492
      %p494 = scmp.ne.s32.totalorder %s486, %s489
      %p495 = scmp.eq.s32.totalorder %s30, 0
      %p496 = por %p494, %p495
      %p497 = scmp.ne.s32.totalorder %s486, %s489
      %p498 = scmp.eq.s32.totalorder %s35, 1
      %p499 = por %p497, %p498
      %p500 = scmp.ne.s32.totalorder %s489, %s490
      %p501 = scmp.eq.s32.totalorder %s35, 0
      %p502 = por %p500, %p501
      %p503 = scmp.ne.s32.totalorder %s489, %s490
      %p504 = scmp.eq.s32.totalorder %s36, 1
      %p505 = por %p503, %p504
      %p507 = scmp.ne.s32.totalorder %s490, %s506
      %p508 = scmp.eq.s32.totalorder %s36, 0
      %p509 = por %p507, %p508
      %p510 = scmp.le.s32.totalorder 1, %s30
      %p511 = scmp.lt.s32.totalorder %s30, 3
      %p512 = pnand %p510, %p511
      %p513 = pneg %p512
      // Predicated region
      $region9: #{run.1} parent=5 // pred_check
        _
      $region10: #{run.1} parent=5 // pred_check_branch
        %515 = sbr.rel (%p512) target = $region12
      $region11: #{run.1} parent=5 // pred_region
        %s516 = ssub.s32 %s30, 1
        // Predicated region
        $region13: #{run.1} parent=11 // pred_check
          %p517 = pneg %p77
        $region14: #{run.1} parent=11 // pred_check_branch
          %519 = sbr.rel (%p517) target = $region16
        $region15: #{run.1} parent=11 // pred_region
          _
        $region16: #{run.1} parent=11 // pred_fallthru
          _
        // Predicated region
        $region17: #{run.1} parent=11 // pred_check
          %p520 = pneg %p98
        $region18: #{run.1} parent=11 // pred_check_branch
          %522 = sbr.rel (%p520) target = $region20
        $region19: #{run.1} parent=11 // pred_region
          _
        $region20: #{run.1} parent=11 // pred_fallthru
          _
        // Predicated region
        $region21: #{run.1} parent=11 // pred_check
          %p523 = pneg %p119
        $region22: #{run.1} parent=11 // pred_check_branch
          %525 = sbr.rel (%p523) target = $region24
        $region23: #{run.1} parent=11 // pred_region
          _
        $region24: #{run.1} parent=11 // pred_fallthru
          _
        // Predicated region
        $region25: #{run.1} parent=11 // pred_check
          %p526 = pneg %p140
        $region26: #{run.1} parent=11 // pred_check_branch
          %528 = sbr.rel (%p526) target = $region28
        $region27: #{run.1} parent=11 // pred_region
          %530 = vsyncadd [#allocation5], 0
          %s531 = sshll.u32 %s4, 4
          %s532 = int_to_ptr.hbm [resolvable:$true] %s531
          %s533 = sshll.u32 [#allocation4], 4
          %s534 = int_to_ptr.vmem [resolvable:$true] %s533
          %539 = dma.hbm_to_vmem [thread:$0]  %s532, 1024, %s534, [#allocation5], 64, 64, 4
        $region28: #{run.1} parent=11 // pred_fallthru
          _
        // Predicated region
        $region29: #{run.1} parent=11 // pred_check
          %p540 = pneg %p161
        $region30: #{run.1} parent=11 // pred_check_branch
          %542 = sbr.rel (%p540) target = $region32
        $region31: #{run.1} parent=11 // pred_region
          _
        $region32: #{run.1} parent=11 // pred_fallthru
          _
        // Predicated region
        $region33: #{run.1} parent=11 // pred_check
          %p543 = pneg %p182
        $region34: #{run.1} parent=11 // pred_check_branch
          %545 = sbr.rel (%p543) target = $region36
        $region35: #{run.1} parent=11 // pred_region
          _
        $region36: #{run.1} parent=11 // pred_fallthru
          _
        // Predicated region
        $region37: #{run.1} parent=11 // pred_check
          %p546 = pneg %p203
        $region38: #{run.1} parent=11 // pred_check_branch
          %548 = sbr.rel (%p546) target = $region40
        $region39: #{run.1} parent=11 // pred_region
          _
        $region40: #{run.1} parent=11 // pred_fallthru
          _
        // Predicated region
        $region41: #{run.1} parent=11 // pred_check
          %p549 = pneg %p224
        $region42: #{run.1} parent=11 // pred_check_branch
          %551 = sbr.rel (%p549) target = $region44
        $region43: #{run.1} parent=11 // pred_region
          _
        $region44: #{run.1} parent=11 // pred_fallthru
          _
        // Predicated region
        $region45: #{run.1} parent=11 // pred_check
          %p552 = pneg %p245
        $region46: #{run.1} parent=11 // pred_check_branch
          %554 = sbr.rel (%p552) target = $region48
        $region47: #{run.1} parent=11 // pred_region
          _
        $region48: #{run.1} parent=11 // pred_fallthru
          _
        // Predicated region
        $region49: #{run.1} parent=11 // pred_check
          %p555 = pneg %p266
        $region50: #{run.1} parent=11 // pred_check_branch
          %557 = sbr.rel (%p555) target = $region52
        $region51: #{run.1} parent=11 // pred_region
          %559 = vsyncadd [#allocation7], 0
          %s560 = sshll.u32 %s10, 4
          %s561 = int_to_ptr.hbm [resolvable:$true] %s560
          %s562 = sshll.u32 [#allocation6], 4
          %s563 = int_to_ptr.vmem [resolvable:$true] %s562
          %568 = dma.hbm_to_vmem [thread:$0]  %s561, 12288, %s563, [#allocation7], 192, 192, 12
        $region52: #{run.1} parent=11 // pred_fallthru
          _
        // Predicated region
        $region53: #{run.1} parent=11 // pred_check
          %p569 = pneg %p287
        $region54: #{run.1} parent=11 // pred_check_branch
          %571 = sbr.rel (%p569) target = $region56
        $region55: #{run.1} parent=11 // pred_region
          _
        $region56: #{run.1} parent=11 // pred_fallthru
          _
        // Predicated region
        $region57: #{run.1} parent=11 // pred_check
          %p572 = pneg %p308
        $region58: #{run.1} parent=11 // pred_check_branch
          %574 = sbr.rel (%p572) target = $region60
        $region59: #{run.1} parent=11 // pred_region
          %576 = vsyncadd [#allocation7], 0
          %s577 = sshll.u32 %s12, 4
          %s578 = int_to_ptr.hbm [resolvable:$true] %s577
          %s579 = sshll.u32 [#allocation8], 4
          %s580 = int_to_ptr.vmem [resolvable:$true] %s579
          %585 = dma.hbm_to_vmem [thread:$0]  %s578, 12288, %s580, [#allocation7], 128, 128, 8
        $region60: #{run.1} parent=11 // pred_fallthru
          _
        // Predicated region
        $region61: #{run.1} parent=11 // pred_check
          %p586 = pneg %p329
        $region62: #{run.1} parent=11 // pred_check_branch
          %588 = sbr.rel (%p586) target = $region64
        $region63: #{run.1} parent=11 // pred_region
          %590 = vsyncadd [#allocation10], 0
          %s591 = sshll.u32 %s13, 4
          %s592 = int_to_ptr.hbm [resolvable:$true] %s591
          %s593 = sshll.u32 [#allocation9], 4
          %s594 = int_to_ptr.vmem [resolvable:$true] %s593
          %599 = dma.hbm_to_vmem [thread:$0]  %s592, 12288, %s594, [#allocation10], 128, 128, 8
        $region64: #{run.1} parent=11 // pred_fallthru
          _
        // Predicated region
        $region65: #{run.1} parent=11 // pred_check
          %p600 = pneg %p350
        $region66: #{run.1} parent=11 // pred_check_branch
          %602 = sbr.rel (%p600) target = $region68
        $region67: #{run.1} parent=11 // pred_region
          _
        $region68: #{run.1} parent=11 // pred_fallthru
          _
        // Predicated region
        $region69: #{run.1} parent=11 // pred_check
          %p603 = pneg %p371
        $region70: #{run.1} parent=11 // pred_check_branch
          %605 = sbr.rel (%p603) target = $region72
        $region71: #{run.1} parent=11 // pred_region
          _
        $region72: #{run.1} parent=11 // pred_fallthru
          _
        // Predicated region
        $region73: #{run.1} parent=11 // pred_check
          %p606 = pneg %p392
        $region74: #{run.1} parent=11 // pred_check_branch
          %608 = sbr.rel (%p606) target = $region76
        $region75: #{run.1} parent=11 // pred_region
          %610 = vsyncadd [#allocation10], 0
          %s611 = sshll.u32 %s16, 4
          %s612 = int_to_ptr.hbm [resolvable:$true] %s611
          %s613 = sshll.u32 [#allocation11], 4
          %s614 = int_to_ptr.vmem [resolvable:$true] %s613
          %619 = dma.hbm_to_vmem [thread:$0]  %s612, 4096, %s614, [#allocation10], 64, 64, 4
        $region76: #{run.1} parent=11 // pred_fallthru
          _
        // Predicated region
        $region77: #{run.1} parent=11 // pred_check
          %p620 = pneg %p413
        $region78: #{run.1} parent=11 // pred_check_branch
          %622 = sbr.rel (%p620) target = $region80
        $region79: #{run.1} parent=11 // pred_region
          _
        $region80: #{run.1} parent=11 // pred_fallthru
          _
        // Predicated region
        $region81: #{run.1} parent=11 // pred_check
          %p623 = pneg %p434
        $region82: #{run.1} parent=11 // pred_check_branch
          %625 = sbr.rel (%p623) target = $region84
        $region83: #{run.1} parent=11 // pred_region
          _
        $region84: #{run.1} parent=11 // pred_fallthru
          _
        // Predicated region
        $region85: #{run.1} parent=11 // pred_check
          %p626 = pneg %p455
        $region86: #{run.1} parent=11 // pred_check_branch
          %628 = sbr.rel (%p626) target = $region88
        $region87: #{run.1} parent=11 // pred_region
          _
        $region88: #{run.1} parent=11 // pred_fallthru
          _
        // Predicated region
        $region89: #{run.1} parent=11 // pred_check
          %p629 = pneg %p476
        $region90: #{run.1} parent=11 // pred_check_branch
          %631 = sbr.rel (%p629) target = $region92
        $region91: #{run.1} parent=11 // pred_region
          _
        $region92: #{run.1} parent=11 // pred_fallthru
          _
      $region12: #{run.1} parent=5 // pred_fallthru
        _
      %p632 = scmp.lt.s32.totalorder %s30, 2
      // Predicated region
      $region93: #{run.1} parent=5 // pred_check
        %p633 = pneg %p632
      $region94: #{run.1} parent=5 // pred_check_branch
        %635 = sbr.rel (%p633) target = $region96
      $region95: #{run.1} parent=5 // pred_region
        // Predicated region
        $region97: #{run.1} parent=95 // pred_check
          %p636 = pneg %p50
        $region98: #{run.1} parent=95 // pred_check_branch
          %638 = sbr.rel (%p636) target = $region100
        $region99: #{run.1} parent=95 // pred_region
          %s639 = smul.u32 12, %s30
          %p640 = scmp.lt.s32.totalorder %s639, 23
          %s641 = scalar_select %p640, %s639, 23
          %s642 = smul.addr %s641, 8
          %s643 = scalar_lea.vmem %s0, %s642
          %s644 = smul.u32 12, %s30
        $region100: #{run.1} parent=95 // pred_fallthru
          _
      $region96: #{run.1} parent=5 // pred_fallthru
        _
      %p645 = scmp.le.s32.totalorder 1, %s30
      %p646 = scmp.lt.s32.totalorder %s30, 3
      %p647 = pnand %p645, %p646
      %p648 = pneg %p647
      // Predicated region
      $region101: #{run.1} parent=5 // pred_check
        _
      $region102: #{run.1} parent=5 // pred_check_branch
        %650 = sbr.rel (%p647) target = $region104
      $region103: #{run.1} parent=5 // pred_region
        %s651 = ssub.s32 %s30, 1
        // Predicated region
        $region105: #{run.1} parent=103 // pred_check
          %p652 = pneg %p140
        $region106: #{run.1} parent=103 // pred_check_branch
          %654 = sbr.rel (%p652) target = $region108
        $region107: #{run.1} parent=103 // pred_region
          %656 = dma.done [#allocation5], 1024
        $region108: #{run.1} parent=103 // pred_fallthru
          _
        // Predicated region
        $region109: #{run.1} parent=103 // pred_check
          %p657 = pneg %p266
        $region110: #{run.1} parent=103 // pred_check_branch
          %659 = sbr.rel (%p657) target = $region112
        $region111: #{run.1} parent=103 // pred_region
          %661 = dma.done [#allocation7], 12288
        $region112: #{run.1} parent=103 // pred_fallthru
          _
        // Predicated region
        $region113: #{run.1} parent=103 // pred_check
          %p662 = pneg %p308
        $region114: #{run.1} parent=103 // pred_check_branch
          %664 = sbr.rel (%p662) target = $region116
        $region115: #{run.1} parent=103 // pred_region
          %666 = dma.done [#allocation7], 12288
        $region116: #{run.1} parent=103 // pred_fallthru
          _
        // Predicated region
        $region117: #{run.1} parent=103 // pred_check
          %p667 = pneg %p329
        $region118: #{run.1} parent=103 // pred_check_branch
          %669 = sbr.rel (%p667) target = $region120
        $region119: #{run.1} parent=103 // pred_region
          %671 = dma.done [#allocation10], 12288
        $region120: #{run.1} parent=103 // pred_fallthru
          _
        // Predicated region
        $region121: #{run.1} parent=103 // pred_check
          %p672 = pneg %p392
        $region122: #{run.1} parent=103 // pred_check_branch
          %674 = sbr.rel (%p672) target = $region124
        $region123: #{run.1} parent=103 // pred_region
          %676 = dma.done [#allocation10], 4096
        $region124: #{run.1} parent=103 // pred_fallthru
          _
        %s677 = smul.u32 12, %s35
        %p678 = scmp.lt.s32.totalorder %s677, 23
        %s679 = scalar_select %p678, %s677, 23
        %s680 = smul.addr %s679, 8
        %s681 = scalar_lea.vmem %s0, %s680
        %p682 = pneg %p56
        %p683 = pneg %p53
        %p684 = pneg %p77
        %p685 = pneg %p74
        %p686 = pneg %p98
        %p687 = pneg %p95
        %p688 = pneg %p119
        %p689 = pneg %p116
        %p690 = pneg %p140
        %p691 = pneg %p137
        %p692 = pneg %p161
        %p693 = pneg %p158
        %p694 = pneg %p182
        %p695 = pneg %p179
        %p696 = pneg %p203
        %p697 = pneg %p200
        %p698 = pneg %p224
        %p699 = pneg %p221
        %p700 = pneg %p245
        %p701 = pneg %p242
        %p702 = pneg %p266
        %p703 = pneg %p263
        %p704 = pneg %p287
        %p705 = pneg %p284
        %p706 = pneg %p308
        %p707 = pneg %p305
        %p708 = pneg %p329
        %p709 = pneg %p326
        %p710 = pneg %p350
        %p711 = pneg %p347
        %p712 = pneg %p371
        %p713 = pneg %p368
        %p714 = pneg %p392
        %p715 = pneg %p389
        %p716 = pneg %p413
        %p717 = pneg %p410
        %p718 = pneg %p434
        %p719 = pneg %p431
        %p720 = pneg %p455
        %p721 = pneg %p452
        %p722 = pneg %p476
        %p723 = pneg %p473
        %p724 = pneg %p502
        %p725 = pneg %p499
        %s726 = smul.u32 4, %s35
        %p727 = scmp.lt.s32.totalorder %s726, 7
        %s728 = scalar_select %p727, %s726, 7
        %s729 = smul.addr %s728, 2
        %s730 = smul.addr %s729, 8
        %s731 = scalar_lea.vmem %s21, %s730
        %s732 = smul.u32 12, %s35
        %p733 = scmp.lt.s32.totalorder %s732, 23
        %s734 = scalar_select %p733, %s732, 23
        %s735 = smul.addr %s734, 8
        %s736 = scalar_lea.vmem %s0, %s735
        %s737 = smul.u32 12, %s35
        %s738 = smul.u32 4, %s35
        %p739 = scmp.lt.s32.totalorder %s738, 7
        %s740 = scalar_select %p739, %s738, 7
        %s741 = smul.addr %s740, 2
        %s742 = smul.addr %s741, 8
        %s743 = scalar_lea.vmem %s21, %s742
        %s744 = smul.u32 4, %s35
        %v745 = vld [vmem:[%s1] sm:$0xff]
        %v746 = vld [vmem:[%s1 + $0x8] sm:$0xff]
        %v747 = vld [vmem:[%s1 + $0x10] sm:$0xff]
        %v748 = vld [vmem:[%s1 + $0x18] sm:$0xff]
        %v749 = vld [vmem:[%s1 + $0x20] sm:$0xff]
        %v750 = vld [vmem:[%s1 + $0x28] sm:$0xff]
        %v751 = vld [vmem:[%s1 + $0x30] sm:$0xff]
        %v752 = vld [vmem:[%s1 + $0x38] sm:$0xff]
        %v753 = vld [vmem:[%s1 + $0x40] sm:$0xff]
        %v754 = vld [vmem:[%s1 + $0x48] sm:$0xff]
        %v755 = vld [vmem:[%s1 + $0x50] sm:$0xff]
        %v756 = vld [vmem:[%s1 + $0x58] sm:$0xff]
        %vm757 = vcmp.ge.s32.totalorder %v745, 1
        %vm758 = vcmp.ge.s32.totalorder %v746, 1
        %vm759 = vcmp.ge.s32.totalorder %v747, 1
        %vm760 = vcmp.ge.s32.totalorder %v748, 1
        %vm761 = vcmp.ge.s32.totalorder %v749, 1
        %vm762 = vcmp.ge.s32.totalorder %v750, 1
        %vm763 = vcmp.ge.s32.totalorder %v751, 1
        %vm764 = vcmp.ge.s32.totalorder %v752, 1
        %vm765 = vcmp.ge.s32.totalorder %v753, 1
        %vm766 = vcmp.ge.s32.totalorder %v754, 1
        %vm767 = vcmp.ge.s32.totalorder %v755, 1
        %vm768 = vcmp.ge.s32.totalorder %v756, 1
        %v769 = vld [vmem:[%s3] sm:$0xf]
        %v770 = vld [vmem:[%s3 + $0x4] sm:$0xf]
        %v771 = vld [vmem:[%s3 + $0x8] sm:$0xf]
        %v772 = vld [vmem:[%s3 + $0xc] sm:$0xf]
        %v773 = vld [vmem:[%s3 + $0x10] sm:$0xf]
        %v774 = vld [vmem:[%s3 + $0x14] sm:$0xf]
        %v775 = vld [vmem:[%s3 + $0x18] sm:$0xf]
        %v776 = vld [vmem:[%s3 + $0x1c] sm:$0xf]
        %v777 = vld [vmem:[%s3 + $0x20] sm:$0xf]
        %v778 = vld [vmem:[%s3 + $0x24] sm:$0xf]
        %v779 = vld [vmem:[%s3 + $0x28] sm:$0xf]
        %v780 = vld [vmem:[%s3 + $0x2c] sm:$0xf]
        %v781 = vld [vmem:[%s3 + $0x30] sm:$0xf]
        %v782 = vld [vmem:[%s3 + $0x34] sm:$0xf]
        %v783 = vld [vmem:[%s3 + $0x38] sm:$0xf]
        %v784 = vld [vmem:[%s3 + $0x3c] sm:$0xf]
        %v785 = vld [vmem:[#allocation4] sm:$0xf]
        %v786 = vld [vmem:[#allocation4 + $0x4] sm:$0xf]
        %v787 = vld [vmem:[#allocation4 + $0x8] sm:$0xf]
        %v788 = vld [vmem:[#allocation4 + $0xc] sm:$0xf]
        %v789 = vld [vmem:[#allocation4 + $0x10] sm:$0xf]
        %v790 = vld [vmem:[#allocation4 + $0x14] sm:$0xf]
        %v791 = vld [vmem:[#allocation4 + $0x18] sm:$0xf]
        %v792 = vld [vmem:[#allocation4 + $0x1c] sm:$0xf]
        %v793 = vld [vmem:[#allocation4 + $0x20] sm:$0xf]
        %v794 = vld [vmem:[#allocation4 + $0x24] sm:$0xf]
        %v795 = vld [vmem:[#allocation4 + $0x28] sm:$0xf]
        %v796 = vld [vmem:[#allocation4 + $0x2c] sm:$0xf]
        %v797 = vld [vmem:[#allocation4 + $0x30] sm:$0xf]
        %v798 = vld [vmem:[#allocation4 + $0x34] sm:$0xf]
        %v799 = vld [vmem:[#allocation4 + $0x38] sm:$0xf]
        %v800 = vld [vmem:[#allocation4 + $0x3c] sm:$0xf]
        %v801 = vld [vmem:[%s5] sm:$0x1]
        %v802 = vld [vmem:[%s736] sm:$0xff]
        %v803 = vld [vmem:[%s736 + $0x8] sm:$0xff]
        %v804 = vld [vmem:[%s736 + $0x10] sm:$0xff]
        %v805 = vld [vmem:[%s736 + $0x18] sm:$0xff]
        %v806 = vld [vmem:[%s736 + $0x20] sm:$0xff]
        %v807 = vld [vmem:[%s736 + $0x28] sm:$0xff]
        %v808 = vld [vmem:[%s736 + $0x30] sm:$0xff]
        %v809 = vld [vmem:[%s736 + $0x38] sm:$0xff]
        %v810 = vld [vmem:[%s736 + $0x40] sm:$0xff]
        %v811 = vld [vmem:[%s736 + $0x48] sm:$0xff]
        %v812 = vld [vmem:[%s736 + $0x50] sm:$0xff]
        %v813 = vld [vmem:[%s736 + $0x58] sm:$0xff]
        %v814 = vpack.c.bf16 %v803, %v802
        %v815 = vpack.c.bf16 %v805, %v804
        %v816 = vpack.c.bf16 %v807, %v806
        %v817 = vpack.c.bf16 %v809, %v808
        %v818 = vpack.c.bf16 %v811, %v810
        %v819 = vpack.c.bf16 %v813, %v812
        %v836 = vunpack.c.l.b16 %v785
        %v837 = vunpack.c.l.b16 %v786
        %v838 = vunpack.c.l.b16 %v787
        %v839 = vunpack.c.l.b16 %v788
        %v840 = vunpack.c.l.b16 %v789
        %v841 = vunpack.c.l.b16 %v790
        %v842 = vunpack.c.l.b16 %v791
        %v843 = vunpack.c.l.b16 %v792
        %v844 = vunpack.c.l.b16 %v793
        %v845 = vunpack.c.l.b16 %v794
        %v846 = vunpack.c.l.b16 %v795
        %v847 = vunpack.c.l.b16 %v796
        %v848 = vunpack.c.l.b16 %v797
        %v849 = vunpack.c.l.b16 %v798
        %v850 = vunpack.c.l.b16 %v799
        %v851 = vunpack.c.l.b16 %v800
        %v852 = vpack.c.b16 %v837, %v836
        %v853 = vpack.c.b16 %v839, %v838
        %v854 = vpack.c.b16 %v841, %v840
        %v855 = vpack.c.b16 %v843, %v842
        %v856 = vpack.c.b16 %v845, %v844
        %v857 = vpack.c.b16 %v847, %v846
        %v858 = vpack.c.b16 %v849, %v848
        %v859 = vpack.c.b16 %v851, %v850
        %868 = vmatpush.bf16.msra.mxu0 %v859
        %869 = vmatpush.bf16.msra.mxu0 %v858
        %870 = vmatpush.bf16.msra.mxu0 %v857
        %871 = vmatpush.bf16.msra.mxu0 %v856
        %872 = vmatpush.bf16.msra.mxu0 %v855
        %873 = vmatpush.bf16.msra.mxu0 %v854
        %874 = vmatpush.bf16.msra.mxu0 %v853
        %875 = vmatpush.bf16.msra.mxu0 %v852
        %876 = vmatmul.bf16.gmra.mxu0 %v814
        %v877 = vpop.f32.mrf.mxu0
        %v878 = vadd.f32 0.0, %v877
        %v879 = vpop.f32.mrf.mxu0
        %v880 = vadd.f32 0.0, %v879
        %881 = vmatmul.bf16.gmra.mxu0 %v815
        %v882 = vpop.f32.mrf.mxu0
        %v883 = vadd.f32 0.0, %v882
        %v884 = vpop.f32.mrf.mxu0
        %v885 = vadd.f32 0.0, %v884
        %886 = vmatmul.bf16.gmra.mxu0 %v816
        %v887 = vpop.f32.mrf.mxu0
        %v888 = vadd.f32 0.0, %v887
        %v889 = vpop.f32.mrf.mxu0
        %v890 = vadd.f32 0.0, %v889
        %891 = vmatmul.bf16.gmra.mxu0 %v817
        %v892 = vpop.f32.mrf.mxu0
        %v893 = vadd.f32 0.0, %v892
        %v894 = vpop.f32.mrf.mxu0
        %v895 = vadd.f32 0.0, %v894
        %896 = vmatmul.bf16.gmra.mxu0 %v818
        %v897 = vpop.f32.mrf.mxu0
        %v898 = vadd.f32 0.0, %v897
        %v899 = vpop.f32.mrf.mxu0
        %v900 = vadd.f32 0.0, %v899
        %901 = vmatmul.bf16.gmra.mxu0 %v819
        %v902 = vpop.f32.mrf.mxu0
        %v903 = vadd.f32 0.0, %v902
        %v904 = vpop.f32.mrf.mxu0
        %v905 = vadd.f32 0.0, %v904
        %906 = vdwg.mxu0
        %v907 = vrot.slane %v878, 1
        %v908 = vrot.slane %v880, 1
        %v909 = vrot.slane %v883, 1
        %v910 = vrot.slane %v885, 1
        %v911 = vrot.slane %v888, 1
        %v912 = vrot.slane %v890, 1
        %v913 = vrot.slane %v893, 1
        %v914 = vrot.slane %v895, 1
        %v915 = vrot.slane %v898, 1
        %v916 = vrot.slane %v900, 1
        %v917 = vrot.slane %v903, 1
        %v918 = vrot.slane %v905, 1
        %v919 = vlaneseq
        %v920 = vshrl.u32 %v919, 7
        %vm921 = vcmp.lt.s32.totalorder %v920, 7
        %v922 = vsel %vm921, %v917, %v918
        %v923 = vsel %vm921, %v916, %v917
        %v924 = vsel %vm921, %v915, %v916
        %v925 = vsel %vm921, %v914, %v915
        %v926 = vsel %vm921, %v913, %v914
        %v927 = vsel %vm921, %v912, %v913
        %v928 = vsel %vm921, %v911, %v912
        %v929 = vsel %vm921, %v910, %v911
        %v930 = vsel %vm921, %v909, %v910
        %v931 = vsel %vm921, %v908, %v909
        %v932 = vsel %vm921, %v907, %v908
        %v933 = vsel %vm921, %v918, %v907
        %v950 = vunpack.c.l.b16 %v769
        %v951 = vunpack.c.l.b16 %v770
        %v952 = vunpack.c.l.b16 %v771
        %v953 = vunpack.c.l.b16 %v772
        %v954 = vunpack.c.l.b16 %v773
        %v955 = vunpack.c.l.b16 %v774
        %v956 = vunpack.c.l.b16 %v775
        %v957 = vunpack.c.l.b16 %v776
        %v958 = vunpack.c.l.b16 %v777
        %v959 = vunpack.c.l.b16 %v778
        %v960 = vunpack.c.l.b16 %v779
        %v961 = vunpack.c.l.b16 %v780
        %v962 = vunpack.c.l.b16 %v781
        %v963 = vunpack.c.l.b16 %v782
        %v964 = vunpack.c.l.b16 %v783
        %v965 = vunpack.c.l.b16 %v784
        %v966 = vpack.c.b16 %v951, %v950
        %v967 = vpack.c.b16 %v953, %v952
        %v968 = vpack.c.b16 %v955, %v954
        %v969 = vpack.c.b16 %v957, %v956
        %v970 = vpack.c.b16 %v959, %v958
        %v971 = vpack.c.b16 %v961, %v960
        %v972 = vpack.c.b16 %v963, %v962
        %v973 = vpack.c.b16 %v965, %v964
        %982 = vmatpush.bf16.msra.mxu0 %v973
        %983 = vmatpush.bf16.msra.mxu0 %v972
        %984 = vmatpush.bf16.msra.mxu0 %v971
        %985 = vmatpush.bf16.msra.mxu0 %v970
        %986 = vmatpush.bf16.msra.mxu0 %v969
        %987 = vmatpush.bf16.msra.mxu0 %v968
        %988 = vmatpush.bf16.msra.mxu0 %v967
        %989 = vmatpush.bf16.msra.mxu0 %v966
        %990 = vmatmul.bf16.gmra.mxu0 %v814
        %v991 = vpop.f32.mrf.mxu0
        %v992 = vadd.f32 %v932, %v991
        %v993 = vpop.f32.mrf.mxu0
        %v994 = vadd.f32 %v931, %v993
        %995 = vmatmul.bf16.gmra.mxu0 %v815
        %v996 = vpop.f32.mrf.mxu0
        %v997 = vadd.f32 %v930, %v996
        %v998 = vpop.f32.mrf.mxu0
        %v999 = vadd.f32 %v929, %v998
        %1000 = vmatmul.bf16.gmra.mxu0 %v816
        %v1001 = vpop.f32.mrf.mxu0
        %v1002 = vadd.f32 %v928, %v1001
        %v1003 = vpop.f32.mrf.mxu0
        %v1004 = vadd.f32 %v927, %v1003
        %1005 = vmatmul.bf16.gmra.mxu0 %v817
        %v1006 = vpop.f32.mrf.mxu0
        %v1007 = vadd.f32 %v926, %v1006
        %v1008 = vpop.f32.mrf.mxu0
        %v1009 = vadd.f32 %v925, %v1008
        %1010 = vmatmul.bf16.gmra.mxu0 %v818
        %v1011 = vpop.f32.mrf.mxu0
        %v1012 = vadd.f32 %v924, %v1011
        %v1013 = vpop.f32.mrf.mxu0
        %v1014 = vadd.f32 %v923, %v1013
        %1015 = vmatmul.bf16.gmra.mxu0 %v819
        %v1016 = vpop.f32.mrf.mxu0
        %v1017 = vadd.f32 %v922, %v1016
        %v1018 = vpop.f32.mrf.mxu0
        %v1019 = vadd.f32 %v933, %v1018
        %1020 = vdwg.mxu0
        %v1022 = vperm.slane %v801, 0
        %v1024 = vadd.f32 %v992, %v1022
        %v1025 = vadd.f32 %v994, %v1022
        %v1026 = vadd.f32 %v997, %v1022
        %v1027 = vadd.f32 %v999, %v1022
        %v1028 = vadd.f32 %v1002, %v1022
        %v1029 = vadd.f32 %v1004, %v1022
        %v1030 = vadd.f32 %v1007, %v1022
        %v1031 = vadd.f32 %v1009, %v1022
        %v1032 = vadd.f32 %v1012, %v1022
        %v1033 = vadd.f32 %v1014, %v1022
        %v1034 = vadd.f32 %v1017, %v1022
        %v1035 = vadd.f32 %v1019, %v1022
        %vm1036 = vcmp.lt.s32.totalorder %v745, 16
        %vm1037 = vcmp.lt.s32.totalorder %v746, 16
        %vm1038 = vcmp.lt.s32.totalorder %v747, 16
        %vm1039 = vcmp.lt.s32.totalorder %v748, 16
        %vm1040 = vcmp.lt.s32.totalorder %v749, 16
        %vm1041 = vcmp.lt.s32.totalorder %v750, 16
        %vm1042 = vcmp.lt.s32.totalorder %v751, 16
        %vm1043 = vcmp.lt.s32.totalorder %v752, 16
        %vm1044 = vcmp.lt.s32.totalorder %v753, 16
        %vm1045 = vcmp.lt.s32.totalorder %v754, 16
        %vm1046 = vcmp.lt.s32.totalorder %v755, 16
        %vm1047 = vcmp.lt.s32.totalorder %v756, 16
        %vm1048 = vmand %vm757, %vm1036
        %vm1049 = vmand %vm758, %vm1037
        %vm1050 = vmand %vm759, %vm1038
        %vm1051 = vmand %vm760, %vm1039
        %vm1052 = vmand %vm761, %vm1040
        %vm1053 = vmand %vm762, %vm1041
        %vm1054 = vmand %vm763, %vm1042
        %vm1055 = vmand %vm764, %vm1043
        %vm1056 = vmand %vm765, %vm1044
        %vm1057 = vmand %vm766, %vm1045
        %vm1058 = vmand %vm767, %vm1046
        %vm1059 = vmand %vm768, %vm1047
        %v1060 = vsel %vm1048, 1, 0
        %v1061 = vsel %vm1049, 1, 0
        %v1062 = vsel %vm1050, 1, 0
        %v1063 = vsel %vm1051, 1, 0
        %v1064 = vsel %vm1052, 1, 0
        %v1065 = vsel %vm1053, 1, 0
        %v1066 = vsel %vm1054, 1, 0
        %v1067 = vsel %vm1055, 1, 0
        %v1068 = vsel %vm1056, 1, 0
        %v1069 = vsel %vm1057, 1, 0
        %v1070 = vsel %vm1058, 1, 0
        %v1071 = vsel %vm1059, 1, 0
        %v1072 = vcvt.s32.f32 %v1060
        %v1073 = vcvt.s32.f32 %v1061
        %v1074 = vcvt.s32.f32 %v1062
        %v1075 = vcvt.s32.f32 %v1063
        %v1076 = vcvt.s32.f32 %v1064
        %v1077 = vcvt.s32.f32 %v1065
        %v1078 = vcvt.s32.f32 %v1066
        %v1079 = vcvt.s32.f32 %v1067
        %v1080 = vcvt.s32.f32 %v1068
        %v1081 = vcvt.s32.f32 %v1069
        %v1082 = vcvt.s32.f32 %v1070
        %v1083 = vcvt.s32.f32 %v1071
        %1085 = vset.pattern.permute.xlu0 0
        %1086 = vperm.xlu0 %1085, %v1072
        %v1087 = vpop.permute.xlu0 %1086
        %1090 = vset.pattern.permute.xlu0 0
        %1091 = vperm.xlu0 %1090, %v1073
        %v1092 = vpop.permute.xlu0 %1091
        %1095 = vset.pattern.permute.xlu0 0
        %1096 = vperm.xlu0 %1095, %v1074
        %v1097 = vpop.permute.xlu0 %1096
        %1100 = vset.pattern.permute.xlu0 0
        %1101 = vperm.xlu0 %1100, %v1075
        %v1102 = vpop.permute.xlu0 %1101
        %1105 = vset.pattern.permute.xlu0 0
        %1106 = vperm.xlu0 %1105, %v1076
        %v1107 = vpop.permute.xlu0 %1106
        %1110 = vset.pattern.permute.xlu0 0
        %1111 = vperm.xlu0 %1110, %v1077
        %v1112 = vpop.permute.xlu0 %1111
        %1115 = vset.pattern.permute.xlu0 0
        %1116 = vperm.xlu0 %1115, %v1078
        %v1117 = vpop.permute.xlu0 %1116
        %1120 = vset.pattern.permute.xlu0 0
        %1121 = vperm.xlu0 %1120, %v1079
        %v1122 = vpop.permute.xlu0 %1121
        %1125 = vset.pattern.permute.xlu0 0
        %1126 = vperm.xlu0 %1125, %v1080
        %v1127 = vpop.permute.xlu0 %1126
        %1130 = vset.pattern.permute.xlu0 0
        %1131 = vperm.xlu0 %1130, %v1081
        %v1132 = vpop.permute.xlu0 %1131
        %1135 = vset.pattern.permute.xlu0 0
        %1136 = vperm.xlu0 %1135, %v1082
        %v1137 = vpop.permute.xlu0 %1136
        %1140 = vset.pattern.permute.xlu0 0
        %1141 = vperm.xlu0 %1140, %v1083
        %v1142 = vpop.permute.xlu0 %1141
        %v1144 = vmul.f32 %v1024, %v1087
        %v1145 = vmul.f32 %v1025, %v1092
        %v1146 = vmul.f32 %v1026, %v1097
        %v1147 = vmul.f32 %v1027, %v1102
        %v1148 = vmul.f32 %v1028, %v1107
        %v1149 = vmul.f32 %v1029, %v1112
        %v1150 = vmul.f32 %v1030, %v1117
        %v1151 = vmul.f32 %v1031, %v1122
        %v1152 = vmul.f32 %v1032, %v1127
        %v1153 = vmul.f32 %v1033, %v1132
        %v1154 = vmul.f32 %v1034, %v1137
        %v1155 = vmul.f32 %v1035, %v1142
        %v1156 = vmax.f32 %v1144, 0.0
        %v1157 = vmax.f32 %v1145, 0.0
        %v1158 = vmax.f32 %v1146, 0.0
        %v1159 = vmax.f32 %v1147, 0.0
        %v1160 = vmax.f32 %v1148, 0.0
        %v1161 = vmax.f32 %v1149, 0.0
        %v1162 = vmax.f32 %v1150, 0.0
        %v1163 = vmax.f32 %v1151, 0.0
        %v1164 = vmax.f32 %v1152, 0.0
        %v1165 = vmax.f32 %v1153, 0.0
        %v1166 = vmax.f32 %v1154, 0.0
        %v1167 = vmax.f32 %v1155, 0.0
        %1168 = vst [vmem:[#allocation2] sm:$0xff] %v1156
        %1169 = vst [vmem:[#allocation2 + $0x30] sm:$0xff] %v1157
        %1170 = vst [vmem:[#allocation2 + $0x60] sm:$0xff] %v1158
        %1171 = vst [vmem:[#allocation2 + $0x90] sm:$0xff] %v1159
        %1172 = vst [vmem:[#allocation2 + $0xc0] sm:$0xff] %v1160
        %1173 = vst [vmem:[#allocation2 + $0xf0] sm:$0xff] %v1161
        %1174 = vst [vmem:[#allocation2 + $0x120] sm:$0xff] %v1162
        %1175 = vst [vmem:[#allocation2 + $0x150] sm:$0xff] %v1163
        %1176 = vst [vmem:[#allocation2 + $0x180] sm:$0xff] %v1164
        %1177 = vst [vmem:[#allocation2 + $0x1b0] sm:$0xff] %v1165
        %1178 = vst [vmem:[#allocation2 + $0x1e0] sm:$0xff] %v1166
        %1179 = vst [vmem:[#allocation2 + $0x210] sm:$0xff] %v1167
        %v1180 = vsub.f32 0.0, %v1144
        %v1181 = vsub.f32 0.0, %v1145
        %v1182 = vsub.f32 0.0, %v1146
        %v1183 = vsub.f32 0.0, %v1147
        %v1184 = vsub.f32 0.0, %v1148
        %v1185 = vsub.f32 0.0, %v1149
        %v1186 = vsub.f32 0.0, %v1150
        %v1187 = vsub.f32 0.0, %v1151
        %v1188 = vsub.f32 0.0, %v1152
        %v1189 = vsub.f32 0.0, %v1153
        %v1190 = vsub.f32 0.0, %v1154
        %v1191 = vsub.f32 0.0, %v1155
        %v1192 = vmax.f32 %v1180, 0.0
        %v1193 = vmax.f32 %v1181, 0.0
        %v1194 = vmax.f32 %v1182, 0.0
        %v1195 = vmax.f32 %v1183, 0.0
        %v1196 = vmax.f32 %v1184, 0.0
        %v1197 = vmax.f32 %v1185, 0.0
        %v1198 = vmax.f32 %v1186, 0.0
        %v1199 = vmax.f32 %v1187, 0.0
        %v1200 = vmax.f32 %v1188, 0.0
        %v1201 = vmax.f32 %v1189, 0.0
        %v1202 = vmax.f32 %v1190, 0.0
        %v1203 = vmax.f32 %v1191, 0.0
        %1204 = vst [vmem:[#allocation2 + $0x8] sm:$0xff] %v1192
        %1205 = vst [vmem:[#allocation2 + $0x38] sm:$0xff] %v1193
        %1206 = vst [vmem:[#allocation2 + $0x68] sm:$0xff] %v1194
        %1207 = vst [vmem:[#allocation2 + $0x98] sm:$0xff] %v1195
        %1208 = vst [vmem:[#allocation2 + $0xc8] sm:$0xff] %v1196
        %1209 = vst [vmem:[#allocation2 + $0xf8] sm:$0xff] %v1197
        %1210 = vst [vmem:[#allocation2 + $0x128] sm:$0xff] %v1198
        %1211 = vst [vmem:[#allocation2 + $0x158] sm:$0xff] %v1199
        %1212 = vst [vmem:[#allocation2 + $0x188] sm:$0xff] %v1200
        %1213 = vst [vmem:[#allocation2 + $0x1b8] sm:$0xff] %v1201
        %1214 = vst [vmem:[#allocation2 + $0x1e8] sm:$0xff] %v1202
        %1215 = vst [vmem:[#allocation2 + $0x218] sm:$0xff] %v1203
        %v1216 = vld [vmem:[%s6] sm:$0xff]
        %v1217 = vld [vmem:[%s6 + $0x8] sm:$0xff]
        %v1218 = vld [vmem:[%s6 + $0x10] sm:$0xff]
        %v1219 = vld [vmem:[%s6 + $0x18] sm:$0xff]
        %v1220 = vld [vmem:[%s6 + $0x20] sm:$0xff]
        %v1221 = vld [vmem:[%s6 + $0x28] sm:$0xff]
        %v1222 = vld [vmem:[%s6 + $0x30] sm:$0xff]
        %v1223 = vld [vmem:[%s6 + $0x38] sm:$0xff]
        %v1224 = vld [vmem:[%s6 + $0x40] sm:$0xff]
        %v1225 = vld [vmem:[%s6 + $0x48] sm:$0xff]
        %v1226 = vld [vmem:[%s6 + $0x50] sm:$0xff]
        %v1227 = vld [vmem:[%s6 + $0x58] sm:$0xff]
        %v1228 = vld [vmem:[%s6 + $0x60] sm:$0xff]
        %v1229 = vld [vmem:[%s6 + $0x68] sm:$0xff]
        %v1230 = vld [vmem:[%s6 + $0x70] sm:$0xff]
        %v1231 = vld [vmem:[%s6 + $0x78] sm:$0xff]
        %v1232 = vld [vmem:[%s6 + $0x80] sm:$0xff]
        %v1233 = vld [vmem:[%s6 + $0x88] sm:$0xff]
        %v1234 = vld [vmem:[%s6 + $0x90] sm:$0xff]
        %v1235 = vld [vmem:[%s6 + $0x98] sm:$0xff]
        %v1236 = vld [vmem:[%s6 + $0xa0] sm:$0xff]
        %v1237 = vld [vmem:[%s6 + $0xa8] sm:$0xff]
        %v1238 = vld [vmem:[%s6 + $0xb0] sm:$0xff]
        %v1239 = vld [vmem:[%s6 + $0xb8] sm:$0xff]
        %v1240 = vld [vmem:[%s6 + $0xc0] sm:$0xff]
        %v1241 = vld [vmem:[%s6 + $0xc8] sm:$0xff]
        %v1242 = vld [vmem:[%s6 + $0xd0] sm:$0xff]
        %v1243 = vld [vmem:[%s6 + $0xd8] sm:$0xff]
        %v1244 = vld [vmem:[%s6 + $0xe0] sm:$0xff]
        %v1245 = vld [vmem:[%s6 + $0xe8] sm:$0xff]
        %v1246 = vld [vmem:[%s6 + $0xf0] sm:$0xff]
        %v1247 = vld [vmem:[%s6 + $0xf8] sm:$0xff]
        %v1248 = vld [vmem:[%s7] sm:$0xff]
        %v1249 = vld [vmem:[%s7 + $0x8] sm:$0xff]
        %v1250 = vld [vmem:[%s7 + $0x10] sm:$0xff]
        %v1251 = vld [vmem:[%s7 + $0x18] sm:$0xff]
        %v1252 = vld [vmem:[%s7 + $0x20] sm:$0xff]
        %v1253 = vld [vmem:[%s7 + $0x28] sm:$0xff]
        %v1254 = vld [vmem:[%s7 + $0x30] sm:$0xff]
        %v1255 = vld [vmem:[%s7 + $0x38] sm:$0xff]
        %v1256 = vld [vmem:[%s7 + $0x40] sm:$0xff]
        %v1257 = vld [vmem:[%s7 + $0x48] sm:$0xff]
        %v1258 = vld [vmem:[%s7 + $0x50] sm:$0xff]
        %v1259 = vld [vmem:[%s7 + $0x58] sm:$0xff]
        %v1260 = vld [vmem:[%s7 + $0x60] sm:$0xff]
        %v1261 = vld [vmem:[%s7 + $0x68] sm:$0xff]
        %v1262 = vld [vmem:[%s7 + $0x70] sm:$0xff]
        %v1263 = vld [vmem:[%s7 + $0x78] sm:$0xff]
        %v1264 = vld [vmem:[%s7 + $0x80] sm:$0xff]
        %v1265 = vld [vmem:[%s7 + $0x88] sm:$0xff]
        %v1266 = vld [vmem:[%s7 + $0x90] sm:$0xff]
        %v1267 = vld [vmem:[%s7 + $0x98] sm:$0xff]
        %v1268 = vld [vmem:[%s7 + $0xa0] sm:$0xff]
        %v1269 = vld [vmem:[%s7 + $0xa8] sm:$0xff]
        %v1270 = vld [vmem:[%s7 + $0xb0] sm:$0xff]
        %v1271 = vld [vmem:[%s7 + $0xb8] sm:$0xff]
        %v1272 = vld [vmem:[%s7 + $0xc0] sm:$0xff]
        %v1273 = vld [vmem:[%s7 + $0xc8] sm:$0xff]
        %v1274 = vld [vmem:[%s7 + $0xd0] sm:$0xff]
        %v1275 = vld [vmem:[%s7 + $0xd8] sm:$0xff]
        %v1276 = vld [vmem:[%s7 + $0xe0] sm:$0xff]
        %v1277 = vld [vmem:[%s7 + $0xe8] sm:$0xff]
        %v1278 = vld [vmem:[%s7 + $0xf0] sm:$0xff]
        %v1279 = vld [vmem:[%s7 + $0xf8] sm:$0xff]
        %v1280 = vld [vmem:[%s8] sm:$0x3]
        %v1281 = vld [vmem:[#allocation2] sm:$0xff]
        %v1282 = vld [vmem:[#allocation2 + $0x8] sm:$0xff]
        %v1283 = vld [vmem:[#allocation2 + $0x30] sm:$0xff]
        %v1284 = vld [vmem:[#allocation2 + $0x38] sm:$0xff]
        %v1285 = vld [vmem:[#allocation2 + $0x60] sm:$0xff]
        %v1286 = vld [vmem:[#allocation2 + $0x68] sm:$0xff]
        %v1287 = vld [vmem:[#allocation2 + $0x90] sm:$0xff]
        %v1288 = vld [vmem:[#allocation2 + $0x98] sm:$0xff]
        %v1289 = vld [vmem:[#allocation2 + $0xc0] sm:$0xff]
        %v1290 = vld [vmem:[#allocation2 + $0xc8] sm:$0xff]
        %v1291 = vld [vmem:[#allocation2 + $0xf0] sm:$0xff]
        %v1292 = vld [vmem:[#allocation2 + $0xf8] sm:$0xff]
        %v1293 = vld [vmem:[#allocation2 + $0x120] sm:$0xff]
        %v1294 = vld [vmem:[#allocation2 + $0x128] sm:$0xff]
        %v1295 = vld [vmem:[#allocation2 + $0x150] sm:$0xff]
        %v1296 = vld [vmem:[#allocation2 + $0x158] sm:$0xff]
        %v1297 = vld [vmem:[#allocation2 + $0x180] sm:$0xff]
        %v1298 = vld [vmem:[#allocation2 + $0x188] sm:$0xff]
        %v1299 = vld [vmem:[#allocation2 + $0x1b0] sm:$0xff]
        %v1300 = vld [vmem:[#allocation2 + $0x1b8] sm:$0xff]
        %v1301 = vld [vmem:[#allocation2 + $0x1e0] sm:$0xff]
        %v1302 = vld [vmem:[#allocation2 + $0x1e8] sm:$0xff]
        %v1303 = vld [vmem:[#allocation2 + $0x210] sm:$0xff]
        %v1304 = vld [vmem:[#allocation2 + $0x218] sm:$0xff]
        %v1305 = vpack.c.bf16 %v1283, %v1281
        %v1306 = vpack.c.bf16 %v1284, %v1282
        %v1307 = vpack.c.bf16 %v1287, %v1285
        %v1308 = vpack.c.bf16 %v1288, %v1286
        %v1309 = vpack.c.bf16 %v1291, %v1289
        %v1310 = vpack.c.bf16 %v1292, %v1290
        %v1311 = vpack.c.bf16 %v1295, %v1293
        %v1312 = vpack.c.bf16 %v1296, %v1294
        %v1313 = vpack.c.bf16 %v1299, %v1297
        %v1314 = vpack.c.bf16 %v1300, %v1298
        %v1315 = vpack.c.bf16 %v1303, %v1301
        %v1316 = vpack.c.bf16 %v1304, %v1302
        %v1349 = vunpack.c.l.b16 %v1248
        %v1350 = vunpack.c.h.b16 %v1248
        %v1351 = vunpack.c.l.b16 %v1249
        %v1352 = vunpack.c.h.b16 %v1249
        %v1353 = vunpack.c.l.b16 %v1250
        %v1354 = vunpack.c.h.b16 %v1250
        %v1355 = vunpack.c.l.b16 %v1251
        %v1356 = vunpack.c.h.b16 %v1251
        %v1357 = vunpack.c.l.b16 %v1252
        %v1358 = vunpack.c.h.b16 %v1252
        %v1359 = vunpack.c.l.b16 %v1253
        %v1360 = vunpack.c.h.b16 %v1253
        %v1361 = vunpack.c.l.b16 %v1254
        %v1362 = vunpack.c.h.b16 %v1254
        %v1363 = vunpack.c.l.b16 %v1255
        %v1364 = vunpack.c.h.b16 %v1255
        %v1365 = vunpack.c.l.b16 %v1256
        %v1366 = vunpack.c.h.b16 %v1256
        %v1367 = vunpack.c.l.b16 %v1257
        %v1368 = vunpack.c.h.b16 %v1257
        %v1369 = vunpack.c.l.b16 %v1258
        %v1370 = vunpack.c.h.b16 %v1258
        %v1371 = vunpack.c.l.b16 %v1259
        %v1372 = vunpack.c.h.b16 %v1259
        %v1373 = vunpack.c.l.b16 %v1260
        %v1374 = vunpack.c.h.b16 %v1260
        %v1375 = vunpack.c.l.b16 %v1261
        %v1376 = vunpack.c.h.b16 %v1261
        %v1377 = vunpack.c.l.b16 %v1262
        %v1378 = vunpack.c.h.b16 %v1262
        %v1379 = vunpack.c.l.b16 %v1263
        %v1380 = vunpack.c.h.b16 %v1263
        %v1381 = vunpack.c.l.b16 %v1264
        %v1382 = vunpack.c.h.b16 %v1264
        %v1383 = vunpack.c.l.b16 %v1265
        %v1384 = vunpack.c.h.b16 %v1265
        %v1385 = vunpack.c.l.b16 %v1266
        %v1386 = vunpack.c.h.b16 %v1266
        %v1387 = vunpack.c.l.b16 %v1267
        %v1388 = vunpack.c.h.b16 %v1267
        %v1389 = vunpack.c.l.b16 %v1268
        %v1390 = vunpack.c.h.b16 %v1268
        %v1391 = vunpack.c.l.b16 %v1269
        %v1392 = vunpack.c.h.b16 %v1269
        %v1393 = vunpack.c.l.b16 %v1270
        %v1394 = vunpack.c.h.b16 %v1270
        %v1395 = vunpack.c.l.b16 %v1271
        %v1396 = vunpack.c.h.b16 %v1271
        %v1397 = vunpack.c.l.b16 %v1272
        %v1398 = vunpack.c.h.b16 %v1272
        %v1399 = vunpack.c.l.b16 %v1273
        %v1400 = vunpack.c.h.b16 %v1273
        %v1401 = vunpack.c.l.b16 %v1274
        %v1402 = vunpack.c.h.b16 %v1274
        %v1403 = vunpack.c.l.b16 %v1275
        %v1404 = vunpack.c.h.b16 %v1275
        %v1405 = vunpack.c.l.b16 %v1276
        %v1406 = vunpack.c.h.b16 %v1276
        %v1407 = vunpack.c.l.b16 %v1277
        %v1408 = vunpack.c.h.b16 %v1277
        %v1409 = vunpack.c.l.b16 %v1278
        %v1410 = vunpack.c.h.b16 %v1278
        %v1411 = vunpack.c.l.b16 %v1279
        %v1412 = vunpack.c.h.b16 %v1279
        %v1413 = vpack.c.b16 %v1351, %v1349
        %v1414 = vpack.c.b16 %v1352, %v1350
        %v1415 = vpack.c.b16 %v1355, %v1353
        %v1416 = vpack.c.b16 %v1356, %v1354
        %v1417 = vpack.c.b16 %v1359, %v1357
        %v1418 = vpack.c.b16 %v1360, %v1358
        %v1419 = vpack.c.b16 %v1363, %v1361
        %v1420 = vpack.c.b16 %v1364, %v1362
        %v1421 = vpack.c.b16 %v1367, %v1365
        %v1422 = vpack.c.b16 %v1368, %v1366
        %v1423 = vpack.c.b16 %v1371, %v1369
        %v1424 = vpack.c.b16 %v1372, %v1370
        %v1425 = vpack.c.b16 %v1375, %v1373
        %v1426 = vpack.c.b16 %v1376, %v1374
        %v1427 = vpack.c.b16 %v1379, %v1377
        %v1428 = vpack.c.b16 %v1380, %v1378
        %v1429 = vpack.c.b16 %v1383, %v1381
        %v1430 = vpack.c.b16 %v1384, %v1382
        %v1431 = vpack.c.b16 %v1387, %v1385
        %v1432 = vpack.c.b16 %v1388, %v1386
        %v1433 = vpack.c.b16 %v1391, %v1389
        %v1434 = vpack.c.b16 %v1392, %v1390
        %v1435 = vpack.c.b16 %v1395, %v1393
        %v1436 = vpack.c.b16 %v1396, %v1394
        %v1437 = vpack.c.b16 %v1399, %v1397
        %v1438 = vpack.c.b16 %v1400, %v1398
        %v1439 = vpack.c.b16 %v1403, %v1401
        %v1440 = vpack.c.b16 %v1404, %v1402
        %v1441 = vpack.c.b16 %v1407, %v1405
        %v1442 = vpack.c.b16 %v1408, %v1406
        %v1443 = vpack.c.b16 %v1411, %v1409
        %v1444 = vpack.c.b16 %v1412, %v1410
        %1477 = vmatpush.bf16.msra.mxu0 %v1427
        %1478 = vmatpush.bf16.msra.mxu0 %v1425
        %1479 = vmatpush.bf16.msra.mxu0 %v1423
        %1480 = vmatpush.bf16.msra.mxu0 %v1421
        %1481 = vmatpush.bf16.msra.mxu0 %v1419
        %1482 = vmatpush.bf16.msra.mxu0 %v1417
        %1483 = vmatpush.bf16.msra.mxu0 %v1415
        %1484 = vmatpush.bf16.msra.mxu0 %v1413
        %1485 = vmatmul.bf16.gmra.mxu0 %v1305
        %v1486 = vpop.f32.mrf.mxu0
        %v1487 = vadd.f32 0.0, %v1486
        %v1488 = vpop.f32.mrf.mxu0
        %v1489 = vadd.f32 0.0, %v1488
        %1490 = vmatmul.bf16.gmra.mxu0 %v1307
        %v1491 = vpop.f32.mrf.mxu0
        %v1492 = vadd.f32 0.0, %v1491
        %v1493 = vpop.f32.mrf.mxu0
        %v1494 = vadd.f32 0.0, %v1493
        %1495 = vmatmul.bf16.gmra.mxu0 %v1309
        %v1496 = vpop.f32.mrf.mxu0
        %v1497 = vadd.f32 0.0, %v1496
        %v1498 = vpop.f32.mrf.mxu0
        %v1499 = vadd.f32 0.0, %v1498
        %1500 = vmatmul.bf16.gmra.mxu0 %v1311
        %v1501 = vpop.f32.mrf.mxu0
        %v1502 = vadd.f32 0.0, %v1501
        %v1503 = vpop.f32.mrf.mxu0
        %v1504 = vadd.f32 0.0, %v1503
        %1505 = vmatmul.bf16.gmra.mxu0 %v1313
        %v1506 = vpop.f32.mrf.mxu0
        %v1507 = vadd.f32 0.0, %v1506
        %v1508 = vpop.f32.mrf.mxu0
        %v1509 = vadd.f32 0.0, %v1508
        %1510 = vmatmul.bf16.gmra.mxu0 %v1315
        %v1511 = vpop.f32.mrf.mxu0
        %v1512 = vadd.f32 0.0, %v1511
        %v1513 = vpop.f32.mrf.mxu0
        %v1514 = vadd.f32 0.0, %v1513
        %1515 = vdwg.mxu0
        %1516 = vmatpush.bf16.msra.mxu0 %v1443
        %1517 = vmatpush.bf16.msra.mxu0 %v1441
        %1518 = vmatpush.bf16.msra.mxu0 %v1439
        %1519 = vmatpush.bf16.msra.mxu0 %v1437
        %1520 = vmatpush.bf16.msra.mxu0 %v1435
        %1521 = vmatpush.bf16.msra.mxu0 %v1433
        %1522 = vmatpush.bf16.msra.mxu0 %v1431
        %1523 = vmatpush.bf16.msra.mxu0 %v1429
        %1524 = vmatmul.bf16.gmra.mxu0 %v1306
        %v1525 = vpop.f32.mrf.mxu0
        %v1526 = vadd.f32 %v1487, %v1525
        %v1527 = vpop.f32.mrf.mxu0
        %v1528 = vadd.f32 %v1489, %v1527
        %1529 = vmatmul.bf16.gmra.mxu0 %v1308
        %v1530 = vpop.f32.mrf.mxu0
        %v1531 = vadd.f32 %v1492, %v1530
        %v1532 = vpop.f32.mrf.mxu0
        %v1533 = vadd.f32 %v1494, %v1532
        %1534 = vmatmul.bf16.gmra.mxu0 %v1310
        %v1535 = vpop.f32.mrf.mxu0
        %v1536 = vadd.f32 %v1497, %v1535
        %v1537 = vpop.f32.mrf.mxu0
        %v1538 = vadd.f32 %v1499, %v1537
        %1539 = vmatmul.bf16.gmra.mxu0 %v1312
        %v1540 = vpop.f32.mrf.mxu0
        %v1541 = vadd.f32 %v1502, %v1540
        %v1542 = vpop.f32.mrf.mxu0
        %v1543 = vadd.f32 %v1504, %v1542
        %1544 = vmatmul.bf16.gmra.mxu0 %v1314
        %v1545 = vpop.f32.mrf.mxu0
        %v1546 = vadd.f32 %v1507, %v1545
        %v1547 = vpop.f32.mrf.mxu0
        %v1548 = vadd.f32 %v1509, %v1547
        %1549 = vmatmul.bf16.gmra.mxu0 %v1316
        %v1550 = vpop.f32.mrf.mxu0
        %v1551 = vadd.f32 %v1512, %v1550
        %v1552 = vpop.f32.mrf.mxu0
        %v1553 = vadd.f32 %v1514, %v1552
        %1554 = vdwg.mxu0
        %1555 = vmatpush.bf16.msra.mxu0 %v1428
        %1556 = vmatpush.bf16.msra.mxu0 %v1426
        %1557 = vmatpush.bf16.msra.mxu0 %v1424
        %1558 = vmatpush.bf16.msra.mxu0 %v1422
        %1559 = vmatpush.bf16.msra.mxu0 %v1420
        %1560 = vmatpush.bf16.msra.mxu0 %v1418
        %1561 = vmatpush.bf16.msra.mxu0 %v1416
        %1562 = vmatpush.bf16.msra.mxu0 %v1414
        %1563 = vmatmul.bf16.gmra.mxu0 %v1305
        %v1564 = vpop.f32.mrf.mxu0
        %v1565 = vadd.f32 0.0, %v1564
        %v1566 = vpop.f32.mrf.mxu0
        %v1567 = vadd.f32 0.0, %v1566
        %1568 = vmatmul.bf16.gmra.mxu0 %v1307
        %v1569 = vpop.f32.mrf.mxu0
        %v1570 = vadd.f32 0.0, %v1569
        %v1571 = vpop.f32.mrf.mxu0
        %v1572 = vadd.f32 0.0, %v1571
        %1573 = vmatmul.bf16.gmra.mxu0 %v1309
        %v1574 = vpop.f32.mrf.mxu0
        %v1575 = vadd.f32 0.0, %v1574
        %v1576 = vpop.f32.mrf.mxu0
        %v1577 = vadd.f32 0.0, %v1576
        %1578 = vmatmul.bf16.gmra.mxu0 %v1311
        %v1579 = vpop.f32.mrf.mxu0
        %v1580 = vadd.f32 0.0, %v1579
        %v1581 = vpop.f32.mrf.mxu0
        %v1582 = vadd.f32 0.0, %v1581
        %1583 = vmatmul.bf16.gmra.mxu0 %v1313
        %v1584 = vpop.f32.mrf.mxu0
        %v1585 = vadd.f32 0.0, %v1584
        %v1586 = vpop.f32.mrf.mxu0
        %v1587 = vadd.f32 0.0, %v1586
        %1588 = vmatmul.bf16.gmra.mxu0 %v1315
        %v1589 = vpop.f32.mrf.mxu0
        %v1590 = vadd.f32 0.0, %v1589
        %v1591 = vpop.f32.mrf.mxu0
        %v1592 = vadd.f32 0.0, %v1591
        %1593 = vdwg.mxu0
        %1594 = vmatpush.bf16.msra.mxu0 %v1444
        %1595 = vmatpush.bf16.msra.mxu0 %v1442
        %1596 = vmatpush.bf16.msra.mxu0 %v1440
        %1597 = vmatpush.bf16.msra.mxu0 %v1438
        %1598 = vmatpush.bf16.msra.mxu0 %v1436
        %1599 = vmatpush.bf16.msra.mxu0 %v1434
        %1600 = vmatpush.bf16.msra.mxu0 %v1432
        %1601 = vmatpush.bf16.msra.mxu0 %v1430
        %1602 = vmatmul.bf16.gmra.mxu0 %v1306
        %v1603 = vpop.f32.mrf.mxu0
        %v1604 = vadd.f32 %v1565, %v1603
        %v1605 = vpop.f32.mrf.mxu0
        %v1606 = vadd.f32 %v1567, %v1605
        %1607 = vmatmul.bf16.gmra.mxu0 %v1308
        %v1608 = vpop.f32.mrf.mxu0
        %v1609 = vadd.f32 %v1570, %v1608
        %v1610 = vpop.f32.mrf.mxu0
        %v1611 = vadd.f32 %v1572, %v1610
        %1612 = vmatmul.bf16.gmra.mxu0 %v1310
        %v1613 = vpop.f32.mrf.mxu0
        %v1614 = vadd.f32 %v1575, %v1613
        %v1615 = vpop.f32.mrf.mxu0
        %v1616 = vadd.f32 %v1577, %v1615
        %1617 = vmatmul.bf16.gmra.mxu0 %v1312
        %v1618 = vpop.f32.mrf.mxu0
        %v1619 = vadd.f32 %v1580, %v1618
        %v1620 = vpop.f32.mrf.mxu0
        %v1621 = vadd.f32 %v1582, %v1620
        %1622 = vmatmul.bf16.gmra.mxu0 %v1314
        %v1623 = vpop.f32.mrf.mxu0
        %v1624 = vadd.f32 %v1585, %v1623
        %v1625 = vpop.f32.mrf.mxu0
        %v1626 = vadd.f32 %v1587, %v1625
        %1627 = vmatmul.bf16.gmra.mxu0 %v1316
        %v1628 = vpop.f32.mrf.mxu0
        %v1629 = vadd.f32 %v1590, %v1628
        %v1630 = vpop.f32.mrf.mxu0
        %v1631 = vadd.f32 %v1592, %v1630
        %1632 = vdwg.mxu0
        %v1633 = vrot.slane %v1526, 1
        %v1634 = vrot.slane %v1604, 1
        %v1635 = vrot.slane %v1528, 1
        %v1636 = vrot.slane %v1606, 1
        %v1637 = vrot.slane %v1531, 1
        %v1638 = vrot.slane %v1609, 1
        %v1639 = vrot.slane %v1533, 1
        %v1640 = vrot.slane %v1611, 1
        %v1641 = vrot.slane %v1536, 1
        %v1642 = vrot.slane %v1614, 1
        %v1643 = vrot.slane %v1538, 1
        %v1644 = vrot.slane %v1616, 1
        %v1645 = vrot.slane %v1541, 1
        %v1646 = vrot.slane %v1619, 1
        %v1647 = vrot.slane %v1543, 1
        %v1648 = vrot.slane %v1621, 1
        %v1649 = vrot.slane %v1546, 1
        %v1650 = vrot.slane %v1624, 1
        %v1651 = vrot.slane %v1548, 1
        %v1652 = vrot.slane %v1626, 1
        %v1653 = vrot.slane %v1551, 1
        %v1654 = vrot.slane %v1629, 1
        %v1655 = vrot.slane %v1553, 1
        %v1656 = vrot.slane %v1631, 1
        %v1657 = vsel %vm921, %v1653, %v1655
        %v1658 = vsel %vm921, %v1654, %v1656
        %v1659 = vsel %vm921, %v1651, %v1653
        %v1660 = vsel %vm921, %v1652, %v1654
        %v1661 = vsel %vm921, %v1649, %v1651
        %v1662 = vsel %vm921, %v1650, %v1652
        %v1663 = vsel %vm921, %v1647, %v1649
        %v1664 = vsel %vm921, %v1648, %v1650
        %v1665 = vsel %vm921, %v1645, %v1647
        %v1666 = vsel %vm921, %v1646, %v1648
        %v1667 = vsel %vm921, %v1643, %v1645
        %v1668 = vsel %vm921, %v1644, %v1646
        %v1669 = vsel %vm921, %v1641, %v1643
        %v1670 = vsel %vm921, %v1642, %v1644
        %v1671 = vsel %vm921, %v1639, %v1641
        %v1672 = vsel %vm921, %v1640, %v1642
        %v1673 = vsel %vm921, %v1637, %v1639
        %v1674 = vsel %vm921, %v1638, %v1640
        %v1675 = vsel %vm921, %v1635, %v1637
        %v1676 = vsel %vm921, %v1636, %v1638
        %v1677 = vsel %vm921, %v1633, %v1635
        %v1678 = vsel %vm921, %v1634, %v1636
        %v1679 = vsel %vm921, %v1655, %v1633
        %v1680 = vsel %vm921, %v1656, %v1634
        %v1713 = vunpack.c.l.b16 %v1216
        %v1714 = vunpack.c.h.b16 %v1216
        %v1715 = vunpack.c.l.b16 %v1217
        %v1716 = vunpack.c.h.b16 %v1217
        %v1717 = vunpack.c.l.b16 %v1218
        %v1718 = vunpack.c.h.b16 %v1218
        %v1719 = vunpack.c.l.b16 %v1219
        %v1720 = vunpack.c.h.b16 %v1219
        %v1721 = vunpack.c.l.b16 %v1220
        %v1722 = vunpack.c.h.b16 %v1220
        %v1723 = vunpack.c.l.b16 %v1221
        %v1724 = vunpack.c.h.b16 %v1221
        %v1725 = vunpack.c.l.b16 %v1222
        %v1726 = vunpack.c.h.b16 %v1222
        %v1727 = vunpack.c.l.b16 %v1223
        %v1728 = vunpack.c.h.b16 %v1223
        %v1729 = vunpack.c.l.b16 %v1224
        %v1730 = vunpack.c.h.b16 %v1224
        %v1731 = vunpack.c.l.b16 %v1225
        %v1732 = vunpack.c.h.b16 %v1225
        %v1733 = vunpack.c.l.b16 %v1226
        %v1734 = vunpack.c.h.b16 %v1226
        %v1735 = vunpack.c.l.b16 %v1227
        %v1736 = vunpack.c.h.b16 %v1227
        %v1737 = vunpack.c.l.b16 %v1228
        %v1738 = vunpack.c.h.b16 %v1228
        %v1739 = vunpack.c.l.b16 %v1229
        %v1740 = vunpack.c.h.b16 %v1229
        %v1741 = vunpack.c.l.b16 %v1230
        %v1742 = vunpack.c.h.b16 %v1230
        %v1743 = vunpack.c.l.b16 %v1231
        %v1744 = vunpack.c.h.b16 %v1231
        %v1745 = vunpack.c.l.b16 %v1232
        %v1746 = vunpack.c.h.b16 %v1232
        %v1747 = vunpack.c.l.b16 %v1233
        %v1748 = vunpack.c.h.b16 %v1233
        %v1749 = vunpack.c.l.b16 %v1234
        %v1750 = vunpack.c.h.b16 %v1234
        %v1751 = vunpack.c.l.b16 %v1235
        %v1752 = vunpack.c.h.b16 %v1235
        %v1753 = vunpack.c.l.b16 %v1236
        %v1754 = vunpack.c.h.b16 %v1236
        %v1755 = vunpack.c.l.b16 %v1237
        %v1756 = vunpack.c.h.b16 %v1237
        %v1757 = vunpack.c.l.b16 %v1238
        %v1758 = vunpack.c.h.b16 %v1238
        %v1759 = vunpack.c.l.b16 %v1239
        %v1760 = vunpack.c.h.b16 %v1239
        %v1761 = vunpack.c.l.b16 %v1240
        %v1762 = vunpack.c.h.b16 %v1240
        %v1763 = vunpack.c.l.b16 %v1241
        %v1764 = vunpack.c.h.b16 %v1241
        %v1765 = vunpack.c.l.b16 %v1242
        %v1766 = vunpack.c.h.b16 %v1242
        %v1767 = vunpack.c.l.b16 %v1243
        %v1768 = vunpack.c.h.b16 %v1243
        %v1769 = vunpack.c.l.b16 %v1244
        %v1770 = vunpack.c.h.b16 %v1244
        %v1771 = vunpack.c.l.b16 %v1245
        %v1772 = vunpack.c.h.b16 %v1245
        %v1773 = vunpack.c.l.b16 %v1246
        %v1774 = vunpack.c.h.b16 %v1246
        %v1775 = vunpack.c.l.b16 %v1247
        %v1776 = vunpack.c.h.b16 %v1247
        %v1777 = vpack.c.b16 %v1715, %v1713
        %v1778 = vpack.c.b16 %v1716, %v1714
        %v1779 = vpack.c.b16 %v1719, %v1717
        %v1780 = vpack.c.b16 %v1720, %v1718
        %v1781 = vpack.c.b16 %v1723, %v1721
        %v1782 = vpack.c.b16 %v1724, %v1722
        %v1783 = vpack.c.b16 %v1727, %v1725
        %v1784 = vpack.c.b16 %v1728, %v1726
        %v1785 = vpack.c.b16 %v1731, %v1729
        %v1786 = vpack.c.b16 %v1732, %v1730
        %v1787 = vpack.c.b16 %v1735, %v1733
        %v1788 = vpack.c.b16 %v1736, %v1734
        %v1789 = vpack.c.b16 %v1739, %v1737
        %v1790 = vpack.c.b16 %v1740, %v1738
        %v1791 = vpack.c.b16 %v1743, %v1741
        %v1792 = vpack.c.b16 %v1744, %v1742
        %v1793 = vpack.c.b16 %v1747, %v1745
        %v1794 = vpack.c.b16 %v1748, %v1746
        %v1795 = vpack.c.b16 %v1751, %v1749
        %v1796 = vpack.c.b16 %v1752, %v1750
        %v1797 = vpack.c.b16 %v1755, %v1753
        %v1798 = vpack.c.b16 %v1756, %v1754
        %v1799 = vpack.c.b16 %v1759, %v1757
        %v1800 = vpack.c.b16 %v1760, %v1758
        %v1801 = vpack.c.b16 %v1763, %v1761
        %v1802 = vpack.c.b16 %v1764, %v1762
        %v1803 = vpack.c.b16 %v1767, %v1765
        %v1804 = vpack.c.b16 %v1768, %v1766
        %v1805 = vpack.c.b16 %v1771, %v1769
        %v1806 = vpack.c.b16 %v1772, %v1770
        %v1807 = vpack.c.b16 %v1775, %v1773
        %v1808 = vpack.c.b16 %v1776, %v1774
        %1841 = vmatpush.bf16.msra.mxu0 %v1791
        %1842 = vmatpush.bf16.msra.mxu0 %v1789
        %1843 = vmatpush.bf16.msra.mxu0 %v1787
        %1844 = vmatpush.bf16.msra.mxu0 %v1785
        %1845 = vmatpush.bf16.msra.mxu0 %v1783
        %1846 = vmatpush.bf16.msra.mxu0 %v1781
        %1847 = vmatpush.bf16.msra.mxu0 %v1779
        %1848 = vmatpush.bf16.msra.mxu0 %v1777
        %1849 = vmatmul.bf16.gmra.mxu0 %v1305
        %v1850 = vpop.f32.mrf.mxu0
        %v1851 = vadd.f32 %v1677, %v1850
        %v1852 = vpop.f32.mrf.mxu0
        %v1853 = vadd.f32 %v1675, %v1852
        %1854 = vmatmul.bf16.gmra.mxu0 %v1307
        %v1855 = vpop.f32.mrf.mxu0
        %v1856 = vadd.f32 %v1673, %v1855
        %v1857 = vpop.f32.mrf.mxu0
        %v1858 = vadd.f32 %v1671, %v1857
        %1859 = vmatmul.bf16.gmra.mxu0 %v1309
        %v1860 = vpop.f32.mrf.mxu0
        %v1861 = vadd.f32 %v1669, %v1860
        %v1862 = vpop.f32.mrf.mxu0
        %v1863 = vadd.f32 %v1667, %v1862
        %1864 = vmatmul.bf16.gmra.mxu0 %v1311
        %v1865 = vpop.f32.mrf.mxu0
        %v1866 = vadd.f32 %v1665, %v1865
        %v1867 = vpop.f32.mrf.mxu0
        %v1868 = vadd.f32 %v1663, %v1867
        %1869 = vmatmul.bf16.gmra.mxu0 %v1313
        %v1870 = vpop.f32.mrf.mxu0
        %v1871 = vadd.f32 %v1661, %v1870
        %v1872 = vpop.f32.mrf.mxu0
        %v1873 = vadd.f32 %v1659, %v1872
        %1874 = vmatmul.bf16.gmra.mxu0 %v1315
        %v1875 = vpop.f32.mrf.mxu0
        %v1876 = vadd.f32 %v1657, %v1875
        %v1877 = vpop.f32.mrf.mxu0
        %v1878 = vadd.f32 %v1679, %v1877
        %1879 = vdwg.mxu0
        %1880 = vmatpush.bf16.msra.mxu0 %v1807
        %1881 = vmatpush.bf16.msra.mxu0 %v1805
        %1882 = vmatpush.bf16.msra.mxu0 %v1803
        %1883 = vmatpush.bf16.msra.mxu0 %v1801
        %1884 = vmatpush.bf16.msra.mxu0 %v1799
        %1885 = vmatpush.bf16.msra.mxu0 %v1797
        %1886 = vmatpush.bf16.msra.mxu0 %v1795
        %1887 = vmatpush.bf16.msra.mxu0 %v1793
        %1888 = vmatmul.bf16.gmra.mxu0 %v1306
        %v1889 = vpop.f32.mrf.mxu0
        %v1890 = vadd.f32 %v1851, %v1889
        %v1891 = vpop.f32.mrf.mxu0
        %v1892 = vadd.f32 %v1853, %v1891
        %1893 = vmatmul.bf16.gmra.mxu0 %v1308
        %v1894 = vpop.f32.mrf.mxu0
        %v1895 = vadd.f32 %v1856, %v1894
        %v1896 = vpop.f32.mrf.mxu0
        %v1897 = vadd.f32 %v1858, %v1896
        %1898 = vmatmul.bf16.gmra.mxu0 %v1310
        %v1899 = vpop.f32.mrf.mxu0
        %v1900 = vadd.f32 %v1861, %v1899
        %v1901 = vpop.f32.mrf.mxu0
        %v1902 = vadd.f32 %v1863, %v1901
        %1903 = vmatmul.bf16.gmra.mxu0 %v1312
        %v1904 = vpop.f32.mrf.mxu0
        %v1905 = vadd.f32 %v1866, %v1904
        %v1906 = vpop.f32.mrf.mxu0
        %v1907 = vadd.f32 %v1868, %v1906
        %1908 = vmatmul.bf16.gmra.mxu0 %v1314
        %v1909 = vpop.f32.mrf.mxu0
        %v1910 = vadd.f32 %v1871, %v1909
        %v1911 = vpop.f32.mrf.mxu0
        %v1912 = vadd.f32 %v1873, %v1911
        %1913 = vmatmul.bf16.gmra.mxu0 %v1316
        %v1914 = vpop.f32.mrf.mxu0
        %v1915 = vadd.f32 %v1876, %v1914
        %v1916 = vpop.f32.mrf.mxu0
        %v1917 = vadd.f32 %v1878, %v1916
        %1918 = vdwg.mxu0
        %1919 = vmatpush.bf16.msra.mxu0 %v1792
        %1920 = vmatpush.bf16.msra.mxu0 %v1790
        %1921 = vmatpush.bf16.msra.mxu0 %v1788
        %1922 = vmatpush.bf16.msra.mxu0 %v1786
        %1923 = vmatpush.bf16.msra.mxu0 %v1784
        %1924 = vmatpush.bf16.msra.mxu0 %v1782
        %1925 = vmatpush.bf16.msra.mxu0 %v1780
        %1926 = vmatpush.bf16.msra.mxu0 %v1778
        %1927 = vmatmul.bf16.gmra.mxu0 %v1305
        %v1928 = vpop.f32.mrf.mxu0
        %v1929 = vadd.f32 %v1678, %v1928
        %v1930 = vpop.f32.mrf.mxu0
        %v1931 = vadd.f32 %v1676, %v1930
        %1932 = vmatmul.bf16.gmra.mxu0 %v1307
        %v1933 = vpop.f32.mrf.mxu0
        %v1934 = vadd.f32 %v1674, %v1933
        %v1935 = vpop.f32.mrf.mxu0
        %v1936 = vadd.f32 %v1672, %v1935
        %1937 = vmatmul.bf16.gmra.mxu0 %v1309
        %v1938 = vpop.f32.mrf.mxu0
        %v1939 = vadd.f32 %v1670, %v1938
        %v1940 = vpop.f32.mrf.mxu0
        %v1941 = vadd.f32 %v1668, %v1940
        %1942 = vmatmul.bf16.gmra.mxu0 %v1311
        %v1943 = vpop.f32.mrf.mxu0
        %v1944 = vadd.f32 %v1666, %v1943
        %v1945 = vpop.f32.mrf.mxu0
        %v1946 = vadd.f32 %v1664, %v1945
        %1947 = vmatmul.bf16.gmra.mxu0 %v1313
        %v1948 = vpop.f32.mrf.mxu0
        %v1949 = vadd.f32 %v1662, %v1948
        %v1950 = vpop.f32.mrf.mxu0
        %v1951 = vadd.f32 %v1660, %v1950
        %1952 = vmatmul.bf16.gmra.mxu0 %v1315
        %v1953 = vpop.f32.mrf.mxu0
        %v1954 = vadd.f32 %v1658, %v1953
        %v1955 = vpop.f32.mrf.mxu0
        %v1956 = vadd.f32 %v1680, %v1955
        %1957 = vdwg.mxu0
        %1958 = vmatpush.bf16.msra.mxu0 %v1808
        %1959 = vmatpush.bf16.msra.mxu0 %v1806
        %1960 = vmatpush.bf16.msra.mxu0 %v1804
        %1961 = vmatpush.bf16.msra.mxu0 %v1802
        %1962 = vmatpush.bf16.msra.mxu0 %v1800
        %1963 = vmatpush.bf16.msra.mxu0 %v1798
        %1964 = vmatpush.bf16.msra.mxu0 %v1796
        %1965 = vmatpush.bf16.msra.mxu0 %v1794
        %1966 = vmatmul.bf16.gmra.mxu0 %v1306
        %v1967 = vpop.f32.mrf.mxu0
        %v1968 = vadd.f32 %v1929, %v1967
        %v1969 = vpop.f32.mrf.mxu0
        %v1970 = vadd.f32 %v1931, %v1969
        %1971 = vmatmul.bf16.gmra.mxu0 %v1308
        %v1972 = vpop.f32.mrf.mxu0
        %v1973 = vadd.f32 %v1934, %v1972
        %v1974 = vpop.f32.mrf.mxu0
        %v1975 = vadd.f32 %v1936, %v1974
        %1976 = vmatmul.bf16.gmra.mxu0 %v1310
        %v1977 = vpop.f32.mrf.mxu0
        %v1978 = vadd.f32 %v1939, %v1977
        %v1979 = vpop.f32.mrf.mxu0
        %v1980 = vadd.f32 %v1941, %v1979
        %1981 = vmatmul.bf16.gmra.mxu0 %v1312
        %v1982 = vpop.f32.mrf.mxu0
        %v1983 = vadd.f32 %v1944, %v1982
        %v1984 = vpop.f32.mrf.mxu0
        %v1985 = vadd.f32 %v1946, %v1984
        %1986 = vmatmul.bf16.gmra.mxu0 %v1314
        %v1987 = vpop.f32.mrf.mxu0
        %v1988 = vadd.f32 %v1949, %v1987
        %v1989 = vpop.f32.mrf.mxu0
        %v1990 = vadd.f32 %v1951, %v1989
        %1991 = vmatmul.bf16.gmra.mxu0 %v1316
        %v1992 = vpop.f32.mrf.mxu0
        %v1993 = vadd.f32 %v1954, %v1992
        %v1994 = vpop.f32.mrf.mxu0
        %v1995 = vadd.f32 %v1956, %v1994
        %1996 = vdwg.mxu0
        %v1998 = vperm.slane %v1280, 0
        %v1999 = vperm.slane %v1280, 1
        %v2002 = vadd.f32 %v1890, %v1998
        %v2003 = vadd.f32 %v1968, %v1999
        %v2004 = vadd.f32 %v1892, %v1998
        %v2005 = vadd.f32 %v1970, %v1999
        %v2006 = vadd.f32 %v1895, %v1998
        %v2007 = vadd.f32 %v1973, %v1999
        %v2008 = vadd.f32 %v1897, %v1998
        %v2009 = vadd.f32 %v1975, %v1999
        %v2010 = vadd.f32 %v1900, %v1998
        %v2011 = vadd.f32 %v1978, %v1999
        %v2012 = vadd.f32 %v1902, %v1998
        %v2013 = vadd.f32 %v1980, %v1999
        %v2014 = vadd.f32 %v1905, %v1998
        %v2015 = vadd.f32 %v1983, %v1999
        %v2016 = vadd.f32 %v1907, %v1998
        %v2017 = vadd.f32 %v1985, %v1999
        %v2018 = vadd.f32 %v1910, %v1998
        %v2019 = vadd.f32 %v1988, %v1999
        %v2020 = vadd.f32 %v1912, %v1998
        %v2021 = vadd.f32 %v1990, %v1999
        %v2022 = vadd.f32 %v1915, %v1998
        %v2023 = vadd.f32 %v1993, %v1999
        %v2024 = vadd.f32 %v1917, %v1998
        %v2025 = vadd.f32 %v1995, %v1999
        %vm2026 = vcmp.lt.s32.totalorder %v745, 15
        %vm2027 = vcmp.lt.s32.totalorder %v746, 15
        %vm2028 = vcmp.lt.s32.totalorder %v747, 15
        %vm2029 = vcmp.lt.s32.totalorder %v748, 15
        %vm2030 = vcmp.lt.s32.totalorder %v749, 15
        %vm2031 = vcmp.lt.s32.totalorder %v750, 15
        %vm2032 = vcmp.lt.s32.totalorder %v751, 15
        %vm2033 = vcmp.lt.s32.totalorder %v752, 15
        %vm2034 = vcmp.lt.s32.totalorder %v753, 15
        %vm2035 = vcmp.lt.s32.totalorder %v754, 15
        %vm2036 = vcmp.lt.s32.totalorder %v755, 15
        %vm2037 = vcmp.lt.s32.totalorder %v756, 15
        %vm2038 = vmand %vm757, %vm2026
        %vm2039 = vmand %vm758, %vm2027
        %vm2040 = vmand %vm759, %vm2028
        %vm2041 = vmand %vm760, %vm2029
        %vm2042 = vmand %vm761, %vm2030
        %vm2043 = vmand %vm762, %vm2031
        %vm2044 = vmand %vm763, %vm2032
        %vm2045 = vmand %vm764, %vm2033
        %vm2046 = vmand %vm765, %vm2034
        %vm2047 = vmand %vm766, %vm2035
        %vm2048 = vmand %vm767, %vm2036
        %vm2049 = vmand %vm768, %vm2037
        %v2050 = vsel %vm2038, 1, 0
        %v2051 = vsel %vm2039, 1, 0
        %v2052 = vsel %vm2040, 1, 0
        %v2053 = vsel %vm2041, 1, 0
        %v2054 = vsel %vm2042, 1, 0
        %v2055 = vsel %vm2043, 1, 0
        %v2056 = vsel %vm2044, 1, 0
        %v2057 = vsel %vm2045, 1, 0
        %v2058 = vsel %vm2046, 1, 0
        %v2059 = vsel %vm2047, 1, 0
        %v2060 = vsel %vm2048, 1, 0
        %v2061 = vsel %vm2049, 1, 0
        %v2062 = vcvt.s32.f32 %v2050
        %v2063 = vcvt.s32.f32 %v2051
        %v2064 = vcvt.s32.f32 %v2052
        %v2065 = vcvt.s32.f32 %v2053
        %v2066 = vcvt.s32.f32 %v2054
        %v2067 = vcvt.s32.f32 %v2055
        %v2068 = vcvt.s32.f32 %v2056
        %v2069 = vcvt.s32.f32 %v2057
        %v2070 = vcvt.s32.f32 %v2058
        %v2071 = vcvt.s32.f32 %v2059
        %v2072 = vcvt.s32.f32 %v2060
        %v2073 = vcvt.s32.f32 %v2061
        %2075 = vset.pattern.permute.xlu0 0
        %2076 = vperm.xlu0 %2075, %v2062
        %v2077 = vpop.permute.xlu0 %2076
        %2080 = vset.pattern.permute.xlu0 0
        %2081 = vperm.xlu0 %2080, %v2063
        %v2082 = vpop.permute.xlu0 %2081
        %2085 = vset.pattern.permute.xlu0 0
        %2086 = vperm.xlu0 %2085, %v2064
        %v2087 = vpop.permute.xlu0 %2086
        %2090 = vset.pattern.permute.xlu0 0
        %2091 = vperm.xlu0 %2090, %v2065
        %v2092 = vpop.permute.xlu0 %2091
        %2095 = vset.pattern.permute.xlu0 0
        %2096 = vperm.xlu0 %2095, %v2066
        %v2097 = vpop.permute.xlu0 %2096
        %2100 = vset.pattern.permute.xlu0 0
        %2101 = vperm.xlu0 %2100, %v2067
        %v2102 = vpop.permute.xlu0 %2101
        %2105 = vset.pattern.permute.xlu0 0
        %2106 = vperm.xlu0 %2105, %v2068
        %v2107 = vpop.permute.xlu0 %2106
        %2110 = vset.pattern.permute.xlu0 0
        %2111 = vperm.xlu0 %2110, %v2069
        %v2112 = vpop.permute.xlu0 %2111
        %2115 = vset.pattern.permute.xlu0 0
        %2116 = vperm.xlu0 %2115, %v2070
        %v2117 = vpop.permute.xlu0 %2116
        %2120 = vset.pattern.permute.xlu0 0
        %2121 = vperm.xlu0 %2120, %v2071
        %v2122 = vpop.permute.xlu0 %2121
        %2125 = vset.pattern.permute.xlu0 0
        %2126 = vperm.xlu0 %2125, %v2072
        %v2127 = vpop.permute.xlu0 %2126
        %2130 = vset.pattern.permute.xlu0 0
        %2131 = vperm.xlu0 %2130, %v2073
        %v2132 = vpop.permute.xlu0 %2131
        %v2134 = vmul.f32 %v2002, %v2077
        %v2135 = vmul.f32 %v2003, %v2077
        %v2136 = vmul.f32 %v2004, %v2082
        %v2137 = vmul.f32 %v2005, %v2082
        %v2138 = vmul.f32 %v2006, %v2087
        %v2139 = vmul.f32 %v2007, %v2087
        %v2140 = vmul.f32 %v2008, %v2092
        %v2141 = vmul.f32 %v2009, %v2092
        %v2142 = vmul.f32 %v2010, %v2097
        %v2143 = vmul.f32 %v2011, %v2097
        %v2144 = vmul.f32 %v2012, %v2102
        %v2145 = vmul.f32 %v2013, %v2102
        %v2146 = vmul.f32 %v2014, %v2107
        %v2147 = vmul.f32 %v2015, %v2107
        %v2148 = vmul.f32 %v2016, %v2112
        %v2149 = vmul.f32 %v2017, %v2112
        %v2150 = vmul.f32 %v2018, %v2117
        %v2151 = vmul.f32 %v2019, %v2117
        %v2152 = vmul.f32 %v2020, %v2122
        %v2153 = vmul.f32 %v2021, %v2122
        %v2154 = vmul.f32 %v2022, %v2127
        %v2155 = vmul.f32 %v2023, %v2127
        %v2156 = vmul.f32 %v2024, %v2132
        %v2157 = vmul.f32 %v2025, %v2132
        %v2158 = vmax.f32 %v2134, 0.0
        %v2159 = vmax.f32 %v2135, 0.0
        %v2160 = vmax.f32 %v2136, 0.0
        %v2161 = vmax.f32 %v2137, 0.0
        %v2162 = vmax.f32 %v2138, 0.0
        %v2163 = vmax.f32 %v2139, 0.0
        %v2164 = vmax.f32 %v2140, 0.0
        %v2165 = vmax.f32 %v2141, 0.0
        %v2166 = vmax.f32 %v2142, 0.0
        %v2167 = vmax.f32 %v2143, 0.0
        %v2168 = vmax.f32 %v2144, 0.0
        %v2169 = vmax.f32 %v2145, 0.0
        %v2170 = vmax.f32 %v2146, 0.0
        %v2171 = vmax.f32 %v2147, 0.0
        %v2172 = vmax.f32 %v2148, 0.0
        %v2173 = vmax.f32 %v2149, 0.0
        %v2174 = vmax.f32 %v2150, 0.0
        %v2175 = vmax.f32 %v2151, 0.0
        %v2176 = vmax.f32 %v2152, 0.0
        %v2177 = vmax.f32 %v2153, 0.0
        %v2178 = vmax.f32 %v2154, 0.0
        %v2179 = vmax.f32 %v2155, 0.0
        %v2180 = vmax.f32 %v2156, 0.0
        %v2181 = vmax.f32 %v2157, 0.0
        %2182 = vst [vmem:[#allocation3] sm:$0xff] %v2158
        %2183 = vst [vmem:[#allocation3 + $0x8] sm:$0xff] %v2159
        %2184 = vst [vmem:[#allocation3 + $0x20] sm:$0xff] %v2160
        %2185 = vst [vmem:[#allocation3 + $0x28] sm:$0xff] %v2161
        %2186 = vst [vmem:[#allocation3 + $0x40] sm:$0xff] %v2162
        %2187 = vst [vmem:[#allocation3 + $0x48] sm:$0xff] %v2163
        %2188 = vst [vmem:[#allocation3 + $0x60] sm:$0xff] %v2164
        %2189 = vst [vmem:[#allocation3 + $0x68] sm:$0xff] %v2165
        %2190 = vst [vmem:[#allocation3 + $0x80] sm:$0xff] %v2166
        %2191 = vst [vmem:[#allocation3 + $0x88] sm:$0xff] %v2167
        %2192 = vst [vmem:[#allocation3 + $0xa0] sm:$0xff] %v2168
        %2193 = vst [vmem:[#allocation3 + $0xa8] sm:$0xff] %v2169
        %2194 = vst [vmem:[#allocation3 + $0xc0] sm:$0xff] %v2170
        %2195 = vst [vmem:[#allocation3 + $0xc8] sm:$0xff] %v2171
        %2196 = vst [vmem:[#allocation3 + $0xe0] sm:$0xff] %v2172
        %2197 = vst [vmem:[#allocation3 + $0xe8] sm:$0xff] %v2173
        %2198 = vst [vmem:[#allocation3 + $0x100] sm:$0xff] %v2174
        %2199 = vst [vmem:[#allocation3 + $0x108] sm:$0xff] %v2175
        %2200 = vst [vmem:[#allocation3 + $0x120] sm:$0xff] %v2176
        %2201 = vst [vmem:[#allocation3 + $0x128] sm:$0xff] %v2177
        %2202 = vst [vmem:[#allocation3 + $0x140] sm:$0xff] %v2178
        %2203 = vst [vmem:[#allocation3 + $0x148] sm:$0xff] %v2179
        %2204 = vst [vmem:[#allocation3 + $0x160] sm:$0xff] %v2180
        %2205 = vst [vmem:[#allocation3 + $0x168] sm:$0xff] %v2181
        %v2206 = vsub.f32 0.0, %v2134
        %v2207 = vsub.f32 0.0, %v2135
        %v2208 = vsub.f32 0.0, %v2136
        %v2209 = vsub.f32 0.0, %v2137
        %v2210 = vsub.f32 0.0, %v2138
        %v2211 = vsub.f32 0.0, %v2139
        %v2212 = vsub.f32 0.0, %v2140
        %v2213 = vsub.f32 0.0, %v2141
        %v2214 = vsub.f32 0.0, %v2142
        %v2215 = vsub.f32 0.0, %v2143
        %v2216 = vsub.f32 0.0, %v2144
        %v2217 = vsub.f32 0.0, %v2145
        %v2218 = vsub.f32 0.0, %v2146
        %v2219 = vsub.f32 0.0, %v2147
        %v2220 = vsub.f32 0.0, %v2148
        %v2221 = vsub.f32 0.0, %v2149
        %v2222 = vsub.f32 0.0, %v2150
        %v2223 = vsub.f32 0.0, %v2151
        %v2224 = vsub.f32 0.0, %v2152
        %v2225 = vsub.f32 0.0, %v2153
        %v2226 = vsub.f32 0.0, %v2154
        %v2227 = vsub.f32 0.0, %v2155
        %v2228 = vsub.f32 0.0, %v2156
        %v2229 = vsub.f32 0.0, %v2157
        %v2230 = vmax.f32 %v2206, 0.0
        %v2231 = vmax.f32 %v2207, 0.0
        %v2232 = vmax.f32 %v2208, 0.0
        %v2233 = vmax.f32 %v2209, 0.0
        %v2234 = vmax.f32 %v2210, 0.0
        %v2235 = vmax.f32 %v2211, 0.0
        %v2236 = vmax.f32 %v2212, 0.0
        %v2237 = vmax.f32 %v2213, 0.0
        %v2238 = vmax.f32 %v2214, 0.0
        %v2239 = vmax.f32 %v2215, 0.0
        %v2240 = vmax.f32 %v2216, 0.0
        %v2241 = vmax.f32 %v2217, 0.0
        %v2242 = vmax.f32 %v2218, 0.0
        %v2243 = vmax.f32 %v2219, 0.0
        %v2244 = vmax.f32 %v2220, 0.0
        %v2245 = vmax.f32 %v2221, 0.0
        %v2246 = vmax.f32 %v2222, 0.0
        %v2247 = vmax.f32 %v2223, 0.0
        %v2248 = vmax.f32 %v2224, 0.0
        %v2249 = vmax.f32 %v2225, 0.0
        %v2250 = vmax.f32 %v2226, 0.0
        %v2251 = vmax.f32 %v2227, 0.0
        %v2252 = vmax.f32 %v2228, 0.0
        %v2253 = vmax.f32 %v2229, 0.0
        %2254 = vst [vmem:[#allocation3 + $0x10] sm:$0xff] %v2230
        %2255 = vst [vmem:[#allocation3 + $0x18] sm:$0xff] %v2231
        %2256 = vst [vmem:[#allocation3 + $0x30] sm:$0xff] %v2232
        %2257 = vst [vmem:[#allocation3 + $0x38] sm:$0xff] %v2233
        %2258 = vst [vmem:[#allocation3 + $0x50] sm:$0xff] %v2234
        %2259 = vst [vmem:[#allocation3 + $0x58] sm:$0xff] %v2235
        %2260 = vst [vmem:[#allocation3 + $0x70] sm:$0xff] %v2236
        %2261 = vst [vmem:[#allocation3 + $0x78] sm:$0xff] %v2237
        %2262 = vst [vmem:[#allocation3 + $0x90] sm:$0xff] %v2238
        %2263 = vst [vmem:[#allocation3 + $0x98] sm:$0xff] %v2239
        %2264 = vst [vmem:[#allocation3 + $0xb0] sm:$0xff] %v2240
        %2265 = vst [vmem:[#allocation3 + $0xb8] sm:$0xff] %v2241
        %2266 = vst [vmem:[#allocation3 + $0xd0] sm:$0xff] %v2242
        %2267 = vst [vmem:[#allocation3 + $0xd8] sm:$0xff] %v2243
        %2268 = vst [vmem:[#allocation3 + $0xf0] sm:$0xff] %v2244
        %2269 = vst [vmem:[#allocation3 + $0xf8] sm:$0xff] %v2245
        %2270 = vst [vmem:[#allocation3 + $0x110] sm:$0xff] %v2246
        %2271 = vst [vmem:[#allocation3 + $0x118] sm:$0xff] %v2247
        %2272 = vst [vmem:[#allocation3 + $0x130] sm:$0xff] %v2248
        %2273 = vst [vmem:[#allocation3 + $0x138] sm:$0xff] %v2249
        %2274 = vst [vmem:[#allocation3 + $0x150] sm:$0xff] %v2250
        %2275 = vst [vmem:[#allocation3 + $0x158] sm:$0xff] %v2251
        %2276 = vst [vmem:[#allocation3 + $0x170] sm:$0xff] %v2252
        %2277 = vst [vmem:[#allocation3 + $0x178] sm:$0xff] %v2253
        %v2278 = vld [vmem:[%s9] sm:$0xff]
        %v2279 = vld [vmem:[%s9 + $0x8] sm:$0xf]
        %v2280 = vld [vmem:[%s9 + $0xc] sm:$0xff]
        %v2281 = vld [vmem:[%s9 + $0x14] sm:$0xf]
        %v2282 = vld [vmem:[%s9 + $0x18] sm:$0xff]
        %v2283 = vld [vmem:[%s9 + $0x20] sm:$0xf]
        %v2284 = vld [vmem:[%s9 + $0x24] sm:$0xff]
        %v2285 = vld [vmem:[%s9 + $0x2c] sm:$0xf]
        %v2286 = vld [vmem:[%s9 + $0x30] sm:$0xff]
        %v2287 = vld [vmem:[%s9 + $0x38] sm:$0xf]
        %v2288 = vld [vmem:[%s9 + $0x3c] sm:$0xff]
        %v2289 = vld [vmem:[%s9 + $0x44] sm:$0xf]
        %v2290 = vld [vmem:[%s9 + $0x48] sm:$0xff]
        %v2291 = vld [vmem:[%s9 + $0x50] sm:$0xf]
        %v2292 = vld [vmem:[%s9 + $0x54] sm:$0xff]
        %v2293 = vld [vmem:[%s9 + $0x5c] sm:$0xf]
        %v2294 = vld [vmem:[%s9 + $0x60] sm:$0xff]
        %v2295 = vld [vmem:[%s9 + $0x68] sm:$0xf]
        %v2296 = vld [vmem:[%s9 + $0x6c] sm:$0xff]
        %v2297 = vld [vmem:[%s9 + $0x74] sm:$0xf]
        %v2298 = vld [vmem:[%s9 + $0x78] sm:$0xff]
        %v2299 = vld [vmem:[%s9 + $0x80] sm:$0xf]
        %v2300 = vld [vmem:[%s9 + $0x84] sm:$0xff]
        %v2301 = vld [vmem:[%s9 + $0x8c] sm:$0xf]
        %v2302 = vld [vmem:[%s9 + $0x90] sm:$0xff]
        %v2303 = vld [vmem:[%s9 + $0x98] sm:$0xf]
        %v2304 = vld [vmem:[%s9 + $0x9c] sm:$0xff]
        %v2305 = vld [vmem:[%s9 + $0xa4] sm:$0xf]
        %v2306 = vld [vmem:[%s9 + $0xa8] sm:$0xff]
        %v2307 = vld [vmem:[%s9 + $0xb0] sm:$0xf]
        %v2308 = vld [vmem:[%s9 + $0xb4] sm:$0xff]
        %v2309 = vld [vmem:[%s9 + $0xbc] sm:$0xf]
        %v2310 = vld [vmem:[%s9 + $0xc0] sm:$0xff]
        %v2311 = vld [vmem:[%s9 + $0xc8] sm:$0xf]
        %v2312 = vld [vmem:[%s9 + $0xcc] sm:$0xff]
        %v2313 = vld [vmem:[%s9 + $0xd4] sm:$0xf]
        %v2314 = vld [vmem:[%s9 + $0xd8] sm:$0xff]
        %v2315 = vld [vmem:[%s9 + $0xe0] sm:$0xf]
        %v2316 = vld [vmem:[%s9 + $0xe4] sm:$0xff]
        %v2317 = vld [vmem:[%s9 + $0xec] sm:$0xf]
        %v2318 = vld [vmem:[%s9 + $0xf0] sm:$0xff]
        %v2319 = vld [vmem:[%s9 + $0xf8] sm:$0xf]
        %v2320 = vld [vmem:[%s9 + $0xfc] sm:$0xff]
        %v2321 = vld [vmem:[%s9 + $0x104] sm:$0xf]
        %v2322 = vld [vmem:[%s9 + $0x108] sm:$0xff]
        %v2323 = vld [vmem:[%s9 + $0x110] sm:$0xf]
        %v2324 = vld [vmem:[%s9 + $0x114] sm:$0xff]
        %v2325 = vld [vmem:[%s9 + $0x11c] sm:$0xf]
        %v2326 = vld [vmem:[%s9 + $0x120] sm:$0xff]
        %v2327 = vld [vmem:[%s9 + $0x128] sm:$0xf]
        %v2328 = vld [vmem:[%s9 + $0x12c] sm:$0xff]
        %v2329 = vld [vmem:[%s9 + $0x134] sm:$0xf]
        %v2330 = vld [vmem:[%s9 + $0x138] sm:$0xff]
        %v2331 = vld [vmem:[%s9 + $0x140] sm:$0xf]
        %v2332 = vld [vmem:[%s9 + $0x144] sm:$0xff]
        %v2333 = vld [vmem:[%s9 + $0x14c] sm:$0xf]
        %v2334 = vld [vmem:[%s9 + $0x150] sm:$0xff]
        %v2335 = vld [vmem:[%s9 + $0x158] sm:$0xf]
        %v2336 = vld [vmem:[%s9 + $0x15c] sm:$0xff]
        %v2337 = vld [vmem:[%s9 + $0x164] sm:$0xf]
        %v2338 = vld [vmem:[%s9 + $0x168] sm:$0xff]
        %v2339 = vld [vmem:[%s9 + $0x170] sm:$0xf]
        %v2340 = vld [vmem:[%s9 + $0x174] sm:$0xff]
        %v2341 = vld [vmem:[%s9 + $0x17c] sm:$0xf]
        %v2342 = vld [vmem:[%s9 + $0x180] sm:$0xff]
        %v2343 = vld [vmem:[%s9 + $0x188] sm:$0xf]
        %v2344 = vld [vmem:[%s9 + $0x18c] sm:$0xff]
        %v2345 = vld [vmem:[%s9 + $0x194] sm:$0xf]
        %v2346 = vld [vmem:[%s9 + $0x198] sm:$0xff]
        %v2347 = vld [vmem:[%s9 + $0x1a0] sm:$0xf]
        %v2348 = vld [vmem:[%s9 + $0x1a4] sm:$0xff]
        %v2349 = vld [vmem:[%s9 + $0x1ac] sm:$0xf]
        %v2350 = vld [vmem:[%s9 + $0x1b0] sm:$0xff]
        %v2351 = vld [vmem:[%s9 + $0x1b8] sm:$0xf]
        %v2352 = vld [vmem:[%s9 + $0x1bc] sm:$0xff]
        %v2353 = vld [vmem:[%s9 + $0x1c4] sm:$0xf]
        %v2354 = vld [vmem:[%s9 + $0x1c8] sm:$0xff]
        %v2355 = vld [vmem:[%s9 + $0x1d0] sm:$0xf]
        %v2356 = vld [vmem:[%s9 + $0x1d4] sm:$0xff]
        %v2357 = vld [vmem:[%s9 + $0x1dc] sm:$0xf]
        %v2358 = vld [vmem:[%s9 + $0x1e0] sm:$0xff]
        %v2359 = vld [vmem:[%s9 + $0x1e8] sm:$0xf]
        %v2360 = vld [vmem:[%s9 + $0x1ec] sm:$0xff]
        %v2361 = vld [vmem:[%s9 + $0x1f4] sm:$0xf]
        %v2362 = vld [vmem:[%s9 + $0x1f8] sm:$0xff]
        %v2363 = vld [vmem:[%s9 + $0x200] sm:$0xf]
        %v2364 = vld [vmem:[%s9 + $0x204] sm:$0xff]
        %v2365 = vld [vmem:[%s9 + $0x20c] sm:$0xf]
        %v2366 = vld [vmem:[%s9 + $0x210] sm:$0xff]
        %v2367 = vld [vmem:[%s9 + $0x218] sm:$0xf]
        %v2368 = vld [vmem:[%s9 + $0x21c] sm:$0xff]
        %v2369 = vld [vmem:[%s9 + $0x224] sm:$0xf]
        %v2370 = vld [vmem:[%s9 + $0x228] sm:$0xff]
        %v2371 = vld [vmem:[%s9 + $0x230] sm:$0xf]
        %v2372 = vld [vmem:[%s9 + $0x234] sm:$0xff]
        %v2373 = vld [vmem:[%s9 + $0x23c] sm:$0xf]
        %v2374 = vld [vmem:[%s9 + $0x240] sm:$0xff]
        %v2375 = vld [vmem:[%s9 + $0x248] sm:$0xf]
        %v2376 = vld [vmem:[%s9 + $0x24c] sm:$0xff]
        %v2377 = vld [vmem:[%s9 + $0x254] sm:$0xf]
        %v2378 = vld [vmem:[%s9 + $0x258] sm:$0xff]
        %v2379 = vld [vmem:[%s9 + $0x260] sm:$0xf]
        %v2380 = vld [vmem:[%s9 + $0x264] sm:$0xff]
        %v2381 = vld [vmem:[%s9 + $0x26c] sm:$0xf]
        %v2382 = vld [vmem:[%s9 + $0x270] sm:$0xff]
        %v2383 = vld [vmem:[%s9 + $0x278] sm:$0xf]
        %v2384 = vld [vmem:[%s9 + $0x27c] sm:$0xff]
        %v2385 = vld [vmem:[%s9 + $0x284] sm:$0xf]
        %v2386 = vld [vmem:[%s9 + $0x288] sm:$0xff]
        %v2387 = vld [vmem:[%s9 + $0x290] sm:$0xf]
        %v2388 = vld [vmem:[%s9 + $0x294] sm:$0xff]
        %v2389 = vld [vmem:[%s9 + $0x29c] sm:$0xf]
        %v2390 = vld [vmem:[%s9 + $0x2a0] sm:$0xff]
        %v2391 = vld [vmem:[%s9 + $0x2a8] sm:$0xf]
        %v2392 = vld [vmem:[%s9 + $0x2ac] sm:$0xff]
        %v2393 = vld [vmem:[%s9 + $0x2b4] sm:$0xf]
        %v2394 = vld [vmem:[%s9 + $0x2b8] sm:$0xff]
        %v2395 = vld [vmem:[%s9 + $0x2c0] sm:$0xf]
        %v2396 = vld [vmem:[%s9 + $0x2c4] sm:$0xff]
        %v2397 = vld [vmem:[%s9 + $0x2cc] sm:$0xf]
        %v2398 = vld [vmem:[%s9 + $0x2d0] sm:$0xff]
        %v2399 = vld [vmem:[%s9 + $0x2d8] sm:$0xf]
        %v2400 = vld [vmem:[%s9 + $0x2dc] sm:$0xff]
        %v2401 = vld [vmem:[%s9 + $0x2e4] sm:$0xf]
        %v2402 = vld [vmem:[%s9 + $0x2e8] sm:$0xff]
        %v2403 = vld [vmem:[%s9 + $0x2f0] sm:$0xf]
        %v2404 = vld [vmem:[%s9 + $0x2f4] sm:$0xff]
        %v2405 = vld [vmem:[%s9 + $0x2fc] sm:$0xf]
        %v2406 = vld [vmem:[#allocation6] sm:$0xff]
        %v2407 = vld [vmem:[#allocation6 + $0x8] sm:$0xf]
        %v2408 = vld [vmem:[#allocation6 + $0xc] sm:$0xff]
        %v2409 = vld [vmem:[#allocation6 + $0x14] sm:$0xf]
        %v2410 = vld [vmem:[#allocation6 + $0x18] sm:$0xff]
        %v2411 = vld [vmem:[#allocation6 + $0x20] sm:$0xf]
        %v2412 = vld [vmem:[#allocation6 + $0x24] sm:$0xff]
        %v2413 = vld [vmem:[#allocation6 + $0x2c] sm:$0xf]
        %v2414 = vld [vmem:[#allocation6 + $0x30] sm:$0xff]
        %v2415 = vld [vmem:[#allocation6 + $0x38] sm:$0xf]
        %v2416 = vld [vmem:[#allocation6 + $0x3c] sm:$0xff]
        %v2417 = vld [vmem:[#allocation6 + $0x44] sm:$0xf]
        %v2418 = vld [vmem:[#allocation6 + $0x48] sm:$0xff]
        %v2419 = vld [vmem:[#allocation6 + $0x50] sm:$0xf]
        %v2420 = vld [vmem:[#allocation6 + $0x54] sm:$0xff]
        %v2421 = vld [vmem:[#allocation6 + $0x5c] sm:$0xf]
        %v2422 = vld [vmem:[#allocation6 + $0x60] sm:$0xff]
        %v2423 = vld [vmem:[#allocation6 + $0x68] sm:$0xf]
        %v2424 = vld [vmem:[#allocation6 + $0x6c] sm:$0xff]
        %v2425 = vld [vmem:[#allocation6 + $0x74] sm:$0xf]
        %v2426 = vld [vmem:[#allocation6 + $0x78] sm:$0xff]
        %v2427 = vld [vmem:[#allocation6 + $0x80] sm:$0xf]
        %v2428 = vld [vmem:[#allocation6 + $0x84] sm:$0xff]
        %v2429 = vld [vmem:[#allocation6 + $0x8c] sm:$0xf]
        %v2430 = vld [vmem:[#allocation6 + $0x90] sm:$0xff]
        %v2431 = vld [vmem:[#allocation6 + $0x98] sm:$0xf]
        %v2432 = vld [vmem:[#allocation6 + $0x9c] sm:$0xff]
        %v2433 = vld [vmem:[#allocation6 + $0xa4] sm:$0xf]
        %v2434 = vld [vmem:[#allocation6 + $0xa8] sm:$0xff]
        %v2435 = vld [vmem:[#allocation6 + $0xb0] sm:$0xf]
        %v2436 = vld [vmem:[#allocation6 + $0xb4] sm:$0xff]
        %v2437 = vld [vmem:[#allocation6 + $0xbc] sm:$0xf]
        %v2438 = vld [vmem:[#allocation6 + $0xc0] sm:$0xff]
        %v2439 = vld [vmem:[#allocation6 + $0xc8] sm:$0xf]
        %v2440 = vld [vmem:[#allocation6 + $0xcc] sm:$0xff]
        %v2441 = vld [vmem:[#allocation6 + $0xd4] sm:$0xf]
        %v2442 = vld [vmem:[#allocation6 + $0xd8] sm:$0xff]
        %v2443 = vld [vmem:[#allocation6 + $0xe0] sm:$0xf]
        %v2444 = vld [vmem:[#allocation6 + $0xe4] sm:$0xff]
        %v2445 = vld [vmem:[#allocation6 + $0xec] sm:$0xf]
        %v2446 = vld [vmem:[#allocation6 + $0xf0] sm:$0xff]
        %v2447 = vld [vmem:[#allocation6 + $0xf8] sm:$0xf]
        %v2448 = vld [vmem:[#allocation6 + $0xfc] sm:$0xff]
        %v2449 = vld [vmem:[#allocation6 + $0x104] sm:$0xf]
        %v2450 = vld [vmem:[#allocation6 + $0x108] sm:$0xff]
        %v2451 = vld [vmem:[#allocation6 + $0x110] sm:$0xf]
        %v2452 = vld [vmem:[#allocation6 + $0x114] sm:$0xff]
        %v2453 = vld [vmem:[#allocation6 + $0x11c] sm:$0xf]
        %v2454 = vld [vmem:[#allocation6 + $0x120] sm:$0xff]
        %v2455 = vld [vmem:[#allocation6 + $0x128] sm:$0xf]
        %v2456 = vld [vmem:[#allocation6 + $0x12c] sm:$0xff]
        %v2457 = vld [vmem:[#allocation6 + $0x134] sm:$0xf]
        %v2458 = vld [vmem:[#allocation6 + $0x138] sm:$0xff]
        %v2459 = vld [vmem:[#allocation6 + $0x140] sm:$0xf]
        %v2460 = vld [vmem:[#allocation6 + $0x144] sm:$0xff]
        %v2461 = vld [vmem:[#allocation6 + $0x14c] sm:$0xf]
        %v2462 = vld [vmem:[#allocation6 + $0x150] sm:$0xff]
        %v2463 = vld [vmem:[#allocation6 + $0x158] sm:$0xf]
        %v2464 = vld [vmem:[#allocation6 + $0x15c] sm:$0xff]
        %v2465 = vld [vmem:[#allocation6 + $0x164] sm:$0xf]
        %v2466 = vld [vmem:[#allocation6 + $0x168] sm:$0xff]
        %v2467 = vld [vmem:[#allocation6 + $0x170] sm:$0xf]
        %v2468 = vld [vmem:[#allocation6 + $0x174] sm:$0xff]
        %v2469 = vld [vmem:[#allocation6 + $0x17c] sm:$0xf]
        %v2470 = vld [vmem:[#allocation6 + $0x180] sm:$0xff]
        %v2471 = vld [vmem:[#allocation6 + $0x188] sm:$0xf]
        %v2472 = vld [vmem:[#allocation6 + $0x18c] sm:$0xff]
        %v2473 = vld [vmem:[#allocation6 + $0x194] sm:$0xf]
        %v2474 = vld [vmem:[#allocation6 + $0x198] sm:$0xff]
        %v2475 = vld [vmem:[#allocation6 + $0x1a0] sm:$0xf]
        %v2476 = vld [vmem:[#allocation6 + $0x1a4] sm:$0xff]
        %v2477 = vld [vmem:[#allocation6 + $0x1ac] sm:$0xf]
        %v2478 = vld [vmem:[#allocation6 + $0x1b0] sm:$0xff]
        %v2479 = vld [vmem:[#allocation6 + $0x1b8] sm:$0xf]
        %v2480 = vld [vmem:[#allocation6 + $0x1bc] sm:$0xff]
        %v2481 = vld [vmem:[#allocation6 + $0x1c4] sm:$0xf]
        %v2482 = vld [vmem:[#allocation6 + $0x1c8] sm:$0xff]
        %v2483 = vld [vmem:[#allocation6 + $0x1d0] sm:$0xf]
        %v2484 = vld [vmem:[#allocation6 + $0x1d4] sm:$0xff]
        %v2485 = vld [vmem:[#allocation6 + $0x1dc] sm:$0xf]
        %v2486 = vld [vmem:[#allocation6 + $0x1e0] sm:$0xff]
        %v2487 = vld [vmem:[#allocation6 + $0x1e8] sm:$0xf]
        %v2488 = vld [vmem:[#allocation6 + $0x1ec] sm:$0xff]
        %v2489 = vld [vmem:[#allocation6 + $0x1f4] sm:$0xf]
        %v2490 = vld [vmem:[#allocation6 + $0x1f8] sm:$0xff]
        %v2491 = vld [vmem:[#allocation6 + $0x200] sm:$0xf]
        %v2492 = vld [vmem:[#allocation6 + $0x204] sm:$0xff]
        %v2493 = vld [vmem:[#allocation6 + $0x20c] sm:$0xf]
        %v2494 = vld [vmem:[#allocation6 + $0x210] sm:$0xff]
        %v2495 = vld [vmem:[#allocation6 + $0x218] sm:$0xf]
        %v2496 = vld [vmem:[#allocation6 + $0x21c] sm:$0xff]
        %v2497 = vld [vmem:[#allocation6 + $0x224] sm:$0xf]
        %v2498 = vld [vmem:[#allocation6 + $0x228] sm:$0xff]
        %v2499 = vld [vmem:[#allocation6 + $0x230] sm:$0xf]
        %v2500 = vld [vmem:[#allocation6 + $0x234] sm:$0xff]
        %v2501 = vld [vmem:[#allocation6 + $0x23c] sm:$0xf]
        %v2502 = vld [vmem:[#allocation6 + $0x240] sm:$0xff]
        %v2503 = vld [vmem:[#allocation6 + $0x248] sm:$0xf]
        %v2504 = vld [vmem:[#allocation6 + $0x24c] sm:$0xff]
        %v2505 = vld [vmem:[#allocation6 + $0x254] sm:$0xf]
        %v2506 = vld [vmem:[#allocation6 + $0x258] sm:$0xff]
        %v2507 = vld [vmem:[#allocation6 + $0x260] sm:$0xf]
        %v2508 = vld [vmem:[#allocation6 + $0x264] sm:$0xff]
        %v2509 = vld [vmem:[#allocation6 + $0x26c] sm:$0xf]
        %v2510 = vld [vmem:[#allocation6 + $0x270] sm:$0xff]
        %v2511 = vld [vmem:[#allocation6 + $0x278] sm:$0xf]
        %v2512 = vld [vmem:[#allocation6 + $0x27c] sm:$0xff]
        %v2513 = vld [vmem:[#allocation6 + $0x284] sm:$0xf]
        %v2514 = vld [vmem:[#allocation6 + $0x288] sm:$0xff]
        %v2515 = vld [vmem:[#allocation6 + $0x290] sm:$0xf]
        %v2516 = vld [vmem:[#allocation6 + $0x294] sm:$0xff]
        %v2517 = vld [vmem:[#allocation6 + $0x29c] sm:$0xf]
        %v2518 = vld [vmem:[#allocation6 + $0x2a0] sm:$0xff]
        %v2519 = vld [vmem:[#allocation6 + $0x2a8] sm:$0xf]
        %v2520 = vld [vmem:[#allocation6 + $0x2ac] sm:$0xff]
        %v2521 = vld [vmem:[#allocation6 + $0x2b4] sm:$0xf]
        %v2522 = vld [vmem:[#allocation6 + $0x2b8] sm:$0xff]
        %v2523 = vld [vmem:[#allocation6 + $0x2c0] sm:$0xf]
        %v2524 = vld [vmem:[#allocation6 + $0x2c4] sm:$0xff]
        %v2525 = vld [vmem:[#allocation6 + $0x2cc] sm:$0xf]
        %v2526 = vld [vmem:[#allocation6 + $0x2d0] sm:$0xff]
        %v2527 = vld [vmem:[#allocation6 + $0x2d8] sm:$0xf]
        %v2528 = vld [vmem:[#allocation6 + $0x2dc] sm:$0xff]
        %v2529 = vld [vmem:[#allocation6 + $0x2e4] sm:$0xf]
        %v2530 = vld [vmem:[#allocation6 + $0x2e8] sm:$0xff]
        %v2531 = vld [vmem:[#allocation6 + $0x2f0] sm:$0xf]
        %v2532 = vld [vmem:[#allocation6 + $0x2f4] sm:$0xff]
        %v2533 = vld [vmem:[#allocation6 + $0x2fc] sm:$0xf]
        %v2534 = vld [vmem:[%s11] sm:$0x7]
        %v2535 = vld [vmem:[#allocation3] sm:$0xff]
        %v2536 = vld [vmem:[#allocation3 + $0x8] sm:$0xff]
        %v2537 = vld [vmem:[#allocation3 + $0x10] sm:$0xff]
        %v2538 = vld [vmem:[#allocation3 + $0x18] sm:$0xff]
        %v2539 = vld [vmem:[#allocation3 + $0x20] sm:$0xff]
        %v2540 = vld [vmem:[#allocation3 + $0x28] sm:$0xff]
        %v2541 = vld [vmem:[#allocation3 + $0x30] sm:$0xff]
        %v2542 = vld [vmem:[#allocation3 + $0x38] sm:$0xff]
        %v2543 = vld [vmem:[#allocation3 + $0x40] sm:$0xff]
        %v2544 = vld [vmem:[#allocation3 + $0x48] sm:$0xff]
        %v2545 = vld [vmem:[#allocation3 + $0x50] sm:$0xff]
        %v2546 = vld [vmem:[#allocation3 + $0x58] sm:$0xff]
        %v2547 = vld [vmem:[#allocation3 + $0x60] sm:$0xff]
        %v2548 = vld [vmem:[#allocation3 + $0x68] sm:$0xff]
        %v2549 = vld [vmem:[#allocation3 + $0x70] sm:$0xff]
        %v2550 = vld [vmem:[#allocation3 + $0x78] sm:$0xff]
        %v2551 = vld [vmem:[#allocation3 + $0x80] sm:$0xff]
        %v2552 = vld [vmem:[#allocation3 + $0x88] sm:$0xff]
        %v2553 = vld [vmem:[#allocation3 + $0x90] sm:$0xff]
        %v2554 = vld [vmem:[#allocation3 + $0x98] sm:$0xff]
        %v2555 = vld [vmem:[#allocation3 + $0xa0] sm:$0xff]
        %v2556 = vld [vmem:[#allocation3 + $0xa8] sm:$0xff]
        %v2557 = vld [vmem:[#allocation3 + $0xb0] sm:$0xff]
        %v2558 = vld [vmem:[#allocation3 + $0xb8] sm:$0xff]
        %v2559 = vld [vmem:[#allocation3 + $0xc0] sm:$0xff]
        %v2560 = vld [vmem:[#allocation3 + $0xc8] sm:$0xff]
        %v2561 = vld [vmem:[#allocation3 + $0xd0] sm:$0xff]
        %v2562 = vld [vmem:[#allocation3 + $0xd8] sm:$0xff]
        %v2563 = vld [vmem:[#allocation3 + $0xe0] sm:$0xff]
        %v2564 = vld [vmem:[#allocation3 + $0xe8] sm:$0xff]
        %v2565 = vld [vmem:[#allocation3 + $0xf0] sm:$0xff]
        %v2566 = vld [vmem:[#allocation3 + $0xf8] sm:$0xff]
        %v2567 = vld [vmem:[#allocation3 + $0x100] sm:$0xff]
        %v2568 = vld [vmem:[#allocation3 + $0x108] sm:$0xff]
        %v2569 = vld [vmem:[#allocation3 + $0x110] sm:$0xff]
        %v2570 = vld [vmem:[#allocation3 + $0x118] sm:$0xff]
        %v2571 = vld [vmem:[#allocation3 + $0x120] sm:$0xff]
        %v2572 = vld [vmem:[#allocation3 + $0x128] sm:$0xff]
        %v2573 = vld [vmem:[#allocation3 + $0x130] sm:$0xff]
        %v2574 = vld [vmem:[#allocation3 + $0x138] sm:$0xff]
        %v2575 = vld [vmem:[#allocation3 + $0x140] sm:$0xff]
        %v2576 = vld [vmem:[#allocation3 + $0x148] sm:$0xff]
        %v2577 = vld [vmem:[#allocation3 + $0x150] sm:$0xff]
        %v2578 = vld [vmem:[#allocation3 + $0x158] sm:$0xff]
        %v2579 = vld [vmem:[#allocation3 + $0x160] sm:$0xff]
        %v2580 = vld [vmem:[#allocation3 + $0x168] sm:$0xff]
        %v2581 = vld [vmem:[#allocation3 + $0x170] sm:$0xff]
        %v2582 = vld [vmem:[#allocation3 + $0x178] sm:$0xff]
        %v2583 = vpack.c.bf16 %v2539, %v2535
        %v2584 = vpack.c.bf16 %v2540, %v2536
        %v2585 = vpack.c.bf16 %v2541, %v2537
        %v2586 = vpack.c.bf16 %v2542, %v2538
        %v2587 = vpack.c.bf16 %v2547, %v2543
        %v2588 = vpack.c.bf16 %v2548, %v2544
        %v2589 = vpack.c.bf16 %v2549, %v2545
        %v2590 = vpack.c.bf16 %v2550, %v2546
        %v2591 = vpack.c.bf16 %v2555, %v2551
        %v2592 = vpack.c.bf16 %v2556, %v2552
        %v2593 = vpack.c.bf16 %v2557, %v2553
        %v2594 = vpack.c.bf16 %v2558, %v2554
        %v2595 = vpack.c.bf16 %v2563, %v2559
        %v2596 = vpack.c.bf16 %v2564, %v2560
        %v2597 = vpack.c.bf16 %v2565, %v2561
        %v2598 = vpack.c.bf16 %v2566, %v2562
        %v2599 = vpack.c.bf16 %v2571, %v2567
        %v2600 = vpack.c.bf16 %v2572, %v2568
        %v2601 = vpack.c.bf16 %v2573, %v2569
        %v2602 = vpack.c.bf16 %v2574, %v2570
        %v2603 = vpack.c.bf16 %v2579, %v2575
        %v2604 = vpack.c.bf16 %v2580, %v2576
        %v2605 = vpack.c.bf16 %v2581, %v2577
        %v2606 = vpack.c.bf16 %v2582, %v2578
        %v2735 = vunpack.c.l.b16 %v2406
        %v2736 = vunpack.c.h.b16 %v2406
        %v2737 = vunpack.c.l.b16 %v2407
        %v2738 = vunpack.c.l.b16 %v2408
        %v2739 = vunpack.c.h.b16 %v2408
        %v2740 = vunpack.c.l.b16 %v2409
        %v2741 = vunpack.c.l.b16 %v2410
        %v2742 = vunpack.c.h.b16 %v2410
        %v2743 = vunpack.c.l.b16 %v2411
        %v2744 = vunpack.c.l.b16 %v2412
        %v2745 = vunpack.c.h.b16 %v2412
        %v2746 = vunpack.c.l.b16 %v2413
        %v2747 = vunpack.c.l.b16 %v2414
        %v2748 = vunpack.c.h.b16 %v2414
        %v2749 = vunpack.c.l.b16 %v2415
        %v2750 = vunpack.c.l.b16 %v2416
        %v2751 = vunpack.c.h.b16 %v2416
        %v2752 = vunpack.c.l.b16 %v2417
        %v2753 = vunpack.c.l.b16 %v2418
        %v2754 = vunpack.c.h.b16 %v2418
        %v2755 = vunpack.c.l.b16 %v2419
        %v2756 = vunpack.c.l.b16 %v2420
        %v2757 = vunpack.c.h.b16 %v2420
        %v2758 = vunpack.c.l.b16 %v2421
        %v2759 = vunpack.c.l.b16 %v2422
        %v2760 = vunpack.c.h.b16 %v2422
        %v2761 = vunpack.c.l.b16 %v2423
        %v2762 = vunpack.c.l.b16 %v2424
        %v2763 = vunpack.c.h.b16 %v2424
        %v2764 = vunpack.c.l.b16 %v2425
        %v2765 = vunpack.c.l.b16 %v2426
        %v2766 = vunpack.c.h.b16 %v2426
        %v2767 = vunpack.c.l.b16 %v2427
        %v2768 = vunpack.c.l.b16 %v2428
        %v2769 = vunpack.c.h.b16 %v2428
        %v2770 = vunpack.c.l.b16 %v2429
        %v2771 = vunpack.c.l.b16 %v2430
        %v2772 = vunpack.c.h.b16 %v2430
        %v2773 = vunpack.c.l.b16 %v2431
        %v2774 = vunpack.c.l.b16 %v2432
        %v2775 = vunpack.c.h.b16 %v2432
        %v2776 = vunpack.c.l.b16 %v2433
        %v2777 = vunpack.c.l.b16 %v2434
        %v2778 = vunpack.c.h.b16 %v2434
        %v2779 = vunpack.c.l.b16 %v2435
        %v2780 = vunpack.c.l.b16 %v2436
        %v2781 = vunpack.c.h.b16 %v2436
        %v2782 = vunpack.c.l.b16 %v2437
        %v2783 = vunpack.c.l.b16 %v2438
        %v2784 = vunpack.c.h.b16 %v2438
        %v2785 = vunpack.c.l.b16 %v2439
        %v2786 = vunpack.c.l.b16 %v2440
        %v2787 = vunpack.c.h.b16 %v2440
        %v2788 = vunpack.c.l.b16 %v2441
        %v2789 = vunpack.c.l.b16 %v2442
        %v2790 = vunpack.c.h.b16 %v2442
        %v2791 = vunpack.c.l.b16 %v2443
        %v2792 = vunpack.c.l.b16 %v2444
        %v2793 = vunpack.c.h.b16 %v2444
        %v2794 = vunpack.c.l.b16 %v2445
        %v2795 = vunpack.c.l.b16 %v2446
        %v2796 = vunpack.c.h.b16 %v2446
        %v2797 = vunpack.c.l.b16 %v2447
        %v2798 = vunpack.c.l.b16 %v2448
        %v2799 = vunpack.c.h.b16 %v2448
        %v2800 = vunpack.c.l.b16 %v2449
        %v2801 = vunpack.c.l.b16 %v2450
        %v2802 = vunpack.c.h.b16 %v2450
        %v2803 = vunpack.c.l.b16 %v2451
        %v2804 = vunpack.c.l.b16 %v2452
        %v2805 = vunpack.c.h.b16 %v2452
        %v2806 = vunpack.c.l.b16 %v2453
        %v2807 = vunpack.c.l.b16 %v2454
        %v2808 = vunpack.c.h.b16 %v2454
        %v2809 = vunpack.c.l.b16 %v2455
        %v2810 = vunpack.c.l.b16 %v2456
        %v2811 = vunpack.c.h.b16 %v2456
        %v2812 = vunpack.c.l.b16 %v2457
        %v2813 = vunpack.c.l.b16 %v2458
        %v2814 = vunpack.c.h.b16 %v2458
        %v2815 = vunpack.c.l.b16 %v2459
        %v2816 = vunpack.c.l.b16 %v2460
        %v2817 = vunpack.c.h.b16 %v2460
        %v2818 = vunpack.c.l.b16 %v2461
        %v2819 = vunpack.c.l.b16 %v2462
        %v2820 = vunpack.c.h.b16 %v2462
        %v2821 = vunpack.c.l.b16 %v2463
        %v2822 = vunpack.c.l.b16 %v2464
        %v2823 = vunpack.c.h.b16 %v2464
        %v2824 = vunpack.c.l.b16 %v2465
        %v2825 = vunpack.c.l.b16 %v2466
        %v2826 = vunpack.c.h.b16 %v2466
        %v2827 = vunpack.c.l.b16 %v2467
        %v2828 = vunpack.c.l.b16 %v2468
        %v2829 = vunpack.c.h.b16 %v2468
        %v2830 = vunpack.c.l.b16 %v2469
        %v2831 = vunpack.c.l.b16 %v2470
        %v2832 = vunpack.c.h.b16 %v2470
        %v2833 = vunpack.c.l.b16 %v2471
        %v2834 = vunpack.c.l.b16 %v2472
        %v2835 = vunpack.c.h.b16 %v2472
        %v2836 = vunpack.c.l.b16 %v2473
        %v2837 = vunpack.c.l.b16 %v2474
        %v2838 = vunpack.c.h.b16 %v2474
        %v2839 = vunpack.c.l.b16 %v2475
        %v2840 = vunpack.c.l.b16 %v2476
        %v2841 = vunpack.c.h.b16 %v2476
        %v2842 = vunpack.c.l.b16 %v2477
        %v2843 = vunpack.c.l.b16 %v2478
        %v2844 = vunpack.c.h.b16 %v2478
        %v2845 = vunpack.c.l.b16 %v2479
        %v2846 = vunpack.c.l.b16 %v2480
        %v2847 = vunpack.c.h.b16 %v2480
        %v2848 = vunpack.c.l.b16 %v2481
        %v2849 = vunpack.c.l.b16 %v2482
        %v2850 = vunpack.c.h.b16 %v2482
        %v2851 = vunpack.c.l.b16 %v2483
        %v2852 = vunpack.c.l.b16 %v2484
        %v2853 = vunpack.c.h.b16 %v2484
        %v2854 = vunpack.c.l.b16 %v2485
        %v2855 = vunpack.c.l.b16 %v2486
        %v2856 = vunpack.c.h.b16 %v2486
        %v2857 = vunpack.c.l.b16 %v2487
        %v2858 = vunpack.c.l.b16 %v2488
        %v2859 = vunpack.c.h.b16 %v2488
        %v2860 = vunpack.c.l.b16 %v2489
        %v2861 = vunpack.c.l.b16 %v2490
        %v2862 = vunpack.c.h.b16 %v2490
        %v2863 = vunpack.c.l.b16 %v2491
        %v2864 = vunpack.c.l.b16 %v2492
        %v2865 = vunpack.c.h.b16 %v2492
        %v2866 = vunpack.c.l.b16 %v2493
        %v2867 = vunpack.c.l.b16 %v2494
        %v2868 = vunpack.c.h.b16 %v2494
        %v2869 = vunpack.c.l.b16 %v2495
        %v2870 = vunpack.c.l.b16 %v2496
        %v2871 = vunpack.c.h.b16 %v2496
        %v2872 = vunpack.c.l.b16 %v2497
        %v2873 = vunpack.c.l.b16 %v2498
        %v2874 = vunpack.c.h.b16 %v2498
        %v2875 = vunpack.c.l.b16 %v2499
        %v2876 = vunpack.c.l.b16 %v2500
        %v2877 = vunpack.c.h.b16 %v2500
        %v2878 = vunpack.c.l.b16 %v2501
        %v2879 = vunpack.c.l.b16 %v2502
        %v2880 = vunpack.c.h.b16 %v2502
        %v2881 = vunpack.c.l.b16 %v2503
        %v2882 = vunpack.c.l.b16 %v2504
        %v2883 = vunpack.c.h.b16 %v2504
        %v2884 = vunpack.c.l.b16 %v2505
        %v2885 = vunpack.c.l.b16 %v2506
        %v2886 = vunpack.c.h.b16 %v2506
        %v2887 = vunpack.c.l.b16 %v2507
        %v2888 = vunpack.c.l.b16 %v2508
        %v2889 = vunpack.c.h.b16 %v2508
        %v2890 = vunpack.c.l.b16 %v2509
        %v2891 = vunpack.c.l.b16 %v2510
        %v2892 = vunpack.c.h.b16 %v2510
        %v2893 = vunpack.c.l.b16 %v2511
        %v2894 = vunpack.c.l.b16 %v2512
        %v2895 = vunpack.c.h.b16 %v2512
        %v2896 = vunpack.c.l.b16 %v2513
        %v2897 = vunpack.c.l.b16 %v2514
        %v2898 = vunpack.c.h.b16 %v2514
        %v2899 = vunpack.c.l.b16 %v2515
        %v2900 = vunpack.c.l.b16 %v2516
        %v2901 = vunpack.c.h.b16 %v2516
        %v2902 = vunpack.c.l.b16 %v2517
        %v2903 = vunpack.c.l.b16 %v2518
        %v2904 = vunpack.c.h.b16 %v2518
        %v2905 = vunpack.c.l.b16 %v2519
        %v2906 = vunpack.c.l.b16 %v2520
        %v2907 = vunpack.c.h.b16 %v2520
        %v2908 = vunpack.c.l.b16 %v2521
        %v2909 = vunpack.c.l.b16 %v2522
        %v2910 = vunpack.c.h.b16 %v2522
        %v2911 = vunpack.c.l.b16 %v2523
        %v2912 = vunpack.c.l.b16 %v2524
        %v2913 = vunpack.c.h.b16 %v2524
        %v2914 = vunpack.c.l.b16 %v2525
        %v2915 = vunpack.c.l.b16 %v2526
        %v2916 = vunpack.c.h.b16 %v2526
        %v2917 = vunpack.c.l.b16 %v2527
        %v2918 = vunpack.c.l.b16 %v2528
        %v2919 = vunpack.c.h.b16 %v2528
        %v2920 = vunpack.c.l.b16 %v2529
        %v2921 = vunpack.c.l.b16 %v2530
        %v2922 = vunpack.c.h.b16 %v2530
        %v2923 = vunpack.c.l.b16 %v2531
        %v2924 = vunpack.c.l.b16 %v2532
        %v2925 = vunpack.c.h.b16 %v2532
        %v2926 = vunpack.c.l.b16 %v2533
        %v2927 = vpack.c.b16 %v2738, %v2735
        %v2928 = vpack.c.b16 %v2739, %v2736
        %v2929 = vpack.c.b16 %v2740, %v2737
        %v2930 = vpack.c.b16 %v2744, %v2741
        %v2931 = vpack.c.b16 %v2745, %v2742
        %v2932 = vpack.c.b16 %v2746, %v2743
        %v2933 = vpack.c.b16 %v2750, %v2747
        %v2934 = vpack.c.b16 %v2751, %v2748
        %v2935 = vpack.c.b16 %v2752, %v2749
        %v2936 = vpack.c.b16 %v2756, %v2753
        %v2937 = vpack.c.b16 %v2757, %v2754
        %v2938 = vpack.c.b16 %v2758, %v2755
        %v2939 = vpack.c.b16 %v2762, %v2759
        %v2940 = vpack.c.b16 %v2763, %v2760
        %v2941 = vpack.c.b16 %v2764, %v2761
        %v2942 = vpack.c.b16 %v2768, %v2765
        %v2943 = vpack.c.b16 %v2769, %v2766
        %v2944 = vpack.c.b16 %v2770, %v2767
        %v2945 = vpack.c.b16 %v2774, %v2771
        %v2946 = vpack.c.b16 %v2775, %v2772
        %v2947 = vpack.c.b16 %v2776, %v2773
        %v2948 = vpack.c.b16 %v2780, %v2777
        %v2949 = vpack.c.b16 %v2781, %v2778
        %v2950 = vpack.c.b16 %v2782, %v2779
        %v2951 = vpack.c.b16 %v2786, %v2783
        %v2952 = vpack.c.b16 %v2787, %v2784
        %v2953 = vpack.c.b16 %v2788, %v2785
        %v2954 = vpack.c.b16 %v2792, %v2789
        %v2955 = vpack.c.b16 %v2793, %v2790
        %v2956 = vpack.c.b16 %v2794, %v2791
        %v2957 = vpack.c.b16 %v2798, %v2795
        %v2958 = vpack.c.b16 %v2799, %v2796
        %v2959 = vpack.c.b16 %v2800, %v2797
        %v2960 = vpack.c.b16 %v2804, %v2801
        %v2961 = vpack.c.b16 %v2805, %v2802
        %v2962 = vpack.c.b16 %v2806, %v2803
        %v2963 = vpack.c.b16 %v2810, %v2807
        %v2964 = vpack.c.b16 %v2811, %v2808
        %v2965 = vpack.c.b16 %v2812, %v2809
        %v2966 = vpack.c.b16 %v2816, %v2813
        %v2967 = vpack.c.b16 %v2817, %v2814
        %v2968 = vpack.c.b16 %v2818, %v2815
        %v2969 = vpack.c.b16 %v2822, %v2819
        %v2970 = vpack.c.b16 %v2823, %v2820
        %v2971 = vpack.c.b16 %v2824, %v2821
        %v2972 = vpack.c.b16 %v2828, %v2825
        %v2973 = vpack.c.b16 %v2829, %v2826
        %v2974 = vpack.c.b16 %v2830, %v2827
        %v2975 = vpack.c.b16 %v2834, %v2831
        %v2976 = vpack.c.b16 %v2835, %v2832
        %v2977 = vpack.c.b16 %v2836, %v2833
        %v2978 = vpack.c.b16 %v2840, %v2837
        %v2979 = vpack.c.b16 %v2841, %v2838
        %v2980 = vpack.c.b16 %v2842, %v2839
        %v2981 = vpack.c.b16 %v2846, %v2843
        %v2982 = vpack.c.b16 %v2847, %v2844
        %v2983 = vpack.c.b16 %v2848, %v2845
        %v2984 = vpack.c.b16 %v2852, %v2849
        %v2985 = vpack.c.b16 %v2853, %v2850
        %v2986 = vpack.c.b16 %v2854, %v2851
        %v2987 = vpack.c.b16 %v2858, %v2855
        %v2988 = vpack.c.b16 %v2859, %v2856
        %v2989 = vpack.c.b16 %v2860, %v2857
        %v2990 = vpack.c.b16 %v2864, %v2861
        %v2991 = vpack.c.b16 %v2865, %v2862
        %v2992 = vpack.c.b16 %v2866, %v2863
        %v2993 = vpack.c.b16 %v2870, %v2867
        %v2994 = vpack.c.b16 %v2871, %v2868
        %v2995 = vpack.c.b16 %v2872, %v2869
        %v2996 = vpack.c.b16 %v2876, %v2873
        %v2997 = vpack.c.b16 %v2877, %v2874
        %v2998 = vpack.c.b16 %v2878, %v2875
        %v2999 = vpack.c.b16 %v2882, %v2879
        %v3000 = vpack.c.b16 %v2883, %v2880
        %v3001 = vpack.c.b16 %v2884, %v2881
        %v3002 = vpack.c.b16 %v2888, %v2885
        %v3003 = vpack.c.b16 %v2889, %v2886
        %v3004 = vpack.c.b16 %v2890, %v2887
        %v3005 = vpack.c.b16 %v2894, %v2891
        %v3006 = vpack.c.b16 %v2895, %v2892
        %v3007 = vpack.c.b16 %v2896, %v2893
        %v3008 = vpack.c.b16 %v2900, %v2897
        %v3009 = vpack.c.b16 %v2901, %v2898
        %v3010 = vpack.c.b16 %v2902, %v2899
        %v3011 = vpack.c.b16 %v2906, %v2903
        %v3012 = vpack.c.b16 %v2907, %v2904
        %v3013 = vpack.c.b16 %v2908, %v2905
        %v3014 = vpack.c.b16 %v2912, %v2909
        %v3015 = vpack.c.b16 %v2913, %v2910
        %v3016 = vpack.c.b16 %v2914, %v2911
        %v3017 = vpack.c.b16 %v2918, %v2915
        %v3018 = vpack.c.b16 %v2919, %v2916
        %v3019 = vpack.c.b16 %v2920, %v2917
        %v3020 = vpack.c.b16 %v2924, %v2921
        %v3021 = vpack.c.b16 %v2925, %v2922
        %v3022 = vpack.c.b16 %v2926, %v2923
        %3119 = vmatpush.bf16.msra.mxu0 %v2948
        %3120 = vmatpush.bf16.msra.mxu0 %v2945
        %3121 = vmatpush.bf16.msra.mxu0 %v2942
        %3122 = vmatpush.bf16.msra.mxu0 %v2939
        %3123 = vmatpush.bf16.msra.mxu0 %v2936
        %3124 = vmatpush.bf16.msra.mxu0 %v2933
        %3125 = vmatpush.bf16.msra.mxu0 %v2930
        %3126 = vmatpush.bf16.msra.mxu0 %v2927
        %3127 = vmatmul.bf16.gmra.mxu0 %v2583
        %v3128 = vpop.f32.mrf.mxu0
        %v3129 = vadd.f32 0.0, %v3128
        %v3130 = vpop.f32.mrf.mxu0
        %v3131 = vadd.f32 0.0, %v3130
        %3132 = vmatmul.bf16.gmra.mxu0 %v2587
        %v3133 = vpop.f32.mrf.mxu0
        %v3134 = vadd.f32 0.0, %v3133
        %v3135 = vpop.f32.mrf.mxu0
        %v3136 = vadd.f32 0.0, %v3135
        %3137 = vmatmul.bf16.gmra.mxu0 %v2591
        %v3138 = vpop.f32.mrf.mxu0
        %v3139 = vadd.f32 0.0, %v3138
        %v3140 = vpop.f32.mrf.mxu0
        %v3141 = vadd.f32 0.0, %v3140
        %3142 = vmatmul.bf16.gmra.mxu0 %v2595
        %v3143 = vpop.f32.mrf.mxu0
        %v3144 = vadd.f32 0.0, %v3143
        %v3145 = vpop.f32.mrf.mxu0
        %v3146 = vadd.f32 0.0, %v3145
        %3147 = vmatmul.bf16.gmra.mxu0 %v2599
        %v3148 = vpop.f32.mrf.mxu0
        %v3149 = vadd.f32 0.0, %v3148
        %v3150 = vpop.f32.mrf.mxu0
        %v3151 = vadd.f32 0.0, %v3150
        %3152 = vmatmul.bf16.gmra.mxu0 %v2603
        %v3153 = vpop.f32.mrf.mxu0
        %v3154 = vadd.f32 0.0, %v3153
        %v3155 = vpop.f32.mrf.mxu0
        %v3156 = vadd.f32 0.0, %v3155
        %3157 = vdwg.mxu0
        %3158 = vmatpush.bf16.msra.mxu0 %v2972
        %3159 = vmatpush.bf16.msra.mxu0 %v2969
        %3160 = vmatpush.bf16.msra.mxu0 %v2966
        %3161 = vmatpush.bf16.msra.mxu0 %v2963
        %3162 = vmatpush.bf16.msra.mxu0 %v2960
        %3163 = vmatpush.bf16.msra.mxu0 %v2957
        %3164 = vmatpush.bf16.msra.mxu0 %v2954
        %3165 = vmatpush.bf16.msra.mxu0 %v2951
        %3166 = vmatmul.bf16.gmra.mxu0 %v2584
        %v3167 = vpop.f32.mrf.mxu0
        %v3168 = vadd.f32 %v3129, %v3167
        %v3169 = vpop.f32.mrf.mxu0
        %v3170 = vadd.f32 %v3131, %v3169
        %3171 = vmatmul.bf16.gmra.mxu0 %v2588
        %v3172 = vpop.f32.mrf.mxu0
        %v3173 = vadd.f32 %v3134, %v3172
        %v3174 = vpop.f32.mrf.mxu0
        %v3175 = vadd.f32 %v3136, %v3174
        %3176 = vmatmul.bf16.gmra.mxu0 %v2592
        %v3177 = vpop.f32.mrf.mxu0
        %v3178 = vadd.f32 %v3139, %v3177
        %v3179 = vpop.f32.mrf.mxu0
        %v3180 = vadd.f32 %v3141, %v3179
        %3181 = vmatmul.bf16.gmra.mxu0 %v2596
        %v3182 = vpop.f32.mrf.mxu0
        %v3183 = vadd.f32 %v3144, %v3182
        %v3184 = vpop.f32.mrf.mxu0
        %v3185 = vadd.f32 %v3146, %v3184
        %3186 = vmatmul.bf16.gmra.mxu0 %v2600
        %v3187 = vpop.f32.mrf.mxu0
        %v3188 = vadd.f32 %v3149, %v3187
        %v3189 = vpop.f32.mrf.mxu0
        %v3190 = vadd.f32 %v3151, %v3189
        %3191 = vmatmul.bf16.gmra.mxu0 %v2604
        %v3192 = vpop.f32.mrf.mxu0
        %v3193 = vadd.f32 %v3154, %v3192
        %v3194 = vpop.f32.mrf.mxu0
        %v3195 = vadd.f32 %v3156, %v3194
        %3196 = vdwg.mxu0
        %3197 = vmatpush.bf16.msra.mxu0 %v2996
        %3198 = vmatpush.bf16.msra.mxu0 %v2993
        %3199 = vmatpush.bf16.msra.mxu0 %v2990
        %3200 = vmatpush.bf16.msra.mxu0 %v2987
        %3201 = vmatpush.bf16.msra.mxu0 %v2984
        %3202 = vmatpush.bf16.msra.mxu0 %v2981
        %3203 = vmatpush.bf16.msra.mxu0 %v2978
        %3204 = vmatpush.bf16.msra.mxu0 %v2975
        %3205 = vmatmul.bf16.gmra.mxu0 %v2585
        %v3206 = vpop.f32.mrf.mxu0
        %v3207 = vadd.f32 %v3168, %v3206
        %v3208 = vpop.f32.mrf.mxu0
        %v3209 = vadd.f32 %v3170, %v3208
        %3210 = vmatmul.bf16.gmra.mxu0 %v2589
        %v3211 = vpop.f32.mrf.mxu0
        %v3212 = vadd.f32 %v3173, %v3211
        %v3213 = vpop.f32.mrf.mxu0
        %v3214 = vadd.f32 %v3175, %v3213
        %3215 = vmatmul.bf16.gmra.mxu0 %v2593
        %v3216 = vpop.f32.mrf.mxu0
        %v3217 = vadd.f32 %v3178, %v3216
        %v3218 = vpop.f32.mrf.mxu0
        %v3219 = vadd.f32 %v3180, %v3218
        %3220 = vmatmul.bf16.gmra.mxu0 %v2597
        %v3221 = vpop.f32.mrf.mxu0
        %v3222 = vadd.f32 %v3183, %v3221
        %v3223 = vpop.f32.mrf.mxu0
        %v3224 = vadd.f32 %v3185, %v3223
        %3225 = vmatmul.bf16.gmra.mxu0 %v2601
        %v3226 = vpop.f32.mrf.mxu0
        %v3227 = vadd.f32 %v3188, %v3226
        %v3228 = vpop.f32.mrf.mxu0
        %v3229 = vadd.f32 %v3190, %v3228
        %3230 = vmatmul.bf16.gmra.mxu0 %v2605
        %v3231 = vpop.f32.mrf.mxu0
        %v3232 = vadd.f32 %v3193, %v3231
        %v3233 = vpop.f32.mrf.mxu0
        %v3234 = vadd.f32 %v3195, %v3233
        %3235 = vdwg.mxu0
        %3236 = vmatpush.bf16.msra.mxu0 %v3020
        %3237 = vmatpush.bf16.msra.mxu0 %v3017
        %3238 = vmatpush.bf16.msra.mxu0 %v3014
        %3239 = vmatpush.bf16.msra.mxu0 %v3011
        %3240 = vmatpush.bf16.msra.mxu0 %v3008
        %3241 = vmatpush.bf16.msra.mxu0 %v3005
        %3242 = vmatpush.bf16.msra.mxu0 %v3002
        %3243 = vmatpush.bf16.msra.mxu0 %v2999
        %3244 = vmatmul.bf16.gmra.mxu0 %v2586
        %v3245 = vpop.f32.mrf.mxu0
        %v3246 = vadd.f32 %v3207, %v3245
        %v3247 = vpop.f32.mrf.mxu0
        %v3248 = vadd.f32 %v3209, %v3247
        %3249 = vmatmul.bf16.gmra.mxu0 %v2590
        %v3250 = vpop.f32.mrf.mxu0
        %v3251 = vadd.f32 %v3212, %v3250
        %v3252 = vpop.f32.mrf.mxu0
        %v3253 = vadd.f32 %v3214, %v3252
        %3254 = vmatmul.bf16.gmra.mxu0 %v2594
        %v3255 = vpop.f32.mrf.mxu0
        %v3256 = vadd.f32 %v3217, %v3255
        %v3257 = vpop.f32.mrf.mxu0
        %v3258 = vadd.f32 %v3219, %v3257
        %3259 = vmatmul.bf16.gmra.mxu0 %v2598
        %v3260 = vpop.f32.mrf.mxu0
        %v3261 = vadd.f32 %v3222, %v3260
        %v3262 = vpop.f32.mrf.mxu0
        %v3263 = vadd.f32 %v3224, %v3262
        %3264 = vmatmul.bf16.gmra.mxu0 %v2602
        %v3265 = vpop.f32.mrf.mxu0
        %v3266 = vadd.f32 %v3227, %v3265
        %v3267 = vpop.f32.mrf.mxu0
        %v3268 = vadd.f32 %v3229, %v3267
        %3269 = vmatmul.bf16.gmra.mxu0 %v2606
        %v3270 = vpop.f32.mrf.mxu0
        %v3271 = vadd.f32 %v3232, %v3270
        %v3272 = vpop.f32.mrf.mxu0
        %v3273 = vadd.f32 %v3234, %v3272
        %3274 = vdwg.mxu0
        %3275 = vmatpush.bf16.msra.mxu0 %v2949
        %3276 = vmatpush.bf16.msra.mxu0 %v2946
        %3277 = vmatpush.bf16.msra.mxu0 %v2943
        %3278 = vmatpush.bf16.msra.mxu0 %v2940
        %3279 = vmatpush.bf16.msra.mxu0 %v2937
        %3280 = vmatpush.bf16.msra.mxu0 %v2934
        %3281 = vmatpush.bf16.msra.mxu0 %v2931
        %3282 = vmatpush.bf16.msra.mxu0 %v2928
        %3283 = vmatmul.bf16.gmra.mxu0 %v2583
        %v3284 = vpop.f32.mrf.mxu0
        %v3285 = vadd.f32 0.0, %v3284
        %v3286 = vpop.f32.mrf.mxu0
        %v3287 = vadd.f32 0.0, %v3286
        %3288 = vmatmul.bf16.gmra.mxu0 %v2587
        %v3289 = vpop.f32.mrf.mxu0
        %v3290 = vadd.f32 0.0, %v3289
        %v3291 = vpop.f32.mrf.mxu0
        %v3292 = vadd.f32 0.0, %v3291
        %3293 = vmatmul.bf16.gmra.mxu0 %v2591
        %v3294 = vpop.f32.mrf.mxu0
        %v3295 = vadd.f32 0.0, %v3294
        %v3296 = vpop.f32.mrf.mxu0
        %v3297 = vadd.f32 0.0, %v3296
        %3298 = vmatmul.bf16.gmra.mxu0 %v2595
        %v3299 = vpop.f32.mrf.mxu0
        %v3300 = vadd.f32 0.0, %v3299
        %v3301 = vpop.f32.mrf.mxu0
        %v3302 = vadd.f32 0.0, %v3301
        %3303 = vmatmul.bf16.gmra.mxu0 %v2599
        %v3304 = vpop.f32.mrf.mxu0
        %v3305 = vadd.f32 0.0, %v3304
        %v3306 = vpop.f32.mrf.mxu0
        %v3307 = vadd.f32 0.0, %v3306
        %3308 = vmatmul.bf16.gmra.mxu0 %v2603
        %v3309 = vpop.f32.mrf.mxu0
        %v3310 = vadd.f32 0.0, %v3309
        %v3311 = vpop.f32.mrf.mxu0
        %v3312 = vadd.f32 0.0, %v3311
        %3313 = vdwg.mxu0
        %3314 = vmatpush.bf16.msra.mxu0 %v2973
        %3315 = vmatpush.bf16.msra.mxu0 %v2970
        %3316 = vmatpush.bf16.msra.mxu0 %v2967
        %3317 = vmatpush.bf16.msra.mxu0 %v2964
        %3318 = vmatpush.bf16.msra.mxu0 %v2961
        %3319 = vmatpush.bf16.msra.mxu0 %v2958
        %3320 = vmatpush.bf16.msra.mxu0 %v2955
        %3321 = vmatpush.bf16.msra.mxu0 %v2952
        %3322 = vmatmul.bf16.gmra.mxu0 %v2584
        %v3323 = vpop.f32.mrf.mxu0
        %v3324 = vadd.f32 %v3285, %v3323
        %v3325 = vpop.f32.mrf.mxu0
        %v3326 = vadd.f32 %v3287, %v3325
        %3327 = vmatmul.bf16.gmra.mxu0 %v2588
        %v3328 = vpop.f32.mrf.mxu0
        %v3329 = vadd.f32 %v3290, %v3328
        %v3330 = vpop.f32.mrf.mxu0
        %v3331 = vadd.f32 %v3292, %v3330
        %3332 = vmatmul.bf16.gmra.mxu0 %v2592
        %v3333 = vpop.f32.mrf.mxu0
        %v3334 = vadd.f32 %v3295, %v3333
        %v3335 = vpop.f32.mrf.mxu0
        %v3336 = vadd.f32 %v3297, %v3335
        %3337 = vmatmul.bf16.gmra.mxu0 %v2596
        %v3338 = vpop.f32.mrf.mxu0
        %v3339 = vadd.f32 %v3300, %v3338
        %v3340 = vpop.f32.mrf.mxu0
        %v3341 = vadd.f32 %v3302, %v3340
        %3342 = vmatmul.bf16.gmra.mxu0 %v2600
        %v3343 = vpop.f32.mrf.mxu0
        %v3344 = vadd.f32 %v3305, %v3343
        %v3345 = vpop.f32.mrf.mxu0
        %v3346 = vadd.f32 %v3307, %v3345
        %3347 = vmatmul.bf16.gmra.mxu0 %v2604
        %v3348 = vpop.f32.mrf.mxu0
        %v3349 = vadd.f32 %v3310, %v3348
        %v3350 = vpop.f32.mrf.mxu0
        %v3351 = vadd.f32 %v3312, %v3350
        %3352 = vdwg.mxu0
        %3353 = vmatpush.bf16.msra.mxu0 %v2997
        %3354 = vmatpush.bf16.msra.mxu0 %v2994
        %3355 = vmatpush.bf16.msra.mxu0 %v2991
        %3356 = vmatpush.bf16.msra.mxu0 %v2988
        %3357 = vmatpush.bf16.msra.mxu0 %v2985
        %3358 = vmatpush.bf16.msra.mxu0 %v2982
        %3359 = vmatpush.bf16.msra.mxu0 %v2979
        %3360 = vmatpush.bf16.msra.mxu0 %v2976
        %3361 = vmatmul.bf16.gmra.mxu0 %v2585
        %v3362 = vpop.f32.mrf.mxu0
        %v3363 = vadd.f32 %v3324, %v3362
        %v3364 = vpop.f32.mrf.mxu0
        %v3365 = vadd.f32 %v3326, %v3364
        %3366 = vmatmul.bf16.gmra.mxu0 %v2589
        %v3367 = vpop.f32.mrf.mxu0
        %v3368 = vadd.f32 %v3329, %v3367
        %v3369 = vpop.f32.mrf.mxu0
        %v3370 = vadd.f32 %v3331, %v3369
        %3371 = vmatmul.bf16.gmra.mxu0 %v2593
        %v3372 = vpop.f32.mrf.mxu0
        %v3373 = vadd.f32 %v3334, %v3372
        %v3374 = vpop.f32.mrf.mxu0
        %v3375 = vadd.f32 %v3336, %v3374
        %3376 = vmatmul.bf16.gmra.mxu0 %v2597
        %v3377 = vpop.f32.mrf.mxu0
        %v3378 = vadd.f32 %v3339, %v3377
        %v3379 = vpop.f32.mrf.mxu0
        %v3380 = vadd.f32 %v3341, %v3379
        %3381 = vmatmul.bf16.gmra.mxu0 %v2601
        %v3382 = vpop.f32.mrf.mxu0
        %v3383 = vadd.f32 %v3344, %v3382
        %v3384 = vpop.f32.mrf.mxu0
        %v3385 = vadd.f32 %v3346, %v3384
        %3386 = vmatmul.bf16.gmra.mxu0 %v2605
        %v3387 = vpop.f32.mrf.mxu0
        %v3388 = vadd.f32 %v3349, %v3387
        %v3389 = vpop.f32.mrf.mxu0
        %v3390 = vadd.f32 %v3351, %v3389
        %3391 = vdwg.mxu0
        %3392 = vmatpush.bf16.msra.mxu0 %v3021
        %3393 = vmatpush.bf16.msra.mxu0 %v3018
        %3394 = vmatpush.bf16.msra.mxu0 %v3015
        %3395 = vmatpush.bf16.msra.mxu0 %v3012
        %3396 = vmatpush.bf16.msra.mxu0 %v3009
        %3397 = vmatpush.bf16.msra.mxu0 %v3006
        %3398 = vmatpush.bf16.msra.mxu0 %v3003
        %3399 = vmatpush.bf16.msra.mxu0 %v3000
        %3400 = vmatmul.bf16.gmra.mxu0 %v2586
        %v3401 = vpop.f32.mrf.mxu0
        %v3402 = vadd.f32 %v3363, %v3401
        %v3403 = vpop.f32.mrf.mxu0
        %v3404 = vadd.f32 %v3365, %v3403
        %3405 = vmatmul.bf16.gmra.mxu0 %v2590
        %v3406 = vpop.f32.mrf.mxu0
        %v3407 = vadd.f32 %v3368, %v3406
        %v3408 = vpop.f32.mrf.mxu0
        %v3409 = vadd.f32 %v3370, %v3408
        %3410 = vmatmul.bf16.gmra.mxu0 %v2594
        %v3411 = vpop.f32.mrf.mxu0
        %v3412 = vadd.f32 %v3373, %v3411
        %v3413 = vpop.f32.mrf.mxu0
        %v3414 = vadd.f32 %v3375, %v3413
        %3415 = vmatmul.bf16.gmra.mxu0 %v2598
        %v3416 = vpop.f32.mrf.mxu0
        %v3417 = vadd.f32 %v3378, %v3416
        %v3418 = vpop.f32.mrf.mxu0
        %v3419 = vadd.f32 %v3380, %v3418
        %3420 = vmatmul.bf16.gmra.mxu0 %v2602
        %v3421 = vpop.f32.mrf.mxu0
        %v3422 = vadd.f32 %v3383, %v3421
        %v3423 = vpop.f32.mrf.mxu0
        %v3424 = vadd.f32 %v3385, %v3423
        %3425 = vmatmul.bf16.gmra.mxu0 %v2606
        %v3426 = vpop.f32.mrf.mxu0
        %v3427 = vadd.f32 %v3388, %v3426
        %v3428 = vpop.f32.mrf.mxu0
        %v3429 = vadd.f32 %v3390, %v3428
        %3430 = vdwg.mxu0
        %3431 = vmatpush.bf16.msra.mxu0 %v2950
        %3432 = vmatpush.bf16.msra.mxu0 %v2947
        %3433 = vmatpush.bf16.msra.mxu0 %v2944
        %3434 = vmatpush.bf16.msra.mxu0 %v2941
        %3435 = vmatpush.bf16.msra.mxu0 %v2938
        %3436 = vmatpush.bf16.msra.mxu0 %v2935
        %3437 = vmatpush.bf16.msra.mxu0 %v2932
        %3438 = vmatpush.bf16.msra.mxu0 %v2929
        %3439 = vmatmul.bf16.gmra.mxu0 %v2583
        %v3440 = vpop.f32.mrf.mxu0
        %v3441 = vadd.f32 0.0, %v3440
        %v3442 = vpop.f32.mrf.mxu0
        %v3443 = vadd.f32 0.0, %v3442
        %3444 = vmatmul.bf16.gmra.mxu0 %v2587
        %v3445 = vpop.f32.mrf.mxu0
        %v3446 = vadd.f32 0.0, %v3445
        %v3447 = vpop.f32.mrf.mxu0
        %v3448 = vadd.f32 0.0, %v3447
        %3449 = vmatmul.bf16.gmra.mxu0 %v2591
        %v3450 = vpop.f32.mrf.mxu0
        %v3451 = vadd.f32 0.0, %v3450
        %v3452 = vpop.f32.mrf.mxu0
        %v3453 = vadd.f32 0.0, %v3452
        %3454 = vmatmul.bf16.gmra.mxu0 %v2595
        %v3455 = vpop.f32.mrf.mxu0
        %v3456 = vadd.f32 0.0, %v3455
        %v3457 = vpop.f32.mrf.mxu0
        %v3458 = vadd.f32 0.0, %v3457
        %3459 = vmatmul.bf16.gmra.mxu0 %v2599
        %v3460 = vpop.f32.mrf.mxu0
        %v3461 = vadd.f32 0.0, %v3460
        %v3462 = vpop.f32.mrf.mxu0
        %v3463 = vadd.f32 0.0, %v3462
        %3464 = vmatmul.bf16.gmra.mxu0 %v2603
        %v3465 = vpop.f32.mrf.mxu0
        %v3466 = vadd.f32 0.0, %v3465
        %v3467 = vpop.f32.mrf.mxu0
        %v3468 = vadd.f32 0.0, %v3467
        %3469 = vdwg.mxu0
        %3470 = vmatpush.bf16.msra.mxu0 %v2974
        %3471 = vmatpush.bf16.msra.mxu0 %v2971
        %3472 = vmatpush.bf16.msra.mxu0 %v2968
        %3473 = vmatpush.bf16.msra.mxu0 %v2965
        %3474 = vmatpush.bf16.msra.mxu0 %v2962
        %3475 = vmatpush.bf16.msra.mxu0 %v2959
        %3476 = vmatpush.bf16.msra.mxu0 %v2956
        %3477 = vmatpush.bf16.msra.mxu0 %v2953
        %3478 = vmatmul.bf16.gmra.mxu0 %v2584
        %v3479 = vpop.f32.mrf.mxu0
        %v3480 = vadd.f32 %v3441, %v3479
        %v3481 = vpop.f32.mrf.mxu0
        %v3482 = vadd.f32 %v3443, %v3481
        %3483 = vmatmul.bf16.gmra.mxu0 %v2588
        %v3484 = vpop.f32.mrf.mxu0
        %v3485 = vadd.f32 %v3446, %v3484
        %v3486 = vpop.f32.mrf.mxu0
        %v3487 = vadd.f32 %v3448, %v3486
        %3488 = vmatmul.bf16.gmra.mxu0 %v2592
        %v3489 = vpop.f32.mrf.mxu0
        %v3490 = vadd.f32 %v3451, %v3489
        %v3491 = vpop.f32.mrf.mxu0
        %v3492 = vadd.f32 %v3453, %v3491
        %3493 = vmatmul.bf16.gmra.mxu0 %v2596
        %v3494 = vpop.f32.mrf.mxu0
        %v3495 = vadd.f32 %v3456, %v3494
        %v3496 = vpop.f32.mrf.mxu0
        %v3497 = vadd.f32 %v3458, %v3496
        %3498 = vmatmul.bf16.gmra.mxu0 %v2600
        %v3499 = vpop.f32.mrf.mxu0
        %v3500 = vadd.f32 %v3461, %v3499
        %v3501 = vpop.f32.mrf.mxu0
        %v3502 = vadd.f32 %v3463, %v3501
        %3503 = vmatmul.bf16.gmra.mxu0 %v2604
        %v3504 = vpop.f32.mrf.mxu0
        %v3505 = vadd.f32 %v3466, %v3504
        %v3506 = vpop.f32.mrf.mxu0
        %v3507 = vadd.f32 %v3468, %v3506
        %3508 = vdwg.mxu0
        %3509 = vmatpush.bf16.msra.mxu0 %v2998
        %3510 = vmatpush.bf16.msra.mxu0 %v2995
        %3511 = vmatpush.bf16.msra.mxu0 %v2992
        %3512 = vmatpush.bf16.msra.mxu0 %v2989
        %3513 = vmatpush.bf16.msra.mxu0 %v2986
        %3514 = vmatpush.bf16.msra.mxu0 %v2983
        %3515 = vmatpush.bf16.msra.mxu0 %v2980
        %3516 = vmatpush.bf16.msra.mxu0 %v2977
        %3517 = vmatmul.bf16.gmra.mxu0 %v2585
        %v3518 = vpop.f32.mrf.mxu0
        %v3519 = vadd.f32 %v3480, %v3518
        %v3520 = vpop.f32.mrf.mxu0
        %v3521 = vadd.f32 %v3482, %v3520
        %3522 = vmatmul.bf16.gmra.mxu0 %v2589
        %v3523 = vpop.f32.mrf.mxu0
        %v3524 = vadd.f32 %v3485, %v3523
        %v3525 = vpop.f32.mrf.mxu0
        %v3526 = vadd.f32 %v3487, %v3525
        %3527 = vmatmul.bf16.gmra.mxu0 %v2593
        %v3528 = vpop.f32.mrf.mxu0
        %v3529 = vadd.f32 %v3490, %v3528
        %v3530 = vpop.f32.mrf.mxu0
        %v3531 = vadd.f32 %v3492, %v3530
        %3532 = vmatmul.bf16.gmra.mxu0 %v2597
        %v3533 = vpop.f32.mrf.mxu0
        %v3534 = vadd.f32 %v3495, %v3533
        %v3535 = vpop.f32.mrf.mxu0
        %v3536 = vadd.f32 %v3497, %v3535
        %3537 = vmatmul.bf16.gmra.mxu0 %v2601
        %v3538 = vpop.f32.mrf.mxu0
        %v3539 = vadd.f32 %v3500, %v3538
        %v3540 = vpop.f32.mrf.mxu0
        %v3541 = vadd.f32 %v3502, %v3540
        %3542 = vmatmul.bf16.gmra.mxu0 %v2605
        %v3543 = vpop.f32.mrf.mxu0
        %v3544 = vadd.f32 %v3505, %v3543
        %v3545 = vpop.f32.mrf.mxu0
        %v3546 = vadd.f32 %v3507, %v3545
        %3547 = vdwg.mxu0
        %3548 = vmatpush.bf16.msra.mxu0 %v3022
        %3549 = vmatpush.bf16.msra.mxu0 %v3019
        %3550 = vmatpush.bf16.msra.mxu0 %v3016
        %3551 = vmatpush.bf16.msra.mxu0 %v3013
        %3552 = vmatpush.bf16.msra.mxu0 %v3010
        %3553 = vmatpush.bf16.msra.mxu0 %v3007
        %3554 = vmatpush.bf16.msra.mxu0 %v3004
        %3555 = vmatpush.bf16.msra.mxu0 %v3001
        %3556 = vmatmul.bf16.gmra.mxu0 %v2586
        %v3557 = vpop.f32.mrf.mxu0
        %v3558 = vadd.f32 %v3519, %v3557
        %v3559 = vpop.f32.mrf.mxu0
        %v3560 = vadd.f32 %v3521, %v3559
        %3561 = vmatmul.bf16.gmra.mxu0 %v2590
        %v3562 = vpop.f32.mrf.mxu0
        %v3563 = vadd.f32 %v3524, %v3562
        %v3564 = vpop.f32.mrf.mxu0
        %v3565 = vadd.f32 %v3526, %v3564
        %3566 = vmatmul.bf16.gmra.mxu0 %v2594
        %v3567 = vpop.f32.mrf.mxu0
        %v3568 = vadd.f32 %v3529, %v3567
        %v3569 = vpop.f32.mrf.mxu0
        %v3570 = vadd.f32 %v3531, %v3569
        %3571 = vmatmul.bf16.gmra.mxu0 %v2598
        %v3572 = vpop.f32.mrf.mxu0
        %v3573 = vadd.f32 %v3534, %v3572
        %v3574 = vpop.f32.mrf.mxu0
        %v3575 = vadd.f32 %v3536, %v3574
        %3576 = vmatmul.bf16.gmra.mxu0 %v2602
        %v3577 = vpop.f32.mrf.mxu0
        %v3578 = vadd.f32 %v3539, %v3577
        %v3579 = vpop.f32.mrf.mxu0
        %v3580 = vadd.f32 %v3541, %v3579
        %3581 = vmatmul.bf16.gmra.mxu0 %v2606
        %v3582 = vpop.f32.mrf.mxu0
        %v3583 = vadd.f32 %v3544, %v3582
        %v3584 = vpop.f32.mrf.mxu0
        %v3585 = vadd.f32 %v3546, %v3584
        %3586 = vdwg.mxu0
        %v3587 = vrot.slane %v3246, 1
        %v3588 = vrot.slane %v3402, 1
        %v3589 = vrot.slane %v3558, 1
        %v3590 = vrot.slane %v3248, 1
        %v3591 = vrot.slane %v3404, 1
        %v3592 = vrot.slane %v3560, 1
        %v3593 = vrot.slane %v3251, 1
        %v3594 = vrot.slane %v3407, 1
        %v3595 = vrot.slane %v3563, 1
        %v3596 = vrot.slane %v3253, 1
        %v3597 = vrot.slane %v3409, 1
        %v3598 = vrot.slane %v3565, 1
        %v3599 = vrot.slane %v3256, 1
        %v3600 = vrot.slane %v3412, 1
        %v3601 = vrot.slane %v3568, 1
        %v3602 = vrot.slane %v3258, 1
        %v3603 = vrot.slane %v3414, 1
        %v3604 = vrot.slane %v3570, 1
        %v3605 = vrot.slane %v3261, 1
        %v3606 = vrot.slane %v3417, 1
        %v3607 = vrot.slane %v3573, 1
        %v3608 = vrot.slane %v3263, 1
        %v3609 = vrot.slane %v3419, 1
        %v3610 = vrot.slane %v3575, 1
        %v3611 = vrot.slane %v3266, 1
        %v3612 = vrot.slane %v3422, 1
        %v3613 = vrot.slane %v3578, 1
        %v3614 = vrot.slane %v3268, 1
        %v3615 = vrot.slane %v3424, 1
        %v3616 = vrot.slane %v3580, 1
        %v3617 = vrot.slane %v3271, 1
        %v3618 = vrot.slane %v3427, 1
        %v3619 = vrot.slane %v3583, 1
        %v3620 = vrot.slane %v3273, 1
        %v3621 = vrot.slane %v3429, 1
        %v3622 = vrot.slane %v3585, 1
        %v3623 = vsel %vm921, %v3617, %v3620
        %v3624 = vsel %vm921, %v3618, %v3621
        %v3625 = vsel %vm921, %v3619, %v3622
        %v3626 = vsel %vm921, %v3614, %v3617
        %v3627 = vsel %vm921, %v3615, %v3618
        %v3628 = vsel %vm921, %v3616, %v3619
        %v3629 = vsel %vm921, %v3611, %v3614
        %v3630 = vsel %vm921, %v3612, %v3615
        %v3631 = vsel %vm921, %v3613, %v3616
        %v3632 = vsel %vm921, %v3608, %v3611
        %v3633 = vsel %vm921, %v3609, %v3612
        %v3634 = vsel %vm921, %v3610, %v3613
        %v3635 = vsel %vm921, %v3605, %v3608
        %v3636 = vsel %vm921, %v3606, %v3609
        %v3637 = vsel %vm921, %v3607, %v3610
        %v3638 = vsel %vm921, %v3602, %v3605
        %v3639 = vsel %vm921, %v3603, %v3606
        %v3640 = vsel %vm921, %v3604, %v3607
        %v3641 = vsel %vm921, %v3599, %v3602
        %v3642 = vsel %vm921, %v3600, %v3603
        %v3643 = vsel %vm921, %v3601, %v3604
        %v3644 = vsel %vm921, %v3596, %v3599
        %v3645 = vsel %vm921, %v3597, %v3600
        %v3646 = vsel %vm921, %v3598, %v3601
        %v3647 = vsel %vm921, %v3593, %v3596
        %v3648 = vsel %vm921, %v3594, %v3597
        %v3649 = vsel %vm921, %v3595, %v3598
        %v3650 = vsel %vm921, %v3590, %v3593
        %v3651 = vsel %vm921, %v3591, %v3594
        %v3652 = vsel %vm921, %v3592, %v3595
        %v3653 = vsel %vm921, %v3587, %v3590
        %v3654 = vsel %vm921, %v3588, %v3591
        %v3655 = vsel %vm921, %v3589, %v3592
        %v3656 = vsel %vm921, %v3620, %v3587
        %v3657 = vsel %vm921, %v3621, %v3588
        %v3658 = vsel %vm921, %v3622, %v3589
        %v3787 = vunpack.c.l.b16 %v2278
        %v3788 = vunpack.c.h.b16 %v2278
        %v3789 = vunpack.c.l.b16 %v2279
        %v3790 = vunpack.c.l.b16 %v2280
        %v3791 = vunpack.c.h.b16 %v2280
        %v3792 = vunpack.c.l.b16 %v2281
        %v3793 = vunpack.c.l.b16 %v2282
        %v3794 = vunpack.c.h.b16 %v2282
        %v3795 = vunpack.c.l.b16 %v2283
        %v3796 = vunpack.c.l.b16 %v2284
        %v3797 = vunpack.c.h.b16 %v2284
        %v3798 = vunpack.c.l.b16 %v2285
        %v3799 = vunpack.c.l.b16 %v2286
        %v3800 = vunpack.c.h.b16 %v2286
        %v3801 = vunpack.c.l.b16 %v2287
        %v3802 = vunpack.c.l.b16 %v2288
        %v3803 = vunpack.c.h.b16 %v2288
        %v3804 = vunpack.c.l.b16 %v2289
        %v3805 = vunpack.c.l.b16 %v2290
        %v3806 = vunpack.c.h.b16 %v2290
        %v3807 = vunpack.c.l.b16 %v2291
        %v3808 = vunpack.c.l.b16 %v2292
        %v3809 = vunpack.c.h.b16 %v2292
        %v3810 = vunpack.c.l.b16 %v2293
        %v3811 = vunpack.c.l.b16 %v2294
        %v3812 = vunpack.c.h.b16 %v2294
        %v3813 = vunpack.c.l.b16 %v2295
        %v3814 = vunpack.c.l.b16 %v2296
        %v3815 = vunpack.c.h.b16 %v2296
        %v3816 = vunpack.c.l.b16 %v2297
        %v3817 = vunpack.c.l.b16 %v2298
        %v3818 = vunpack.c.h.b16 %v2298
        %v3819 = vunpack.c.l.b16 %v2299
        %v3820 = vunpack.c.l.b16 %v2300
        %v3821 = vunpack.c.h.b16 %v2300
        %v3822 = vunpack.c.l.b16 %v2301
        %v3823 = vunpack.c.l.b16 %v2302
        %v3824 = vunpack.c.h.b16 %v2302
        %v3825 = vunpack.c.l.b16 %v2303
        %v3826 = vunpack.c.l.b16 %v2304
        %v3827 = vunpack.c.h.b16 %v2304
        %v3828 = vunpack.c.l.b16 %v2305
        %v3829 = vunpack.c.l.b16 %v2306
        %v3830 = vunpack.c.h.b16 %v2306
        %v3831 = vunpack.c.l.b16 %v2307
        %v3832 = vunpack.c.l.b16 %v2308
        %v3833 = vunpack.c.h.b16 %v2308
        %v3834 = vunpack.c.l.b16 %v2309
        %v3835 = vunpack.c.l.b16 %v2310
        %v3836 = vunpack.c.h.b16 %v2310
        %v3837 = vunpack.c.l.b16 %v2311
        %v3838 = vunpack.c.l.b16 %v2312
        %v3839 = vunpack.c.h.b16 %v2312
        %v3840 = vunpack.c.l.b16 %v2313
        %v3841 = vunpack.c.l.b16 %v2314
        %v3842 = vunpack.c.h.b16 %v2314
        %v3843 = vunpack.c.l.b16 %v2315
        %v3844 = vunpack.c.l.b16 %v2316
        %v3845 = vunpack.c.h.b16 %v2316
        %v3846 = vunpack.c.l.b16 %v2317
        %v3847 = vunpack.c.l.b16 %v2318
        %v3848 = vunpack.c.h.b16 %v2318
        %v3849 = vunpack.c.l.b16 %v2319
        %v3850 = vunpack.c.l.b16 %v2320
        %v3851 = vunpack.c.h.b16 %v2320
        %v3852 = vunpack.c.l.b16 %v2321
        %v3853 = vunpack.c.l.b16 %v2322
        %v3854 = vunpack.c.h.b16 %v2322
        %v3855 = vunpack.c.l.b16 %v2323
        %v3856 = vunpack.c.l.b16 %v2324
        %v3857 = vunpack.c.h.b16 %v2324
        %v3858 = vunpack.c.l.b16 %v2325
        %v3859 = vunpack.c.l.b16 %v2326
        %v3860 = vunpack.c.h.b16 %v2326
        %v3861 = vunpack.c.l.b16 %v2327
        %v3862 = vunpack.c.l.b16 %v2328
        %v3863 = vunpack.c.h.b16 %v2328
        %v3864 = vunpack.c.l.b16 %v2329
        %v3865 = vunpack.c.l.b16 %v2330
        %v3866 = vunpack.c.h.b16 %v2330
        %v3867 = vunpack.c.l.b16 %v2331
        %v3868 = vunpack.c.l.b16 %v2332
        %v3869 = vunpack.c.h.b16 %v2332
        %v3870 = vunpack.c.l.b16 %v2333
        %v3871 = vunpack.c.l.b16 %v2334
        %v3872 = vunpack.c.h.b16 %v2334
        %v3873 = vunpack.c.l.b16 %v2335
        %v3874 = vunpack.c.l.b16 %v2336
        %v3875 = vunpack.c.h.b16 %v2336
        %v3876 = vunpack.c.l.b16 %v2337
        %v3877 = vunpack.c.l.b16 %v2338
        %v3878 = vunpack.c.h.b16 %v2338
        %v3879 = vunpack.c.l.b16 %v2339
        %v3880 = vunpack.c.l.b16 %v2340
        %v3881 = vunpack.c.h.b16 %v2340
        %v3882 = vunpack.c.l.b16 %v2341
        %v3883 = vunpack.c.l.b16 %v2342
        %v3884 = vunpack.c.h.b16 %v2342
        %v3885 = vunpack.c.l.b16 %v2343
        %v3886 = vunpack.c.l.b16 %v2344
        %v3887 = vunpack.c.h.b16 %v2344
        %v3888 = vunpack.c.l.b16 %v2345
        %v3889 = vunpack.c.l.b16 %v2346
        %v3890 = vunpack.c.h.b16 %v2346
        %v3891 = vunpack.c.l.b16 %v2347
        %v3892 = vunpack.c.l.b16 %v2348
        %v3893 = vunpack.c.h.b16 %v2348
        %v3894 = vunpack.c.l.b16 %v2349
        %v3895 = vunpack.c.l.b16 %v2350
        %v3896 = vunpack.c.h.b16 %v2350
        %v3897 = vunpack.c.l.b16 %v2351
        %v3898 = vunpack.c.l.b16 %v2352
        %v3899 = vunpack.c.h.b16 %v2352
        %v3900 = vunpack.c.l.b16 %v2353
        %v3901 = vunpack.c.l.b16 %v2354
        %v3902 = vunpack.c.h.b16 %v2354
        %v3903 = vunpack.c.l.b16 %v2355
        %v3904 = vunpack.c.l.b16 %v2356
        %v3905 = vunpack.c.h.b16 %v2356
        %v3906 = vunpack.c.l.b16 %v2357
        %v3907 = vunpack.c.l.b16 %v2358
        %v3908 = vunpack.c.h.b16 %v2358
        %v3909 = vunpack.c.l.b16 %v2359
        %v3910 = vunpack.c.l.b16 %v2360
        %v3911 = vunpack.c.h.b16 %v2360
        %v3912 = vunpack.c.l.b16 %v2361
        %v3913 = vunpack.c.l.b16 %v2362
        %v3914 = vunpack.c.h.b16 %v2362
        %v3915 = vunpack.c.l.b16 %v2363
        %v3916 = vunpack.c.l.b16 %v2364
        %v3917 = vunpack.c.h.b16 %v2364
        %v3918 = vunpack.c.l.b16 %v2365
        %v3919 = vunpack.c.l.b16 %v2366
        %v3920 = vunpack.c.h.b16 %v2366
        %v3921 = vunpack.c.l.b16 %v2367
        %v3922 = vunpack.c.l.b16 %v2368
        %v3923 = vunpack.c.h.b16 %v2368
        %v3924 = vunpack.c.l.b16 %v2369
        %v3925 = vunpack.c.l.b16 %v2370
        %v3926 = vunpack.c.h.b16 %v2370
        %v3927 = vunpack.c.l.b16 %v2371
        %v3928 = vunpack.c.l.b16 %v2372
        %v3929 = vunpack.c.h.b16 %v2372
        %v3930 = vunpack.c.l.b16 %v2373
        %v3931 = vunpack.c.l.b16 %v2374
        %v3932 = vunpack.c.h.b16 %v2374
        %v3933 = vunpack.c.l.b16 %v2375
        %v3934 = vunpack.c.l.b16 %v2376
        %v3935 = vunpack.c.h.b16 %v2376
        %v3936 = vunpack.c.l.b16 %v2377
        %v3937 = vunpack.c.l.b16 %v2378
        %v3938 = vunpack.c.h.b16 %v2378
        %v3939 = vunpack.c.l.b16 %v2379
        %v3940 = vunpack.c.l.b16 %v2380
        %v3941 = vunpack.c.h.b16 %v2380
        %v3942 = vunpack.c.l.b16 %v2381
        %v3943 = vunpack.c.l.b16 %v2382
        %v3944 = vunpack.c.h.b16 %v2382
        %v3945 = vunpack.c.l.b16 %v2383
        %v3946 = vunpack.c.l.b16 %v2384
        %v3947 = vunpack.c.h.b16 %v2384
        %v3948 = vunpack.c.l.b16 %v2385
        %v3949 = vunpack.c.l.b16 %v2386
        %v3950 = vunpack.c.h.b16 %v2386
        %v3951 = vunpack.c.l.b16 %v2387
        %v3952 = vunpack.c.l.b16 %v2388
        %v3953 = vunpack.c.h.b16 %v2388
        %v3954 = vunpack.c.l.b16 %v2389
        %v3955 = vunpack.c.l.b16 %v2390
        %v3956 = vunpack.c.h.b16 %v2390
        %v3957 = vunpack.c.l.b16 %v2391
        %v3958 = vunpack.c.l.b16 %v2392
        %v3959 = vunpack.c.h.b16 %v2392
        %v3960 = vunpack.c.l.b16 %v2393
        %v3961 = vunpack.c.l.b16 %v2394
        %v3962 = vunpack.c.h.b16 %v2394
        %v3963 = vunpack.c.l.b16 %v2395
        %v3964 = vunpack.c.l.b16 %v2396
        %v3965 = vunpack.c.h.b16 %v2396
        %v3966 = vunpack.c.l.b16 %v2397
        %v3967 = vunpack.c.l.b16 %v2398
        %v3968 = vunpack.c.h.b16 %v2398
        %v3969 = vunpack.c.l.b16 %v2399
        %v3970 = vunpack.c.l.b16 %v2400
        %v3971 = vunpack.c.h.b16 %v2400
        %v3972 = vunpack.c.l.b16 %v2401
        %v3973 = vunpack.c.l.b16 %v2402
        %v3974 = vunpack.c.h.b16 %v2402
        %v3975 = vunpack.c.l.b16 %v2403
        %v3976 = vunpack.c.l.b16 %v2404
        %v3977 = vunpack.c.h.b16 %v2404
        %v3978 = vunpack.c.l.b16 %v2405
        %v3979 = vpack.c.b16 %v3790, %v3787
        %v3980 = vpack.c.b16 %v3791, %v3788
        %v3981 = vpack.c.b16 %v3792, %v3789
        %v3982 = vpack.c.b16 %v3796, %v3793
        %v3983 = vpack.c.b16 %v3797, %v3794
        %v3984 = vpack.c.b16 %v3798, %v3795
        %v3985 = vpack.c.b16 %v3802, %v3799
        %v3986 = vpack.c.b16 %v3803, %v3800
        %v3987 = vpack.c.b16 %v3804, %v3801
        %v3988 = vpack.c.b16 %v3808, %v3805
        %v3989 = vpack.c.b16 %v3809, %v3806
        %v3990 = vpack.c.b16 %v3810, %v3807
        %v3991 = vpack.c.b16 %v3814, %v3811
        %v3992 = vpack.c.b16 %v3815, %v3812
        %v3993 = vpack.c.b16 %v3816, %v3813
        %v3994 = vpack.c.b16 %v3820, %v3817
        %v3995 = vpack.c.b16 %v3821, %v3818
        %v3996 = vpack.c.b16 %v3822, %v3819
        %v3997 = vpack.c.b16 %v3826, %v3823
        %v3998 = vpack.c.b16 %v3827, %v3824
        %v3999 = vpack.c.b16 %v3828, %v3825
        %v4000 = vpack.c.b16 %v3832, %v3829
        %v4001 = vpack.c.b16 %v3833, %v3830
        %v4002 = vpack.c.b16 %v3834, %v3831
        %v4003 = vpack.c.b16 %v3838, %v3835
        %v4004 = vpack.c.b16 %v3839, %v3836
        %v4005 = vpack.c.b16 %v3840, %v3837
        %v4006 = vpack.c.b16 %v3844, %v3841
        %v4007 = vpack.c.b16 %v3845, %v3842
        %v4008 = vpack.c.b16 %v3846, %v3843
        %v4009 = vpack.c.b16 %v3850, %v3847
        %v4010 = vpack.c.b16 %v3851, %v3848
        %v4011 = vpack.c.b16 %v3852, %v3849
        %v4012 = vpack.c.b16 %v3856, %v3853
        %v4013 = vpack.c.b16 %v3857, %v3854
        %v4014 = vpack.c.b16 %v3858, %v3855
        %v4015 = vpack.c.b16 %v3862, %v3859
        %v4016 = vpack.c.b16 %v3863, %v3860
        %v4017 = vpack.c.b16 %v3864, %v3861
        %v4018 = vpack.c.b16 %v3868, %v3865
        %v4019 = vpack.c.b16 %v3869, %v3866
        %v4020 = vpack.c.b16 %v3870, %v3867
        %v4021 = vpack.c.b16 %v3874, %v3871
        %v4022 = vpack.c.b16 %v3875, %v3872
        %v4023 = vpack.c.b16 %v3876, %v3873
        %v4024 = vpack.c.b16 %v3880, %v3877
        %v4025 = vpack.c.b16 %v3881, %v3878
        %v4026 = vpack.c.b16 %v3882, %v3879
        %v4027 = vpack.c.b16 %v3886, %v3883
        %v4028 = vpack.c.b16 %v3887, %v3884
        %v4029 = vpack.c.b16 %v3888, %v3885
        %v4030 = vpack.c.b16 %v3892, %v3889
        %v4031 = vpack.c.b16 %v3893, %v3890
        %v4032 = vpack.c.b16 %v3894, %v3891
        %v4033 = vpack.c.b16 %v3898, %v3895
        %v4034 = vpack.c.b16 %v3899, %v3896
        %v4035 = vpack.c.b16 %v3900, %v3897
        %v4036 = vpack.c.b16 %v3904, %v3901
        %v4037 = vpack.c.b16 %v3905, %v3902
        %v4038 = vpack.c.b16 %v3906, %v3903
        %v4039 = vpack.c.b16 %v3910, %v3907
        %v4040 = vpack.c.b16 %v3911, %v3908
        %v4041 = vpack.c.b16 %v3912, %v3909
        %v4042 = vpack.c.b16 %v3916, %v3913
        %v4043 = vpack.c.b16 %v3917, %v3914
        %v4044 = vpack.c.b16 %v3918, %v3915
        %v4045 = vpack.c.b16 %v3922, %v3919
        %v4046 = vpack.c.b16 %v3923, %v3920
        %v4047 = vpack.c.b16 %v3924, %v3921
        %v4048 = vpack.c.b16 %v3928, %v3925
        %v4049 = vpack.c.b16 %v3929, %v3926
        %v4050 = vpack.c.b16 %v3930, %v3927
        %v4051 = vpack.c.b16 %v3934, %v3931
        %v4052 = vpack.c.b16 %v3935, %v3932
        %v4053 = vpack.c.b16 %v3936, %v3933
        %v4054 = vpack.c.b16 %v3940, %v3937
        %v4055 = vpack.c.b16 %v3941, %v3938
        %v4056 = vpack.c.b16 %v3942, %v3939
        %v4057 = vpack.c.b16 %v3946, %v3943
        %v4058 = vpack.c.b16 %v3947, %v3944
        %v4059 = vpack.c.b16 %v3948, %v3945
        %v4060 = vpack.c.b16 %v3952, %v3949
        %v4061 = vpack.c.b16 %v3953, %v3950
        %v4062 = vpack.c.b16 %v3954, %v3951
        %v4063 = vpack.c.b16 %v3958, %v3955
        %v4064 = vpack.c.b16 %v3959, %v3956
        %v4065 = vpack.c.b16 %v3960, %v3957
        %v4066 = vpack.c.b16 %v3964, %v3961
        %v4067 = vpack.c.b16 %v3965, %v3962
        %v4068 = vpack.c.b16 %v3966, %v3963
        %v4069 = vpack.c.b16 %v3970, %v3967
        %v4070 = vpack.c.b16 %v3971, %v3968
        %v4071 = vpack.c.b16 %v3972, %v3969
        %v4072 = vpack.c.b16 %v3976, %v3973
        %v4073 = vpack.c.b16 %v3977, %v3974
        %v4074 = vpack.c.b16 %v3978, %v3975
        %4171 = vmatpush.bf16.msra.mxu0 %v4000
        %4172 = vmatpush.bf16.msra.mxu0 %v3997
        %4173 = vmatpush.bf16.msra.mxu0 %v3994
        %4174 = vmatpush.bf16.msra.mxu0 %v3991
        %4175 = vmatpush.bf16.msra.mxu0 %v3988
        %4176 = vmatpush.bf16.msra.mxu0 %v3985
        %4177 = vmatpush.bf16.msra.mxu0 %v3982
        %4178 = vmatpush.bf16.msra.mxu0 %v3979
        %4179 = vmatmul.bf16.gmra.mxu0 %v2583
        %v4180 = vpop.f32.mrf.mxu0
        %v4181 = vadd.f32 %v3653, %v4180
        %v4182 = vpop.f32.mrf.mxu0
        %v4183 = vadd.f32 %v3650, %v4182
        %4184 = vmatmul.bf16.gmra.mxu0 %v2587
        %v4185 = vpop.f32.mrf.mxu0
        %v4186 = vadd.f32 %v3647, %v4185
        %v4187 = vpop.f32.mrf.mxu0
        %v4188 = vadd.f32 %v3644, %v4187
        %4189 = vmatmul.bf16.gmra.mxu0 %v2591
        %v4190 = vpop.f32.mrf.mxu0
        %v4191 = vadd.f32 %v3641, %v4190
        %v4192 = vpop.f32.mrf.mxu0
        %v4193 = vadd.f32 %v3638, %v4192
        %4194 = vmatmul.bf16.gmra.mxu0 %v2595
        %v4195 = vpop.f32.mrf.mxu0
        %v4196 = vadd.f32 %v3635, %v4195
        %v4197 = vpop.f32.mrf.mxu0
        %v4198 = vadd.f32 %v3632, %v4197
        %4199 = vmatmul.bf16.gmra.mxu0 %v2599
        %v4200 = vpop.f32.mrf.mxu0
        %v4201 = vadd.f32 %v3629, %v4200
        %v4202 = vpop.f32.mrf.mxu0
        %v4203 = vadd.f32 %v3626, %v4202
        %4204 = vmatmul.bf16.gmra.mxu0 %v2603
        %v4205 = vpop.f32.mrf.mxu0
        %v4206 = vadd.f32 %v3623, %v4205
        %v4207 = vpop.f32.mrf.mxu0
        %v4208 = vadd.f32 %v3656, %v4207
        %4209 = vdwg.mxu0
        %4210 = vmatpush.bf16.msra.mxu0 %v4024
        %4211 = vmatpush.bf16.msra.mxu0 %v4021
        %4212 = vmatpush.bf16.msra.mxu0 %v4018
        %4213 = vmatpush.bf16.msra.mxu0 %v4015
        %4214 = vmatpush.bf16.msra.mxu0 %v4012
        %4215 = vmatpush.bf16.msra.mxu0 %v4009
        %4216 = vmatpush.bf16.msra.mxu0 %v4006
        %4217 = vmatpush.bf16.msra.mxu0 %v4003
        %4218 = vmatmul.bf16.gmra.mxu0 %v2584
        %v4219 = vpop.f32.mrf.mxu0
        %v4220 = vadd.f32 %v4181, %v4219
        %v4221 = vpop.f32.mrf.mxu0
        %v4222 = vadd.f32 %v4183, %v4221
        %4223 = vmatmul.bf16.gmra.mxu0 %v2588
        %v4224 = vpop.f32.mrf.mxu0
        %v4225 = vadd.f32 %v4186, %v4224
        %v4226 = vpop.f32.mrf.mxu0
        %v4227 = vadd.f32 %v4188, %v4226
        %4228 = vmatmul.bf16.gmra.mxu0 %v2592
        %v4229 = vpop.f32.mrf.mxu0
        %v4230 = vadd.f32 %v4191, %v4229
        %v4231 = vpop.f32.mrf.mxu0
        %v4232 = vadd.f32 %v4193, %v4231
        %4233 = vmatmul.bf16.gmra.mxu0 %v2596
        %v4234 = vpop.f32.mrf.mxu0
        %v4235 = vadd.f32 %v4196, %v4234
        %v4236 = vpop.f32.mrf.mxu0
        %v4237 = vadd.f32 %v4198, %v4236
        %4238 = vmatmul.bf16.gmra.mxu0 %v2600
        %v4239 = vpop.f32.mrf.mxu0
        %v4240 = vadd.f32 %v4201, %v4239
        %v4241 = vpop.f32.mrf.mxu0
        %v4242 = vadd.f32 %v4203, %v4241
        %4243 = vmatmul.bf16.gmra.mxu0 %v2604
        %v4244 = vpop.f32.mrf.mxu0
        %v4245 = vadd.f32 %v4206, %v4244
        %v4246 = vpop.f32.mrf.mxu0
        %v4247 = vadd.f32 %v4208, %v4246
        %4248 = vdwg.mxu0
        %4249 = vmatpush.bf16.msra.mxu0 %v4048
        %4250 = vmatpush.bf16.msra.mxu0 %v4045
        %4251 = vmatpush.bf16.msra.mxu0 %v4042
        %4252 = vmatpush.bf16.msra.mxu0 %v4039
        %4253 = vmatpush.bf16.msra.mxu0 %v4036
        %4254 = vmatpush.bf16.msra.mxu0 %v4033
        %4255 = vmatpush.bf16.msra.mxu0 %v4030
        %4256 = vmatpush.bf16.msra.mxu0 %v4027
        %4257 = vmatmul.bf16.gmra.mxu0 %v2585
        %v4258 = vpop.f32.mrf.mxu0
        %v4259 = vadd.f32 %v4220, %v4258
        %v4260 = vpop.f32.mrf.mxu0
        %v4261 = vadd.f32 %v4222, %v4260
        %4262 = vmatmul.bf16.gmra.mxu0 %v2589
        %v4263 = vpop.f32.mrf.mxu0
        %v4264 = vadd.f32 %v4225, %v4263
        %v4265 = vpop.f32.mrf.mxu0
        %v4266 = vadd.f32 %v4227, %v4265
        %4267 = vmatmul.bf16.gmra.mxu0 %v2593
        %v4268 = vpop.f32.mrf.mxu0
        %v4269 = vadd.f32 %v4230, %v4268
        %v4270 = vpop.f32.mrf.mxu0
        %v4271 = vadd.f32 %v4232, %v4270
        %4272 = vmatmul.bf16.gmra.mxu0 %v2597
        %v4273 = vpop.f32.mrf.mxu0
        %v4274 = vadd.f32 %v4235, %v4273
        %v4275 = vpop.f32.mrf.mxu0
        %v4276 = vadd.f32 %v4237, %v4275
        %4277 = vmatmul.bf16.gmra.mxu0 %v2601
        %v4278 = vpop.f32.mrf.mxu0
        %v4279 = vadd.f32 %v4240, %v4278
        %v4280 = vpop.f32.mrf.mxu0
        %v4281 = vadd.f32 %v4242, %v4280
        %4282 = vmatmul.bf16.gmra.mxu0 %v2605
        %v4283 = vpop.f32.mrf.mxu0
        %v4284 = vadd.f32 %v4245, %v4283
        %v4285 = vpop.f32.mrf.mxu0
        %v4286 = vadd.f32 %v4247, %v4285
        %4287 = vdwg.mxu0
        %4288 = vmatpush.bf16.msra.mxu0 %v4072
        %4289 = vmatpush.bf16.msra.mxu0 %v4069
        %4290 = vmatpush.bf16.msra.mxu0 %v4066
        %4291 = vmatpush.bf16.msra.mxu0 %v4063
        %4292 = vmatpush.bf16.msra.mxu0 %v4060
        %4293 = vmatpush.bf16.msra.mxu0 %v4057
        %4294 = vmatpush.bf16.msra.mxu0 %v4054
        %4295 = vmatpush.bf16.msra.mxu0 %v4051
        %4296 = vmatmul.bf16.gmra.mxu0 %v2586
        %v4297 = vpop.f32.mrf.mxu0
        %v4298 = vadd.f32 %v4259, %v4297
        %v4299 = vpop.f32.mrf.mxu0
        %v4300 = vadd.f32 %v4261, %v4299
        %4301 = vmatmul.bf16.gmra.mxu0 %v2590
        %v4302 = vpop.f32.mrf.mxu0
        %v4303 = vadd.f32 %v4264, %v4302
        %v4304 = vpop.f32.mrf.mxu0
        %v4305 = vadd.f32 %v4266, %v4304
        %4306 = vmatmul.bf16.gmra.mxu0 %v2594
        %v4307 = vpop.f32.mrf.mxu0
        %v4308 = vadd.f32 %v4269, %v4307
        %v4309 = vpop.f32.mrf.mxu0
        %v4310 = vadd.f32 %v4271, %v4309
        %4311 = vmatmul.bf16.gmra.mxu0 %v2598
        %v4312 = vpop.f32.mrf.mxu0
        %v4313 = vadd.f32 %v4274, %v4312
        %v4314 = vpop.f32.mrf.mxu0
        %v4315 = vadd.f32 %v4276, %v4314
        %4316 = vmatmul.bf16.gmra.mxu0 %v2602
        %v4317 = vpop.f32.mrf.mxu0
        %v4318 = vadd.f32 %v4279, %v4317
        %v4319 = vpop.f32.mrf.mxu0
        %v4320 = vadd.f32 %v4281, %v4319
        %4321 = vmatmul.bf16.gmra.mxu0 %v2606
        %v4322 = vpop.f32.mrf.mxu0
        %v4323 = vadd.f32 %v4284, %v4322
        %v4324 = vpop.f32.mrf.mxu0
        %v4325 = vadd.f32 %v4286, %v4324
        %4326 = vdwg.mxu0
        %4327 = vmatpush.bf16.msra.mxu0 %v4001
        %4328 = vmatpush.bf16.msra.mxu0 %v3998
        %4329 = vmatpush.bf16.msra.mxu0 %v3995
        %4330 = vmatpush.bf16.msra.mxu0 %v3992
        %4331 = vmatpush.bf16.msra.mxu0 %v3989
        %4332 = vmatpush.bf16.msra.mxu0 %v3986
        %4333 = vmatpush.bf16.msra.mxu0 %v3983
        %4334 = vmatpush.bf16.msra.mxu0 %v3980
        %4335 = vmatmul.bf16.gmra.mxu0 %v2583
        %v4336 = vpop.f32.mrf.mxu0
        %v4337 = vadd.f32 %v3654, %v4336
        %v4338 = vpop.f32.mrf.mxu0
        %v4339 = vadd.f32 %v3651, %v4338
        %4340 = vmatmul.bf16.gmra.mxu0 %v2587
        %v4341 = vpop.f32.mrf.mxu0
        %v4342 = vadd.f32 %v3648, %v4341
        %v4343 = vpop.f32.mrf.mxu0
        %v4344 = vadd.f32 %v3645, %v4343
        %4345 = vmatmul.bf16.gmra.mxu0 %v2591
        %v4346 = vpop.f32.mrf.mxu0
        %v4347 = vadd.f32 %v3642, %v4346
        %v4348 = vpop.f32.mrf.mxu0
        %v4349 = vadd.f32 %v3639, %v4348
        %4350 = vmatmul.bf16.gmra.mxu0 %v2595
        %v4351 = vpop.f32.mrf.mxu0
        %v4352 = vadd.f32 %v3636, %v4351
        %v4353 = vpop.f32.mrf.mxu0
        %v4354 = vadd.f32 %v3633, %v4353
        %4355 = vmatmul.bf16.gmra.mxu0 %v2599
        %v4356 = vpop.f32.mrf.mxu0
        %v4357 = vadd.f32 %v3630, %v4356
        %v4358 = vpop.f32.mrf.mxu0
        %v4359 = vadd.f32 %v3627, %v4358
        %4360 = vmatmul.bf16.gmra.mxu0 %v2603
        %v4361 = vpop.f32.mrf.mxu0
        %v4362 = vadd.f32 %v3624, %v4361
        %v4363 = vpop.f32.mrf.mxu0
        %v4364 = vadd.f32 %v3657, %v4363
        %4365 = vdwg.mxu0
        %4366 = vmatpush.bf16.msra.mxu0 %v4025
        %4367 = vmatpush.bf16.msra.mxu0 %v4022
        %4368 = vmatpush.bf16.msra.mxu0 %v4019
        %4369 = vmatpush.bf16.msra.mxu0 %v4016
        %4370 = vmatpush.bf16.msra.mxu0 %v4013
        %4371 = vmatpush.bf16.msra.mxu0 %v4010
        %4372 = vmatpush.bf16.msra.mxu0 %v4007
        %4373 = vmatpush.bf16.msra.mxu0 %v4004
        %4374 = vmatmul.bf16.gmra.mxu0 %v2584
        %v4375 = vpop.f32.mrf.mxu0
        %v4376 = vadd.f32 %v4337, %v4375
        %v4377 = vpop.f32.mrf.mxu0
        %v4378 = vadd.f32 %v4339, %v4377
        %4379 = vmatmul.bf16.gmra.mxu0 %v2588
        %v4380 = vpop.f32.mrf.mxu0
        %v4381 = vadd.f32 %v4342, %v4380
        %v4382 = vpop.f32.mrf.mxu0
        %v4383 = vadd.f32 %v4344, %v4382
        %4384 = vmatmul.bf16.gmra.mxu0 %v2592
        %v4385 = vpop.f32.mrf.mxu0
        %v4386 = vadd.f32 %v4347, %v4385
        %v4387 = vpop.f32.mrf.mxu0
        %v4388 = vadd.f32 %v4349, %v4387
        %4389 = vmatmul.bf16.gmra.mxu0 %v2596
        %v4390 = vpop.f32.mrf.mxu0
        %v4391 = vadd.f32 %v4352, %v4390
        %v4392 = vpop.f32.mrf.mxu0
        %v4393 = vadd.f32 %v4354, %v4392
        %4394 = vmatmul.bf16.gmra.mxu0 %v2600
        %v4395 = vpop.f32.mrf.mxu0
        %v4396 = vadd.f32 %v4357, %v4395
        %v4397 = vpop.f32.mrf.mxu0
        %v4398 = vadd.f32 %v4359, %v4397
        %4399 = vmatmul.bf16.gmra.mxu0 %v2604
        %v4400 = vpop.f32.mrf.mxu0
        %v4401 = vadd.f32 %v4362, %v4400
        %v4402 = vpop.f32.mrf.mxu0
        %v4403 = vadd.f32 %v4364, %v4402
        %4404 = vdwg.mxu0
        %4405 = vmatpush.bf16.msra.mxu0 %v4049
        %4406 = vmatpush.bf16.msra.mxu0 %v4046
        %4407 = vmatpush.bf16.msra.mxu0 %v4043
        %4408 = vmatpush.bf16.msra.mxu0 %v4040
        %4409 = vmatpush.bf16.msra.mxu0 %v4037
        %4410 = vmatpush.bf16.msra.mxu0 %v4034
        %4411 = vmatpush.bf16.msra.mxu0 %v4031
        %4412 = vmatpush.bf16.msra.mxu0 %v4028
        %4413 = vmatmul.bf16.gmra.mxu0 %v2585
        %v4414 = vpop.f32.mrf.mxu0
        %v4415 = vadd.f32 %v4376, %v4414
        %v4416 = vpop.f32.mrf.mxu0
        %v4417 = vadd.f32 %v4378, %v4416
        %4418 = vmatmul.bf16.gmra.mxu0 %v2589
        %v4419 = vpop.f32.mrf.mxu0
        %v4420 = vadd.f32 %v4381, %v4419
        %v4421 = vpop.f32.mrf.mxu0
        %v4422 = vadd.f32 %v4383, %v4421
        %4423 = vmatmul.bf16.gmra.mxu0 %v2593
        %v4424 = vpop.f32.mrf.mxu0
        %v4425 = vadd.f32 %v4386, %v4424
        %v4426 = vpop.f32.mrf.mxu0
        %v4427 = vadd.f32 %v4388, %v4426
        %4428 = vmatmul.bf16.gmra.mxu0 %v2597
        %v4429 = vpop.f32.mrf.mxu0
        %v4430 = vadd.f32 %v4391, %v4429
        %v4431 = vpop.f32.mrf.mxu0
        %v4432 = vadd.f32 %v4393, %v4431
        %4433 = vmatmul.bf16.gmra.mxu0 %v2601
        %v4434 = vpop.f32.mrf.mxu0
        %v4435 = vadd.f32 %v4396, %v4434
        %v4436 = vpop.f32.mrf.mxu0
        %v4437 = vadd.f32 %v4398, %v4436
        %4438 = vmatmul.bf16.gmra.mxu0 %v2605
        %v4439 = vpop.f32.mrf.mxu0
        %v4440 = vadd.f32 %v4401, %v4439
        %v4441 = vpop.f32.mrf.mxu0
        %v4442 = vadd.f32 %v4403, %v4441
        %4443 = vdwg.mxu0
        %4444 = vmatpush.bf16.msra.mxu0 %v4073
        %4445 = vmatpush.bf16.msra.mxu0 %v4070
        %4446 = vmatpush.bf16.msra.mxu0 %v4067
        %4447 = vmatpush.bf16.msra.mxu0 %v4064
        %4448 = vmatpush.bf16.msra.mxu0 %v4061
        %4449 = vmatpush.bf16.msra.mxu0 %v4058
        %4450 = vmatpush.bf16.msra.mxu0 %v4055
        %4451 = vmatpush.bf16.msra.mxu0 %v4052
        %4452 = vmatmul.bf16.gmra.mxu0 %v2586
        %v4453 = vpop.f32.mrf.mxu0
        %v4454 = vadd.f32 %v4415, %v4453
        %v4455 = vpop.f32.mrf.mxu0
        %v4456 = vadd.f32 %v4417, %v4455
        %4457 = vmatmul.bf16.gmra.mxu0 %v2590
        %v4458 = vpop.f32.mrf.mxu0
        %v4459 = vadd.f32 %v4420, %v4458
        %v4460 = vpop.f32.mrf.mxu0
        %v4461 = vadd.f32 %v4422, %v4460
        %4462 = vmatmul.bf16.gmra.mxu0 %v2594
        %v4463 = vpop.f32.mrf.mxu0
        %v4464 = vadd.f32 %v4425, %v4463
        %v4465 = vpop.f32.mrf.mxu0
        %v4466 = vadd.f32 %v4427, %v4465
        %4467 = vmatmul.bf16.gmra.mxu0 %v2598
        %v4468 = vpop.f32.mrf.mxu0
        %v4469 = vadd.f32 %v4430, %v4468
        %v4470 = vpop.f32.mrf.mxu0
        %v4471 = vadd.f32 %v4432, %v4470
        %4472 = vmatmul.bf16.gmra.mxu0 %v2602
        %v4473 = vpop.f32.mrf.mxu0
        %v4474 = vadd.f32 %v4435, %v4473
        %v4475 = vpop.f32.mrf.mxu0
        %v4476 = vadd.f32 %v4437, %v4475
        %4477 = vmatmul.bf16.gmra.mxu0 %v2606
        %v4478 = vpop.f32.mrf.mxu0
        %v4479 = vadd.f32 %v4440, %v4478
        %v4480 = vpop.f32.mrf.mxu0
        %v4481 = vadd.f32 %v4442, %v4480
        %4482 = vdwg.mxu0
        %4483 = vmatpush.bf16.msra.mxu0 %v4002
        %4484 = vmatpush.bf16.msra.mxu0 %v3999
        %4485 = vmatpush.bf16.msra.mxu0 %v3996
        %4486 = vmatpush.bf16.msra.mxu0 %v3993
        %4487 = vmatpush.bf16.msra.mxu0 %v3990
        %4488 = vmatpush.bf16.msra.mxu0 %v3987
        %4489 = vmatpush.bf16.msra.mxu0 %v3984
        %4490 = vmatpush.bf16.msra.mxu0 %v3981
        %4491 = vmatmul.bf16.gmra.mxu0 %v2583
        %v4492 = vpop.f32.mrf.mxu0
        %v4493 = vadd.f32 %v3655, %v4492
        %v4494 = vpop.f32.mrf.mxu0
        %v4495 = vadd.f32 %v3652, %v4494
        %4496 = vmatmul.bf16.gmra.mxu0 %v2587
        %v4497 = vpop.f32.mrf.mxu0
        %v4498 = vadd.f32 %v3649, %v4497
        %v4499 = vpop.f32.mrf.mxu0
        %v4500 = vadd.f32 %v3646, %v4499
        %4501 = vmatmul.bf16.gmra.mxu0 %v2591
        %v4502 = vpop.f32.mrf.mxu0
        %v4503 = vadd.f32 %v3643, %v4502
        %v4504 = vpop.f32.mrf.mxu0
        %v4505 = vadd.f32 %v3640, %v4504
        %4506 = vmatmul.bf16.gmra.mxu0 %v2595
        %v4507 = vpop.f32.mrf.mxu0
        %v4508 = vadd.f32 %v3637, %v4507
        %v4509 = vpop.f32.mrf.mxu0
        %v4510 = vadd.f32 %v3634, %v4509
        %4511 = vmatmul.bf16.gmra.mxu0 %v2599
        %v4512 = vpop.f32.mrf.mxu0
        %v4513 = vadd.f32 %v3631, %v4512
        %v4514 = vpop.f32.mrf.mxu0
        %v4515 = vadd.f32 %v3628, %v4514
        %4516 = vmatmul.bf16.gmra.mxu0 %v2603
        %v4517 = vpop.f32.mrf.mxu0
        %v4518 = vadd.f32 %v3625, %v4517
        %v4519 = vpop.f32.mrf.mxu0
        %v4520 = vadd.f32 %v3658, %v4519
        %4521 = vdwg.mxu0
        %4522 = vmatpush.bf16.msra.mxu0 %v4026
        %4523 = vmatpush.bf16.msra.mxu0 %v4023
        %4524 = vmatpush.bf16.msra.mxu0 %v4020
        %4525 = vmatpush.bf16.msra.mxu0 %v4017
        %4526 = vmatpush.bf16.msra.mxu0 %v4014
        %4527 = vmatpush.bf16.msra.mxu0 %v4011
        %4528 = vmatpush.bf16.msra.mxu0 %v4008
        %4529 = vmatpush.bf16.msra.mxu0 %v4005
        %4530 = vmatmul.bf16.gmra.mxu0 %v2584
        %v4531 = vpop.f32.mrf.mxu0
        %v4532 = vadd.f32 %v4493, %v4531
        %v4533 = vpop.f32.mrf.mxu0
        %v4534 = vadd.f32 %v4495, %v4533
        %4535 = vmatmul.bf16.gmra.mxu0 %v2588
        %v4536 = vpop.f32.mrf.mxu0
        %v4537 = vadd.f32 %v4498, %v4536
        %v4538 = vpop.f32.mrf.mxu0
        %v4539 = vadd.f32 %v4500, %v4538
        %4540 = vmatmul.bf16.gmra.mxu0 %v2592
        %v4541 = vpop.f32.mrf.mxu0
        %v4542 = vadd.f32 %v4503, %v4541
        %v4543 = vpop.f32.mrf.mxu0
        %v4544 = vadd.f32 %v4505, %v4543
        %4545 = vmatmul.bf16.gmra.mxu0 %v2596
        %v4546 = vpop.f32.mrf.mxu0
        %v4547 = vadd.f32 %v4508, %v4546
        %v4548 = vpop.f32.mrf.mxu0
        %v4549 = vadd.f32 %v4510, %v4548
        %4550 = vmatmul.bf16.gmra.mxu0 %v2600
        %v4551 = vpop.f32.mrf.mxu0
        %v4552 = vadd.f32 %v4513, %v4551
        %v4553 = vpop.f32.mrf.mxu0
        %v4554 = vadd.f32 %v4515, %v4553
        %4555 = vmatmul.bf16.gmra.mxu0 %v2604
        %v4556 = vpop.f32.mrf.mxu0
        %v4557 = vadd.f32 %v4518, %v4556
        %v4558 = vpop.f32.mrf.mxu0
        %v4559 = vadd.f32 %v4520, %v4558
        %4560 = vdwg.mxu0
        %4561 = vmatpush.bf16.msra.mxu0 %v4050
        %4562 = vmatpush.bf16.msra.mxu0 %v4047
        %4563 = vmatpush.bf16.msra.mxu0 %v4044
        %4564 = vmatpush.bf16.msra.mxu0 %v4041
        %4565 = vmatpush.bf16.msra.mxu0 %v4038
        %4566 = vmatpush.bf16.msra.mxu0 %v4035
        %4567 = vmatpush.bf16.msra.mxu0 %v4032
        %4568 = vmatpush.bf16.msra.mxu0 %v4029
        %4569 = vmatmul.bf16.gmra.mxu0 %v2585
        %v4570 = vpop.f32.mrf.mxu0
        %v4571 = vadd.f32 %v4532, %v4570
        %v4572 = vpop.f32.mrf.mxu0
        %v4573 = vadd.f32 %v4534, %v4572
        %4574 = vmatmul.bf16.gmra.mxu0 %v2589
        %v4575 = vpop.f32.mrf.mxu0
        %v4576 = vadd.f32 %v4537, %v4575
        %v4577 = vpop.f32.mrf.mxu0
        %v4578 = vadd.f32 %v4539, %v4577
        %4579 = vmatmul.bf16.gmra.mxu0 %v2593
        %v4580 = vpop.f32.mrf.mxu0
        %v4581 = vadd.f32 %v4542, %v4580
        %v4582 = vpop.f32.mrf.mxu0
        %v4583 = vadd.f32 %v4544, %v4582
        %4584 = vmatmul.bf16.gmra.mxu0 %v2597
        %v4585 = vpop.f32.mrf.mxu0
        %v4586 = vadd.f32 %v4547, %v4585
        %v4587 = vpop.f32.mrf.mxu0
        %v4588 = vadd.f32 %v4549, %v4587
        %4589 = vmatmul.bf16.gmra.mxu0 %v2601
        %v4590 = vpop.f32.mrf.mxu0
        %v4591 = vadd.f32 %v4552, %v4590
        %v4592 = vpop.f32.mrf.mxu0
        %v4593 = vadd.f32 %v4554, %v4592
        %4594 = vmatmul.bf16.gmra.mxu0 %v2605
        %v4595 = vpop.f32.mrf.mxu0
        %v4596 = vadd.f32 %v4557, %v4595
        %v4597 = vpop.f32.mrf.mxu0
        %v4598 = vadd.f32 %v4559, %v4597
        %4599 = vdwg.mxu0
        %4600 = vmatpush.bf16.msra.mxu0 %v4074
        %4601 = vmatpush.bf16.msra.mxu0 %v4071
        %4602 = vmatpush.bf16.msra.mxu0 %v4068
        %4603 = vmatpush.bf16.msra.mxu0 %v4065
        %4604 = vmatpush.bf16.msra.mxu0 %v4062
        %4605 = vmatpush.bf16.msra.mxu0 %v4059
        %4606 = vmatpush.bf16.msra.mxu0 %v4056
        %4607 = vmatpush.bf16.msra.mxu0 %v4053
        %4608 = vmatmul.bf16.gmra.mxu0 %v2586
        %v4609 = vpop.f32.mrf.mxu0
        %v4610 = vadd.f32 %v4571, %v4609
        %v4611 = vpop.f32.mrf.mxu0
        %v4612 = vadd.f32 %v4573, %v4611
        %4613 = vmatmul.bf16.gmra.mxu0 %v2590
        %v4614 = vpop.f32.mrf.mxu0
        %v4615 = vadd.f32 %v4576, %v4614
        %v4616 = vpop.f32.mrf.mxu0
        %v4617 = vadd.f32 %v4578, %v4616
        %4618 = vmatmul.bf16.gmra.mxu0 %v2594
        %v4619 = vpop.f32.mrf.mxu0
        %v4620 = vadd.f32 %v4581, %v4619
        %v4621 = vpop.f32.mrf.mxu0
        %v4622 = vadd.f32 %v4583, %v4621
        %4623 = vmatmul.bf16.gmra.mxu0 %v2598
        %v4624 = vpop.f32.mrf.mxu0
        %v4625 = vadd.f32 %v4586, %v4624
        %v4626 = vpop.f32.mrf.mxu0
        %v4627 = vadd.f32 %v4588, %v4626
        %4628 = vmatmul.bf16.gmra.mxu0 %v2602
        %v4629 = vpop.f32.mrf.mxu0
        %v4630 = vadd.f32 %v4591, %v4629
        %v4631 = vpop.f32.mrf.mxu0
        %v4632 = vadd.f32 %v4593, %v4631
        %4633 = vmatmul.bf16.gmra.mxu0 %v2606
        %v4634 = vpop.f32.mrf.mxu0
        %v4635 = vadd.f32 %v4596, %v4634
        %v4636 = vpop.f32.mrf.mxu0
        %v4637 = vadd.f32 %v4598, %v4636
        %4638 = vdwg.mxu0
        %v4640 = vperm.slane %v2534, 0
        %v4641 = vperm.slane %v2534, 1
        %v4642 = vperm.slane %v2534, 2
        %v4646 = vadd.f32 %v4298, %v4640
        %v4647 = vadd.f32 %v4454, %v4641
        %v4648 = vadd.f32 %v4610, %v4642
        %v4649 = vadd.f32 %v4300, %v4640
        %v4650 = vadd.f32 %v4456, %v4641
        %v4651 = vadd.f32 %v4612, %v4642
        %v4652 = vadd.f32 %v4303, %v4640
        %v4653 = vadd.f32 %v4459, %v4641
        %v4654 = vadd.f32 %v4615, %v4642
        %v4655 = vadd.f32 %v4305, %v4640
        %v4656 = vadd.f32 %v4461, %v4641
        %v4657 = vadd.f32 %v4617, %v4642
        %v4658 = vadd.f32 %v4308, %v4640
        %v4659 = vadd.f32 %v4464, %v4641
        %v4660 = vadd.f32 %v4620, %v4642
        %v4661 = vadd.f32 %v4310, %v4640
        %v4662 = vadd.f32 %v4466, %v4641
        %v4663 = vadd.f32 %v4622, %v4642
        %v4664 = vadd.f32 %v4313, %v4640
        %v4665 = vadd.f32 %v4469, %v4641
        %v4666 = vadd.f32 %v4625, %v4642
        %v4667 = vadd.f32 %v4315, %v4640
        %v4668 = vadd.f32 %v4471, %v4641
        %v4669 = vadd.f32 %v4627, %v4642
        %v4670 = vadd.f32 %v4318, %v4640
        %v4671 = vadd.f32 %v4474, %v4641
        %v4672 = vadd.f32 %v4630, %v4642
        %v4673 = vadd.f32 %v4320, %v4640
        %v4674 = vadd.f32 %v4476, %v4641
        %v4675 = vadd.f32 %v4632, %v4642
        %v4676 = vadd.f32 %v4323, %v4640
        %v4677 = vadd.f32 %v4479, %v4641
        %v4678 = vadd.f32 %v4635, %v4642
        %v4679 = vadd.f32 %v4325, %v4640
        %v4680 = vadd.f32 %v4481, %v4641
        %v4681 = vadd.f32 %v4637, %v4642
        %vm4682 = vcmp.lt.s32.totalorder %v745, 14
        %vm4683 = vcmp.lt.s32.totalorder %v746, 14
        %vm4684 = vcmp.lt.s32.totalorder %v747, 14
        %vm4685 = vcmp.lt.s32.totalorder %v748, 14
        %vm4686 = vcmp.lt.s32.totalorder %v749, 14
        %vm4687 = vcmp.lt.s32.totalorder %v750, 14
        %vm4688 = vcmp.lt.s32.totalorder %v751, 14
        %vm4689 = vcmp.lt.s32.totalorder %v752, 14
        %vm4690 = vcmp.lt.s32.totalorder %v753, 14
        %vm4691 = vcmp.lt.s32.totalorder %v754, 14
        %vm4692 = vcmp.lt.s32.totalorder %v755, 14
        %vm4693 = vcmp.lt.s32.totalorder %v756, 14
        %vm4694 = vmand %vm757, %vm4682
        %vm4695 = vmand %vm758, %vm4683
        %vm4696 = vmand %vm759, %vm4684
        %vm4697 = vmand %vm760, %vm4685
        %vm4698 = vmand %vm761, %vm4686
        %vm4699 = vmand %vm762, %vm4687
        %vm4700 = vmand %vm763, %vm4688
        %vm4701 = vmand %vm764, %vm4689
        %vm4702 = vmand %vm765, %vm4690
        %vm4703 = vmand %vm766, %vm4691
        %vm4704 = vmand %vm767, %vm4692
        %vm4705 = vmand %vm768, %vm4693
        %v4706 = vsel %vm4694, 1, 0
        %v4707 = vsel %vm4695, 1, 0
        %v4708 = vsel %vm4696, 1, 0
        %v4709 = vsel %vm4697, 1, 0
        %v4710 = vsel %vm4698, 1, 0
        %v4711 = vsel %vm4699, 1, 0
        %v4712 = vsel %vm4700, 1, 0
        %v4713 = vsel %vm4701, 1, 0
        %v4714 = vsel %vm4702, 1, 0
        %v4715 = vsel %vm4703, 1, 0
        %v4716 = vsel %vm4704, 1, 0
        %v4717 = vsel %vm4705, 1, 0
        %v4718 = vcvt.s32.f32 %v4706
        %v4719 = vcvt.s32.f32 %v4707
        %v4720 = vcvt.s32.f32 %v4708
        %v4721 = vcvt.s32.f32 %v4709
        %v4722 = vcvt.s32.f32 %v4710
        %v4723 = vcvt.s32.f32 %v4711
        %v4724 = vcvt.s32.f32 %v4712
        %v4725 = vcvt.s32.f32 %v4713
        %v4726 = vcvt.s32.f32 %v4714
        %v4727 = vcvt.s32.f32 %v4715
        %v4728 = vcvt.s32.f32 %v4716
        %v4729 = vcvt.s32.f32 %v4717
        %4731 = vset.pattern.permute.xlu0 0
        %4732 = vperm.xlu0 %4731, %v4718
        %v4733 = vpop.permute.xlu0 %4732
        %4736 = vset.pattern.permute.xlu0 0
        %4737 = vperm.xlu0 %4736, %v4719
        %v4738 = vpop.permute.xlu0 %4737
        %4741 = vset.pattern.permute.xlu0 0
        %4742 = vperm.xlu0 %4741, %v4720
        %v4743 = vpop.permute.xlu0 %4742
        %4746 = vset.pattern.permute.xlu0 0
        %4747 = vperm.xlu0 %4746, %v4721
        %v4748 = vpop.permute.xlu0 %4747
        %4751 = vset.pattern.permute.xlu0 0
        %4752 = vperm.xlu0 %4751, %v4722
        %v4753 = vpop.permute.xlu0 %4752
        %4756 = vset.pattern.permute.xlu0 0
        %4757 = vperm.xlu0 %4756, %v4723
        %v4758 = vpop.permute.xlu0 %4757
        %4761 = vset.pattern.permute.xlu0 0
        %4762 = vperm.xlu0 %4761, %v4724
        %v4763 = vpop.permute.xlu0 %4762
        %4766 = vset.pattern.permute.xlu0 0
        %4767 = vperm.xlu0 %4766, %v4725
        %v4768 = vpop.permute.xlu0 %4767
        %4771 = vset.pattern.permute.xlu0 0
        %4772 = vperm.xlu0 %4771, %v4726
        %v4773 = vpop.permute.xlu0 %4772
        %4776 = vset.pattern.permute.xlu0 0
        %4777 = vperm.xlu0 %4776, %v4727
        %v4778 = vpop.permute.xlu0 %4777
        %4781 = vset.pattern.permute.xlu0 0
        %4782 = vperm.xlu0 %4781, %v4728
        %v4783 = vpop.permute.xlu0 %4782
        %4786 = vset.pattern.permute.xlu0 0
        %4787 = vperm.xlu0 %4786, %v4729
        %v4788 = vpop.permute.xlu0 %4787
        %v4790 = vmul.f32 %v4646, %v4733
        %v4791 = vmul.f32 %v4647, %v4733
        %v4792 = vmul.f32 %v4648, %v4733
        %v4793 = vmul.f32 %v4649, %v4738
        %v4794 = vmul.f32 %v4650, %v4738
        %v4795 = vmul.f32 %v4651, %v4738
        %v4796 = vmul.f32 %v4652, %v4743
        %v4797 = vmul.f32 %v4653, %v4743
        %v4798 = vmul.f32 %v4654, %v4743
        %v4799 = vmul.f32 %v4655, %v4748
        %v4800 = vmul.f32 %v4656, %v4748
        %v4801 = vmul.f32 %v4657, %v4748
        %v4802 = vmul.f32 %v4658, %v4753
        %v4803 = vmul.f32 %v4659, %v4753
        %v4804 = vmul.f32 %v4660, %v4753
        %v4805 = vmul.f32 %v4661, %v4758
        %v4806 = vmul.f32 %v4662, %v4758
        %v4807 = vmul.f32 %v4663, %v4758
        %v4808 = vmul.f32 %v4664, %v4763
        %v4809 = vmul.f32 %v4665, %v4763
        %v4810 = vmul.f32 %v4666, %v4763
        %v4811 = vmul.f32 %v4667, %v4768
        %v4812 = vmul.f32 %v4668, %v4768
        %v4813 = vmul.f32 %v4669, %v4768
        %v4814 = vmul.f32 %v4670, %v4773
        %v4815 = vmul.f32 %v4671, %v4773
        %v4816 = vmul.f32 %v4672, %v4773
        %v4817 = vmul.f32 %v4673, %v4778
        %v4818 = vmul.f32 %v4674, %v4778
        %v4819 = vmul.f32 %v4675, %v4778
        %v4820 = vmul.f32 %v4676, %v4783
        %v4821 = vmul.f32 %v4677, %v4783
        %v4822 = vmul.f32 %v4678, %v4783
        %v4823 = vmul.f32 %v4679, %v4788
        %v4824 = vmul.f32 %v4680, %v4788
        %v4825 = vmul.f32 %v4681, %v4788
        %v4826 = vmax.f32 %v4790, 0.0
        %v4827 = vmax.f32 %v4791, 0.0
        %v4828 = vmax.f32 %v4792, 0.0
        %v4829 = vmax.f32 %v4793, 0.0
        %v4830 = vmax.f32 %v4794, 0.0
        %v4831 = vmax.f32 %v4795, 0.0
        %v4832 = vmax.f32 %v4796, 0.0
        %v4833 = vmax.f32 %v4797, 0.0
        %v4834 = vmax.f32 %v4798, 0.0
        %v4835 = vmax.f32 %v4799, 0.0
        %v4836 = vmax.f32 %v4800, 0.0
        %v4837 = vmax.f32 %v4801, 0.0
        %v4838 = vmax.f32 %v4802, 0.0
        %v4839 = vmax.f32 %v4803, 0.0
        %v4840 = vmax.f32 %v4804, 0.0
        %v4841 = vmax.f32 %v4805, 0.0
        %v4842 = vmax.f32 %v4806, 0.0
        %v4843 = vmax.f32 %v4807, 0.0
        %v4844 = vmax.f32 %v4808, 0.0
        %v4845 = vmax.f32 %v4809, 0.0
        %v4846 = vmax.f32 %v4810, 0.0
        %v4847 = vmax.f32 %v4811, 0.0
        %v4848 = vmax.f32 %v4812, 0.0
        %v4849 = vmax.f32 %v4813, 0.0
        %v4850 = vmax.f32 %v4814, 0.0
        %v4851 = vmax.f32 %v4815, 0.0
        %v4852 = vmax.f32 %v4816, 0.0
        %v4853 = vmax.f32 %v4817, 0.0
        %v4854 = vmax.f32 %v4818, 0.0
        %v4855 = vmax.f32 %v4819, 0.0
        %v4856 = vmax.f32 %v4820, 0.0
        %v4857 = vmax.f32 %v4821, 0.0
        %v4858 = vmax.f32 %v4822, 0.0
        %v4859 = vmax.f32 %v4823, 0.0
        %v4860 = vmax.f32 %v4824, 0.0
        %v4861 = vmax.f32 %v4825, 0.0
        %4862 = vst [vmem:[#allocation2] sm:$0xff] %v4826
        %4863 = vst [vmem:[#allocation2 + $0x8] sm:$0xff] %v4827
        %4864 = vst [vmem:[#allocation2 + $0x10] sm:$0xff] %v4828
        %4865 = vst [vmem:[#allocation2 + $0x30] sm:$0xff] %v4829
        %4866 = vst [vmem:[#allocation2 + $0x38] sm:$0xff] %v4830
        %4867 = vst [vmem:[#allocation2 + $0x40] sm:$0xff] %v4831
        %4868 = vst [vmem:[#allocation2 + $0x60] sm:$0xff] %v4832
        %4869 = vst [vmem:[#allocation2 + $0x68] sm:$0xff] %v4833
        %4870 = vst [vmem:[#allocation2 + $0x70] sm:$0xff] %v4834
        %4871 = vst [vmem:[#allocation2 + $0x90] sm:$0xff] %v4835
        %4872 = vst [vmem:[#allocation2 + $0x98] sm:$0xff] %v4836
        %4873 = vst [vmem:[#allocation2 + $0xa0] sm:$0xff] %v4837
        %4874 = vst [vmem:[#allocation2 + $0xc0] sm:$0xff] %v4838
        %4875 = vst [vmem:[#allocation2 + $0xc8] sm:$0xff] %v4839
        %4876 = vst [vmem:[#allocation2 + $0xd0] sm:$0xff] %v4840
        %4877 = vst [vmem:[#allocation2 + $0xf0] sm:$0xff] %v4841
        %4878 = vst [vmem:[#allocation2 + $0xf8] sm:$0xff] %v4842
        %4879 = vst [vmem:[#allocation2 + $0x100] sm:$0xff] %v4843
        %4880 = vst [vmem:[#allocation2 + $0x120] sm:$0xff] %v4844
        %4881 = vst [vmem:[#allocation2 + $0x128] sm:$0xff] %v4845
        %4882 = vst [vmem:[#allocation2 + $0x130] sm:$0xff] %v4846
        %4883 = vst [vmem:[#allocation2 + $0x150] sm:$0xff] %v4847
        %4884 = vst [vmem:[#allocation2 + $0x158] sm:$0xff] %v4848
        %4885 = vst [vmem:[#allocation2 + $0x160] sm:$0xff] %v4849
        %4886 = vst [vmem:[#allocation2 + $0x180] sm:$0xff] %v4850
        %4887 = vst [vmem:[#allocation2 + $0x188] sm:$0xff] %v4851
        %4888 = vst [vmem:[#allocation2 + $0x190] sm:$0xff] %v4852
        %4889 = vst [vmem:[#allocation2 + $0x1b0] sm:$0xff] %v4853
        %4890 = vst [vmem:[#allocation2 + $0x1b8] sm:$0xff] %v4854
        %4891 = vst [vmem:[#allocation2 + $0x1c0] sm:$0xff] %v4855
        %4892 = vst [vmem:[#allocation2 + $0x1e0] sm:$0xff] %v4856
        %4893 = vst [vmem:[#allocation2 + $0x1e8] sm:$0xff] %v4857
        %4894 = vst [vmem:[#allocation2 + $0x1f0] sm:$0xff] %v4858
        %4895 = vst [vmem:[#allocation2 + $0x210] sm:$0xff] %v4859
        %4896 = vst [vmem:[#allocation2 + $0x218] sm:$0xff] %v4860
        %4897 = vst [vmem:[#allocation2 + $0x220] sm:$0xff] %v4861
        %v4898 = vsub.f32 0.0, %v4790
        %v4899 = vsub.f32 0.0, %v4791
        %v4900 = vsub.f32 0.0, %v4792
        %v4901 = vsub.f32 0.0, %v4793
        %v4902 = vsub.f32 0.0, %v4794
        %v4903 = vsub.f32 0.0, %v4795
        %v4904 = vsub.f32 0.0, %v4796
        %v4905 = vsub.f32 0.0, %v4797
        %v4906 = vsub.f32 0.0, %v4798
        %v4907 = vsub.f32 0.0, %v4799
        %v4908 = vsub.f32 0.0, %v4800
        %v4909 = vsub.f32 0.0, %v4801
        %v4910 = vsub.f32 0.0, %v4802
        %v4911 = vsub.f32 0.0, %v4803
        %v4912 = vsub.f32 0.0, %v4804
        %v4913 = vsub.f32 0.0, %v4805
        %v4914 = vsub.f32 0.0, %v4806
        %v4915 = vsub.f32 0.0, %v4807
        %v4916 = vsub.f32 0.0, %v4808
        %v4917 = vsub.f32 0.0, %v4809
        %v4918 = vsub.f32 0.0, %v4810
        %v4919 = vsub.f32 0.0, %v4811
        %v4920 = vsub.f32 0.0, %v4812
        %v4921 = vsub.f32 0.0, %v4813
        %v4922 = vsub.f32 0.0, %v4814
        %v4923 = vsub.f32 0.0, %v4815
        %v4924 = vsub.f32 0.0, %v4816
        %v4925 = vsub.f32 0.0, %v4817
        %v4926 = vsub.f32 0.0, %v4818
        %v4927 = vsub.f32 0.0, %v4819
        %v4928 = vsub.f32 0.0, %v4820
        %v4929 = vsub.f32 0.0, %v4821
        %v4930 = vsub.f32 0.0, %v4822
        %v4931 = vsub.f32 0.0, %v4823
        %v4932 = vsub.f32 0.0, %v4824
        %v4933 = vsub.f32 0.0, %v4825
        %v4934 = vmax.f32 %v4898, 0.0
        %v4935 = vmax.f32 %v4899, 0.0
        %v4936 = vmax.f32 %v4900, 0.0
        %v4937 = vmax.f32 %v4901, 0.0
        %v4938 = vmax.f32 %v4902, 0.0
        %v4939 = vmax.f32 %v4903, 0.0
        %v4940 = vmax.f32 %v4904, 0.0
        %v4941 = vmax.f32 %v4905, 0.0
        %v4942 = vmax.f32 %v4906, 0.0
        %v4943 = vmax.f32 %v4907, 0.0
        %v4944 = vmax.f32 %v4908, 0.0
        %v4945 = vmax.f32 %v4909, 0.0
        %v4946 = vmax.f32 %v4910, 0.0
        %v4947 = vmax.f32 %v4911, 0.0
        %v4948 = vmax.f32 %v4912, 0.0
        %v4949 = vmax.f32 %v4913, 0.0
        %v4950 = vmax.f32 %v4914, 0.0
        %v4951 = vmax.f32 %v4915, 0.0
        %v4952 = vmax.f32 %v4916, 0.0
        %v4953 = vmax.f32 %v4917, 0.0
        %v4954 = vmax.f32 %v4918, 0.0
        %v4955 = vmax.f32 %v4919, 0.0
        %v4956 = vmax.f32 %v4920, 0.0
        %v4957 = vmax.f32 %v4921, 0.0
        %v4958 = vmax.f32 %v4922, 0.0
        %v4959 = vmax.f32 %v4923, 0.0
        %v4960 = vmax.f32 %v4924, 0.0
        %v4961 = vmax.f32 %v4925, 0.0
        %v4962 = vmax.f32 %v4926, 0.0
        %v4963 = vmax.f32 %v4927, 0.0
        %v4964 = vmax.f32 %v4928, 0.0
        %v4965 = vmax.f32 %v4929, 0.0
        %v4966 = vmax.f32 %v4930, 0.0
        %v4967 = vmax.f32 %v4931, 0.0
        %v4968 = vmax.f32 %v4932, 0.0
        %v4969 = vmax.f32 %v4933, 0.0
        %4970 = vst [vmem:[#allocation2 + $0x18] sm:$0xff] %v4934
        %4971 = vst [vmem:[#allocation2 + $0x20] sm:$0xff] %v4935
        %4972 = vst [vmem:[#allocation2 + $0x28] sm:$0xff] %v4936
        %4973 = vst [vmem:[#allocation2 + $0x48] sm:$0xff] %v4937
        %4974 = vst [vmem:[#allocation2 + $0x50] sm:$0xff] %v4938
        %4975 = vst [vmem:[#allocation2 + $0x58] sm:$0xff] %v4939
        %4976 = vst [vmem:[#allocation2 + $0x78] sm:$0xff] %v4940
        %4977 = vst [vmem:[#allocation2 + $0x80] sm:$0xff] %v4941
        %4978 = vst [vmem:[#allocation2 + $0x88] sm:$0xff] %v4942
        %4979 = vst [vmem:[#allocation2 + $0xa8] sm:$0xff] %v4943
        %4980 = vst [vmem:[#allocation2 + $0xb0] sm:$0xff] %v4944
        %4981 = vst [vmem:[#allocation2 + $0xb8] sm:$0xff] %v4945
        %4982 = vst [vmem:[#allocation2 + $0xd8] sm:$0xff] %v4946
        %4983 = vst [vmem:[#allocation2 + $0xe0] sm:$0xff] %v4947
        %4984 = vst [vmem:[#allocation2 + $0xe8] sm:$0xff] %v4948
        %4985 = vst [vmem:[#allocation2 + $0x108] sm:$0xff] %v4949
        %4986 = vst [vmem:[#allocation2 + $0x110] sm:$0xff] %v4950
        %4987 = vst [vmem:[#allocation2 + $0x118] sm:$0xff] %v4951
        %4988 = vst [vmem:[#allocation2 + $0x138] sm:$0xff] %v4952
        %4989 = vst [vmem:[#allocation2 + $0x140] sm:$0xff] %v4953
        %4990 = vst [vmem:[#allocation2 + $0x148] sm:$0xff] %v4954
        %4991 = vst [vmem:[#allocation2 + $0x168] sm:$0xff] %v4955
        %4992 = vst [vmem:[#allocation2 + $0x170] sm:$0xff] %v4956
        %4993 = vst [vmem:[#allocation2 + $0x178] sm:$0xff] %v4957
        %4994 = vst [vmem:[#allocation2 + $0x198] sm:$0xff] %v4958
        %4995 = vst [vmem:[#allocation2 + $0x1a0] sm:$0xff] %v4959
        %4996 = vst [vmem:[#allocation2 + $0x1a8] sm:$0xff] %v4960
        %4997 = vst [vmem:[#allocation2 + $0x1c8] sm:$0xff] %v4961
        %4998 = vst [vmem:[#allocation2 + $0x1d0] sm:$0xff] %v4962
        %4999 = vst [vmem:[#allocation2 + $0x1d8] sm:$0xff] %v4963
        %5000 = vst [vmem:[#allocation2 + $0x1f8] sm:$0xff] %v4964
        %5001 = vst [vmem:[#allocation2 + $0x200] sm:$0xff] %v4965
        %5002 = vst [vmem:[#allocation2 + $0x208] sm:$0xff] %v4966
        %5003 = vst [vmem:[#allocation2 + $0x228] sm:$0xff] %v4967
        %5004 = vst [vmem:[#allocation2 + $0x230] sm:$0xff] %v4968
        %5005 = vst [vmem:[#allocation2 + $0x238] sm:$0xff] %v4969
        %v5006 = vld [vmem:[#allocation8] sm:$0xff]
        %v5007 = vld [vmem:[#allocation8 + $0x8] sm:$0xff]
        %v5008 = vld [vmem:[#allocation8 + $0x10] sm:$0xff]
        %v5009 = vld [vmem:[#allocation8 + $0x18] sm:$0xff]
        %v5010 = vld [vmem:[#allocation8 + $0x20] sm:$0xff]
        %v5011 = vld [vmem:[#allocation8 + $0x28] sm:$0xff]
        %v5012 = vld [vmem:[#allocation8 + $0x30] sm:$0xff]
        %v5013 = vld [vmem:[#allocation8 + $0x38] sm:$0xff]
        %v5014 = vld [vmem:[#allocation8 + $0x40] sm:$0xff]
        %v5015 = vld [vmem:[#allocation8 + $0x48] sm:$0xff]
        %v5016 = vld [vmem:[#allocation8 + $0x50] sm:$0xff]
        %v5017 = vld [vmem:[#allocation8 + $0x58] sm:$0xff]
        %v5018 = vld [vmem:[#allocation8 + $0x60] sm:$0xff]
        %v5019 = vld [vmem:[#allocation8 + $0x68] sm:$0xff]
        %v5020 = vld [vmem:[#allocation8 + $0x70] sm:$0xff]
        %v5021 = vld [vmem:[#allocation8 + $0x78] sm:$0xff]
        %v5022 = vld [vmem:[#allocation8 + $0x80] sm:$0xff]
        %v5023 = vld [vmem:[#allocation8 + $0x88] sm:$0xff]
        %v5024 = vld [vmem:[#allocation8 + $0x90] sm:$0xff]
        %v5025 = vld [vmem:[#allocation8 + $0x98] sm:$0xff]
        %v5026 = vld [vmem:[#allocation8 + $0xa0] sm:$0xff]
        %v5027 = vld [vmem:[#allocation8 + $0xa8] sm:$0xff]
        %v5028 = vld [vmem:[#allocation8 + $0xb0] sm:$0xff]
        %v5029 = vld [vmem:[#allocation8 + $0xb8] sm:$0xff]
        %v5030 = vld [vmem:[#allocation8 + $0xc0] sm:$0xff]
        %v5031 = vld [vmem:[#allocation8 + $0xc8] sm:$0xff]
        %v5032 = vld [vmem:[#allocation8 + $0xd0] sm:$0xff]
        %v5033 = vld [vmem:[#allocation8 + $0xd8] sm:$0xff]
        %v5034 = vld [vmem:[#allocation8 + $0xe0] sm:$0xff]
        %v5035 = vld [vmem:[#allocation8 + $0xe8] sm:$0xff]
        %v5036 = vld [vmem:[#allocation8 + $0xf0] sm:$0xff]
        %v5037 = vld [vmem:[#allocation8 + $0xf8] sm:$0xff]
        %v5038 = vld [vmem:[#allocation8 + $0x100] sm:$0xff]
        %v5039 = vld [vmem:[#allocation8 + $0x108] sm:$0xff]
        %v5040 = vld [vmem:[#allocation8 + $0x110] sm:$0xff]
        %v5041 = vld [vmem:[#allocation8 + $0x118] sm:$0xff]
        %v5042 = vld [vmem:[#allocation8 + $0x120] sm:$0xff]
        %v5043 = vld [vmem:[#allocation8 + $0x128] sm:$0xff]
        %v5044 = vld [vmem:[#allocation8 + $0x130] sm:$0xff]
        %v5045 = vld [vmem:[#allocation8 + $0x138] sm:$0xff]
        %v5046 = vld [vmem:[#allocation8 + $0x140] sm:$0xff]
        %v5047 = vld [vmem:[#allocation8 + $0x148] sm:$0xff]
        %v5048 = vld [vmem:[#allocation8 + $0x150] sm:$0xff]
        %v5049 = vld [vmem:[#allocation8 + $0x158] sm:$0xff]
        %v5050 = vld [vmem:[#allocation8 + $0x160] sm:$0xff]
        %v5051 = vld [vmem:[#allocation8 + $0x168] sm:$0xff]
        %v5052 = vld [vmem:[#allocation8 + $0x170] sm:$0xff]
        %v5053 = vld [vmem:[#allocation8 + $0x178] sm:$0xff]
        %v5054 = vld [vmem:[#allocation8 + $0x180] sm:$0xff]
        %v5055 = vld [vmem:[#allocation8 + $0x188] sm:$0xff]
        %v5056 = vld [vmem:[#allocation8 + $0x190] sm:$0xff]
        %v5057 = vld [vmem:[#allocation8 + $0x198] sm:$0xff]
        %v5058 = vld [vmem:[#allocation8 + $0x1a0] sm:$0xff]
        %v5059 = vld [vmem:[#allocation8 + $0x1a8] sm:$0xff]
        %v5060 = vld [vmem:[#allocation8 + $0x1b0] sm:$0xff]
        %v5061 = vld [vmem:[#allocation8 + $0x1b8] sm:$0xff]
        %v5062 = vld [vmem:[#allocation8 + $0x1c0] sm:$0xff]
        %v5063 = vld [vmem:[#allocation8 + $0x1c8] sm:$0xff]
        %v5064 = vld [vmem:[#allocation8 + $0x1d0] sm:$0xff]
        %v5065 = vld [vmem:[#allocation8 + $0x1d8] sm:$0xff]
        %v5066 = vld [vmem:[#allocation8 + $0x1e0] sm:$0xff]
        %v5067 = vld [vmem:[#allocation8 + $0x1e8] sm:$0xff]
        %v5068 = vld [vmem:[#allocation8 + $0x1f0] sm:$0xff]
        %v5069 = vld [vmem:[#allocation8 + $0x1f8] sm:$0xff]
        %v5070 = vld [vmem:[#allocation8 + $0x200] sm:$0xff]
        %v5071 = vld [vmem:[#allocation8 + $0x208] sm:$0xff]
        %v5072 = vld [vmem:[#allocation8 + $0x210] sm:$0xff]
        %v5073 = vld [vmem:[#allocation8 + $0x218] sm:$0xff]
        %v5074 = vld [vmem:[#allocation8 + $0x220] sm:$0xff]
        %v5075 = vld [vmem:[#allocation8 + $0x228] sm:$0xff]
        %v5076 = vld [vmem:[#allocation8 + $0x230] sm:$0xff]
        %v5077 = vld [vmem:[#allocation8 + $0x238] sm:$0xff]
        %v5078 = vld [vmem:[#allocation8 + $0x240] sm:$0xff]
        %v5079 = vld [vmem:[#allocation8 + $0x248] sm:$0xff]
        %v5080 = vld [vmem:[#allocation8 + $0x250] sm:$0xff]
        %v5081 = vld [vmem:[#allocation8 + $0x258] sm:$0xff]
        %v5082 = vld [vmem:[#allocation8 + $0x260] sm:$0xff]
        %v5083 = vld [vmem:[#allocation8 + $0x268] sm:$0xff]
        %v5084 = vld [vmem:[#allocation8 + $0x270] sm:$0xff]
        %v5085 = vld [vmem:[#allocation8 + $0x278] sm:$0xff]
        %v5086 = vld [vmem:[#allocation8 + $0x280] sm:$0xff]
        %v5087 = vld [vmem:[#allocation8 + $0x288] sm:$0xff]
        %v5088 = vld [vmem:[#allocation8 + $0x290] sm:$0xff]
        %v5089 = vld [vmem:[#allocation8 + $0x298] sm:$0xff]
        %v5090 = vld [vmem:[#allocation8 + $0x2a0] sm:$0xff]
        %v5091 = vld [vmem:[#allocation8 + $0x2a8] sm:$0xff]
        %v5092 = vld [vmem:[#allocation8 + $0x2b0] sm:$0xff]
        %v5093 = vld [vmem:[#allocation8 + $0x2b8] sm:$0xff]
        %v5094 = vld [vmem:[#allocation8 + $0x2c0] sm:$0xff]
        %v5095 = vld [vmem:[#allocation8 + $0x2c8] sm:$0xff]
        %v5096 = vld [vmem:[#allocation8 + $0x2d0] sm:$0xff]
        %v5097 = vld [vmem:[#allocation8 + $0x2d8] sm:$0xff]
        %v5098 = vld [vmem:[#allocation8 + $0x2e0] sm:$0xff]
        %v5099 = vld [vmem:[#allocation8 + $0x2e8] sm:$0xff]
        %v5100 = vld [vmem:[#allocation8 + $0x2f0] sm:$0xff]
        %v5101 = vld [vmem:[#allocation8 + $0x2f8] sm:$0xff]
        %v5102 = vld [vmem:[#allocation9] sm:$0xff]
        %v5103 = vld [vmem:[#allocation9 + $0x8] sm:$0xff]
        %v5104 = vld [vmem:[#allocation9 + $0x10] sm:$0xff]
        %v5105 = vld [vmem:[#allocation9 + $0x18] sm:$0xff]
        %v5106 = vld [vmem:[#allocation9 + $0x20] sm:$0xff]
        %v5107 = vld [vmem:[#allocation9 + $0x28] sm:$0xff]
        %v5108 = vld [vmem:[#allocation9 + $0x30] sm:$0xff]
        %v5109 = vld [vmem:[#allocation9 + $0x38] sm:$0xff]
        %v5110 = vld [vmem:[#allocation9 + $0x40] sm:$0xff]
        %v5111 = vld [vmem:[#allocation9 + $0x48] sm:$0xff]
        %v5112 = vld [vmem:[#allocation9 + $0x50] sm:$0xff]
        %v5113 = vld [vmem:[#allocation9 + $0x58] sm:$0xff]
        %v5114 = vld [vmem:[#allocation9 + $0x60] sm:$0xff]
        %v5115 = vld [vmem:[#allocation9 + $0x68] sm:$0xff]
        %v5116 = vld [vmem:[#allocation9 + $0x70] sm:$0xff]
        %v5117 = vld [vmem:[#allocation9 + $0x78] sm:$0xff]
        %v5118 = vld [vmem:[#allocation9 + $0x80] sm:$0xff]
        %v5119 = vld [vmem:[#allocation9 + $0x88] sm:$0xff]
        %v5120 = vld [vmem:[#allocation9 + $0x90] sm:$0xff]
        %v5121 = vld [vmem:[#allocation9 + $0x98] sm:$0xff]
        %v5122 = vld [vmem:[#allocation9 + $0xa0] sm:$0xff]
        %v5123 = vld [vmem:[#allocation9 + $0xa8] sm:$0xff]
        %v5124 = vld [vmem:[#allocation9 + $0xb0] sm:$0xff]
        %v5125 = vld [vmem:[#allocation9 + $0xb8] sm:$0xff]
        %v5126 = vld [vmem:[#allocation9 + $0xc0] sm:$0xff]
        %v5127 = vld [vmem:[#allocation9 + $0xc8] sm:$0xff]
        %v5128 = vld [vmem:[#allocation9 + $0xd0] sm:$0xff]
        %v5129 = vld [vmem:[#allocation9 + $0xd8] sm:$0xff]
        %v5130 = vld [vmem:[#allocation9 + $0xe0] sm:$0xff]
        %v5131 = vld [vmem:[#allocation9 + $0xe8] sm:$0xff]
        %v5132 = vld [vmem:[#allocation9 + $0xf0] sm:$0xff]
        %v5133 = vld [vmem:[#allocation9 + $0xf8] sm:$0xff]
        %v5134 = vld [vmem:[#allocation9 + $0x100] sm:$0xff]
        %v5135 = vld [vmem:[#allocation9 + $0x108] sm:$0xff]
        %v5136 = vld [vmem:[#allocation9 + $0x110] sm:$0xff]
        %v5137 = vld [vmem:[#allocation9 + $0x118] sm:$0xff]
        %v5138 = vld [vmem:[#allocation9 + $0x120] sm:$0xff]
        %v5139 = vld [vmem:[#allocation9 + $0x128] sm:$0xff]
        %v5140 = vld [vmem:[#allocation9 + $0x130] sm:$0xff]
        %v5141 = vld [vmem:[#allocation9 + $0x138] sm:$0xff]
        %v5142 = vld [vmem:[#allocation9 + $0x140] sm:$0xff]
        %v5143 = vld [vmem:[#allocation9 + $0x148] sm:$0xff]
        %v5144 = vld [vmem:[#allocation9 + $0x150] sm:$0xff]
        %v5145 = vld [vmem:[#allocation9 + $0x158] sm:$0xff]
        %v5146 = vld [vmem:[#allocation9 + $0x160] sm:$0xff]
        %v5147 = vld [vmem:[#allocation9 + $0x168] sm:$0xff]
        %v5148 = vld [vmem:[#allocation9 + $0x170] sm:$0xff]
        %v5149 = vld [vmem:[#allocation9 + $0x178] sm:$0xff]
        %v5150 = vld [vmem:[#allocation9 + $0x180] sm:$0xff]
        %v5151 = vld [vmem:[#allocation9 + $0x188] sm:$0xff]
        %v5152 = vld [vmem:[#allocation9 + $0x190] sm:$0xff]
        %v5153 = vld [vmem:[#allocation9 + $0x198] sm:$0xff]
        %v5154 = vld [vmem:[#allocation9 + $0x1a0] sm:$0xff]
        %v5155 = vld [vmem:[#allocation9 + $0x1a8] sm:$0xff]
        %v5156 = vld [vmem:[#allocation9 + $0x1b0] sm:$0xff]
        %v5157 = vld [vmem:[#allocation9 + $0x1b8] sm:$0xff]
        %v5158 = vld [vmem:[#allocation9 + $0x1c0] sm:$0xff]
        %v5159 = vld [vmem:[#allocation9 + $0x1c8] sm:$0xff]
        %v5160 = vld [vmem:[#allocation9 + $0x1d0] sm:$0xff]
        %v5161 = vld [vmem:[#allocation9 + $0x1d8] sm:$0xff]
        %v5162 = vld [vmem:[#allocation9 + $0x1e0] sm:$0xff]
        %v5163 = vld [vmem:[#allocation9 + $0x1e8] sm:$0xff]
        %v5164 = vld [vmem:[#allocation9 + $0x1f0] sm:$0xff]
        %v5165 = vld [vmem:[#allocation9 + $0x1f8] sm:$0xff]
        %v5166 = vld [vmem:[#allocation9 + $0x200] sm:$0xff]
        %v5167 = vld [vmem:[#allocation9 + $0x208] sm:$0xff]
        %v5168 = vld [vmem:[#allocation9 + $0x210] sm:$0xff]
        %v5169 = vld [vmem:[#allocation9 + $0x218] sm:$0xff]
        %v5170 = vld [vmem:[#allocation9 + $0x220] sm:$0xff]
        %v5171 = vld [vmem:[#allocation9 + $0x228] sm:$0xff]
        %v5172 = vld [vmem:[#allocation9 + $0x230] sm:$0xff]
        %v5173 = vld [vmem:[#allocation9 + $0x238] sm:$0xff]
        %v5174 = vld [vmem:[#allocation9 + $0x240] sm:$0xff]
        %v5175 = vld [vmem:[#allocation9 + $0x248] sm:$0xff]
        %v5176 = vld [vmem:[#allocation9 + $0x250] sm:$0xff]
        %v5177 = vld [vmem:[#allocation9 + $0x258] sm:$0xff]
        %v5178 = vld [vmem:[#allocation9 + $0x260] sm:$0xff]
        %v5179 = vld [vmem:[#allocation9 + $0x268] sm:$0xff]
        %v5180 = vld [vmem:[#allocation9 + $0x270] sm:$0xff]
        %v5181 = vld [vmem:[#allocation9 + $0x278] sm:$0xff]
        %v5182 = vld [vmem:[#allocation9 + $0x280] sm:$0xff]
        %v5183 = vld [vmem:[#allocation9 + $0x288] sm:$0xff]
        %v5184 = vld [vmem:[#allocation9 + $0x290] sm:$0xff]
        %v5185 = vld [vmem:[#allocation9 + $0x298] sm:$0xff]
        %v5186 = vld [vmem:[#allocation9 + $0x2a0] sm:$0xff]
        %v5187 = vld [vmem:[#allocation9 + $0x2a8] sm:$0xff]
        %v5188 = vld [vmem:[#allocation9 + $0x2b0] sm:$0xff]
        %v5189 = vld [vmem:[#allocation9 + $0x2b8] sm:$0xff]
        %v5190 = vld [vmem:[#allocation9 + $0x2c0] sm:$0xff]
        %v5191 = vld [vmem:[#allocation9 + $0x2c8] sm:$0xff]
        %v5192 = vld [vmem:[#allocation9 + $0x2d0] sm:$0xff]
        %v5193 = vld [vmem:[#allocation9 + $0x2d8] sm:$0xff]
        %v5194 = vld [vmem:[#allocation9 + $0x2e0] sm:$0xff]
        %v5195 = vld [vmem:[#allocation9 + $0x2e8] sm:$0xff]
        %v5196 = vld [vmem:[#allocation9 + $0x2f0] sm:$0xff]
        %v5197 = vld [vmem:[#allocation9 + $0x2f8] sm:$0xff]
        %v5198 = vld [vmem:[%s14] sm:$0x3]
        %v5199 = vld [vmem:[#allocation2] sm:$0xff]
        %v5200 = vld [vmem:[#allocation2 + $0x8] sm:$0xff]
        %v5201 = vld [vmem:[#allocation2 + $0x10] sm:$0xff]
        %v5202 = vld [vmem:[#allocation2 + $0x18] sm:$0xff]
        %v5203 = vld [vmem:[#allocation2 + $0x20] sm:$0xff]
        %v5204 = vld [vmem:[#allocation2 + $0x28] sm:$0xff]
        %v5205 = vld [vmem:[#allocation2 + $0x30] sm:$0xff]
        %v5206 = vld [vmem:[#allocation2 + $0x38] sm:$0xff]
        %v5207 = vld [vmem:[#allocation2 + $0x40] sm:$0xff]
        %v5208 = vld [vmem:[#allocation2 + $0x48] sm:$0xff]
        %v5209 = vld [vmem:[#allocation2 + $0x50] sm:$0xff]
        %v5210 = vld [vmem:[#allocation2 + $0x58] sm:$0xff]
        %v5211 = vld [vmem:[#allocation2 + $0x60] sm:$0xff]
        %v5212 = vld [vmem:[#allocation2 + $0x68] sm:$0xff]
        %v5213 = vld [vmem:[#allocation2 + $0x70] sm:$0xff]
        %v5214 = vld [vmem:[#allocation2 + $0x78] sm:$0xff]
        %v5215 = vld [vmem:[#allocation2 + $0x80] sm:$0xff]
        %v5216 = vld [vmem:[#allocation2 + $0x88] sm:$0xff]
        %v5217 = vld [vmem:[#allocation2 + $0x90] sm:$0xff]
        %v5218 = vld [vmem:[#allocation2 + $0x98] sm:$0xff]
        %v5219 = vld [vmem:[#allocation2 + $0xa0] sm:$0xff]
        %v5220 = vld [vmem:[#allocation2 + $0xa8] sm:$0xff]
        %v5221 = vld [vmem:[#allocation2 + $0xb0] sm:$0xff]
        %v5222 = vld [vmem:[#allocation2 + $0xb8] sm:$0xff]
        %v5223 = vld [vmem:[#allocation2 + $0xc0] sm:$0xff]
        %v5224 = vld [vmem:[#allocation2 + $0xc8] sm:$0xff]
        %v5225 = vld [vmem:[#allocation2 + $0xd0] sm:$0xff]
        %v5226 = vld [vmem:[#allocation2 + $0xd8] sm:$0xff]
        %v5227 = vld [vmem:[#allocation2 + $0xe0] sm:$0xff]
        %v5228 = vld [vmem:[#allocation2 + $0xe8] sm:$0xff]
        %v5229 = vld [vmem:[#allocation2 + $0xf0] sm:$0xff]
        %v5230 = vld [vmem:[#allocation2 + $0xf8] sm:$0xff]
        %v5231 = vld [vmem:[#allocation2 + $0x100] sm:$0xff]
        %v5232 = vld [vmem:[#allocation2 + $0x108] sm:$0xff]
        %v5233 = vld [vmem:[#allocation2 + $0x110] sm:$0xff]
        %v5234 = vld [vmem:[#allocation2 + $0x118] sm:$0xff]
        %v5235 = vld [vmem:[#allocation2 + $0x120] sm:$0xff]
        %v5236 = vld [vmem:[#allocation2 + $0x128] sm:$0xff]
        %v5237 = vld [vmem:[#allocation2 + $0x130] sm:$0xff]
        %v5238 = vld [vmem:[#allocation2 + $0x138] sm:$0xff]
        %v5239 = vld [vmem:[#allocation2 + $0x140] sm:$0xff]
        %v5240 = vld [vmem:[#allocation2 + $0x148] sm:$0xff]
        %v5241 = vld [vmem:[#allocation2 + $0x150] sm:$0xff]
        %v5242 = vld [vmem:[#allocation2 + $0x158] sm:$0xff]
        %v5243 = vld [vmem:[#allocation2 + $0x160] sm:$0xff]
        %v5244 = vld [vmem:[#allocation2 + $0x168] sm:$0xff]
        %v5245 = vld [vmem:[#allocation2 + $0x170] sm:$0xff]
        %v5246 = vld [vmem:[#allocation2 + $0x178] sm:$0xff]
        %v5247 = vld [vmem:[#allocation2 + $0x180] sm:$0xff]
        %v5248 = vld [vmem:[#allocation2 + $0x188] sm:$0xff]
        %v5249 = vld [vmem:[#allocation2 + $0x190] sm:$0xff]
        %v5250 = vld [vmem:[#allocation2 + $0x198] sm:$0xff]
        %v5251 = vld [vmem:[#allocation2 + $0x1a0] sm:$0xff]
        %v5252 = vld [vmem:[#allocation2 + $0x1a8] sm:$0xff]
        %v5253 = vld [vmem:[#allocation2 + $0x1b0] sm:$0xff]
        %v5254 = vld [vmem:[#allocation2 + $0x1b8] sm:$0xff]
        %v5255 = vld [vmem:[#allocation2 + $0x1c0] sm:$0xff]
        %v5256 = vld [vmem:[#allocation2 + $0x1c8] sm:$0xff]
        %v5257 = vld [vmem:[#allocation2 + $0x1d0] sm:$0xff]
        %v5258 = vld [vmem:[#allocation2 + $0x1d8] sm:$0xff]
        %v5259 = vld [vmem:[#allocation2 + $0x1e0] sm:$0xff]
        %v5260 = vld [vmem:[#allocation2 + $0x1e8] sm:$0xff]
        %v5261 = vld [vmem:[#allocation2 + $0x1f0] sm:$0xff]
        %v5262 = vld [vmem:[#allocation2 + $0x1f8] sm:$0xff]
        %v5263 = vld [vmem:[#allocation2 + $0x200] sm:$0xff]
        %v5264 = vld [vmem:[#allocation2 + $0x208] sm:$0xff]
        %v5265 = vld [vmem:[#allocation2 + $0x210] sm:$0xff]
        %v5266 = vld [vmem:[#allocation2 + $0x218] sm:$0xff]
        %v5267 = vld [vmem:[#allocation2 + $0x220] sm:$0xff]
        %v5268 = vld [vmem:[#allocation2 + $0x228] sm:$0xff]
        %v5269 = vld [vmem:[#allocation2 + $0x230] sm:$0xff]
        %v5270 = vld [vmem:[#allocation2 + $0x238] sm:$0xff]
        %v5271 = vpack.c.bf16 %v5205, %v5199
        %v5272 = vpack.c.bf16 %v5206, %v5200
        %v5273 = vpack.c.bf16 %v5207, %v5201
        %v5274 = vpack.c.bf16 %v5208, %v5202
        %v5275 = vpack.c.bf16 %v5209, %v5203
        %v5276 = vpack.c.bf16 %v5210, %v5204
        %v5277 = vpack.c.bf16 %v5217, %v5211
        %v5278 = vpack.c.bf16 %v5218, %v5212
        %v5279 = vpack.c.bf16 %v5219, %v5213
        %v5280 = vpack.c.bf16 %v5220, %v5214
        %v5281 = vpack.c.bf16 %v5221, %v5215
        %v5282 = vpack.c.bf16 %v5222, %v5216
        %v5283 = vpack.c.bf16 %v5229, %v5223
        %v5284 = vpack.c.bf16 %v5230, %v5224
        %v5285 = vpack.c.bf16 %v5231, %v5225
        %v5286 = vpack.c.bf16 %v5232, %v5226
        %v5287 = vpack.c.bf16 %v5233, %v5227
        %v5288 = vpack.c.bf16 %v5234, %v5228
        %v5289 = vpack.c.bf16 %v5241, %v5235
        %v5290 = vpack.c.bf16 %v5242, %v5236
        %v5291 = vpack.c.bf16 %v5243, %v5237
        %v5292 = vpack.c.bf16 %v5244, %v5238
        %v5293 = vpack.c.bf16 %v5245, %v5239
        %v5294 = vpack.c.bf16 %v5246, %v5240
        %v5295 = vpack.c.bf16 %v5253, %v5247
        %v5296 = vpack.c.bf16 %v5254, %v5248
        %v5297 = vpack.c.bf16 %v5255, %v5249
        %v5298 = vpack.c.bf16 %v5256, %v5250
        %v5299 = vpack.c.bf16 %v5257, %v5251
        %v5300 = vpack.c.bf16 %v5258, %v5252
        %v5301 = vpack.c.bf16 %v5265, %v5259
        %v5302 = vpack.c.bf16 %v5266, %v5260
        %v5303 = vpack.c.bf16 %v5267, %v5261
        %v5304 = vpack.c.bf16 %v5268, %v5262
        %v5305 = vpack.c.bf16 %v5269, %v5263
        %v5306 = vpack.c.bf16 %v5270, %v5264
        %v5403 = vunpack.c.l.b16 %v5006
        %v5404 = vunpack.c.h.b16 %v5006
        %v5405 = vunpack.c.l.b16 %v5007
        %v5406 = vunpack.c.h.b16 %v5007
        %v5407 = vunpack.c.l.b16 %v5008
        %v5408 = vunpack.c.h.b16 %v5008
        %v5409 = vunpack.c.l.b16 %v5009
        %v5410 = vunpack.c.h.b16 %v5009
        %v5411 = vunpack.c.l.b16 %v5010
        %v5412 = vunpack.c.h.b16 %v5010
        %v5413 = vunpack.c.l.b16 %v5011
        %v5414 = vunpack.c.h.b16 %v5011
        %v5415 = vunpack.c.l.b16 %v5012
        %v5416 = vunpack.c.h.b16 %v5012
        %v5417 = vunpack.c.l.b16 %v5013
        %v5418 = vunpack.c.h.b16 %v5013
        %v5419 = vunpack.c.l.b16 %v5014
        %v5420 = vunpack.c.h.b16 %v5014
        %v5421 = vunpack.c.l.b16 %v5015
        %v5422 = vunpack.c.h.b16 %v5015
        %v5423 = vunpack.c.l.b16 %v5016
        %v5424 = vunpack.c.h.b16 %v5016
        %v5425 = vunpack.c.l.b16 %v5017
        %v5426 = vunpack.c.h.b16 %v5017
        %v5427 = vunpack.c.l.b16 %v5018
        %v5428 = vunpack.c.h.b16 %v5018
        %v5429 = vunpack.c.l.b16 %v5019
        %v5430 = vunpack.c.h.b16 %v5019
        %v5431 = vunpack.c.l.b16 %v5020
        %v5432 = vunpack.c.h.b16 %v5020
        %v5433 = vunpack.c.l.b16 %v5021
        %v5434 = vunpack.c.h.b16 %v5021
        %v5435 = vunpack.c.l.b16 %v5022
        %v5436 = vunpack.c.h.b16 %v5022
        %v5437 = vunpack.c.l.b16 %v5023
        %v5438 = vunpack.c.h.b16 %v5023
        %v5439 = vunpack.c.l.b16 %v5024
        %v5440 = vunpack.c.h.b16 %v5024
        %v5441 = vunpack.c.l.b16 %v5025
        %v5442 = vunpack.c.h.b16 %v5025
        %v5443 = vunpack.c.l.b16 %v5026
        %v5444 = vunpack.c.h.b16 %v5026
        %v5445 = vunpack.c.l.b16 %v5027
        %v5446 = vunpack.c.h.b16 %v5027
        %v5447 = vunpack.c.l.b16 %v5028
        %v5448 = vunpack.c.h.b16 %v5028
        %v5449 = vunpack.c.l.b16 %v5029
        %v5450 = vunpack.c.h.b16 %v5029
        %v5451 = vunpack.c.l.b16 %v5030
        %v5452 = vunpack.c.h.b16 %v5030
        %v5453 = vunpack.c.l.b16 %v5031
        %v5454 = vunpack.c.h.b16 %v5031
        %v5455 = vunpack.c.l.b16 %v5032
        %v5456 = vunpack.c.h.b16 %v5032
        %v5457 = vunpack.c.l.b16 %v5033
        %v5458 = vunpack.c.h.b16 %v5033
        %v5459 = vunpack.c.l.b16 %v5034
        %v5460 = vunpack.c.h.b16 %v5034
        %v5461 = vunpack.c.l.b16 %v5035
        %v5462 = vunpack.c.h.b16 %v5035
        %v5463 = vunpack.c.l.b16 %v5036
        %v5464 = vunpack.c.h.b16 %v5036
        %v5465 = vunpack.c.l.b16 %v5037
        %v5466 = vunpack.c.h.b16 %v5037
        %v5467 = vunpack.c.l.b16 %v5038
        %v5468 = vunpack.c.h.b16 %v5038
        %v5469 = vunpack.c.l.b16 %v5039
        %v5470 = vunpack.c.h.b16 %v5039
        %v5471 = vunpack.c.l.b16 %v5040
        %v5472 = vunpack.c.h.b16 %v5040
        %v5473 = vunpack.c.l.b16 %v5041
        %v5474 = vunpack.c.h.b16 %v5041
        %v5475 = vunpack.c.l.b16 %v5042
        %v5476 = vunpack.c.h.b16 %v5042
        %v5477 = vunpack.c.l.b16 %v5043
        %v5478 = vunpack.c.h.b16 %v5043
        %v5479 = vunpack.c.l.b16 %v5044
        %v5480 = vunpack.c.h.b16 %v5044
        %v5481 = vunpack.c.l.b16 %v5045
        %v5482 = vunpack.c.h.b16 %v5045
        %v5483 = vunpack.c.l.b16 %v5046
        %v5484 = vunpack.c.h.b16 %v5046
        %v5485 = vunpack.c.l.b16 %v5047
        %v5486 = vunpack.c.h.b16 %v5047
        %v5487 = vunpack.c.l.b16 %v5048
        %v5488 = vunpack.c.h.b16 %v5048
        %v5489 = vunpack.c.l.b16 %v5049
        %v5490 = vunpack.c.h.b16 %v5049
        %v5491 = vunpack.c.l.b16 %v5050
        %v5492 = vunpack.c.h.b16 %v5050
        %v5493 = vunpack.c.l.b16 %v5051
        %v5494 = vunpack.c.h.b16 %v5051
        %v5495 = vunpack.c.l.b16 %v5052
        %v5496 = vunpack.c.h.b16 %v5052
        %v5497 = vunpack.c.l.b16 %v5053
        %v5498 = vunpack.c.h.b16 %v5053
        %v5499 = vunpack.c.l.b16 %v5054
        %v5500 = vunpack.c.h.b16 %v5054
        %v5501 = vunpack.c.l.b16 %v5055
        %v5502 = vunpack.c.h.b16 %v5055
        %v5503 = vunpack.c.l.b16 %v5056
        %v5504 = vunpack.c.h.b16 %v5056
        %v5505 = vunpack.c.l.b16 %v5057
        %v5506 = vunpack.c.h.b16 %v5057
        %v5507 = vunpack.c.l.b16 %v5058
        %v5508 = vunpack.c.h.b16 %v5058
        %v5509 = vunpack.c.l.b16 %v5059
        %v5510 = vunpack.c.h.b16 %v5059
        %v5511 = vunpack.c.l.b16 %v5060
        %v5512 = vunpack.c.h.b16 %v5060
        %v5513 = vunpack.c.l.b16 %v5061
        %v5514 = vunpack.c.h.b16 %v5061
        %v5515 = vunpack.c.l.b16 %v5062
        %v5516 = vunpack.c.h.b16 %v5062
        %v5517 = vunpack.c.l.b16 %v5063
        %v5518 = vunpack.c.h.b16 %v5063
        %v5519 = vunpack.c.l.b16 %v5064
        %v5520 = vunpack.c.h.b16 %v5064
        %v5521 = vunpack.c.l.b16 %v5065
        %v5522 = vunpack.c.h.b16 %v5065
        %v5523 = vunpack.c.l.b16 %v5066
        %v5524 = vunpack.c.h.b16 %v5066
        %v5525 = vunpack.c.l.b16 %v5067
        %v5526 = vunpack.c.h.b16 %v5067
        %v5527 = vunpack.c.l.b16 %v5068
        %v5528 = vunpack.c.h.b16 %v5068
        %v5529 = vunpack.c.l.b16 %v5069
        %v5530 = vunpack.c.h.b16 %v5069
        %v5531 = vunpack.c.l.b16 %v5070
        %v5532 = vunpack.c.h.b16 %v5070
        %v5533 = vunpack.c.l.b16 %v5071
        %v5534 = vunpack.c.h.b16 %v5071
        %v5535 = vunpack.c.l.b16 %v5072
        %v5536 = vunpack.c.h.b16 %v5072
        %v5537 = vunpack.c.l.b16 %v5073
        %v5538 = vunpack.c.h.b16 %v5073
        %v5539 = vunpack.c.l.b16 %v5074
        %v5540 = vunpack.c.h.b16 %v5074
        %v5541 = vunpack.c.l.b16 %v5075
        %v5542 = vunpack.c.h.b16 %v5075
        %v5543 = vunpack.c.l.b16 %v5076
        %v5544 = vunpack.c.h.b16 %v5076
        %v5545 = vunpack.c.l.b16 %v5077
        %v5546 = vunpack.c.h.b16 %v5077
        %v5547 = vunpack.c.l.b16 %v5078
        %v5548 = vunpack.c.h.b16 %v5078
        %v5549 = vunpack.c.l.b16 %v5079
        %v5550 = vunpack.c.h.b16 %v5079
        %v5551 = vunpack.c.l.b16 %v5080
        %v5552 = vunpack.c.h.b16 %v5080
        %v5553 = vunpack.c.l.b16 %v5081
        %v5554 = vunpack.c.h.b16 %v5081
        %v5555 = vunpack.c.l.b16 %v5082
        %v5556 = vunpack.c.h.b16 %v5082
        %v5557 = vunpack.c.l.b16 %v5083
        %v5558 = vunpack.c.h.b16 %v5083
        %v5559 = vunpack.c.l.b16 %v5084
        %v5560 = vunpack.c.h.b16 %v5084
        %v5561 = vunpack.c.l.b16 %v5085
        %v5562 = vunpack.c.h.b16 %v5085
        %v5563 = vunpack.c.l.b16 %v5086
        %v5564 = vunpack.c.h.b16 %v5086
        %v5565 = vunpack.c.l.b16 %v5087
        %v5566 = vunpack.c.h.b16 %v5087
        %v5567 = vunpack.c.l.b16 %v5088
        %v5568 = vunpack.c.h.b16 %v5088
        %v5569 = vunpack.c.l.b16 %v5089
        %v5570 = vunpack.c.h.b16 %v5089
        %v5571 = vunpack.c.l.b16 %v5090
        %v5572 = vunpack.c.h.b16 %v5090
        %v5573 = vunpack.c.l.b16 %v5091
        %v5574 = vunpack.c.h.b16 %v5091
        %v5575 = vunpack.c.l.b16 %v5092
        %v5576 = vunpack.c.h.b16 %v5092
        %v5577 = vunpack.c.l.b16 %v5093
        %v5578 = vunpack.c.h.b16 %v5093
        %v5579 = vunpack.c.l.b16 %v5094
        %v5580 = vunpack.c.h.b16 %v5094
        %v5581 = vunpack.c.l.b16 %v5095
        %v5582 = vunpack.c.h.b16 %v5095
        %v5583 = vunpack.c.l.b16 %v5096
        %v5584 = vunpack.c.h.b16 %v5096
        %v5585 = vunpack.c.l.b16 %v5097
        %v5586 = vunpack.c.h.b16 %v5097
        %v5587 = vunpack.c.l.b16 %v5098
        %v5588 = vunpack.c.h.b16 %v5098
        %v5589 = vunpack.c.l.b16 %v5099
        %v5590 = vunpack.c.h.b16 %v5099
        %v5591 = vunpack.c.l.b16 %v5100
        %v5592 = vunpack.c.h.b16 %v5100
        %v5593 = vunpack.c.l.b16 %v5101
        %v5594 = vunpack.c.h.b16 %v5101
        %v5595 = vpack.c.b16 %v5405, %v5403
        %v5596 = vpack.c.b16 %v5406, %v5404
        %v5597 = vpack.c.b16 %v5409, %v5407
        %v5598 = vpack.c.b16 %v5410, %v5408
        %v5599 = vpack.c.b16 %v5413, %v5411
        %v5600 = vpack.c.b16 %v5414, %v5412
        %v5601 = vpack.c.b16 %v5417, %v5415
        %v5602 = vpack.c.b16 %v5418, %v5416
        %v5603 = vpack.c.b16 %v5421, %v5419
        %v5604 = vpack.c.b16 %v5422, %v5420
        %v5605 = vpack.c.b16 %v5425, %v5423
        %v5606 = vpack.c.b16 %v5426, %v5424
        %v5607 = vpack.c.b16 %v5429, %v5427
        %v5608 = vpack.c.b16 %v5430, %v5428
        %v5609 = vpack.c.b16 %v5433, %v5431
        %v5610 = vpack.c.b16 %v5434, %v5432
        %v5611 = vpack.c.b16 %v5437, %v5435
        %v5612 = vpack.c.b16 %v5438, %v5436
        %v5613 = vpack.c.b16 %v5441, %v5439
        %v5614 = vpack.c.b16 %v5442, %v5440
        %v5615 = vpack.c.b16 %v5445, %v5443
        %v5616 = vpack.c.b16 %v5446, %v5444
        %v5617 = vpack.c.b16 %v5449, %v5447
        %v5618 = vpack.c.b16 %v5450, %v5448
        %v5619 = vpack.c.b16 %v5453, %v5451
        %v5620 = vpack.c.b16 %v5454, %v5452
        %v5621 = vpack.c.b16 %v5457, %v5455
        %v5622 = vpack.c.b16 %v5458, %v5456
        %v5623 = vpack.c.b16 %v5461, %v5459
        %v5624 = vpack.c.b16 %v5462, %v5460
        %v5625 = vpack.c.b16 %v5465, %v5463
        %v5626 = vpack.c.b16 %v5466, %v5464
        %v5627 = vpack.c.b16 %v5469, %v5467
        %v5628 = vpack.c.b16 %v5470, %v5468
        %v5629 = vpack.c.b16 %v5473, %v5471
        %v5630 = vpack.c.b16 %v5474, %v5472
        %v5631 = vpack.c.b16 %v5477, %v5475
        %v5632 = vpack.c.b16 %v5478, %v5476
        %v5633 = vpack.c.b16 %v5481, %v5479
        %v5634 = vpack.c.b16 %v5482, %v5480
        %v5635 = vpack.c.b16 %v5485, %v5483
        %v5636 = vpack.c.b16 %v5486, %v5484
        %v5637 = vpack.c.b16 %v5489, %v5487
        %v5638 = vpack.c.b16 %v5490, %v5488
        %v5639 = vpack.c.b16 %v5493, %v5491
        %v5640 = vpack.c.b16 %v5494, %v5492
        %v5641 = vpack.c.b16 %v5497, %v5495
        %v5642 = vpack.c.b16 %v5498, %v5496
        %v5643 = vpack.c.b16 %v5501, %v5499
        %v5644 = vpack.c.b16 %v5502, %v5500
        %v5645 = vpack.c.b16 %v5505, %v5503
        %v5646 = vpack.c.b16 %v5506, %v5504
        %v5647 = vpack.c.b16 %v5509, %v5507
        %v5648 = vpack.c.b16 %v5510, %v5508
        %v5649 = vpack.c.b16 %v5513, %v5511
        %v5650 = vpack.c.b16 %v5514, %v5512
        %v5651 = vpack.c.b16 %v5517, %v5515
        %v5652 = vpack.c.b16 %v5518, %v5516
        %v5653 = vpack.c.b16 %v5521, %v5519
        %v5654 = vpack.c.b16 %v5522, %v5520
        %v5655 = vpack.c.b16 %v5525, %v5523
        %v5656 = vpack.c.b16 %v5526, %v5524
        %v5657 = vpack.c.b16 %v5529, %v5527
        %v5658 = vpack.c.b16 %v5530, %v5528
        %v5659 = vpack.c.b16 %v5533, %v5531
        %v5660 = vpack.c.b16 %v5534, %v5532
        %v5661 = vpack.c.b16 %v5537, %v5535
        %v5662 = vpack.c.b16 %v5538, %v5536
        %v5663 = vpack.c.b16 %v5541, %v5539
        %v5664 = vpack.c.b16 %v5542, %v5540
        %v5665 = vpack.c.b16 %v5545, %v5543
        %v5666 = vpack.c.b16 %v5546, %v5544
        %v5667 = vpack.c.b16 %v5549, %v5547
        %v5668 = vpack.c.b16 %v5550, %v5548
        %v5669 = vpack.c.b16 %v5553, %v5551
        %v5670 = vpack.c.b16 %v5554, %v5552
        %v5671 = vpack.c.b16 %v5557, %v5555
        %v5672 = vpack.c.b16 %v5558, %v5556
        %v5673 = vpack.c.b16 %v5561, %v5559
        %v5674 = vpack.c.b16 %v5562, %v5560
        %v5675 = vpack.c.b16 %v5565, %v5563
        %v5676 = vpack.c.b16 %v5566, %v5564
        %v5677 = vpack.c.b16 %v5569, %v5567
        %v5678 = vpack.c.b16 %v5570, %v5568
        %v5679 = vpack.c.b16 %v5573, %v5571
        %v5680 = vpack.c.b16 %v5574, %v5572
        %v5681 = vpack.c.b16 %v5577, %v5575
        %v5682 = vpack.c.b16 %v5578, %v5576
        %v5683 = vpack.c.b16 %v5581, %v5579
        %v5684 = vpack.c.b16 %v5582, %v5580
        %v5685 = vpack.c.b16 %v5585, %v5583
        %v5686 = vpack.c.b16 %v5586, %v5584
        %v5687 = vpack.c.b16 %v5589, %v5587
        %v5688 = vpack.c.b16 %v5590, %v5588
        %v5689 = vpack.c.b16 %v5593, %v5591
        %v5690 = vpack.c.b16 %v5594, %v5592
        %5787 = vmatpush.bf16.msra.mxu0 %v5609
        %5788 = vmatpush.bf16.msra.mxu0 %v5607
        %5789 = vmatpush.bf16.msra.mxu0 %v5605
        %5790 = vmatpush.bf16.msra.mxu0 %v5603
        %5791 = vmatpush.bf16.msra.mxu0 %v5601
        %5792 = vmatpush.bf16.msra.mxu0 %v5599
        %5793 = vmatpush.bf16.msra.mxu0 %v5597
        %5794 = vmatpush.bf16.msra.mxu0 %v5595
        %5795 = vmatmul.bf16.gmra.mxu0 %v5271
        %v5796 = vpop.f32.mrf.mxu0
        %v5797 = vadd.f32 0.0, %v5796
        %v5798 = vpop.f32.mrf.mxu0
        %v5799 = vadd.f32 0.0, %v5798
        %5800 = vmatmul.bf16.gmra.mxu0 %v5277
        %v5801 = vpop.f32.mrf.mxu0
        %v5802 = vadd.f32 0.0, %v5801
        %v5803 = vpop.f32.mrf.mxu0
        %v5804 = vadd.f32 0.0, %v5803
        %5805 = vmatmul.bf16.gmra.mxu0 %v5283
        %v5806 = vpop.f32.mrf.mxu0
        %v5807 = vadd.f32 0.0, %v5806
        %v5808 = vpop.f32.mrf.mxu0
        %v5809 = vadd.f32 0.0, %v5808
        %5810 = vmatmul.bf16.gmra.mxu0 %v5289
        %v5811 = vpop.f32.mrf.mxu0
        %v5812 = vadd.f32 0.0, %v5811
        %v5813 = vpop.f32.mrf.mxu0
        %v5814 = vadd.f32 0.0, %v5813
        %5815 = vmatmul.bf16.gmra.mxu0 %v5295
        %v5816 = vpop.f32.mrf.mxu0
        %v5817 = vadd.f32 0.0, %v5816
        %v5818 = vpop.f32.mrf.mxu0
        %v5819 = vadd.f32 0.0, %v5818
        %5820 = vmatmul.bf16.gmra.mxu0 %v5301
        %v5821 = vpop.f32.mrf.mxu0
        %v5822 = vadd.f32 0.0, %v5821
        %v5823 = vpop.f32.mrf.mxu0
        %v5824 = vadd.f32 0.0, %v5823
        %5825 = vdwg.mxu0
        %5826 = vmatpush.bf16.msra.mxu0 %v5625
        %5827 = vmatpush.bf16.msra.mxu0 %v5623
        %5828 = vmatpush.bf16.msra.mxu0 %v5621
        %5829 = vmatpush.bf16.msra.mxu0 %v5619
        %5830 = vmatpush.bf16.msra.mxu0 %v5617
        %5831 = vmatpush.bf16.msra.mxu0 %v5615
        %5832 = vmatpush.bf16.msra.mxu0 %v5613
        %5833 = vmatpush.bf16.msra.mxu0 %v5611
        %5834 = vmatmul.bf16.gmra.mxu0 %v5272
        %v5835 = vpop.f32.mrf.mxu0
        %v5836 = vadd.f32 %v5797, %v5835
        %v5837 = vpop.f32.mrf.mxu0
        %v5838 = vadd.f32 %v5799, %v5837
        %5839 = vmatmul.bf16.gmra.mxu0 %v5278
        %v5840 = vpop.f32.mrf.mxu0
        %v5841 = vadd.f32 %v5802, %v5840
        %v5842 = vpop.f32.mrf.mxu0
        %v5843 = vadd.f32 %v5804, %v5842
        %5844 = vmatmul.bf16.gmra.mxu0 %v5284
        %v5845 = vpop.f32.mrf.mxu0
        %v5846 = vadd.f32 %v5807, %v5845
        %v5847 = vpop.f32.mrf.mxu0
        %v5848 = vadd.f32 %v5809, %v5847
        %5849 = vmatmul.bf16.gmra.mxu0 %v5290
        %v5850 = vpop.f32.mrf.mxu0
        %v5851 = vadd.f32 %v5812, %v5850
        %v5852 = vpop.f32.mrf.mxu0
        %v5853 = vadd.f32 %v5814, %v5852
        %5854 = vmatmul.bf16.gmra.mxu0 %v5296
        %v5855 = vpop.f32.mrf.mxu0
        %v5856 = vadd.f32 %v5817, %v5855
        %v5857 = vpop.f32.mrf.mxu0
        %v5858 = vadd.f32 %v5819, %v5857
        %5859 = vmatmul.bf16.gmra.mxu0 %v5302
        %v5860 = vpop.f32.mrf.mxu0
        %v5861 = vadd.f32 %v5822, %v5860
        %v5862 = vpop.f32.mrf.mxu0
        %v5863 = vadd.f32 %v5824, %v5862
        %5864 = vdwg.mxu0
        %5865 = vmatpush.bf16.msra.mxu0 %v5641
        %5866 = vmatpush.bf16.msra.mxu0 %v5639
        %5867 = vmatpush.bf16.msra.mxu0 %v5637
        %5868 = vmatpush.bf16.msra.mxu0 %v5635
        %5869 = vmatpush.bf16.msra.mxu0 %v5633
        %5870 = vmatpush.bf16.msra.mxu0 %v5631
        %5871 = vmatpush.bf16.msra.mxu0 %v5629
        %5872 = vmatpush.bf16.msra.mxu0 %v5627
        %5873 = vmatmul.bf16.gmra.mxu0 %v5273
        %v5874 = vpop.f32.mrf.mxu0
        %v5875 = vadd.f32 %v5836, %v5874
        %v5876 = vpop.f32.mrf.mxu0
        %v5877 = vadd.f32 %v5838, %v5876
        %5878 = vmatmul.bf16.gmra.mxu0 %v5279
        %v5879 = vpop.f32.mrf.mxu0
        %v5880 = vadd.f32 %v5841, %v5879
        %v5881 = vpop.f32.mrf.mxu0
        %v5882 = vadd.f32 %v5843, %v5881
        %5883 = vmatmul.bf16.gmra.mxu0 %v5285
        %v5884 = vpop.f32.mrf.mxu0
        %v5885 = vadd.f32 %v5846, %v5884
        %v5886 = vpop.f32.mrf.mxu0
        %v5887 = vadd.f32 %v5848, %v5886
        %5888 = vmatmul.bf16.gmra.mxu0 %v5291
        %v5889 = vpop.f32.mrf.mxu0
        %v5890 = vadd.f32 %v5851, %v5889
        %v5891 = vpop.f32.mrf.mxu0
        %v5892 = vadd.f32 %v5853, %v5891
        %5893 = vmatmul.bf16.gmra.mxu0 %v5297
        %v5894 = vpop.f32.mrf.mxu0
        %v5895 = vadd.f32 %v5856, %v5894
        %v5896 = vpop.f32.mrf.mxu0
        %v5897 = vadd.f32 %v5858, %v5896
        %5898 = vmatmul.bf16.gmra.mxu0 %v5303
        %v5899 = vpop.f32.mrf.mxu0
        %v5900 = vadd.f32 %v5861, %v5899
        %v5901 = vpop.f32.mrf.mxu0
        %v5902 = vadd.f32 %v5863, %v5901
        %5903 = vdwg.mxu0
        %5904 = vmatpush.bf16.msra.mxu0 %v5657
        %5905 = vmatpush.bf16.msra.mxu0 %v5655
        %5906 = vmatpush.bf16.msra.mxu0 %v5653
        %5907 = vmatpush.bf16.msra.mxu0 %v5651
        %5908 = vmatpush.bf16.msra.mxu0 %v5649
        %5909 = vmatpush.bf16.msra.mxu0 %v5647
        %5910 = vmatpush.bf16.msra.mxu0 %v5645
        %5911 = vmatpush.bf16.msra.mxu0 %v5643
        %5912 = vmatmul.bf16.gmra.mxu0 %v5274
        %v5913 = vpop.f32.mrf.mxu0
        %v5914 = vadd.f32 %v5875, %v5913
        %v5915 = vpop.f32.mrf.mxu0
        %v5916 = vadd.f32 %v5877, %v5915
        %5917 = vmatmul.bf16.gmra.mxu0 %v5280
        %v5918 = vpop.f32.mrf.mxu0
        %v5919 = vadd.f32 %v5880, %v5918
        %v5920 = vpop.f32.mrf.mxu0
        %v5921 = vadd.f32 %v5882, %v5920
        %5922 = vmatmul.bf16.gmra.mxu0 %v5286
        %v5923 = vpop.f32.mrf.mxu0
        %v5924 = vadd.f32 %v5885, %v5923
        %v5925 = vpop.f32.mrf.mxu0
        %v5926 = vadd.f32 %v5887, %v5925
        %5927 = vmatmul.bf16.gmra.mxu0 %v5292
        %v5928 = vpop.f32.mrf.mxu0
        %v5929 = vadd.f32 %v5890, %v5928
        %v5930 = vpop.f32.mrf.mxu0
        %v5931 = vadd.f32 %v5892, %v5930
        %5932 = vmatmul.bf16.gmra.mxu0 %v5298
        %v5933 = vpop.f32.mrf.mxu0
        %v5934 = vadd.f32 %v5895, %v5933
        %v5935 = vpop.f32.mrf.mxu0
        %v5936 = vadd.f32 %v5897, %v5935
        %5937 = vmatmul.bf16.gmra.mxu0 %v5304
        %v5938 = vpop.f32.mrf.mxu0
        %v5939 = vadd.f32 %v5900, %v5938
        %v5940 = vpop.f32.mrf.mxu0
        %v5941 = vadd.f32 %v5902, %v5940
        %5942 = vdwg.mxu0
        %5943 = vmatpush.bf16.msra.mxu0 %v5673
        %5944 = vmatpush.bf16.msra.mxu0 %v5671
        %5945 = vmatpush.bf16.msra.mxu0 %v5669
        %5946 = vmatpush.bf16.msra.mxu0 %v5667
        %5947 = vmatpush.bf16.msra.mxu0 %v5665
        %5948 = vmatpush.bf16.msra.mxu0 %v5663
        %5949 = vmatpush.bf16.msra.mxu0 %v5661
        %5950 = vmatpush.bf16.msra.mxu0 %v5659
        %5951 = vmatmul.bf16.gmra.mxu0 %v5275
        %v5952 = vpop.f32.mrf.mxu0
        %v5953 = vadd.f32 %v5914, %v5952
        %v5954 = vpop.f32.mrf.mxu0
        %v5955 = vadd.f32 %v5916, %v5954
        %5956 = vmatmul.bf16.gmra.mxu0 %v5281
        %v5957 = vpop.f32.mrf.mxu0
        %v5958 = vadd.f32 %v5919, %v5957
        %v5959 = vpop.f32.mrf.mxu0
        %v5960 = vadd.f32 %v5921, %v5959
        %5961 = vmatmul.bf16.gmra.mxu0 %v5287
        %v5962 = vpop.f32.mrf.mxu0
        %v5963 = vadd.f32 %v5924, %v5962
        %v5964 = vpop.f32.mrf.mxu0
        %v5965 = vadd.f32 %v5926, %v5964
        %5966 = vmatmul.bf16.gmra.mxu0 %v5293
        %v5967 = vpop.f32.mrf.mxu0
        %v5968 = vadd.f32 %v5929, %v5967
        %v5969 = vpop.f32.mrf.mxu0
        %v5970 = vadd.f32 %v5931, %v5969
        %5971 = vmatmul.bf16.gmra.mxu0 %v5299
        %v5972 = vpop.f32.mrf.mxu0
        %v5973 = vadd.f32 %v5934, %v5972
        %v5974 = vpop.f32.mrf.mxu0
        %v5975 = vadd.f32 %v5936, %v5974
        %5976 = vmatmul.bf16.gmra.mxu0 %v5305
        %v5977 = vpop.f32.mrf.mxu0
        %v5978 = vadd.f32 %v5939, %v5977
        %v5979 = vpop.f32.mrf.mxu0
        %v5980 = vadd.f32 %v5941, %v5979
        %5981 = vdwg.mxu0
        %5982 = vmatpush.bf16.msra.mxu0 %v5689
        %5983 = vmatpush.bf16.msra.mxu0 %v5687
        %5984 = vmatpush.bf16.msra.mxu0 %v5685
        %5985 = vmatpush.bf16.msra.mxu0 %v5683
        %5986 = vmatpush.bf16.msra.mxu0 %v5681
        %5987 = vmatpush.bf16.msra.mxu0 %v5679
        %5988 = vmatpush.bf16.msra.mxu0 %v5677
        %5989 = vmatpush.bf16.msra.mxu0 %v5675
        %5990 = vmatmul.bf16.gmra.mxu0 %v5276
        %v5991 = vpop.f32.mrf.mxu0
        %v5992 = vadd.f32 %v5953, %v5991
        %v5993 = vpop.f32.mrf.mxu0
        %v5994 = vadd.f32 %v5955, %v5993
        %5995 = vmatmul.bf16.gmra.mxu0 %v5282
        %v5996 = vpop.f32.mrf.mxu0
        %v5997 = vadd.f32 %v5958, %v5996
        %v5998 = vpop.f32.mrf.mxu0
        %v5999 = vadd.f32 %v5960, %v5998
        %6000 = vmatmul.bf16.gmra.mxu0 %v5288
        %v6001 = vpop.f32.mrf.mxu0
        %v6002 = vadd.f32 %v5963, %v6001
        %v6003 = vpop.f32.mrf.mxu0
        %v6004 = vadd.f32 %v5965, %v6003
        %6005 = vmatmul.bf16.gmra.mxu0 %v5294
        %v6006 = vpop.f32.mrf.mxu0
        %v6007 = vadd.f32 %v5968, %v6006
        %v6008 = vpop.f32.mrf.mxu0
        %v6009 = vadd.f32 %v5970, %v6008
        %6010 = vmatmul.bf16.gmra.mxu0 %v5300
        %v6011 = vpop.f32.mrf.mxu0
        %v6012 = vadd.f32 %v5973, %v6011
        %v6013 = vpop.f32.mrf.mxu0
        %v6014 = vadd.f32 %v5975, %v6013
        %6015 = vmatmul.bf16.gmra.mxu0 %v5306
        %v6016 = vpop.f32.mrf.mxu0
        %v6017 = vadd.f32 %v5978, %v6016
        %v6018 = vpop.f32.mrf.mxu0
        %v6019 = vadd.f32 %v5980, %v6018
        %6020 = vdwg.mxu0
        %6021 = vmatpush.bf16.msra.mxu0 %v5610
        %6022 = vmatpush.bf16.msra.mxu0 %v5608
        %6023 = vmatpush.bf16.msra.mxu0 %v5606
        %6024 = vmatpush.bf16.msra.mxu0 %v5604
        %6025 = vmatpush.bf16.msra.mxu0 %v5602
        %6026 = vmatpush.bf16.msra.mxu0 %v5600
        %6027 = vmatpush.bf16.msra.mxu0 %v5598
        %6028 = vmatpush.bf16.msra.mxu0 %v5596
        %6029 = vmatmul.bf16.gmra.mxu0 %v5271
        %v6030 = vpop.f32.mrf.mxu0
        %v6031 = vadd.f32 0.0, %v6030
        %v6032 = vpop.f32.mrf.mxu0
        %v6033 = vadd.f32 0.0, %v6032
        %6034 = vmatmul.bf16.gmra.mxu0 %v5277
        %v6035 = vpop.f32.mrf.mxu0
        %v6036 = vadd.f32 0.0, %v6035
        %v6037 = vpop.f32.mrf.mxu0
        %v6038 = vadd.f32 0.0, %v6037
        %6039 = vmatmul.bf16.gmra.mxu0 %v5283
        %v6040 = vpop.f32.mrf.mxu0
        %v6041 = vadd.f32 0.0, %v6040
        %v6042 = vpop.f32.mrf.mxu0
        %v6043 = vadd.f32 0.0, %v6042
        %6044 = vmatmul.bf16.gmra.mxu0 %v5289
        %v6045 = vpop.f32.mrf.mxu0
        %v6046 = vadd.f32 0.0, %v6045
        %v6047 = vpop.f32.mrf.mxu0
        %v6048 = vadd.f32 0.0, %v6047
        %6049 = vmatmul.bf16.gmra.mxu0 %v5295
        %v6050 = vpop.f32.mrf.mxu0
        %v6051 = vadd.f32 0.0, %v6050
        %v6052 = vpop.f32.mrf.mxu0
        %v6053 = vadd.f32 0.0, %v6052
        %6054 = vmatmul.bf16.gmra.mxu0 %v5301
        %v6055 = vpop.f32.mrf.mxu0
        %v6056 = vadd.f32 0.0, %v6055
        %v6057 = vpop.f32.mrf.mxu0
        %v6058 = vadd.f32 0.0, %v6057
        %6059 = vdwg.mxu0
        %6060 = vmatpush.bf16.msra.mxu0 %v5626
        %6061 = vmatpush.bf16.msra.mxu0 %v5624
        %6062 = vmatpush.bf16.msra.mxu0 %v5622
        %6063 = vmatpush.bf16.msra.mxu0 %v5620
        %6064 = vmatpush.bf16.msra.mxu0 %v5618
        %6065 = vmatpush.bf16.msra.mxu0 %v5616
        %6066 = vmatpush.bf16.msra.mxu0 %v5614
        %6067 = vmatpush.bf16.msra.mxu0 %v5612
        %6068 = vmatmul.bf16.gmra.mxu0 %v5272
        %v6069 = vpop.f32.mrf.mxu0
        %v6070 = vadd.f32 %v6031, %v6069
        %v6071 = vpop.f32.mrf.mxu0
        %v6072 = vadd.f32 %v6033, %v6071
        %6073 = vmatmul.bf16.gmra.mxu0 %v5278
        %v6074 = vpop.f32.mrf.mxu0
        %v6075 = vadd.f32 %v6036, %v6074
        %v6076 = vpop.f32.mrf.mxu0
        %v6077 = vadd.f32 %v6038, %v6076
        %6078 = vmatmul.bf16.gmra.mxu0 %v5284
        %v6079 = vpop.f32.mrf.mxu0
        %v6080 = vadd.f32 %v6041, %v6079
        %v6081 = vpop.f32.mrf.mxu0
        %v6082 = vadd.f32 %v6043, %v6081
        %6083 = vmatmul.bf16.gmra.mxu0 %v5290
        %v6084 = vpop.f32.mrf.mxu0
        %v6085 = vadd.f32 %v6046, %v6084
        %v6086 = vpop.f32.mrf.mxu0
        %v6087 = vadd.f32 %v6048, %v6086
        %6088 = vmatmul.bf16.gmra.mxu0 %v5296
        %v6089 = vpop.f32.mrf.mxu0
        %v6090 = vadd.f32 %v6051, %v6089
        %v6091 = vpop.f32.mrf.mxu0
        %v6092 = vadd.f32 %v6053, %v6091
        %6093 = vmatmul.bf16.gmra.mxu0 %v5302
        %v6094 = vpop.f32.mrf.mxu0
        %v6095 = vadd.f32 %v6056, %v6094
        %v6096 = vpop.f32.mrf.mxu0
        %v6097 = vadd.f32 %v6058, %v6096
        %6098 = vdwg.mxu0
        %6099 = vmatpush.bf16.msra.mxu0 %v5642
        %6100 = vmatpush.bf16.msra.mxu0 %v5640
        %6101 = vmatpush.bf16.msra.mxu0 %v5638
        %6102 = vmatpush.bf16.msra.mxu0 %v5636
        %6103 = vmatpush.bf16.msra.mxu0 %v5634
        %6104 = vmatpush.bf16.msra.mxu0 %v5632
        %6105 = vmatpush.bf16.msra.mxu0 %v5630
        %6106 = vmatpush.bf16.msra.mxu0 %v5628
        %6107 = vmatmul.bf16.gmra.mxu0 %v5273
        %v6108 = vpop.f32.mrf.mxu0
        %v6109 = vadd.f32 %v6070, %v6108
        %v6110 = vpop.f32.mrf.mxu0
        %v6111 = vadd.f32 %v6072, %v6110
        %6112 = vmatmul.bf16.gmra.mxu0 %v5279
        %v6113 = vpop.f32.mrf.mxu0
        %v6114 = vadd.f32 %v6075, %v6113
        %v6115 = vpop.f32.mrf.mxu0
        %v6116 = vadd.f32 %v6077, %v6115
        %6117 = vmatmul.bf16.gmra.mxu0 %v5285
        %v6118 = vpop.f32.mrf.mxu0
        %v6119 = vadd.f32 %v6080, %v6118
        %v6120 = vpop.f32.mrf.mxu0
        %v6121 = vadd.f32 %v6082, %v6120
        %6122 = vmatmul.bf16.gmra.mxu0 %v5291
        %v6123 = vpop.f32.mrf.mxu0
        %v6124 = vadd.f32 %v6085, %v6123
        %v6125 = vpop.f32.mrf.mxu0
        %v6126 = vadd.f32 %v6087, %v6125
        %6127 = vmatmul.bf16.gmra.mxu0 %v5297
        %v6128 = vpop.f32.mrf.mxu0
        %v6129 = vadd.f32 %v6090, %v6128
        %v6130 = vpop.f32.mrf.mxu0
        %v6131 = vadd.f32 %v6092, %v6130
        %6132 = vmatmul.bf16.gmra.mxu0 %v5303
        %v6133 = vpop.f32.mrf.mxu0
        %v6134 = vadd.f32 %v6095, %v6133
        %v6135 = vpop.f32.mrf.mxu0
        %v6136 = vadd.f32 %v6097, %v6135
        %6137 = vdwg.mxu0
        %6138 = vmatpush.bf16.msra.mxu0 %v5658
        %6139 = vmatpush.bf16.msra.mxu0 %v5656
        %6140 = vmatpush.bf16.msra.mxu0 %v5654
        %6141 = vmatpush.bf16.msra.mxu0 %v5652
        %6142 = vmatpush.bf16.msra.mxu0 %v5650
        %6143 = vmatpush.bf16.msra.mxu0 %v5648
        %6144 = vmatpush.bf16.msra.mxu0 %v5646
        %6145 = vmatpush.bf16.msra.mxu0 %v5644
        %6146 = vmatmul.bf16.gmra.mxu0 %v5274
        %v6147 = vpop.f32.mrf.mxu0
        %v6148 = vadd.f32 %v6109, %v6147
        %v6149 = vpop.f32.mrf.mxu0
        %v6150 = vadd.f32 %v6111, %v6149
        %6151 = vmatmul.bf16.gmra.mxu0 %v5280
        %v6152 = vpop.f32.mrf.mxu0
        %v6153 = vadd.f32 %v6114, %v6152
        %v6154 = vpop.f32.mrf.mxu0
        %v6155 = vadd.f32 %v6116, %v6154
        %6156 = vmatmul.bf16.gmra.mxu0 %v5286
        %v6157 = vpop.f32.mrf.mxu0
        %v6158 = vadd.f32 %v6119, %v6157
        %v6159 = vpop.f32.mrf.mxu0
        %v6160 = vadd.f32 %v6121, %v6159
        %6161 = vmatmul.bf16.gmra.mxu0 %v5292
        %v6162 = vpop.f32.mrf.mxu0
        %v6163 = vadd.f32 %v6124, %v6162
        %v6164 = vpop.f32.mrf.mxu0
        %v6165 = vadd.f32 %v6126, %v6164
        %6166 = vmatmul.bf16.gmra.mxu0 %v5298
        %v6167 = vpop.f32.mrf.mxu0
        %v6168 = vadd.f32 %v6129, %v6167
        %v6169 = vpop.f32.mrf.mxu0
        %v6170 = vadd.f32 %v6131, %v6169
        %6171 = vmatmul.bf16.gmra.mxu0 %v5304
        %v6172 = vpop.f32.mrf.mxu0
        %v6173 = vadd.f32 %v6134, %v6172
        %v6174 = vpop.f32.mrf.mxu0
        %v6175 = vadd.f32 %v6136, %v6174
        %6176 = vdwg.mxu0
        %6177 = vmatpush.bf16.msra.mxu0 %v5674
        %6178 = vmatpush.bf16.msra.mxu0 %v5672
        %6179 = vmatpush.bf16.msra.mxu0 %v5670
        %6180 = vmatpush.bf16.msra.mxu0 %v5668
        %6181 = vmatpush.bf16.msra.mxu0 %v5666
        %6182 = vmatpush.bf16.msra.mxu0 %v5664
        %6183 = vmatpush.bf16.msra.mxu0 %v5662
        %6184 = vmatpush.bf16.msra.mxu0 %v5660
        %6185 = vmatmul.bf16.gmra.mxu0 %v5275
        %v6186 = vpop.f32.mrf.mxu0
        %v6187 = vadd.f32 %v6148, %v6186
        %v6188 = vpop.f32.mrf.mxu0
        %v6189 = vadd.f32 %v6150, %v6188
        %6190 = vmatmul.bf16.gmra.mxu0 %v5281
        %v6191 = vpop.f32.mrf.mxu0
        %v6192 = vadd.f32 %v6153, %v6191
        %v6193 = vpop.f32.mrf.mxu0
        %v6194 = vadd.f32 %v6155, %v6193
        %6195 = vmatmul.bf16.gmra.mxu0 %v5287
        %v6196 = vpop.f32.mrf.mxu0
        %v6197 = vadd.f32 %v6158, %v6196
        %v6198 = vpop.f32.mrf.mxu0
        %v6199 = vadd.f32 %v6160, %v6198
        %6200 = vmatmul.bf16.gmra.mxu0 %v5293
        %v6201 = vpop.f32.mrf.mxu0
        %v6202 = vadd.f32 %v6163, %v6201
        %v6203 = vpop.f32.mrf.mxu0
        %v6204 = vadd.f32 %v6165, %v6203
        %6205 = vmatmul.bf16.gmra.mxu0 %v5299
        %v6206 = vpop.f32.mrf.mxu0
        %v6207 = vadd.f32 %v6168, %v6206
        %v6208 = vpop.f32.mrf.mxu0
        %v6209 = vadd.f32 %v6170, %v6208
        %6210 = vmatmul.bf16.gmra.mxu0 %v5305
        %v6211 = vpop.f32.mrf.mxu0
        %v6212 = vadd.f32 %v6173, %v6211
        %v6213 = vpop.f32.mrf.mxu0
        %v6214 = vadd.f32 %v6175, %v6213
        %6215 = vdwg.mxu0
        %6216 = vmatpush.bf16.msra.mxu0 %v5690
        %6217 = vmatpush.bf16.msra.mxu0 %v5688
        %6218 = vmatpush.bf16.msra.mxu0 %v5686
        %6219 = vmatpush.bf16.msra.mxu0 %v5684
        %6220 = vmatpush.bf16.msra.mxu0 %v5682
        %6221 = vmatpush.bf16.msra.mxu0 %v5680
        %6222 = vmatpush.bf16.msra.mxu0 %v5678
        %6223 = vmatpush.bf16.msra.mxu0 %v5676
        %6224 = vmatmul.bf16.gmra.mxu0 %v5276
        %v6225 = vpop.f32.mrf.mxu0
        %v6226 = vadd.f32 %v6187, %v6225
        %v6227 = vpop.f32.mrf.mxu0
        %v6228 = vadd.f32 %v6189, %v6227
        %6229 = vmatmul.bf16.gmra.mxu0 %v5282
        %v6230 = vpop.f32.mrf.mxu0
        %v6231 = vadd.f32 %v6192, %v6230
        %v6232 = vpop.f32.mrf.mxu0
        %v6233 = vadd.f32 %v6194, %v6232
        %6234 = vmatmul.bf16.gmra.mxu0 %v5288
        %v6235 = vpop.f32.mrf.mxu0
        %v6236 = vadd.f32 %v6197, %v6235
        %v6237 = vpop.f32.mrf.mxu0
        %v6238 = vadd.f32 %v6199, %v6237
        %6239 = vmatmul.bf16.gmra.mxu0 %v5294
        %v6240 = vpop.f32.mrf.mxu0
        %v6241 = vadd.f32 %v6202, %v6240
        %v6242 = vpop.f32.mrf.mxu0
        %v6243 = vadd.f32 %v6204, %v6242
        %6244 = vmatmul.bf16.gmra.mxu0 %v5300
        %v6245 = vpop.f32.mrf.mxu0
        %v6246 = vadd.f32 %v6207, %v6245
        %v6247 = vpop.f32.mrf.mxu0
        %v6248 = vadd.f32 %v6209, %v6247
        %6249 = vmatmul.bf16.gmra.mxu0 %v5306
        %v6250 = vpop.f32.mrf.mxu0
        %v6251 = vadd.f32 %v6212, %v6250
        %v6252 = vpop.f32.mrf.mxu0
        %v6253 = vadd.f32 %v6214, %v6252
        %6254 = vdwg.mxu0
        %v6351 = vunpack.c.l.b16 %v5102
        %v6352 = vunpack.c.h.b16 %v5102
        %v6353 = vunpack.c.l.b16 %v5103
        %v6354 = vunpack.c.h.b16 %v5103
        %v6355 = vunpack.c.l.b16 %v5104
        %v6356 = vunpack.c.h.b16 %v5104
        %v6357 = vunpack.c.l.b16 %v5105
        %v6358 = vunpack.c.h.b16 %v5105
        %v6359 = vunpack.c.l.b16 %v5106
        %v6360 = vunpack.c.h.b16 %v5106
        %v6361 = vunpack.c.l.b16 %v5107
        %v6362 = vunpack.c.h.b16 %v5107
        %v6363 = vunpack.c.l.b16 %v5108
        %v6364 = vunpack.c.h.b16 %v5108
        %v6365 = vunpack.c.l.b16 %v5109
        %v6366 = vunpack.c.h.b16 %v5109
        %v6367 = vunpack.c.l.b16 %v5110
        %v6368 = vunpack.c.h.b16 %v5110
        %v6369 = vunpack.c.l.b16 %v5111
        %v6370 = vunpack.c.h.b16 %v5111
        %v6371 = vunpack.c.l.b16 %v5112
        %v6372 = vunpack.c.h.b16 %v5112
        %v6373 = vunpack.c.l.b16 %v5113
        %v6374 = vunpack.c.h.b16 %v5113
        %v6375 = vunpack.c.l.b16 %v5114
        %v6376 = vunpack.c.h.b16 %v5114
        %v6377 = vunpack.c.l.b16 %v5115
        %v6378 = vunpack.c.h.b16 %v5115
        %v6379 = vunpack.c.l.b16 %v5116
        %v6380 = vunpack.c.h.b16 %v5116
        %v6381 = vunpack.c.l.b16 %v5117
        %v6382 = vunpack.c.h.b16 %v5117
        %v6383 = vunpack.c.l.b16 %v5118
        %v6384 = vunpack.c.h.b16 %v5118
        %v6385 = vunpack.c.l.b16 %v5119
        %v6386 = vunpack.c.h.b16 %v5119
        %v6387 = vunpack.c.l.b16 %v5120
        %v6388 = vunpack.c.h.b16 %v5120
        %v6389 = vunpack.c.l.b16 %v5121
        %v6390 = vunpack.c.h.b16 %v5121
        %v6391 = vunpack.c.l.b16 %v5122
        %v6392 = vunpack.c.h.b16 %v5122
        %v6393 = vunpack.c.l.b16 %v5123
        %v6394 = vunpack.c.h.b16 %v5123
        %v6395 = vunpack.c.l.b16 %v5124
        %v6396 = vunpack.c.h.b16 %v5124
        %v6397 = vunpack.c.l.b16 %v5125
        %v6398 = vunpack.c.h.b16 %v5125
        %v6399 = vunpack.c.l.b16 %v5126
        %v6400 = vunpack.c.h.b16 %v5126
        %v6401 = vunpack.c.l.b16 %v5127
        %v6402 = vunpack.c.h.b16 %v5127
        %v6403 = vunpack.c.l.b16 %v5128
        %v6404 = vunpack.c.h.b16 %v5128
        %v6405 = vunpack.c.l.b16 %v5129
        %v6406 = vunpack.c.h.b16 %v5129
        %v6407 = vunpack.c.l.b16 %v5130
        %v6408 = vunpack.c.h.b16 %v5130
        %v6409 = vunpack.c.l.b16 %v5131
        %v6410 = vunpack.c.h.b16 %v5131
        %v6411 = vunpack.c.l.b16 %v5132
        %v6412 = vunpack.c.h.b16 %v5132
        %v6413 = vunpack.c.l.b16 %v5133
        %v6414 = vunpack.c.h.b16 %v5133
        %v6415 = vunpack.c.l.b16 %v5134
        %v6416 = vunpack.c.h.b16 %v5134
        %v6417 = vunpack.c.l.b16 %v5135
        %v6418 = vunpack.c.h.b16 %v5135
        %v6419 = vunpack.c.l.b16 %v5136
        %v6420 = vunpack.c.h.b16 %v5136
        %v6421 = vunpack.c.l.b16 %v5137
        %v6422 = vunpack.c.h.b16 %v5137
        %v6423 = vunpack.c.l.b16 %v5138
        %v6424 = vunpack.c.h.b16 %v5138
        %v6425 = vunpack.c.l.b16 %v5139
        %v6426 = vunpack.c.h.b16 %v5139
        %v6427 = vunpack.c.l.b16 %v5140
        %v6428 = vunpack.c.h.b16 %v5140
        %v6429 = vunpack.c.l.b16 %v5141
        %v6430 = vunpack.c.h.b16 %v5141
        %v6431 = vunpack.c.l.b16 %v5142
        %v6432 = vunpack.c.h.b16 %v5142
        %v6433 = vunpack.c.l.b16 %v5143
        %v6434 = vunpack.c.h.b16 %v5143
        %v6435 = vunpack.c.l.b16 %v5144
        %v6436 = vunpack.c.h.b16 %v5144
        %v6437 = vunpack.c.l.b16 %v5145
        %v6438 = vunpack.c.h.b16 %v5145
        %v6439 = vunpack.c.l.b16 %v5146
        %v6440 = vunpack.c.h.b16 %v5146
        %v6441 = vunpack.c.l.b16 %v5147
        %v6442 = vunpack.c.h.b16 %v5147
        %v6443 = vunpack.c.l.b16 %v5148
        %v6444 = vunpack.c.h.b16 %v5148
        %v6445 = vunpack.c.l.b16 %v5149
        %v6446 = vunpack.c.h.b16 %v5149
        %v6447 = vunpack.c.l.b16 %v5150
        %v6448 = vunpack.c.h.b16 %v5150
        %v6449 = vunpack.c.l.b16 %v5151
        %v6450 = vunpack.c.h.b16 %v5151
        %v6451 = vunpack.c.l.b16 %v5152
        %v6452 = vunpack.c.h.b16 %v5152
        %v6453 = vunpack.c.l.b16 %v5153
        %v6454 = vunpack.c.h.b16 %v5153
        %v6455 = vunpack.c.l.b16 %v5154
        %v6456 = vunpack.c.h.b16 %v5154
        %v6457 = vunpack.c.l.b16 %v5155
        %v6458 = vunpack.c.h.b16 %v5155
        %v6459 = vunpack.c.l.b16 %v5156
        %v6460 = vunpack.c.h.b16 %v5156
        %v6461 = vunpack.c.l.b16 %v5157
        %v6462 = vunpack.c.h.b16 %v5157
        %v6463 = vunpack.c.l.b16 %v5158
        %v6464 = vunpack.c.h.b16 %v5158
        %v6465 = vunpack.c.l.b16 %v5159
        %v6466 = vunpack.c.h.b16 %v5159
        %v6467 = vunpack.c.l.b16 %v5160
        %v6468 = vunpack.c.h.b16 %v5160
        %v6469 = vunpack.c.l.b16 %v5161
        %v6470 = vunpack.c.h.b16 %v5161
        %v6471 = vunpack.c.l.b16 %v5162
        %v6472 = vunpack.c.h.b16 %v5162
        %v6473 = vunpack.c.l.b16 %v5163
        %v6474 = vunpack.c.h.b16 %v5163
        %v6475 = vunpack.c.l.b16 %v5164
        %v6476 = vunpack.c.h.b16 %v5164
        %v6477 = vunpack.c.l.b16 %v5165
        %v6478 = vunpack.c.h.b16 %v5165
        %v6479 = vunpack.c.l.b16 %v5166
        %v6480 = vunpack.c.h.b16 %v5166
        %v6481 = vunpack.c.l.b16 %v5167
        %v6482 = vunpack.c.h.b16 %v5167
        %v6483 = vunpack.c.l.b16 %v5168
        %v6484 = vunpack.c.h.b16 %v5168
        %v6485 = vunpack.c.l.b16 %v5169
        %v6486 = vunpack.c.h.b16 %v5169
        %v6487 = vunpack.c.l.b16 %v5170
        %v6488 = vunpack.c.h.b16 %v5170
        %v6489 = vunpack.c.l.b16 %v5171
        %v6490 = vunpack.c.h.b16 %v5171
        %v6491 = vunpack.c.l.b16 %v5172
        %v6492 = vunpack.c.h.b16 %v5172
        %v6493 = vunpack.c.l.b16 %v5173
        %v6494 = vunpack.c.h.b16 %v5173
        %v6495 = vunpack.c.l.b16 %v5174
        %v6496 = vunpack.c.h.b16 %v5174
        %v6497 = vunpack.c.l.b16 %v5175
        %v6498 = vunpack.c.h.b16 %v5175
        %v6499 = vunpack.c.l.b16 %v5176
        %v6500 = vunpack.c.h.b16 %v5176
        %v6501 = vunpack.c.l.b16 %v5177
        %v6502 = vunpack.c.h.b16 %v5177
        %v6503 = vunpack.c.l.b16 %v5178
        %v6504 = vunpack.c.h.b16 %v5178
        %v6505 = vunpack.c.l.b16 %v5179
        %v6506 = vunpack.c.h.b16 %v5179
        %v6507 = vunpack.c.l.b16 %v5180
        %v6508 = vunpack.c.h.b16 %v5180
        %v6509 = vunpack.c.l.b16 %v5181
        %v6510 = vunpack.c.h.b16 %v5181
        %v6511 = vunpack.c.l.b16 %v5182
        %v6512 = vunpack.c.h.b16 %v5182
        %v6513 = vunpack.c.l.b16 %v5183
        %v6514 = vunpack.c.h.b16 %v5183
        %v6515 = vunpack.c.l.b16 %v5184
        %v6516 = vunpack.c.h.b16 %v5184
        %v6517 = vunpack.c.l.b16 %v5185
        %v6518 = vunpack.c.h.b16 %v5185
        %v6519 = vunpack.c.l.b16 %v5186
        %v6520 = vunpack.c.h.b16 %v5186
        %v6521 = vunpack.c.l.b16 %v5187
        %v6522 = vunpack.c.h.b16 %v5187
        %v6523 = vunpack.c.l.b16 %v5188
        %v6524 = vunpack.c.h.b16 %v5188
        %v6525 = vunpack.c.l.b16 %v5189
        %v6526 = vunpack.c.h.b16 %v5189
        %v6527 = vunpack.c.l.b16 %v5190
        %v6528 = vunpack.c.h.b16 %v5190
        %v6529 = vunpack.c.l.b16 %v5191
        %v6530 = vunpack.c.h.b16 %v5191
        %v6531 = vunpack.c.l.b16 %v5192
        %v6532 = vunpack.c.h.b16 %v5192
        %v6533 = vunpack.c.l.b16 %v5193
        %v6534 = vunpack.c.h.b16 %v5193
        %v6535 = vunpack.c.l.b16 %v5194
        %v6536 = vunpack.c.h.b16 %v5194
        %v6537 = vunpack.c.l.b16 %v5195
        %v6538 = vunpack.c.h.b16 %v5195
        %v6539 = vunpack.c.l.b16 %v5196
        %v6540 = vunpack.c.h.b16 %v5196
        %v6541 = vunpack.c.l.b16 %v5197
        %v6542 = vunpack.c.h.b16 %v5197
        %v6543 = vpack.c.b16 %v6353, %v6351
        %v6544 = vpack.c.b16 %v6354, %v6352
        %v6545 = vpack.c.b16 %v6357, %v6355
        %v6546 = vpack.c.b16 %v6358, %v6356
        %v6547 = vpack.c.b16 %v6361, %v6359
        %v6548 = vpack.c.b16 %v6362, %v6360
        %v6549 = vpack.c.b16 %v6365, %v6363
        %v6550 = vpack.c.b16 %v6366, %v6364
        %v6551 = vpack.c.b16 %v6369, %v6367
        %v6552 = vpack.c.b16 %v6370, %v6368
        %v6553 = vpack.c.b16 %v6373, %v6371
        %v6554 = vpack.c.b16 %v6374, %v6372
        %v6555 = vpack.c.b16 %v6377, %v6375
        %v6556 = vpack.c.b16 %v6378, %v6376
        %v6557 = vpack.c.b16 %v6381, %v6379
        %v6558 = vpack.c.b16 %v6382, %v6380
        %v6559 = vpack.c.b16 %v6385, %v6383
        %v6560 = vpack.c.b16 %v6386, %v6384
        %v6561 = vpack.c.b16 %v6389, %v6387
        %v6562 = vpack.c.b16 %v6390, %v6388
        %v6563 = vpack.c.b16 %v6393, %v6391
        %v6564 = vpack.c.b16 %v6394, %v6392
        %v6565 = vpack.c.b16 %v6397, %v6395
        %v6566 = vpack.c.b16 %v6398, %v6396
        %v6567 = vpack.c.b16 %v6401, %v6399
        %v6568 = vpack.c.b16 %v6402, %v6400
        %v6569 = vpack.c.b16 %v6405, %v6403
        %v6570 = vpack.c.b16 %v6406, %v6404
        %v6571 = vpack.c.b16 %v6409, %v6407
        %v6572 = vpack.c.b16 %v6410, %v6408
        %v6573 = vpack.c.b16 %v6413, %v6411
        %v6574 = vpack.c.b16 %v6414, %v6412
        %v6575 = vpack.c.b16 %v6417, %v6415
        %v6576 = vpack.c.b16 %v6418, %v6416
        %v6577 = vpack.c.b16 %v6421, %v6419
        %v6578 = vpack.c.b16 %v6422, %v6420
        %v6579 = vpack.c.b16 %v6425, %v6423
        %v6580 = vpack.c.b16 %v6426, %v6424
        %v6581 = vpack.c.b16 %v6429, %v6427
        %v6582 = vpack.c.b16 %v6430, %v6428
        %v6583 = vpack.c.b16 %v6433, %v6431
        %v6584 = vpack.c.b16 %v6434, %v6432
        %v6585 = vpack.c.b16 %v6437, %v6435
        %v6586 = vpack.c.b16 %v6438, %v6436
        %v6587 = vpack.c.b16 %v6441, %v6439
        %v6588 = vpack.c.b16 %v6442, %v6440
        %v6589 = vpack.c.b16 %v6445, %v6443
        %v6590 = vpack.c.b16 %v6446, %v6444
        %v6591 = vpack.c.b16 %v6449, %v6447
        %v6592 = vpack.c.b16 %v6450, %v6448
        %v6593 = vpack.c.b16 %v6453, %v6451
        %v6594 = vpack.c.b16 %v6454, %v6452
        %v6595 = vpack.c.b16 %v6457, %v6455
        %v6596 = vpack.c.b16 %v6458, %v6456
        %v6597 = vpack.c.b16 %v6461, %v6459
        %v6598 = vpack.c.b16 %v6462, %v6460
        %v6599 = vpack.c.b16 %v6465, %v6463
        %v6600 = vpack.c.b16 %v6466, %v6464
        %v6601 = vpack.c.b16 %v6469, %v6467
        %v6602 = vpack.c.b16 %v6470, %v6468
        %v6603 = vpack.c.b16 %v6473, %v6471
        %v6604 = vpack.c.b16 %v6474, %v6472
        %v6605 = vpack.c.b16 %v6477, %v6475
        %v6606 = vpack.c.b16 %v6478, %v6476
        %v6607 = vpack.c.b16 %v6481, %v6479
        %v6608 = vpack.c.b16 %v6482, %v6480
        %v6609 = vpack.c.b16 %v6485, %v6483
        %v6610 = vpack.c.b16 %v6486, %v6484
        %v6611 = vpack.c.b16 %v6489, %v6487
        %v6612 = vpack.c.b16 %v6490, %v6488
        %v6613 = vpack.c.b16 %v6493, %v6491
        %v6614 = vpack.c.b16 %v6494, %v6492
        %v6615 = vpack.c.b16 %v6497, %v6495
        %v6616 = vpack.c.b16 %v6498, %v6496
        %v6617 = vpack.c.b16 %v6501, %v6499
        %v6618 = vpack.c.b16 %v6502, %v6500
        %v6619 = vpack.c.b16 %v6505, %v6503
        %v6620 = vpack.c.b16 %v6506, %v6504
        %v6621 = vpack.c.b16 %v6509, %v6507
        %v6622 = vpack.c.b16 %v6510, %v6508
        %v6623 = vpack.c.b16 %v6513, %v6511
        %v6624 = vpack.c.b16 %v6514, %v6512
        %v6625 = vpack.c.b16 %v6517, %v6515
        %v6626 = vpack.c.b16 %v6518, %v6516
        %v6627 = vpack.c.b16 %v6521, %v6519
        %v6628 = vpack.c.b16 %v6522, %v6520
        %v6629 = vpack.c.b16 %v6525, %v6523
        %v6630 = vpack.c.b16 %v6526, %v6524
        %v6631 = vpack.c.b16 %v6529, %v6527
        %v6632 = vpack.c.b16 %v6530, %v6528
        %v6633 = vpack.c.b16 %v6533, %v6531
        %v6634 = vpack.c.b16 %v6534, %v6532
        %v6635 = vpack.c.b16 %v6537, %v6535
        %v6636 = vpack.c.b16 %v6538, %v6536
        %v6637 = vpack.c.b16 %v6541, %v6539
        %v6638 = vpack.c.b16 %v6542, %v6540
        %6735 = vmatpush.bf16.msra.mxu0 %v6557
        %6736 = vmatpush.bf16.msra.mxu0 %v6555
        %6737 = vmatpush.bf16.msra.mxu0 %v6553
        %6738 = vmatpush.bf16.msra.mxu0 %v6551
        %6739 = vmatpush.bf16.msra.mxu0 %v6549
        %6740 = vmatpush.bf16.msra.mxu0 %v6547
        %6741 = vmatpush.bf16.msra.mxu0 %v6545
        %6742 = vmatpush.bf16.msra.mxu0 %v6543
        %6743 = vmatmul.bf16.gmra.mxu0 %v5271
        %v6744 = vpop.f32.mrf.mxu0
        %v6745 = vadd.f32 0.0, %v6744
        %v6746 = vpop.f32.mrf.mxu0
        %v6747 = vadd.f32 0.0, %v6746
        %6748 = vmatmul.bf16.gmra.mxu0 %v5277
        %v6749 = vpop.f32.mrf.mxu0
        %v6750 = vadd.f32 0.0, %v6749
        %v6751 = vpop.f32.mrf.mxu0
        %v6752 = vadd.f32 0.0, %v6751
        %6753 = vmatmul.bf16.gmra.mxu0 %v5283
        %v6754 = vpop.f32.mrf.mxu0
        %v6755 = vadd.f32 0.0, %v6754
        %v6756 = vpop.f32.mrf.mxu0
        %v6757 = vadd.f32 0.0, %v6756
        %6758 = vmatmul.bf16.gmra.mxu0 %v5289
        %v6759 = vpop.f32.mrf.mxu0
        %v6760 = vadd.f32 0.0, %v6759
        %v6761 = vpop.f32.mrf.mxu0
        %v6762 = vadd.f32 0.0, %v6761
        %6763 = vmatmul.bf16.gmra.mxu0 %v5295
        %v6764 = vpop.f32.mrf.mxu0
        %v6765 = vadd.f32 0.0, %v6764
        %v6766 = vpop.f32.mrf.mxu0
        %v6767 = vadd.f32 0.0, %v6766
        %6768 = vmatmul.bf16.gmra.mxu0 %v5301
        %v6769 = vpop.f32.mrf.mxu0
        %v6770 = vadd.f32 0.0, %v6769
        %v6771 = vpop.f32.mrf.mxu0
        %v6772 = vadd.f32 0.0, %v6771
        %6773 = vdwg.mxu0
        %6774 = vmatpush.bf16.msra.mxu0 %v6573
        %6775 = vmatpush.bf16.msra.mxu0 %v6571
        %6776 = vmatpush.bf16.msra.mxu0 %v6569
        %6777 = vmatpush.bf16.msra.mxu0 %v6567
        %6778 = vmatpush.bf16.msra.mxu0 %v6565
        %6779 = vmatpush.bf16.msra.mxu0 %v6563
        %6780 = vmatpush.bf16.msra.mxu0 %v6561
        %6781 = vmatpush.bf16.msra.mxu0 %v6559
        %6782 = vmatmul.bf16.gmra.mxu0 %v5272
        %v6783 = vpop.f32.mrf.mxu0
        %v6784 = vadd.f32 %v6745, %v6783
        %v6785 = vpop.f32.mrf.mxu0
        %v6786 = vadd.f32 %v6747, %v6785
        %6787 = vmatmul.bf16.gmra.mxu0 %v5278
        %v6788 = vpop.f32.mrf.mxu0
        %v6789 = vadd.f32 %v6750, %v6788
        %v6790 = vpop.f32.mrf.mxu0
        %v6791 = vadd.f32 %v6752, %v6790
        %6792 = vmatmul.bf16.gmra.mxu0 %v5284
        %v6793 = vpop.f32.mrf.mxu0
        %v6794 = vadd.f32 %v6755, %v6793
        %v6795 = vpop.f32.mrf.mxu0
        %v6796 = vadd.f32 %v6757, %v6795
        %6797 = vmatmul.bf16.gmra.mxu0 %v5290
        %v6798 = vpop.f32.mrf.mxu0
        %v6799 = vadd.f32 %v6760, %v6798
        %v6800 = vpop.f32.mrf.mxu0
        %v6801 = vadd.f32 %v6762, %v6800
        %6802 = vmatmul.bf16.gmra.mxu0 %v5296
        %v6803 = vpop.f32.mrf.mxu0
        %v6804 = vadd.f32 %v6765, %v6803
        %v6805 = vpop.f32.mrf.mxu0
        %v6806 = vadd.f32 %v6767, %v6805
        %6807 = vmatmul.bf16.gmra.mxu0 %v5302
        %v6808 = vpop.f32.mrf.mxu0
        %v6809 = vadd.f32 %v6770, %v6808
        %v6810 = vpop.f32.mrf.mxu0
        %v6811 = vadd.f32 %v6772, %v6810
        %6812 = vdwg.mxu0
        %6813 = vmatpush.bf16.msra.mxu0 %v6589
        %6814 = vmatpush.bf16.msra.mxu0 %v6587
        %6815 = vmatpush.bf16.msra.mxu0 %v6585
        %6816 = vmatpush.bf16.msra.mxu0 %v6583
        %6817 = vmatpush.bf16.msra.mxu0 %v6581
        %6818 = vmatpush.bf16.msra.mxu0 %v6579
        %6819 = vmatpush.bf16.msra.mxu0 %v6577
        %6820 = vmatpush.bf16.msra.mxu0 %v6575
        %6821 = vmatmul.bf16.gmra.mxu0 %v5273
        %v6822 = vpop.f32.mrf.mxu0
        %v6823 = vadd.f32 %v6784, %v6822
        %v6824 = vpop.f32.mrf.mxu0
        %v6825 = vadd.f32 %v6786, %v6824
        %6826 = vmatmul.bf16.gmra.mxu0 %v5279
        %v6827 = vpop.f32.mrf.mxu0
        %v6828 = vadd.f32 %v6789, %v6827
        %v6829 = vpop.f32.mrf.mxu0
        %v6830 = vadd.f32 %v6791, %v6829
        %6831 = vmatmul.bf16.gmra.mxu0 %v5285
        %v6832 = vpop.f32.mrf.mxu0
        %v6833 = vadd.f32 %v6794, %v6832
        %v6834 = vpop.f32.mrf.mxu0
        %v6835 = vadd.f32 %v6796, %v6834
        %6836 = vmatmul.bf16.gmra.mxu0 %v5291
        %v6837 = vpop.f32.mrf.mxu0
        %v6838 = vadd.f32 %v6799, %v6837
        %v6839 = vpop.f32.mrf.mxu0
        %v6840 = vadd.f32 %v6801, %v6839
        %6841 = vmatmul.bf16.gmra.mxu0 %v5297
        %v6842 = vpop.f32.mrf.mxu0
        %v6843 = vadd.f32 %v6804, %v6842
        %v6844 = vpop.f32.mrf.mxu0
        %v6845 = vadd.f32 %v6806, %v6844
        %6846 = vmatmul.bf16.gmra.mxu0 %v5303
        %v6847 = vpop.f32.mrf.mxu0
        %v6848 = vadd.f32 %v6809, %v6847
        %v6849 = vpop.f32.mrf.mxu0
        %v6850 = vadd.f32 %v6811, %v6849
        %6851 = vdwg.mxu0
        %6852 = vmatpush.bf16.msra.mxu0 %v6605
        %6853 = vmatpush.bf16.msra.mxu0 %v6603
        %6854 = vmatpush.bf16.msra.mxu0 %v6601
        %6855 = vmatpush.bf16.msra.mxu0 %v6599
        %6856 = vmatpush.bf16.msra.mxu0 %v6597
        %6857 = vmatpush.bf16.msra.mxu0 %v6595
        %6858 = vmatpush.bf16.msra.mxu0 %v6593
        %6859 = vmatpush.bf16.msra.mxu0 %v6591
        %6860 = vmatmul.bf16.gmra.mxu0 %v5274
        %v6861 = vpop.f32.mrf.mxu0
        %v6862 = vadd.f32 %v6823, %v6861
        %v6863 = vpop.f32.mrf.mxu0
        %v6864 = vadd.f32 %v6825, %v6863
        %6865 = vmatmul.bf16.gmra.mxu0 %v5280
        %v6866 = vpop.f32.mrf.mxu0
        %v6867 = vadd.f32 %v6828, %v6866
        %v6868 = vpop.f32.mrf.mxu0
        %v6869 = vadd.f32 %v6830, %v6868
        %6870 = vmatmul.bf16.gmra.mxu0 %v5286
        %v6871 = vpop.f32.mrf.mxu0
        %v6872 = vadd.f32 %v6833, %v6871
        %v6873 = vpop.f32.mrf.mxu0
        %v6874 = vadd.f32 %v6835, %v6873
        %6875 = vmatmul.bf16.gmra.mxu0 %v5292
        %v6876 = vpop.f32.mrf.mxu0
        %v6877 = vadd.f32 %v6838, %v6876
        %v6878 = vpop.f32.mrf.mxu0
        %v6879 = vadd.f32 %v6840, %v6878
        %6880 = vmatmul.bf16.gmra.mxu0 %v5298
        %v6881 = vpop.f32.mrf.mxu0
        %v6882 = vadd.f32 %v6843, %v6881
        %v6883 = vpop.f32.mrf.mxu0
        %v6884 = vadd.f32 %v6845, %v6883
        %6885 = vmatmul.bf16.gmra.mxu0 %v5304
        %v6886 = vpop.f32.mrf.mxu0
        %v6887 = vadd.f32 %v6848, %v6886
        %v6888 = vpop.f32.mrf.mxu0
        %v6889 = vadd.f32 %v6850, %v6888
        %6890 = vdwg.mxu0
        %6891 = vmatpush.bf16.msra.mxu0 %v6621
        %6892 = vmatpush.bf16.msra.mxu0 %v6619
        %6893 = vmatpush.bf16.msra.mxu0 %v6617
        %6894 = vmatpush.bf16.msra.mxu0 %v6615
        %6895 = vmatpush.bf16.msra.mxu0 %v6613
        %6896 = vmatpush.bf16.msra.mxu0 %v6611
        %6897 = vmatpush.bf16.msra.mxu0 %v6609
        %6898 = vmatpush.bf16.msra.mxu0 %v6607
        %6899 = vmatmul.bf16.gmra.mxu0 %v5275
        %v6900 = vpop.f32.mrf.mxu0
        %v6901 = vadd.f32 %v6862, %v6900
        %v6902 = vpop.f32.mrf.mxu0
        %v6903 = vadd.f32 %v6864, %v6902
        %6904 = vmatmul.bf16.gmra.mxu0 %v5281
        %v6905 = vpop.f32.mrf.mxu0
        %v6906 = vadd.f32 %v6867, %v6905
        %v6907 = vpop.f32.mrf.mxu0
        %v6908 = vadd.f32 %v6869, %v6907
        %6909 = vmatmul.bf16.gmra.mxu0 %v5287
        %v6910 = vpop.f32.mrf.mxu0
        %v6911 = vadd.f32 %v6872, %v6910
        %v6912 = vpop.f32.mrf.mxu0
        %v6913 = vadd.f32 %v6874, %v6912
        %6914 = vmatmul.bf16.gmra.mxu0 %v5293
        %v6915 = vpop.f32.mrf.mxu0
        %v6916 = vadd.f32 %v6877, %v6915
        %v6917 = vpop.f32.mrf.mxu0
        %v6918 = vadd.f32 %v6879, %v6917
        %6919 = vmatmul.bf16.gmra.mxu0 %v5299
        %v6920 = vpop.f32.mrf.mxu0
        %v6921 = vadd.f32 %v6882, %v6920
        %v6922 = vpop.f32.mrf.mxu0
        %v6923 = vadd.f32 %v6884, %v6922
        %6924 = vmatmul.bf16.gmra.mxu0 %v5305
        %v6925 = vpop.f32.mrf.mxu0
        %v6926 = vadd.f32 %v6887, %v6925
        %v6927 = vpop.f32.mrf.mxu0
        %v6928 = vadd.f32 %v6889, %v6927
        %6929 = vdwg.mxu0
        %6930 = vmatpush.bf16.msra.mxu0 %v6637
        %6931 = vmatpush.bf16.msra.mxu0 %v6635
        %6932 = vmatpush.bf16.msra.mxu0 %v6633
        %6933 = vmatpush.bf16.msra.mxu0 %v6631
        %6934 = vmatpush.bf16.msra.mxu0 %v6629
        %6935 = vmatpush.bf16.msra.mxu0 %v6627
        %6936 = vmatpush.bf16.msra.mxu0 %v6625
        %6937 = vmatpush.bf16.msra.mxu0 %v6623
        %6938 = vmatmul.bf16.gmra.mxu0 %v5276
        %v6939 = vpop.f32.mrf.mxu0
        %v6940 = vadd.f32 %v6901, %v6939
        %v6941 = vpop.f32.mrf.mxu0
        %v6942 = vadd.f32 %v6903, %v6941
        %6943 = vmatmul.bf16.gmra.mxu0 %v5282
        %v6944 = vpop.f32.mrf.mxu0
        %v6945 = vadd.f32 %v6906, %v6944
        %v6946 = vpop.f32.mrf.mxu0
        %v6947 = vadd.f32 %v6908, %v6946
        %6948 = vmatmul.bf16.gmra.mxu0 %v5288
        %v6949 = vpop.f32.mrf.mxu0
        %v6950 = vadd.f32 %v6911, %v6949
        %v6951 = vpop.f32.mrf.mxu0
        %v6952 = vadd.f32 %v6913, %v6951
        %6953 = vmatmul.bf16.gmra.mxu0 %v5294
        %v6954 = vpop.f32.mrf.mxu0
        %v6955 = vadd.f32 %v6916, %v6954
        %v6956 = vpop.f32.mrf.mxu0
        %v6957 = vadd.f32 %v6918, %v6956
        %6958 = vmatmul.bf16.gmra.mxu0 %v5300
        %v6959 = vpop.f32.mrf.mxu0
        %v6960 = vadd.f32 %v6921, %v6959
        %v6961 = vpop.f32.mrf.mxu0
        %v6962 = vadd.f32 %v6923, %v6961
        %6963 = vmatmul.bf16.gmra.mxu0 %v5306
        %v6964 = vpop.f32.mrf.mxu0
        %v6965 = vadd.f32 %v6926, %v6964
        %v6966 = vpop.f32.mrf.mxu0
        %v6967 = vadd.f32 %v6928, %v6966
        %6968 = vdwg.mxu0
        %6969 = vmatpush.bf16.msra.mxu0 %v6558
        %6970 = vmatpush.bf16.msra.mxu0 %v6556
        %6971 = vmatpush.bf16.msra.mxu0 %v6554
        %6972 = vmatpush.bf16.msra.mxu0 %v6552
        %6973 = vmatpush.bf16.msra.mxu0 %v6550
        %6974 = vmatpush.bf16.msra.mxu0 %v6548
        %6975 = vmatpush.bf16.msra.mxu0 %v6546
        %6976 = vmatpush.bf16.msra.mxu0 %v6544
        %6977 = vmatmul.bf16.gmra.mxu0 %v5271
        %v6978 = vpop.f32.mrf.mxu0
        %v6979 = vadd.f32 0.0, %v6978
        %v6980 = vpop.f32.mrf.mxu0
        %v6981 = vadd.f32 0.0, %v6980
        %6982 = vmatmul.bf16.gmra.mxu0 %v5277
        %v6983 = vpop.f32.mrf.mxu0
        %v6984 = vadd.f32 0.0, %v6983
        %v6985 = vpop.f32.mrf.mxu0
        %v6986 = vadd.f32 0.0, %v6985
        %6987 = vmatmul.bf16.gmra.mxu0 %v5283
        %v6988 = vpop.f32.mrf.mxu0
        %v6989 = vadd.f32 0.0, %v6988
        %v6990 = vpop.f32.mrf.mxu0
        %v6991 = vadd.f32 0.0, %v6990
        %6992 = vmatmul.bf16.gmra.mxu0 %v5289
        %v6993 = vpop.f32.mrf.mxu0
        %v6994 = vadd.f32 0.0, %v6993
        %v6995 = vpop.f32.mrf.mxu0
        %v6996 = vadd.f32 0.0, %v6995
        %6997 = vmatmul.bf16.gmra.mxu0 %v5295
        %v6998 = vpop.f32.mrf.mxu0
        %v6999 = vadd.f32 0.0, %v6998
        %v7000 = vpop.f32.mrf.mxu0
        %v7001 = vadd.f32 0.0, %v7000
        %7002 = vmatmul.bf16.gmra.mxu0 %v5301
        %v7003 = vpop.f32.mrf.mxu0
        %v7004 = vadd.f32 0.0, %v7003
        %v7005 = vpop.f32.mrf.mxu0
        %v7006 = vadd.f32 0.0, %v7005
        %7007 = vdwg.mxu0
        %7008 = vmatpush.bf16.msra.mxu0 %v6574
        %7009 = vmatpush.bf16.msra.mxu0 %v6572
        %7010 = vmatpush.bf16.msra.mxu0 %v6570
        %7011 = vmatpush.bf16.msra.mxu0 %v6568
        %7012 = vmatpush.bf16.msra.mxu0 %v6566
        %7013 = vmatpush.bf16.msra.mxu0 %v6564
        %7014 = vmatpush.bf16.msra.mxu0 %v6562
        %7015 = vmatpush.bf16.msra.mxu0 %v6560
        %7016 = vmatmul.bf16.gmra.mxu0 %v5272
        %v7017 = vpop.f32.mrf.mxu0
        %v7018 = vadd.f32 %v6979, %v7017
        %v7019 = vpop.f32.mrf.mxu0
        %v7020 = vadd.f32 %v6981, %v7019
        %7021 = vmatmul.bf16.gmra.mxu0 %v5278
        %v7022 = vpop.f32.mrf.mxu0
        %v7023 = vadd.f32 %v6984, %v7022
        %v7024 = vpop.f32.mrf.mxu0
        %v7025 = vadd.f32 %v6986, %v7024
        %7026 = vmatmul.bf16.gmra.mxu0 %v5284
        %v7027 = vpop.f32.mrf.mxu0
        %v7028 = vadd.f32 %v6989, %v7027
        %v7029 = vpop.f32.mrf.mxu0
        %v7030 = vadd.f32 %v6991, %v7029
        %7031 = vmatmul.bf16.gmra.mxu0 %v5290
        %v7032 = vpop.f32.mrf.mxu0
        %v7033 = vadd.f32 %v6994, %v7032
        %v7034 = vpop.f32.mrf.mxu0
        %v7035 = vadd.f32 %v6996, %v7034
        %7036 = vmatmul.bf16.gmra.mxu0 %v5296
        %v7037 = vpop.f32.mrf.mxu0
        %v7038 = vadd.f32 %v6999, %v7037
        %v7039 = vpop.f32.mrf.mxu0
        %v7040 = vadd.f32 %v7001, %v7039
        %7041 = vmatmul.bf16.gmra.mxu0 %v5302
        %v7042 = vpop.f32.mrf.mxu0
        %v7043 = vadd.f32 %v7004, %v7042
        %v7044 = vpop.f32.mrf.mxu0
        %v7045 = vadd.f32 %v7006, %v7044
        %7046 = vdwg.mxu0
        %7047 = vmatpush.bf16.msra.mxu0 %v6590
        %7048 = vmatpush.bf16.msra.mxu0 %v6588
        %7049 = vmatpush.bf16.msra.mxu0 %v6586
        %7050 = vmatpush.bf16.msra.mxu0 %v6584
        %7051 = vmatpush.bf16.msra.mxu0 %v6582
        %7052 = vmatpush.bf16.msra.mxu0 %v6580
        %7053 = vmatpush.bf16.msra.mxu0 %v6578
        %7054 = vmatpush.bf16.msra.mxu0 %v6576
        %7055 = vmatmul.bf16.gmra.mxu0 %v5273
        %v7056 = vpop.f32.mrf.mxu0
        %v7057 = vadd.f32 %v7018, %v7056
        %v7058 = vpop.f32.mrf.mxu0
        %v7059 = vadd.f32 %v7020, %v7058
        %7060 = vmatmul.bf16.gmra.mxu0 %v5279
        %v7061 = vpop.f32.mrf.mxu0
        %v7062 = vadd.f32 %v7023, %v7061
        %v7063 = vpop.f32.mrf.mxu0
        %v7064 = vadd.f32 %v7025, %v7063
        %7065 = vmatmul.bf16.gmra.mxu0 %v5285
        %v7066 = vpop.f32.mrf.mxu0
        %v7067 = vadd.f32 %v7028, %v7066
        %v7068 = vpop.f32.mrf.mxu0
        %v7069 = vadd.f32 %v7030, %v7068
        %7070 = vmatmul.bf16.gmra.mxu0 %v5291
        %v7071 = vpop.f32.mrf.mxu0
        %v7072 = vadd.f32 %v7033, %v7071
        %v7073 = vpop.f32.mrf.mxu0
        %v7074 = vadd.f32 %v7035, %v7073
        %7075 = vmatmul.bf16.gmra.mxu0 %v5297
        %v7076 = vpop.f32.mrf.mxu0
        %v7077 = vadd.f32 %v7038, %v7076
        %v7078 = vpop.f32.mrf.mxu0
        %v7079 = vadd.f32 %v7040, %v7078
        %7080 = vmatmul.bf16.gmra.mxu0 %v5303
        %v7081 = vpop.f32.mrf.mxu0
        %v7082 = vadd.f32 %v7043, %v7081
        %v7083 = vpop.f32.mrf.mxu0
        %v7084 = vadd.f32 %v7045, %v7083
        %7085 = vdwg.mxu0
        %7086 = vmatpush.bf16.msra.mxu0 %v6606
        %7087 = vmatpush.bf16.msra.mxu0 %v6604
        %7088 = vmatpush.bf16.msra.mxu0 %v6602
        %7089 = vmatpush.bf16.msra.mxu0 %v6600
        %7090 = vmatpush.bf16.msra.mxu0 %v6598
        %7091 = vmatpush.bf16.msra.mxu0 %v6596
        %7092 = vmatpush.bf16.msra.mxu0 %v6594
        %7093 = vmatpush.bf16.msra.mxu0 %v6592
        %7094 = vmatmul.bf16.gmra.mxu0 %v5274
        %v7095 = vpop.f32.mrf.mxu0
        %v7096 = vadd.f32 %v7057, %v7095
        %v7097 = vpop.f32.mrf.mxu0
        %v7098 = vadd.f32 %v7059, %v7097
        %7099 = vmatmul.bf16.gmra.mxu0 %v5280
        %v7100 = vpop.f32.mrf.mxu0
        %v7101 = vadd.f32 %v7062, %v7100
        %v7102 = vpop.f32.mrf.mxu0
        %v7103 = vadd.f32 %v7064, %v7102
        %7104 = vmatmul.bf16.gmra.mxu0 %v5286
        %v7105 = vpop.f32.mrf.mxu0
        %v7106 = vadd.f32 %v7067, %v7105
        %v7107 = vpop.f32.mrf.mxu0
        %v7108 = vadd.f32 %v7069, %v7107
        %7109 = vmatmul.bf16.gmra.mxu0 %v5292
        %v7110 = vpop.f32.mrf.mxu0
        %v7111 = vadd.f32 %v7072, %v7110
        %v7112 = vpop.f32.mrf.mxu0
        %v7113 = vadd.f32 %v7074, %v7112
        %7114 = vmatmul.bf16.gmra.mxu0 %v5298
        %v7115 = vpop.f32.mrf.mxu0
        %v7116 = vadd.f32 %v7077, %v7115
        %v7117 = vpop.f32.mrf.mxu0
        %v7118 = vadd.f32 %v7079, %v7117
        %7119 = vmatmul.bf16.gmra.mxu0 %v5304
        %v7120 = vpop.f32.mrf.mxu0
        %v7121 = vadd.f32 %v7082, %v7120
        %v7122 = vpop.f32.mrf.mxu0
        %v7123 = vadd.f32 %v7084, %v7122
        %7124 = vdwg.mxu0
        %7125 = vmatpush.bf16.msra.mxu0 %v6622
        %7126 = vmatpush.bf16.msra.mxu0 %v6620
        %7127 = vmatpush.bf16.msra.mxu0 %v6618
        %7128 = vmatpush.bf16.msra.mxu0 %v6616
        %7129 = vmatpush.bf16.msra.mxu0 %v6614
        %7130 = vmatpush.bf16.msra.mxu0 %v6612
        %7131 = vmatpush.bf16.msra.mxu0 %v6610
        %7132 = vmatpush.bf16.msra.mxu0 %v6608
        %7133 = vmatmul.bf16.gmra.mxu0 %v5275
        %v7134 = vpop.f32.mrf.mxu0
        %v7135 = vadd.f32 %v7096, %v7134
        %v7136 = vpop.f32.mrf.mxu0
        %v7137 = vadd.f32 %v7098, %v7136
        %7138 = vmatmul.bf16.gmra.mxu0 %v5281
        %v7139 = vpop.f32.mrf.mxu0
        %v7140 = vadd.f32 %v7101, %v7139
        %v7141 = vpop.f32.mrf.mxu0
        %v7142 = vadd.f32 %v7103, %v7141
        %7143 = vmatmul.bf16.gmra.mxu0 %v5287
        %v7144 = vpop.f32.mrf.mxu0
        %v7145 = vadd.f32 %v7106, %v7144
        %v7146 = vpop.f32.mrf.mxu0
        %v7147 = vadd.f32 %v7108, %v7146
        %7148 = vmatmul.bf16.gmra.mxu0 %v5293
        %v7149 = vpop.f32.mrf.mxu0
        %v7150 = vadd.f32 %v7111, %v7149
        %v7151 = vpop.f32.mrf.mxu0
        %v7152 = vadd.f32 %v7113, %v7151
        %7153 = vmatmul.bf16.gmra.mxu0 %v5299
        %v7154 = vpop.f32.mrf.mxu0
        %v7155 = vadd.f32 %v7116, %v7154
        %v7156 = vpop.f32.mrf.mxu0
        %v7157 = vadd.f32 %v7118, %v7156
        %7158 = vmatmul.bf16.gmra.mxu0 %v5305
        %v7159 = vpop.f32.mrf.mxu0
        %v7160 = vadd.f32 %v7121, %v7159
        %v7161 = vpop.f32.mrf.mxu0
        %v7162 = vadd.f32 %v7123, %v7161
        %7163 = vdwg.mxu0
        %7164 = vmatpush.bf16.msra.mxu0 %v6638
        %7165 = vmatpush.bf16.msra.mxu0 %v6636
        %7166 = vmatpush.bf16.msra.mxu0 %v6634
        %7167 = vmatpush.bf16.msra.mxu0 %v6632
        %7168 = vmatpush.bf16.msra.mxu0 %v6630
        %7169 = vmatpush.bf16.msra.mxu0 %v6628
        %7170 = vmatpush.bf16.msra.mxu0 %v6626
        %7171 = vmatpush.bf16.msra.mxu0 %v6624
        %7172 = vmatmul.bf16.gmra.mxu0 %v5276
        %v7173 = vpop.f32.mrf.mxu0
        %v7174 = vadd.f32 %v7135, %v7173
        %v7175 = vpop.f32.mrf.mxu0
        %v7176 = vadd.f32 %v7137, %v7175
        %7177 = vmatmul.bf16.gmra.mxu0 %v5282
        %v7178 = vpop.f32.mrf.mxu0
        %v7179 = vadd.f32 %v7140, %v7178
        %v7180 = vpop.f32.mrf.mxu0
        %v7181 = vadd.f32 %v7142, %v7180
        %7182 = vmatmul.bf16.gmra.mxu0 %v5288
        %v7183 = vpop.f32.mrf.mxu0
        %v7184 = vadd.f32 %v7145, %v7183
        %v7185 = vpop.f32.mrf.mxu0
        %v7186 = vadd.f32 %v7147, %v7185
        %7187 = vmatmul.bf16.gmra.mxu0 %v5294
        %v7188 = vpop.f32.mrf.mxu0
        %v7189 = vadd.f32 %v7150, %v7188
        %v7190 = vpop.f32.mrf.mxu0
        %v7191 = vadd.f32 %v7152, %v7190
        %7192 = vmatmul.bf16.gmra.mxu0 %v5300
        %v7193 = vpop.f32.mrf.mxu0
        %v7194 = vadd.f32 %v7155, %v7193
        %v7195 = vpop.f32.mrf.mxu0
        %v7196 = vadd.f32 %v7157, %v7195
        %7197 = vmatmul.bf16.gmra.mxu0 %v5306
        %v7198 = vpop.f32.mrf.mxu0
        %v7199 = vadd.f32 %v7160, %v7198
        %v7200 = vpop.f32.mrf.mxu0
        %v7201 = vadd.f32 %v7162, %v7200
        %7202 = vdwg.mxu0
        %v7203 = vrot.slane %v5992, 7
        %v7204 = vrot.slane %v6226, 7
        %v7205 = vrot.slane %v5994, 7
        %v7206 = vrot.slane %v6228, 7
        %v7207 = vrot.slane %v5997, 7
        %v7208 = vrot.slane %v6231, 7
        %v7209 = vrot.slane %v5999, 7
        %v7210 = vrot.slane %v6233, 7
        %v7211 = vrot.slane %v6002, 7
        %v7212 = vrot.slane %v6236, 7
        %v7213 = vrot.slane %v6004, 7
        %v7214 = vrot.slane %v6238, 7
        %v7215 = vrot.slane %v6007, 7
        %v7216 = vrot.slane %v6241, 7
        %v7217 = vrot.slane %v6009, 7
        %v7218 = vrot.slane %v6243, 7
        %v7219 = vrot.slane %v6012, 7
        %v7220 = vrot.slane %v6246, 7
        %v7221 = vrot.slane %v6014, 7
        %v7222 = vrot.slane %v6248, 7
        %v7223 = vrot.slane %v6017, 7
        %v7224 = vrot.slane %v6251, 7
        %v7225 = vrot.slane %v6019, 7
        %v7226 = vrot.slane %v6253, 7
        %vm7227 = vcmp.lt.s32.totalorder %v920, 1
        %v7228 = vsel %vm7227, %v7223, %v7225
        %v7229 = vsel %vm7227, %v7224, %v7226
        %v7230 = vsel %vm7227, %v7221, %v7223
        %v7231 = vsel %vm7227, %v7222, %v7224
        %v7232 = vsel %vm7227, %v7219, %v7221
        %v7233 = vsel %vm7227, %v7220, %v7222
        %v7234 = vsel %vm7227, %v7217, %v7219
        %v7235 = vsel %vm7227, %v7218, %v7220
        %v7236 = vsel %vm7227, %v7215, %v7217
        %v7237 = vsel %vm7227, %v7216, %v7218
        %v7238 = vsel %vm7227, %v7213, %v7215
        %v7239 = vsel %vm7227, %v7214, %v7216
        %v7240 = vsel %vm7227, %v7211, %v7213
        %v7241 = vsel %vm7227, %v7212, %v7214
        %v7242 = vsel %vm7227, %v7209, %v7211
        %v7243 = vsel %vm7227, %v7210, %v7212
        %v7244 = vsel %vm7227, %v7207, %v7209
        %v7245 = vsel %vm7227, %v7208, %v7210
        %v7246 = vsel %vm7227, %v7205, %v7207
        %v7247 = vsel %vm7227, %v7206, %v7208
        %v7248 = vsel %vm7227, %v7203, %v7205
        %v7249 = vsel %vm7227, %v7204, %v7206
        %v7250 = vsel %vm7227, %v7225, %v7203
        %v7251 = vsel %vm7227, %v7226, %v7204
        %v7252 = vadd.f32 %v7250, %v6940
        %v7253 = vadd.f32 %v7251, %v7174
        %v7254 = vadd.f32 %v7248, %v6942
        %v7255 = vadd.f32 %v7249, %v7176
        %v7256 = vadd.f32 %v7246, %v6945
        %v7257 = vadd.f32 %v7247, %v7179
        %v7258 = vadd.f32 %v7244, %v6947
        %v7259 = vadd.f32 %v7245, %v7181
        %v7260 = vadd.f32 %v7242, %v6950
        %v7261 = vadd.f32 %v7243, %v7184
        %v7262 = vadd.f32 %v7240, %v6952
        %v7263 = vadd.f32 %v7241, %v7186
        %v7264 = vadd.f32 %v7238, %v6955
        %v7265 = vadd.f32 %v7239, %v7189
        %v7266 = vadd.f32 %v7236, %v6957
        %v7267 = vadd.f32 %v7237, %v7191
        %v7268 = vadd.f32 %v7234, %v6960
        %v7269 = vadd.f32 %v7235, %v7194
        %v7270 = vadd.f32 %v7232, %v6962
        %v7271 = vadd.f32 %v7233, %v7196
        %v7272 = vadd.f32 %v7230, %v6965
        %v7273 = vadd.f32 %v7231, %v7199
        %v7274 = vadd.f32 %v7228, %v6967
        %v7275 = vadd.f32 %v7229, %v7201
        %v7277 = vperm.slane %v5198, 0
        %v7278 = vperm.slane %v5198, 1
        %v7281 = vadd.f32 %v7252, %v7277
        %v7282 = vadd.f32 %v7253, %v7278
        %v7283 = vadd.f32 %v7254, %v7277
        %v7284 = vadd.f32 %v7255, %v7278
        %v7285 = vadd.f32 %v7256, %v7277
        %v7286 = vadd.f32 %v7257, %v7278
        %v7287 = vadd.f32 %v7258, %v7277
        %v7288 = vadd.f32 %v7259, %v7278
        %v7289 = vadd.f32 %v7260, %v7277
        %v7290 = vadd.f32 %v7261, %v7278
        %v7291 = vadd.f32 %v7262, %v7277
        %v7292 = vadd.f32 %v7263, %v7278
        %v7293 = vadd.f32 %v7264, %v7277
        %v7294 = vadd.f32 %v7265, %v7278
        %v7295 = vadd.f32 %v7266, %v7277
        %v7296 = vadd.f32 %v7267, %v7278
        %v7297 = vadd.f32 %v7268, %v7277
        %v7298 = vadd.f32 %v7269, %v7278
        %v7299 = vadd.f32 %v7270, %v7277
        %v7300 = vadd.f32 %v7271, %v7278
        %v7301 = vadd.f32 %v7272, %v7277
        %v7302 = vadd.f32 %v7273, %v7278
        %v7303 = vadd.f32 %v7274, %v7277
        %v7304 = vadd.f32 %v7275, %v7278
        %v7305 = vmul.f32 %v7281, %v2077
        %v7306 = vmul.f32 %v7282, %v2077
        %v7307 = vmul.f32 %v7283, %v2082
        %v7308 = vmul.f32 %v7284, %v2082
        %v7309 = vmul.f32 %v7285, %v2087
        %v7310 = vmul.f32 %v7286, %v2087
        %v7311 = vmul.f32 %v7287, %v2092
        %v7312 = vmul.f32 %v7288, %v2092
        %v7313 = vmul.f32 %v7289, %v2097
        %v7314 = vmul.f32 %v7290, %v2097
        %v7315 = vmul.f32 %v7291, %v2102
        %v7316 = vmul.f32 %v7292, %v2102
        %v7317 = vmul.f32 %v7293, %v2107
        %v7318 = vmul.f32 %v7294, %v2107
        %v7319 = vmul.f32 %v7295, %v2112
        %v7320 = vmul.f32 %v7296, %v2112
        %v7321 = vmul.f32 %v7297, %v2117
        %v7322 = vmul.f32 %v7298, %v2117
        %v7323 = vmul.f32 %v7299, %v2122
        %v7324 = vmul.f32 %v7300, %v2122
        %v7325 = vmul.f32 %v7301, %v2127
        %v7326 = vmul.f32 %v7302, %v2127
        %v7327 = vmul.f32 %v7303, %v2132
        %v7328 = vmul.f32 %v7304, %v2132
        %v7329 = vmax.f32 %v7305, 0.0
        %v7330 = vmax.f32 %v7306, 0.0
        %v7331 = vmax.f32 %v7307, 0.0
        %v7332 = vmax.f32 %v7308, 0.0
        %v7333 = vmax.f32 %v7309, 0.0
        %v7334 = vmax.f32 %v7310, 0.0
        %v7335 = vmax.f32 %v7311, 0.0
        %v7336 = vmax.f32 %v7312, 0.0
        %v7337 = vmax.f32 %v7313, 0.0
        %v7338 = vmax.f32 %v7314, 0.0
        %v7339 = vmax.f32 %v7315, 0.0
        %v7340 = vmax.f32 %v7316, 0.0
        %v7341 = vmax.f32 %v7317, 0.0
        %v7342 = vmax.f32 %v7318, 0.0
        %v7343 = vmax.f32 %v7319, 0.0
        %v7344 = vmax.f32 %v7320, 0.0
        %v7345 = vmax.f32 %v7321, 0.0
        %v7346 = vmax.f32 %v7322, 0.0
        %v7347 = vmax.f32 %v7323, 0.0
        %v7348 = vmax.f32 %v7324, 0.0
        %v7349 = vmax.f32 %v7325, 0.0
        %v7350 = vmax.f32 %v7326, 0.0
        %v7351 = vmax.f32 %v7327, 0.0
        %v7352 = vmax.f32 %v7328, 0.0
        %7353 = vst [vmem:[#allocation3] sm:$0xff] %v7329
        %7354 = vst [vmem:[#allocation3 + $0x8] sm:$0xff] %v7330
        %7355 = vst [vmem:[#allocation3 + $0x20] sm:$0xff] %v7331
        %7356 = vst [vmem:[#allocation3 + $0x28] sm:$0xff] %v7332
        %7357 = vst [vmem:[#allocation3 + $0x40] sm:$0xff] %v7333
        %7358 = vst [vmem:[#allocation3 + $0x48] sm:$0xff] %v7334
        %7359 = vst [vmem:[#allocation3 + $0x60] sm:$0xff] %v7335
        %7360 = vst [vmem:[#allocation3 + $0x68] sm:$0xff] %v7336
        %7361 = vst [vmem:[#allocation3 + $0x80] sm:$0xff] %v7337
        %7362 = vst [vmem:[#allocation3 + $0x88] sm:$0xff] %v7338
        %7363 = vst [vmem:[#allocation3 + $0xa0] sm:$0xff] %v7339
        %7364 = vst [vmem:[#allocation3 + $0xa8] sm:$0xff] %v7340
        %7365 = vst [vmem:[#allocation3 + $0xc0] sm:$0xff] %v7341
        %7366 = vst [vmem:[#allocation3 + $0xc8] sm:$0xff] %v7342
        %7367 = vst [vmem:[#allocation3 + $0xe0] sm:$0xff] %v7343
        %7368 = vst [vmem:[#allocation3 + $0xe8] sm:$0xff] %v7344
        %7369 = vst [vmem:[#allocation3 + $0x100] sm:$0xff] %v7345
        %7370 = vst [vmem:[#allocation3 + $0x108] sm:$0xff] %v7346
        %7371 = vst [vmem:[#allocation3 + $0x120] sm:$0xff] %v7347
        %7372 = vst [vmem:[#allocation3 + $0x128] sm:$0xff] %v7348
        %7373 = vst [vmem:[#allocation3 + $0x140] sm:$0xff] %v7349
        %7374 = vst [vmem:[#allocation3 + $0x148] sm:$0xff] %v7350
        %7375 = vst [vmem:[#allocation3 + $0x160] sm:$0xff] %v7351
        %7376 = vst [vmem:[#allocation3 + $0x168] sm:$0xff] %v7352
        %v7377 = vsub.f32 0.0, %v7305
        %v7378 = vsub.f32 0.0, %v7306
        %v7379 = vsub.f32 0.0, %v7307
        %v7380 = vsub.f32 0.0, %v7308
        %v7381 = vsub.f32 0.0, %v7309
        %v7382 = vsub.f32 0.0, %v7310
        %v7383 = vsub.f32 0.0, %v7311
        %v7384 = vsub.f32 0.0, %v7312
        %v7385 = vsub.f32 0.0, %v7313
        %v7386 = vsub.f32 0.0, %v7314
        %v7387 = vsub.f32 0.0, %v7315
        %v7388 = vsub.f32 0.0, %v7316
        %v7389 = vsub.f32 0.0, %v7317
        %v7390 = vsub.f32 0.0, %v7318
        %v7391 = vsub.f32 0.0, %v7319
        %v7392 = vsub.f32 0.0, %v7320
        %v7393 = vsub.f32 0.0, %v7321
        %v7394 = vsub.f32 0.0, %v7322
        %v7395 = vsub.f32 0.0, %v7323
        %v7396 = vsub.f32 0.0, %v7324
        %v7397 = vsub.f32 0.0, %v7325
        %v7398 = vsub.f32 0.0, %v7326
        %v7399 = vsub.f32 0.0, %v7327
        %v7400 = vsub.f32 0.0, %v7328
        %v7401 = vmax.f32 %v7377, 0.0
        %v7402 = vmax.f32 %v7378, 0.0
        %v7403 = vmax.f32 %v7379, 0.0
        %v7404 = vmax.f32 %v7380, 0.0
        %v7405 = vmax.f32 %v7381, 0.0
        %v7406 = vmax.f32 %v7382, 0.0
        %v7407 = vmax.f32 %v7383, 0.0
        %v7408 = vmax.f32 %v7384, 0.0
        %v7409 = vmax.f32 %v7385, 0.0
        %v7410 = vmax.f32 %v7386, 0.0
        %v7411 = vmax.f32 %v7387, 0.0
        %v7412 = vmax.f32 %v7388, 0.0
        %v7413 = vmax.f32 %v7389, 0.0
        %v7414 = vmax.f32 %v7390, 0.0
        %v7415 = vmax.f32 %v7391, 0.0
        %v7416 = vmax.f32 %v7392, 0.0
        %v7417 = vmax.f32 %v7393, 0.0
        %v7418 = vmax.f32 %v7394, 0.0
        %v7419 = vmax.f32 %v7395, 0.0
        %v7420 = vmax.f32 %v7396, 0.0
        %v7421 = vmax.f32 %v7397, 0.0
        %v7422 = vmax.f32 %v7398, 0.0
        %v7423 = vmax.f32 %v7399, 0.0
        %v7424 = vmax.f32 %v7400, 0.0
        %7425 = vst [vmem:[#allocation3 + $0x10] sm:$0xff] %v7401
        %7426 = vst [vmem:[#allocation3 + $0x18] sm:$0xff] %v7402
        %7427 = vst [vmem:[#allocation3 + $0x30] sm:$0xff] %v7403
        %7428 = vst [vmem:[#allocation3 + $0x38] sm:$0xff] %v7404
        %7429 = vst [vmem:[#allocation3 + $0x50] sm:$0xff] %v7405
        %7430 = vst [vmem:[#allocation3 + $0x58] sm:$0xff] %v7406
        %7431 = vst [vmem:[#allocation3 + $0x70] sm:$0xff] %v7407
        %7432 = vst [vmem:[#allocation3 + $0x78] sm:$0xff] %v7408
        %7433 = vst [vmem:[#allocation3 + $0x90] sm:$0xff] %v7409
        %7434 = vst [vmem:[#allocation3 + $0x98] sm:$0xff] %v7410
        %7435 = vst [vmem:[#allocation3 + $0xb0] sm:$0xff] %v7411
        %7436 = vst [vmem:[#allocation3 + $0xb8] sm:$0xff] %v7412
        %7437 = vst [vmem:[#allocation3 + $0xd0] sm:$0xff] %v7413
        %7438 = vst [vmem:[#allocation3 + $0xd8] sm:$0xff] %v7414
        %7439 = vst [vmem:[#allocation3 + $0xf0] sm:$0xff] %v7415
        %7440 = vst [vmem:[#allocation3 + $0xf8] sm:$0xff] %v7416
        %7441 = vst [vmem:[#allocation3 + $0x110] sm:$0xff] %v7417
        %7442 = vst [vmem:[#allocation3 + $0x118] sm:$0xff] %v7418
        %7443 = vst [vmem:[#allocation3 + $0x130] sm:$0xff] %v7419
        %7444 = vst [vmem:[#allocation3 + $0x138] sm:$0xff] %v7420
        %7445 = vst [vmem:[#allocation3 + $0x150] sm:$0xff] %v7421
        %7446 = vst [vmem:[#allocation3 + $0x158] sm:$0xff] %v7422
        %7447 = vst [vmem:[#allocation3 + $0x170] sm:$0xff] %v7423
        %7448 = vst [vmem:[#allocation3 + $0x178] sm:$0xff] %v7424
        %v7449 = vld [vmem:[%s15] sm:$0xf]
        %v7450 = vld [vmem:[%s15 + $0x4] sm:$0xf]
        %v7451 = vld [vmem:[%s15 + $0x8] sm:$0xf]
        %v7452 = vld [vmem:[%s15 + $0xc] sm:$0xf]
        %v7453 = vld [vmem:[%s15 + $0x10] sm:$0xf]
        %v7454 = vld [vmem:[%s15 + $0x14] sm:$0xf]
        %v7455 = vld [vmem:[%s15 + $0x18] sm:$0xf]
        %v7456 = vld [vmem:[%s15 + $0x1c] sm:$0xf]
        %v7457 = vld [vmem:[%s15 + $0x20] sm:$0xf]
        %v7458 = vld [vmem:[%s15 + $0x24] sm:$0xf]
        %v7459 = vld [vmem:[%s15 + $0x28] sm:$0xf]
        %v7460 = vld [vmem:[%s15 + $0x2c] sm:$0xf]
        %v7461 = vld [vmem:[%s15 + $0x30] sm:$0xf]
        %v7462 = vld [vmem:[%s15 + $0x34] sm:$0xf]
        %v7463 = vld [vmem:[%s15 + $0x38] sm:$0xf]
        %v7464 = vld [vmem:[%s15 + $0x3c] sm:$0xf]
        %v7465 = vld [vmem:[%s15 + $0x40] sm:$0xf]
        %v7466 = vld [vmem:[%s15 + $0x44] sm:$0xf]
        %v7467 = vld [vmem:[%s15 + $0x48] sm:$0xf]
        %v7468 = vld [vmem:[%s15 + $0x4c] sm:$0xf]
        %v7469 = vld [vmem:[%s15 + $0x50] sm:$0xf]
        %v7470 = vld [vmem:[%s15 + $0x54] sm:$0xf]
        %v7471 = vld [vmem:[%s15 + $0x58] sm:$0xf]
        %v7472 = vld [vmem:[%s15 + $0x5c] sm:$0xf]
        %v7473 = vld [vmem:[%s15 + $0x60] sm:$0xf]
        %v7474 = vld [vmem:[%s15 + $0x64] sm:$0xf]
        %v7475 = vld [vmem:[%s15 + $0x68] sm:$0xf]
        %v7476 = vld [vmem:[%s15 + $0x6c] sm:$0xf]
        %v7477 = vld [vmem:[%s15 + $0x70] sm:$0xf]
        %v7478 = vld [vmem:[%s15 + $0x74] sm:$0xf]
        %v7479 = vld [vmem:[%s15 + $0x78] sm:$0xf]
        %v7480 = vld [vmem:[%s15 + $0x7c] sm:$0xf]
        %v7481 = vld [vmem:[%s15 + $0x80] sm:$0xf]
        %v7482 = vld [vmem:[%s15 + $0x84] sm:$0xf]
        %v7483 = vld [vmem:[%s15 + $0x88] sm:$0xf]
        %v7484 = vld [vmem:[%s15 + $0x8c] sm:$0xf]
        %v7485 = vld [vmem:[%s15 + $0x90] sm:$0xf]
        %v7486 = vld [vmem:[%s15 + $0x94] sm:$0xf]
        %v7487 = vld [vmem:[%s15 + $0x98] sm:$0xf]
        %v7488 = vld [vmem:[%s15 + $0x9c] sm:$0xf]
        %v7489 = vld [vmem:[%s15 + $0xa0] sm:$0xf]
        %v7490 = vld [vmem:[%s15 + $0xa4] sm:$0xf]
        %v7491 = vld [vmem:[%s15 + $0xa8] sm:$0xf]
        %v7492 = vld [vmem:[%s15 + $0xac] sm:$0xf]
        %v7493 = vld [vmem:[%s15 + $0xb0] sm:$0xf]
        %v7494 = vld [vmem:[%s15 + $0xb4] sm:$0xf]
        %v7495 = vld [vmem:[%s15 + $0xb8] sm:$0xf]
        %v7496 = vld [vmem:[%s15 + $0xbc] sm:$0xf]
        %v7497 = vld [vmem:[%s15 + $0xc0] sm:$0xf]
        %v7498 = vld [vmem:[%s15 + $0xc4] sm:$0xf]
        %v7499 = vld [vmem:[%s15 + $0xc8] sm:$0xf]
        %v7500 = vld [vmem:[%s15 + $0xcc] sm:$0xf]
        %v7501 = vld [vmem:[%s15 + $0xd0] sm:$0xf]
        %v7502 = vld [vmem:[%s15 + $0xd4] sm:$0xf]
        %v7503 = vld [vmem:[%s15 + $0xd8] sm:$0xf]
        %v7504 = vld [vmem:[%s15 + $0xdc] sm:$0xf]
        %v7505 = vld [vmem:[%s15 + $0xe0] sm:$0xf]
        %v7506 = vld [vmem:[%s15 + $0xe4] sm:$0xf]
        %v7507 = vld [vmem:[%s15 + $0xe8] sm:$0xf]
        %v7508 = vld [vmem:[%s15 + $0xec] sm:$0xf]
        %v7509 = vld [vmem:[%s15 + $0xf0] sm:$0xf]
        %v7510 = vld [vmem:[%s15 + $0xf4] sm:$0xf]
        %v7511 = vld [vmem:[%s15 + $0xf8] sm:$0xf]
        %v7512 = vld [vmem:[%s15 + $0xfc] sm:$0xf]
        %v7513 = vld [vmem:[#allocation11] sm:$0xf]
        %v7514 = vld [vmem:[#allocation11 + $0x4] sm:$0xf]
        %v7515 = vld [vmem:[#allocation11 + $0x8] sm:$0xf]
        %v7516 = vld [vmem:[#allocation11 + $0xc] sm:$0xf]
        %v7517 = vld [vmem:[#allocation11 + $0x10] sm:$0xf]
        %v7518 = vld [vmem:[#allocation11 + $0x14] sm:$0xf]
        %v7519 = vld [vmem:[#allocation11 + $0x18] sm:$0xf]
        %v7520 = vld [vmem:[#allocation11 + $0x1c] sm:$0xf]
        %v7521 = vld [vmem:[#allocation11 + $0x20] sm:$0xf]
        %v7522 = vld [vmem:[#allocation11 + $0x24] sm:$0xf]
        %v7523 = vld [vmem:[#allocation11 + $0x28] sm:$0xf]
        %v7524 = vld [vmem:[#allocation11 + $0x2c] sm:$0xf]
        %v7525 = vld [vmem:[#allocation11 + $0x30] sm:$0xf]
        %v7526 = vld [vmem:[#allocation11 + $0x34] sm:$0xf]
        %v7527 = vld [vmem:[#allocation11 + $0x38] sm:$0xf]
        %v7528 = vld [vmem:[#allocation11 + $0x3c] sm:$0xf]
        %v7529 = vld [vmem:[#allocation11 + $0x40] sm:$0xf]
        %v7530 = vld [vmem:[#allocation11 + $0x44] sm:$0xf]
        %v7531 = vld [vmem:[#allocation11 + $0x48] sm:$0xf]
        %v7532 = vld [vmem:[#allocation11 + $0x4c] sm:$0xf]
        %v7533 = vld [vmem:[#allocation11 + $0x50] sm:$0xf]
        %v7534 = vld [vmem:[#allocation11 + $0x54] sm:$0xf]
        %v7535 = vld [vmem:[#allocation11 + $0x58] sm:$0xf]
        %v7536 = vld [vmem:[#allocation11 + $0x5c] sm:$0xf]
        %v7537 = vld [vmem:[#allocation11 + $0x60] sm:$0xf]
        %v7538 = vld [vmem:[#allocation11 + $0x64] sm:$0xf]
        %v7539 = vld [vmem:[#allocation11 + $0x68] sm:$0xf]
        %v7540 = vld [vmem:[#allocation11 + $0x6c] sm:$0xf]
        %v7541 = vld [vmem:[#allocation11 + $0x70] sm:$0xf]
        %v7542 = vld [vmem:[#allocation11 + $0x74] sm:$0xf]
        %v7543 = vld [vmem:[#allocation11 + $0x78] sm:$0xf]
        %v7544 = vld [vmem:[#allocation11 + $0x7c] sm:$0xf]
        %v7545 = vld [vmem:[#allocation11 + $0x80] sm:$0xf]
        %v7546 = vld [vmem:[#allocation11 + $0x84] sm:$0xf]
        %v7547 = vld [vmem:[#allocation11 + $0x88] sm:$0xf]
        %v7548 = vld [vmem:[#allocation11 + $0x8c] sm:$0xf]
        %v7549 = vld [vmem:[#allocation11 + $0x90] sm:$0xf]
        %v7550 = vld [vmem:[#allocation11 + $0x94] sm:$0xf]
        %v7551 = vld [vmem:[#allocation11 + $0x98] sm:$0xf]
        %v7552 = vld [vmem:[#allocation11 + $0x9c] sm:$0xf]
        %v7553 = vld [vmem:[#allocation11 + $0xa0] sm:$0xf]
        %v7554 = vld [vmem:[#allocation11 + $0xa4] sm:$0xf]
        %v7555 = vld [vmem:[#allocation11 + $0xa8] sm:$0xf]
        %v7556 = vld [vmem:[#allocation11 + $0xac] sm:$0xf]
        %v7557 = vld [vmem:[#allocation11 + $0xb0] sm:$0xf]
        %v7558 = vld [vmem:[#allocation11 + $0xb4] sm:$0xf]
        %v7559 = vld [vmem:[#allocation11 + $0xb8] sm:$0xf]
        %v7560 = vld [vmem:[#allocation11 + $0xbc] sm:$0xf]
        %v7561 = vld [vmem:[#allocation11 + $0xc0] sm:$0xf]
        %v7562 = vld [vmem:[#allocation11 + $0xc4] sm:$0xf]
        %v7563 = vld [vmem:[#allocation11 + $0xc8] sm:$0xf]
        %v7564 = vld [vmem:[#allocation11 + $0xcc] sm:$0xf]
        %v7565 = vld [vmem:[#allocation11 + $0xd0] sm:$0xf]
        %v7566 = vld [vmem:[#allocation11 + $0xd4] sm:$0xf]
        %v7567 = vld [vmem:[#allocation11 + $0xd8] sm:$0xf]
        %v7568 = vld [vmem:[#allocation11 + $0xdc] sm:$0xf]
        %v7569 = vld [vmem:[#allocation11 + $0xe0] sm:$0xf]
        %v7570 = vld [vmem:[#allocation11 + $0xe4] sm:$0xf]
        %v7571 = vld [vmem:[#allocation11 + $0xe8] sm:$0xf]
        %v7572 = vld [vmem:[#allocation11 + $0xec] sm:$0xf]
        %v7573 = vld [vmem:[#allocation11 + $0xf0] sm:$0xf]
        %v7574 = vld [vmem:[#allocation11 + $0xf4] sm:$0xf]
        %v7575 = vld [vmem:[#allocation11 + $0xf8] sm:$0xf]
        %v7576 = vld [vmem:[#allocation11 + $0xfc] sm:$0xf]
        %v7577 = vld [vmem:[%s17] sm:$0x1]
        %v7578 = vld [vmem:[#allocation3] sm:$0xff]
        %v7579 = vld [vmem:[#allocation3 + $0x8] sm:$0xff]
        %v7580 = vld [vmem:[#allocation3 + $0x10] sm:$0xff]
        %v7581 = vld [vmem:[#allocation3 + $0x18] sm:$0xff]
        %v7582 = vld [vmem:[#allocation3 + $0x20] sm:$0xff]
        %v7583 = vld [vmem:[#allocation3 + $0x28] sm:$0xff]
        %v7584 = vld [vmem:[#allocation3 + $0x30] sm:$0xff]
        %v7585 = vld [vmem:[#allocation3 + $0x38] sm:$0xff]
        %v7586 = vld [vmem:[#allocation3 + $0x40] sm:$0xff]
        %v7587 = vld [vmem:[#allocation3 + $0x48] sm:$0xff]
        %v7588 = vld [vmem:[#allocation3 + $0x50] sm:$0xff]
        %v7589 = vld [vmem:[#allocation3 + $0x58] sm:$0xff]
        %v7590 = vld [vmem:[#allocation3 + $0x60] sm:$0xff]
        %v7591 = vld [vmem:[#allocation3 + $0x68] sm:$0xff]
        %v7592 = vld [vmem:[#allocation3 + $0x70] sm:$0xff]
        %v7593 = vld [vmem:[#allocation3 + $0x78] sm:$0xff]
        %v7594 = vld [vmem:[#allocation3 + $0x80] sm:$0xff]
        %v7595 = vld [vmem:[#allocation3 + $0x88] sm:$0xff]
        %v7596 = vld [vmem:[#allocation3 + $0x90] sm:$0xff]
        %v7597 = vld [vmem:[#allocation3 + $0x98] sm:$0xff]
        %v7598 = vld [vmem:[#allocation3 + $0xa0] sm:$0xff]
        %v7599 = vld [vmem:[#allocation3 + $0xa8] sm:$0xff]
        %v7600 = vld [vmem:[#allocation3 + $0xb0] sm:$0xff]
        %v7601 = vld [vmem:[#allocation3 + $0xb8] sm:$0xff]
        %v7602 = vld [vmem:[#allocation3 + $0xc0] sm:$0xff]
        %v7603 = vld [vmem:[#allocation3 + $0xc8] sm:$0xff]
        %v7604 = vld [vmem:[#allocation3 + $0xd0] sm:$0xff]
        %v7605 = vld [vmem:[#allocation3 + $0xd8] sm:$0xff]
        %v7606 = vld [vmem:[#allocation3 + $0xe0] sm:$0xff]
        %v7607 = vld [vmem:[#allocation3 + $0xe8] sm:$0xff]
        %v7608 = vld [vmem:[#allocation3 + $0xf0] sm:$0xff]
        %v7609 = vld [vmem:[#allocation3 + $0xf8] sm:$0xff]
        %v7610 = vld [vmem:[#allocation3 + $0x100] sm:$0xff]
        %v7611 = vld [vmem:[#allocation3 + $0x108] sm:$0xff]
        %v7612 = vld [vmem:[#allocation3 + $0x110] sm:$0xff]
        %v7613 = vld [vmem:[#allocation3 + $0x118] sm:$0xff]
        %v7614 = vld [vmem:[#allocation3 + $0x120] sm:$0xff]
        %v7615 = vld [vmem:[#allocation3 + $0x128] sm:$0xff]
        %v7616 = vld [vmem:[#allocation3 + $0x130] sm:$0xff]
        %v7617 = vld [vmem:[#allocation3 + $0x138] sm:$0xff]
        %v7618 = vld [vmem:[#allocation3 + $0x140] sm:$0xff]
        %v7619 = vld [vmem:[#allocation3 + $0x148] sm:$0xff]
        %v7620 = vld [vmem:[#allocation3 + $0x150] sm:$0xff]
        %v7621 = vld [vmem:[#allocation3 + $0x158] sm:$0xff]
        %v7622 = vld [vmem:[#allocation3 + $0x160] sm:$0xff]
        %v7623 = vld [vmem:[#allocation3 + $0x168] sm:$0xff]
        %v7624 = vld [vmem:[#allocation3 + $0x170] sm:$0xff]
        %v7625 = vld [vmem:[#allocation3 + $0x178] sm:$0xff]
        %v7626 = vpack.c.bf16 %v7582, %v7578
        %v7627 = vpack.c.bf16 %v7583, %v7579
        %v7628 = vpack.c.bf16 %v7584, %v7580
        %v7629 = vpack.c.bf16 %v7585, %v7581
        %v7630 = vpack.c.bf16 %v7590, %v7586
        %v7631 = vpack.c.bf16 %v7591, %v7587
        %v7632 = vpack.c.bf16 %v7592, %v7588
        %v7633 = vpack.c.bf16 %v7593, %v7589
        %v7634 = vpack.c.bf16 %v7598, %v7594
        %v7635 = vpack.c.bf16 %v7599, %v7595
        %v7636 = vpack.c.bf16 %v7600, %v7596
        %v7637 = vpack.c.bf16 %v7601, %v7597
        %v7638 = vpack.c.bf16 %v7606, %v7602
        %v7639 = vpack.c.bf16 %v7607, %v7603
        %v7640 = vpack.c.bf16 %v7608, %v7604
        %v7641 = vpack.c.bf16 %v7609, %v7605
        %v7642 = vpack.c.bf16 %v7614, %v7610
        %v7643 = vpack.c.bf16 %v7615, %v7611
        %v7644 = vpack.c.bf16 %v7616, %v7612
        %v7645 = vpack.c.bf16 %v7617, %v7613
        %v7646 = vpack.c.bf16 %v7622, %v7618
        %v7647 = vpack.c.bf16 %v7623, %v7619
        %v7648 = vpack.c.bf16 %v7624, %v7620
        %v7649 = vpack.c.bf16 %v7625, %v7621
        %v7714 = vunpack.c.l.b16 %v7449
        %v7715 = vunpack.c.l.b16 %v7450
        %v7716 = vunpack.c.l.b16 %v7451
        %v7717 = vunpack.c.l.b16 %v7452
        %v7718 = vunpack.c.l.b16 %v7453
        %v7719 = vunpack.c.l.b16 %v7454
        %v7720 = vunpack.c.l.b16 %v7455
        %v7721 = vunpack.c.l.b16 %v7456
        %v7722 = vunpack.c.l.b16 %v7457
        %v7723 = vunpack.c.l.b16 %v7458
        %v7724 = vunpack.c.l.b16 %v7459
        %v7725 = vunpack.c.l.b16 %v7460
        %v7726 = vunpack.c.l.b16 %v7461
        %v7727 = vunpack.c.l.b16 %v7462
        %v7728 = vunpack.c.l.b16 %v7463
        %v7729 = vunpack.c.l.b16 %v7464
        %v7730 = vunpack.c.l.b16 %v7465
        %v7731 = vunpack.c.l.b16 %v7466
        %v7732 = vunpack.c.l.b16 %v7467
        %v7733 = vunpack.c.l.b16 %v7468
        %v7734 = vunpack.c.l.b16 %v7469
        %v7735 = vunpack.c.l.b16 %v7470
        %v7736 = vunpack.c.l.b16 %v7471
        %v7737 = vunpack.c.l.b16 %v7472
        %v7738 = vunpack.c.l.b16 %v7473
        %v7739 = vunpack.c.l.b16 %v7474
        %v7740 = vunpack.c.l.b16 %v7475
        %v7741 = vunpack.c.l.b16 %v7476
        %v7742 = vunpack.c.l.b16 %v7477
        %v7743 = vunpack.c.l.b16 %v7478
        %v7744 = vunpack.c.l.b16 %v7479
        %v7745 = vunpack.c.l.b16 %v7480
        %v7746 = vunpack.c.l.b16 %v7481
        %v7747 = vunpack.c.l.b16 %v7482
        %v7748 = vunpack.c.l.b16 %v7483
        %v7749 = vunpack.c.l.b16 %v7484
        %v7750 = vunpack.c.l.b16 %v7485
        %v7751 = vunpack.c.l.b16 %v7486
        %v7752 = vunpack.c.l.b16 %v7487
        %v7753 = vunpack.c.l.b16 %v7488
        %v7754 = vunpack.c.l.b16 %v7489
        %v7755 = vunpack.c.l.b16 %v7490
        %v7756 = vunpack.c.l.b16 %v7491
        %v7757 = vunpack.c.l.b16 %v7492
        %v7758 = vunpack.c.l.b16 %v7493
        %v7759 = vunpack.c.l.b16 %v7494
        %v7760 = vunpack.c.l.b16 %v7495
        %v7761 = vunpack.c.l.b16 %v7496
        %v7762 = vunpack.c.l.b16 %v7497
        %v7763 = vunpack.c.l.b16 %v7498
        %v7764 = vunpack.c.l.b16 %v7499
        %v7765 = vunpack.c.l.b16 %v7500
        %v7766 = vunpack.c.l.b16 %v7501
        %v7767 = vunpack.c.l.b16 %v7502
        %v7768 = vunpack.c.l.b16 %v7503
        %v7769 = vunpack.c.l.b16 %v7504
        %v7770 = vunpack.c.l.b16 %v7505
        %v7771 = vunpack.c.l.b16 %v7506
        %v7772 = vunpack.c.l.b16 %v7507
        %v7773 = vunpack.c.l.b16 %v7508
        %v7774 = vunpack.c.l.b16 %v7509
        %v7775 = vunpack.c.l.b16 %v7510
        %v7776 = vunpack.c.l.b16 %v7511
        %v7777 = vunpack.c.l.b16 %v7512
        %v7778 = vpack.c.b16 %v7715, %v7714
        %v7779 = vpack.c.b16 %v7717, %v7716
        %v7780 = vpack.c.b16 %v7719, %v7718
        %v7781 = vpack.c.b16 %v7721, %v7720
        %v7782 = vpack.c.b16 %v7723, %v7722
        %v7783 = vpack.c.b16 %v7725, %v7724
        %v7784 = vpack.c.b16 %v7727, %v7726
        %v7785 = vpack.c.b16 %v7729, %v7728
        %v7786 = vpack.c.b16 %v7731, %v7730
        %v7787 = vpack.c.b16 %v7733, %v7732
        %v7788 = vpack.c.b16 %v7735, %v7734
        %v7789 = vpack.c.b16 %v7737, %v7736
        %v7790 = vpack.c.b16 %v7739, %v7738
        %v7791 = vpack.c.b16 %v7741, %v7740
        %v7792 = vpack.c.b16 %v7743, %v7742
        %v7793 = vpack.c.b16 %v7745, %v7744
        %v7794 = vpack.c.b16 %v7747, %v7746
        %v7795 = vpack.c.b16 %v7749, %v7748
        %v7796 = vpack.c.b16 %v7751, %v7750
        %v7797 = vpack.c.b16 %v7753, %v7752
        %v7798 = vpack.c.b16 %v7755, %v7754
        %v7799 = vpack.c.b16 %v7757, %v7756
        %v7800 = vpack.c.b16 %v7759, %v7758
        %v7801 = vpack.c.b16 %v7761, %v7760
        %v7802 = vpack.c.b16 %v7763, %v7762
        %v7803 = vpack.c.b16 %v7765, %v7764
        %v7804 = vpack.c.b16 %v7767, %v7766
        %v7805 = vpack.c.b16 %v7769, %v7768
        %v7806 = vpack.c.b16 %v7771, %v7770
        %v7807 = vpack.c.b16 %v7773, %v7772
        %v7808 = vpack.c.b16 %v7775, %v7774
        %v7809 = vpack.c.b16 %v7777, %v7776
        %7842 = vmatpush.bf16.msra.mxu0 %v7785
        %7843 = vmatpush.bf16.msra.mxu0 %v7784
        %7844 = vmatpush.bf16.msra.mxu0 %v7783
        %7845 = vmatpush.bf16.msra.mxu0 %v7782
        %7846 = vmatpush.bf16.msra.mxu0 %v7781
        %7847 = vmatpush.bf16.msra.mxu0 %v7780
        %7848 = vmatpush.bf16.msra.mxu0 %v7779
        %7849 = vmatpush.bf16.msra.mxu0 %v7778
        %7850 = vmatmul.bf16.gmra.mxu0 %v7626
        %v7851 = vpop.f32.mrf.mxu0
        %v7852 = vadd.f32 0.0, %v7851
        %v7853 = vpop.f32.mrf.mxu0
        %v7854 = vadd.f32 0.0, %v7853
        %7855 = vmatmul.bf16.gmra.mxu0 %v7630
        %v7856 = vpop.f32.mrf.mxu0
        %v7857 = vadd.f32 0.0, %v7856
        %v7858 = vpop.f32.mrf.mxu0
        %v7859 = vadd.f32 0.0, %v7858
        %7860 = vmatmul.bf16.gmra.mxu0 %v7634
        %v7861 = vpop.f32.mrf.mxu0
        %v7862 = vadd.f32 0.0, %v7861
        %v7863 = vpop.f32.mrf.mxu0
        %v7864 = vadd.f32 0.0, %v7863
        %7865 = vmatmul.bf16.gmra.mxu0 %v7638
        %v7866 = vpop.f32.mrf.mxu0
        %v7867 = vadd.f32 0.0, %v7866
        %v7868 = vpop.f32.mrf.mxu0
        %v7869 = vadd.f32 0.0, %v7868
        %7870 = vmatmul.bf16.gmra.mxu0 %v7642
        %v7871 = vpop.f32.mrf.mxu0
        %v7872 = vadd.f32 0.0, %v7871
        %v7873 = vpop.f32.mrf.mxu0
        %v7874 = vadd.f32 0.0, %v7873
        %7875 = vmatmul.bf16.gmra.mxu0 %v7646
        %v7876 = vpop.f32.mrf.mxu0
        %v7877 = vadd.f32 0.0, %v7876
        %v7878 = vpop.f32.mrf.mxu0
        %v7879 = vadd.f32 0.0, %v7878
        %7880 = vdwg.mxu0
        %7881 = vmatpush.bf16.msra.mxu0 %v7793
        %7882 = vmatpush.bf16.msra.mxu0 %v7792
        %7883 = vmatpush.bf16.msra.mxu0 %v7791
        %7884 = vmatpush.bf16.msra.mxu0 %v7790
        %7885 = vmatpush.bf16.msra.mxu0 %v7789
        %7886 = vmatpush.bf16.msra.mxu0 %v7788
        %7887 = vmatpush.bf16.msra.mxu0 %v7787
        %7888 = vmatpush.bf16.msra.mxu0 %v7786
        %7889 = vmatmul.bf16.gmra.mxu0 %v7627
        %v7890 = vpop.f32.mrf.mxu0
        %v7891 = vadd.f32 %v7852, %v7890
        %v7892 = vpop.f32.mrf.mxu0
        %v7893 = vadd.f32 %v7854, %v7892
        %7894 = vmatmul.bf16.gmra.mxu0 %v7631
        %v7895 = vpop.f32.mrf.mxu0
        %v7896 = vadd.f32 %v7857, %v7895
        %v7897 = vpop.f32.mrf.mxu0
        %v7898 = vadd.f32 %v7859, %v7897
        %7899 = vmatmul.bf16.gmra.mxu0 %v7635
        %v7900 = vpop.f32.mrf.mxu0
        %v7901 = vadd.f32 %v7862, %v7900
        %v7902 = vpop.f32.mrf.mxu0
        %v7903 = vadd.f32 %v7864, %v7902
        %7904 = vmatmul.bf16.gmra.mxu0 %v7639
        %v7905 = vpop.f32.mrf.mxu0
        %v7906 = vadd.f32 %v7867, %v7905
        %v7907 = vpop.f32.mrf.mxu0
        %v7908 = vadd.f32 %v7869, %v7907
        %7909 = vmatmul.bf16.gmra.mxu0 %v7643
        %v7910 = vpop.f32.mrf.mxu0
        %v7911 = vadd.f32 %v7872, %v7910
        %v7912 = vpop.f32.mrf.mxu0
        %v7913 = vadd.f32 %v7874, %v7912
        %7914 = vmatmul.bf16.gmra.mxu0 %v7647
        %v7915 = vpop.f32.mrf.mxu0
        %v7916 = vadd.f32 %v7877, %v7915
        %v7917 = vpop.f32.mrf.mxu0
        %v7918 = vadd.f32 %v7879, %v7917
        %7919 = vdwg.mxu0
        %7920 = vmatpush.bf16.msra.mxu0 %v7801
        %7921 = vmatpush.bf16.msra.mxu0 %v7800
        %7922 = vmatpush.bf16.msra.mxu0 %v7799
        %7923 = vmatpush.bf16.msra.mxu0 %v7798
        %7924 = vmatpush.bf16.msra.mxu0 %v7797
        %7925 = vmatpush.bf16.msra.mxu0 %v7796
        %7926 = vmatpush.bf16.msra.mxu0 %v7795
        %7927 = vmatpush.bf16.msra.mxu0 %v7794
        %7928 = vmatmul.bf16.gmra.mxu0 %v7628
        %v7929 = vpop.f32.mrf.mxu0
        %v7930 = vadd.f32 %v7891, %v7929
        %v7931 = vpop.f32.mrf.mxu0
        %v7932 = vadd.f32 %v7893, %v7931
        %7933 = vmatmul.bf16.gmra.mxu0 %v7632
        %v7934 = vpop.f32.mrf.mxu0
        %v7935 = vadd.f32 %v7896, %v7934
        %v7936 = vpop.f32.mrf.mxu0
        %v7937 = vadd.f32 %v7898, %v7936
        %7938 = vmatmul.bf16.gmra.mxu0 %v7636
        %v7939 = vpop.f32.mrf.mxu0
        %v7940 = vadd.f32 %v7901, %v7939
        %v7941 = vpop.f32.mrf.mxu0
        %v7942 = vadd.f32 %v7903, %v7941
        %7943 = vmatmul.bf16.gmra.mxu0 %v7640
        %v7944 = vpop.f32.mrf.mxu0
        %v7945 = vadd.f32 %v7906, %v7944
        %v7946 = vpop.f32.mrf.mxu0
        %v7947 = vadd.f32 %v7908, %v7946
        %7948 = vmatmul.bf16.gmra.mxu0 %v7644
        %v7949 = vpop.f32.mrf.mxu0
        %v7950 = vadd.f32 %v7911, %v7949
        %v7951 = vpop.f32.mrf.mxu0
        %v7952 = vadd.f32 %v7913, %v7951
        %7953 = vmatmul.bf16.gmra.mxu0 %v7648
        %v7954 = vpop.f32.mrf.mxu0
        %v7955 = vadd.f32 %v7916, %v7954
        %v7956 = vpop.f32.mrf.mxu0
        %v7957 = vadd.f32 %v7918, %v7956
        %7958 = vdwg.mxu0
        %7959 = vmatpush.bf16.msra.mxu0 %v7809
        %7960 = vmatpush.bf16.msra.mxu0 %v7808
        %7961 = vmatpush.bf16.msra.mxu0 %v7807
        %7962 = vmatpush.bf16.msra.mxu0 %v7806
        %7963 = vmatpush.bf16.msra.mxu0 %v7805
        %7964 = vmatpush.bf16.msra.mxu0 %v7804
        %7965 = vmatpush.bf16.msra.mxu0 %v7803
        %7966 = vmatpush.bf16.msra.mxu0 %v7802
        %7967 = vmatmul.bf16.gmra.mxu0 %v7629
        %v7968 = vpop.f32.mrf.mxu0
        %v7969 = vadd.f32 %v7930, %v7968
        %v7970 = vpop.f32.mrf.mxu0
        %v7971 = vadd.f32 %v7932, %v7970
        %7972 = vmatmul.bf16.gmra.mxu0 %v7633
        %v7973 = vpop.f32.mrf.mxu0
        %v7974 = vadd.f32 %v7935, %v7973
        %v7975 = vpop.f32.mrf.mxu0
        %v7976 = vadd.f32 %v7937, %v7975
        %7977 = vmatmul.bf16.gmra.mxu0 %v7637
        %v7978 = vpop.f32.mrf.mxu0
        %v7979 = vadd.f32 %v7940, %v7978
        %v7980 = vpop.f32.mrf.mxu0
        %v7981 = vadd.f32 %v7942, %v7980
        %7982 = vmatmul.bf16.gmra.mxu0 %v7641
        %v7983 = vpop.f32.mrf.mxu0
        %v7984 = vadd.f32 %v7945, %v7983
        %v7985 = vpop.f32.mrf.mxu0
        %v7986 = vadd.f32 %v7947, %v7985
        %7987 = vmatmul.bf16.gmra.mxu0 %v7645
        %v7988 = vpop.f32.mrf.mxu0
        %v7989 = vadd.f32 %v7950, %v7988
        %v7990 = vpop.f32.mrf.mxu0
        %v7991 = vadd.f32 %v7952, %v7990
        %7992 = vmatmul.bf16.gmra.mxu0 %v7649
        %v7993 = vpop.f32.mrf.mxu0
        %v7994 = vadd.f32 %v7955, %v7993
        %v7995 = vpop.f32.mrf.mxu0
        %v7996 = vadd.f32 %v7957, %v7995
        %7997 = vdwg.mxu0
        %v8062 = vunpack.c.l.b16 %v7513
        %v8063 = vunpack.c.l.b16 %v7514
        %v8064 = vunpack.c.l.b16 %v7515
        %v8065 = vunpack.c.l.b16 %v7516
        %v8066 = vunpack.c.l.b16 %v7517
        %v8067 = vunpack.c.l.b16 %v7518
        %v8068 = vunpack.c.l.b16 %v7519
        %v8069 = vunpack.c.l.b16 %v7520
        %v8070 = vunpack.c.l.b16 %v7521
        %v8071 = vunpack.c.l.b16 %v7522
        %v8072 = vunpack.c.l.b16 %v7523
        %v8073 = vunpack.c.l.b16 %v7524
        %v8074 = vunpack.c.l.b16 %v7525
        %v8075 = vunpack.c.l.b16 %v7526
        %v8076 = vunpack.c.l.b16 %v7527
        %v8077 = vunpack.c.l.b16 %v7528
        %v8078 = vunpack.c.l.b16 %v7529
        %v8079 = vunpack.c.l.b16 %v7530
        %v8080 = vunpack.c.l.b16 %v7531
        %v8081 = vunpack.c.l.b16 %v7532
        %v8082 = vunpack.c.l.b16 %v7533
        %v8083 = vunpack.c.l.b16 %v7534
        %v8084 = vunpack.c.l.b16 %v7535
        %v8085 = vunpack.c.l.b16 %v7536
        %v8086 = vunpack.c.l.b16 %v7537
        %v8087 = vunpack.c.l.b16 %v7538
        %v8088 = vunpack.c.l.b16 %v7539
        %v8089 = vunpack.c.l.b16 %v7540
        %v8090 = vunpack.c.l.b16 %v7541
        %v8091 = vunpack.c.l.b16 %v7542
        %v8092 = vunpack.c.l.b16 %v7543
        %v8093 = vunpack.c.l.b16 %v7544
        %v8094 = vunpack.c.l.b16 %v7545
        %v8095 = vunpack.c.l.b16 %v7546
        %v8096 = vunpack.c.l.b16 %v7547
        %v8097 = vunpack.c.l.b16 %v7548
        %v8098 = vunpack.c.l.b16 %v7549
        %v8099 = vunpack.c.l.b16 %v7550
        %v8100 = vunpack.c.l.b16 %v7551
        %v8101 = vunpack.c.l.b16 %v7552
        %v8102 = vunpack.c.l.b16 %v7553
        %v8103 = vunpack.c.l.b16 %v7554
        %v8104 = vunpack.c.l.b16 %v7555
        %v8105 = vunpack.c.l.b16 %v7556
        %v8106 = vunpack.c.l.b16 %v7557
        %v8107 = vunpack.c.l.b16 %v7558
        %v8108 = vunpack.c.l.b16 %v7559
        %v8109 = vunpack.c.l.b16 %v7560
        %v8110 = vunpack.c.l.b16 %v7561
        %v8111 = vunpack.c.l.b16 %v7562
        %v8112 = vunpack.c.l.b16 %v7563
        %v8113 = vunpack.c.l.b16 %v7564
        %v8114 = vunpack.c.l.b16 %v7565
        %v8115 = vunpack.c.l.b16 %v7566
        %v8116 = vunpack.c.l.b16 %v7567
        %v8117 = vunpack.c.l.b16 %v7568
        %v8118 = vunpack.c.l.b16 %v7569
        %v8119 = vunpack.c.l.b16 %v7570
        %v8120 = vunpack.c.l.b16 %v7571
        %v8121 = vunpack.c.l.b16 %v7572
        %v8122 = vunpack.c.l.b16 %v7573
        %v8123 = vunpack.c.l.b16 %v7574
        %v8124 = vunpack.c.l.b16 %v7575
        %v8125 = vunpack.c.l.b16 %v7576
        %v8126 = vpack.c.b16 %v8063, %v8062
        %v8127 = vpack.c.b16 %v8065, %v8064
        %v8128 = vpack.c.b16 %v8067, %v8066
        %v8129 = vpack.c.b16 %v8069, %v8068
        %v8130 = vpack.c.b16 %v8071, %v8070
        %v8131 = vpack.c.b16 %v8073, %v8072
        %v8132 = vpack.c.b16 %v8075, %v8074
        %v8133 = vpack.c.b16 %v8077, %v8076
        %v8134 = vpack.c.b16 %v8079, %v8078
        %v8135 = vpack.c.b16 %v8081, %v8080
        %v8136 = vpack.c.b16 %v8083, %v8082
        %v8137 = vpack.c.b16 %v8085, %v8084
        %v8138 = vpack.c.b16 %v8087, %v8086
        %v8139 = vpack.c.b16 %v8089, %v8088
        %v8140 = vpack.c.b16 %v8091, %v8090
        %v8141 = vpack.c.b16 %v8093, %v8092
        %v8142 = vpack.c.b16 %v8095, %v8094
        %v8143 = vpack.c.b16 %v8097, %v8096
        %v8144 = vpack.c.b16 %v8099, %v8098
        %v8145 = vpack.c.b16 %v8101, %v8100
        %v8146 = vpack.c.b16 %v8103, %v8102
        %v8147 = vpack.c.b16 %v8105, %v8104
        %v8148 = vpack.c.b16 %v8107, %v8106
        %v8149 = vpack.c.b16 %v8109, %v8108
        %v8150 = vpack.c.b16 %v8111, %v8110
        %v8151 = vpack.c.b16 %v8113, %v8112
        %v8152 = vpack.c.b16 %v8115, %v8114
        %v8153 = vpack.c.b16 %v8117, %v8116
        %v8154 = vpack.c.b16 %v8119, %v8118
        %v8155 = vpack.c.b16 %v8121, %v8120
        %v8156 = vpack.c.b16 %v8123, %v8122
        %v8157 = vpack.c.b16 %v8125, %v8124
        %8190 = vmatpush.bf16.msra.mxu0 %v8133
        %8191 = vmatpush.bf16.msra.mxu0 %v8132
        %8192 = vmatpush.bf16.msra.mxu0 %v8131
        %8193 = vmatpush.bf16.msra.mxu0 %v8130
        %8194 = vmatpush.bf16.msra.mxu0 %v8129
        %8195 = vmatpush.bf16.msra.mxu0 %v8128
        %8196 = vmatpush.bf16.msra.mxu0 %v8127
        %8197 = vmatpush.bf16.msra.mxu0 %v8126
        %8198 = vmatmul.bf16.gmra.mxu0 %v7626
        %v8199 = vpop.f32.mrf.mxu0
        %v8200 = vadd.f32 0.0, %v8199
        %v8201 = vpop.f32.mrf.mxu0
        %v8202 = vadd.f32 0.0, %v8201
        %8203 = vmatmul.bf16.gmra.mxu0 %v7630
        %v8204 = vpop.f32.mrf.mxu0
        %v8205 = vadd.f32 0.0, %v8204
        %v8206 = vpop.f32.mrf.mxu0
        %v8207 = vadd.f32 0.0, %v8206
        %8208 = vmatmul.bf16.gmra.mxu0 %v7634
        %v8209 = vpop.f32.mrf.mxu0
        %v8210 = vadd.f32 0.0, %v8209
        %v8211 = vpop.f32.mrf.mxu0
        %v8212 = vadd.f32 0.0, %v8211
        %8213 = vmatmul.bf16.gmra.mxu0 %v7638
        %v8214 = vpop.f32.mrf.mxu0
        %v8215 = vadd.f32 0.0, %v8214
        %v8216 = vpop.f32.mrf.mxu0
        %v8217 = vadd.f32 0.0, %v8216
        %8218 = vmatmul.bf16.gmra.mxu0 %v7642
        %v8219 = vpop.f32.mrf.mxu0
        %v8220 = vadd.f32 0.0, %v8219
        %v8221 = vpop.f32.mrf.mxu0
        %v8222 = vadd.f32 0.0, %v8221
        %8223 = vmatmul.bf16.gmra.mxu0 %v7646
        %v8224 = vpop.f32.mrf.mxu0
        %v8225 = vadd.f32 0.0, %v8224
        %v8226 = vpop.f32.mrf.mxu0
        %v8227 = vadd.f32 0.0, %v8226
        %8228 = vdwg.mxu0
        %8229 = vmatpush.bf16.msra.mxu0 %v8141
        %8230 = vmatpush.bf16.msra.mxu0 %v8140
        %8231 = vmatpush.bf16.msra.mxu0 %v8139
        %8232 = vmatpush.bf16.msra.mxu0 %v8138
        %8233 = vmatpush.bf16.msra.mxu0 %v8137
        %8234 = vmatpush.bf16.msra.mxu0 %v8136
        %8235 = vmatpush.bf16.msra.mxu0 %v8135
        %8236 = vmatpush.bf16.msra.mxu0 %v8134
        %8237 = vmatmul.bf16.gmra.mxu0 %v7627
        %v8238 = vpop.f32.mrf.mxu0
        %v8239 = vadd.f32 %v8200, %v8238
        %v8240 = vpop.f32.mrf.mxu0
        %v8241 = vadd.f32 %v8202, %v8240
        %8242 = vmatmul.bf16.gmra.mxu0 %v7631
        %v8243 = vpop.f32.mrf.mxu0
        %v8244 = vadd.f32 %v8205, %v8243
        %v8245 = vpop.f32.mrf.mxu0
        %v8246 = vadd.f32 %v8207, %v8245
        %8247 = vmatmul.bf16.gmra.mxu0 %v7635
        %v8248 = vpop.f32.mrf.mxu0
        %v8249 = vadd.f32 %v8210, %v8248
        %v8250 = vpop.f32.mrf.mxu0
        %v8251 = vadd.f32 %v8212, %v8250
        %8252 = vmatmul.bf16.gmra.mxu0 %v7639
        %v8253 = vpop.f32.mrf.mxu0
        %v8254 = vadd.f32 %v8215, %v8253
        %v8255 = vpop.f32.mrf.mxu0
        %v8256 = vadd.f32 %v8217, %v8255
        %8257 = vmatmul.bf16.gmra.mxu0 %v7643
        %v8258 = vpop.f32.mrf.mxu0
        %v8259 = vadd.f32 %v8220, %v8258
        %v8260 = vpop.f32.mrf.mxu0
        %v8261 = vadd.f32 %v8222, %v8260
        %8262 = vmatmul.bf16.gmra.mxu0 %v7647
        %v8263 = vpop.f32.mrf.mxu0
        %v8264 = vadd.f32 %v8225, %v8263
        %v8265 = vpop.f32.mrf.mxu0
        %v8266 = vadd.f32 %v8227, %v8265
        %8267 = vdwg.mxu0
        %8268 = vmatpush.bf16.msra.mxu0 %v8149
        %8269 = vmatpush.bf16.msra.mxu0 %v8148
        %8270 = vmatpush.bf16.msra.mxu0 %v8147
        %8271 = vmatpush.bf16.msra.mxu0 %v8146
        %8272 = vmatpush.bf16.msra.mxu0 %v8145
        %8273 = vmatpush.bf16.msra.mxu0 %v8144
        %8274 = vmatpush.bf16.msra.mxu0 %v8143
        %8275 = vmatpush.bf16.msra.mxu0 %v8142
        %8276 = vmatmul.bf16.gmra.mxu0 %v7628
        %v8277 = vpop.f32.mrf.mxu0
        %v8278 = vadd.f32 %v8239, %v8277
        %v8279 = vpop.f32.mrf.mxu0
        %v8280 = vadd.f32 %v8241, %v8279
        %8281 = vmatmul.bf16.gmra.mxu0 %v7632
        %v8282 = vpop.f32.mrf.mxu0
        %v8283 = vadd.f32 %v8244, %v8282
        %v8284 = vpop.f32.mrf.mxu0
        %v8285 = vadd.f32 %v8246, %v8284
        %8286 = vmatmul.bf16.gmra.mxu0 %v7636
        %v8287 = vpop.f32.mrf.mxu0
        %v8288 = vadd.f32 %v8249, %v8287
        %v8289 = vpop.f32.mrf.mxu0
        %v8290 = vadd.f32 %v8251, %v8289
        %8291 = vmatmul.bf16.gmra.mxu0 %v7640
        %v8292 = vpop.f32.mrf.mxu0
        %v8293 = vadd.f32 %v8254, %v8292
        %v8294 = vpop.f32.mrf.mxu0
        %v8295 = vadd.f32 %v8256, %v8294
        %8296 = vmatmul.bf16.gmra.mxu0 %v7644
        %v8297 = vpop.f32.mrf.mxu0
        %v8298 = vadd.f32 %v8259, %v8297
        %v8299 = vpop.f32.mrf.mxu0
        %v8300 = vadd.f32 %v8261, %v8299
        %8301 = vmatmul.bf16.gmra.mxu0 %v7648
        %v8302 = vpop.f32.mrf.mxu0
        %v8303 = vadd.f32 %v8264, %v8302
        %v8304 = vpop.f32.mrf.mxu0
        %v8305 = vadd.f32 %v8266, %v8304
        %8306 = vdwg.mxu0
        %8307 = vmatpush.bf16.msra.mxu0 %v8157
        %8308 = vmatpush.bf16.msra.mxu0 %v8156
        %8309 = vmatpush.bf16.msra.mxu0 %v8155
        %8310 = vmatpush.bf16.msra.mxu0 %v8154
        %8311 = vmatpush.bf16.msra.mxu0 %v8153
        %8312 = vmatpush.bf16.msra.mxu0 %v8152
        %8313 = vmatpush.bf16.msra.mxu0 %v8151
        %8314 = vmatpush.bf16.msra.mxu0 %v8150
        %8315 = vmatmul.bf16.gmra.mxu0 %v7629
        %v8316 = vpop.f32.mrf.mxu0
        %v8317 = vadd.f32 %v8278, %v8316
        %v8318 = vpop.f32.mrf.mxu0
        %v8319 = vadd.f32 %v8280, %v8318
        %8320 = vmatmul.bf16.gmra.mxu0 %v7633
        %v8321 = vpop.f32.mrf.mxu0
        %v8322 = vadd.f32 %v8283, %v8321
        %v8323 = vpop.f32.mrf.mxu0
        %v8324 = vadd.f32 %v8285, %v8323
        %8325 = vmatmul.bf16.gmra.mxu0 %v7637
        %v8326 = vpop.f32.mrf.mxu0
        %v8327 = vadd.f32 %v8288, %v8326
        %v8328 = vpop.f32.mrf.mxu0
        %v8329 = vadd.f32 %v8290, %v8328
        %8330 = vmatmul.bf16.gmra.mxu0 %v7641
        %v8331 = vpop.f32.mrf.mxu0
        %v8332 = vadd.f32 %v8293, %v8331
        %v8333 = vpop.f32.mrf.mxu0
        %v8334 = vadd.f32 %v8295, %v8333
        %8335 = vmatmul.bf16.gmra.mxu0 %v7645
        %v8336 = vpop.f32.mrf.mxu0
        %v8337 = vadd.f32 %v8298, %v8336
        %v8338 = vpop.f32.mrf.mxu0
        %v8339 = vadd.f32 %v8300, %v8338
        %8340 = vmatmul.bf16.gmra.mxu0 %v7649
        %v8341 = vpop.f32.mrf.mxu0
        %v8342 = vadd.f32 %v8303, %v8341
        %v8343 = vpop.f32.mrf.mxu0
        %v8344 = vadd.f32 %v8305, %v8343
        %8345 = vdwg.mxu0
        %v8346 = vrot.slane %v7969, 7
        %v8347 = vrot.slane %v7971, 7
        %v8348 = vrot.slane %v7974, 7
        %v8349 = vrot.slane %v7976, 7
        %v8350 = vrot.slane %v7979, 7
        %v8351 = vrot.slane %v7981, 7
        %v8352 = vrot.slane %v7984, 7
        %v8353 = vrot.slane %v7986, 7
        %v8354 = vrot.slane %v7989, 7
        %v8355 = vrot.slane %v7991, 7
        %v8356 = vrot.slane %v7994, 7
        %v8357 = vrot.slane %v7996, 7
        %v8358 = vsel %vm7227, %v8356, %v8357
        %v8359 = vsel %vm7227, %v8355, %v8356
        %v8360 = vsel %vm7227, %v8354, %v8355
        %v8361 = vsel %vm7227, %v8353, %v8354
        %v8362 = vsel %vm7227, %v8352, %v8353
        %v8363 = vsel %vm7227, %v8351, %v8352
        %v8364 = vsel %vm7227, %v8350, %v8351
        %v8365 = vsel %vm7227, %v8349, %v8350
        %v8366 = vsel %vm7227, %v8348, %v8349
        %v8367 = vsel %vm7227, %v8347, %v8348
        %v8368 = vsel %vm7227, %v8346, %v8347
        %v8369 = vsel %vm7227, %v8357, %v8346
        %v8370 = vadd.f32 %v8369, %v8317
        %v8371 = vadd.f32 %v8368, %v8319
        %v8372 = vadd.f32 %v8367, %v8322
        %v8373 = vadd.f32 %v8366, %v8324
        %v8374 = vadd.f32 %v8365, %v8327
        %v8375 = vadd.f32 %v8364, %v8329
        %v8376 = vadd.f32 %v8363, %v8332
        %v8377 = vadd.f32 %v8362, %v8334
        %v8378 = vadd.f32 %v8361, %v8337
        %v8379 = vadd.f32 %v8360, %v8339
        %v8380 = vadd.f32 %v8359, %v8342
        %v8381 = vadd.f32 %v8358, %v8344
        %v8383 = vperm.slane %v7577, 0
        %v8385 = vadd.f32 %v8370, %v8383
        %v8386 = vadd.f32 %v8371, %v8383
        %v8387 = vadd.f32 %v8372, %v8383
        %v8388 = vadd.f32 %v8373, %v8383
        %v8389 = vadd.f32 %v8374, %v8383
        %v8390 = vadd.f32 %v8375, %v8383
        %v8391 = vadd.f32 %v8376, %v8383
        %v8392 = vadd.f32 %v8377, %v8383
        %v8393 = vadd.f32 %v8378, %v8383
        %v8394 = vadd.f32 %v8379, %v8383
        %v8395 = vadd.f32 %v8380, %v8383
        %v8396 = vadd.f32 %v8381, %v8383
        %v8397 = vmul.f32 %v8385, %v1087
        %v8398 = vmul.f32 %v8386, %v1092
        %v8399 = vmul.f32 %v8387, %v1097
        %v8400 = vmul.f32 %v8388, %v1102
        %v8401 = vmul.f32 %v8389, %v1107
        %v8402 = vmul.f32 %v8390, %v1112
        %v8403 = vmul.f32 %v8391, %v1117
        %v8404 = vmul.f32 %v8392, %v1122
        %v8405 = vmul.f32 %v8393, %v1127
        %v8406 = vmul.f32 %v8394, %v1132
        %v8407 = vmul.f32 %v8395, %v1137
        %v8408 = vmul.f32 %v8396, %v1142
        %v8409 = vmax.f32 %v8397, 0.0
        %v8410 = vmax.f32 %v8398, 0.0
        %v8411 = vmax.f32 %v8399, 0.0
        %v8412 = vmax.f32 %v8400, 0.0
        %v8413 = vmax.f32 %v8401, 0.0
        %v8414 = vmax.f32 %v8402, 0.0
        %v8415 = vmax.f32 %v8403, 0.0
        %v8416 = vmax.f32 %v8404, 0.0
        %v8417 = vmax.f32 %v8405, 0.0
        %v8418 = vmax.f32 %v8406, 0.0
        %v8419 = vmax.f32 %v8407, 0.0
        %v8420 = vmax.f32 %v8408, 0.0
        %8421 = vst [vmem:[#allocation2] sm:$0xff] %v8409
        %8422 = vst [vmem:[#allocation2 + $0x30] sm:$0xff] %v8410
        %8423 = vst [vmem:[#allocation2 + $0x60] sm:$0xff] %v8411
        %8424 = vst [vmem:[#allocation2 + $0x90] sm:$0xff] %v8412
        %8425 = vst [vmem:[#allocation2 + $0xc0] sm:$0xff] %v8413
        %8426 = vst [vmem:[#allocation2 + $0xf0] sm:$0xff] %v8414
        %8427 = vst [vmem:[#allocation2 + $0x120] sm:$0xff] %v8415
        %8428 = vst [vmem:[#allocation2 + $0x150] sm:$0xff] %v8416
        %8429 = vst [vmem:[#allocation2 + $0x180] sm:$0xff] %v8417
        %8430 = vst [vmem:[#allocation2 + $0x1b0] sm:$0xff] %v8418
        %8431 = vst [vmem:[#allocation2 + $0x1e0] sm:$0xff] %v8419
        %8432 = vst [vmem:[#allocation2 + $0x210] sm:$0xff] %v8420
        %v8433 = vsub.f32 0.0, %v8397
        %v8434 = vsub.f32 0.0, %v8398
        %v8435 = vsub.f32 0.0, %v8399
        %v8436 = vsub.f32 0.0, %v8400
        %v8437 = vsub.f32 0.0, %v8401
        %v8438 = vsub.f32 0.0, %v8402
        %v8439 = vsub.f32 0.0, %v8403
        %v8440 = vsub.f32 0.0, %v8404
        %v8441 = vsub.f32 0.0, %v8405
        %v8442 = vsub.f32 0.0, %v8406
        %v8443 = vsub.f32 0.0, %v8407
        %v8444 = vsub.f32 0.0, %v8408
        %v8445 = vmax.f32 %v8433, 0.0
        %v8446 = vmax.f32 %v8434, 0.0
        %v8447 = vmax.f32 %v8435, 0.0
        %v8448 = vmax.f32 %v8436, 0.0
        %v8449 = vmax.f32 %v8437, 0.0
        %v8450 = vmax.f32 %v8438, 0.0
        %v8451 = vmax.f32 %v8439, 0.0
        %v8452 = vmax.f32 %v8440, 0.0
        %v8453 = vmax.f32 %v8441, 0.0
        %v8454 = vmax.f32 %v8442, 0.0
        %v8455 = vmax.f32 %v8443, 0.0
        %v8456 = vmax.f32 %v8444, 0.0
        %8457 = vst [vmem:[#allocation2 + $0x8] sm:$0xff] %v8445
        %8458 = vst [vmem:[#allocation2 + $0x38] sm:$0xff] %v8446
        %8459 = vst [vmem:[#allocation2 + $0x68] sm:$0xff] %v8447
        %8460 = vst [vmem:[#allocation2 + $0x98] sm:$0xff] %v8448
        %8461 = vst [vmem:[#allocation2 + $0xc8] sm:$0xff] %v8449
        %8462 = vst [vmem:[#allocation2 + $0xf8] sm:$0xff] %v8450
        %8463 = vst [vmem:[#allocation2 + $0x128] sm:$0xff] %v8451
        %8464 = vst [vmem:[#allocation2 + $0x158] sm:$0xff] %v8452
        %8465 = vst [vmem:[#allocation2 + $0x188] sm:$0xff] %v8453
        %8466 = vst [vmem:[#allocation2 + $0x1b8] sm:$0xff] %v8454
        %8467 = vst [vmem:[#allocation2 + $0x1e8] sm:$0xff] %v8455
        %8468 = vst [vmem:[#allocation2 + $0x218] sm:$0xff] %v8456
        %v8469 = vld [vmem:[%s18] sm:$0xff]
        %v8470 = vld [vmem:[%s18 + $0x8] sm:$0xff]
        %v8471 = vld [vmem:[%s18 + $0x10] sm:$0xff]
        %v8472 = vld [vmem:[%s18 + $0x18] sm:$0xff]
        %v8473 = vld [vmem:[%s18 + $0x20] sm:$0xff]
        %v8474 = vld [vmem:[%s18 + $0x28] sm:$0xff]
        %v8475 = vld [vmem:[%s18 + $0x30] sm:$0xff]
        %v8476 = vld [vmem:[%s18 + $0x38] sm:$0xff]
        %v8477 = vld [vmem:[%s18 + $0x40] sm:$0xff]
        %v8478 = vld [vmem:[%s18 + $0x48] sm:$0xff]
        %v8479 = vld [vmem:[%s18 + $0x50] sm:$0xff]
        %v8480 = vld [vmem:[%s18 + $0x58] sm:$0xff]
        %v8481 = vld [vmem:[%s18 + $0x60] sm:$0xff]
        %v8482 = vld [vmem:[%s18 + $0x68] sm:$0xff]
        %v8483 = vld [vmem:[%s18 + $0x70] sm:$0xff]
        %v8484 = vld [vmem:[%s18 + $0x78] sm:$0xff]
        %v8485 = vld [vmem:[%s18 + $0x80] sm:$0xff]
        %v8486 = vld [vmem:[%s18 + $0x88] sm:$0xff]
        %v8487 = vld [vmem:[%s18 + $0x90] sm:$0xff]
        %v8488 = vld [vmem:[%s18 + $0x98] sm:$0xff]
        %v8489 = vld [vmem:[%s18 + $0xa0] sm:$0xff]
        %v8490 = vld [vmem:[%s18 + $0xa8] sm:$0xff]
        %v8491 = vld [vmem:[%s18 + $0xb0] sm:$0xff]
        %v8492 = vld [vmem:[%s18 + $0xb8] sm:$0xff]
        %v8493 = vld [vmem:[%s18 + $0xc0] sm:$0xff]
        %v8494 = vld [vmem:[%s18 + $0xc8] sm:$0xff]
        %v8495 = vld [vmem:[%s18 + $0xd0] sm:$0xff]
        %v8496 = vld [vmem:[%s18 + $0xd8] sm:$0xff]
        %v8497 = vld [vmem:[%s18 + $0xe0] sm:$0xff]
        %v8498 = vld [vmem:[%s18 + $0xe8] sm:$0xff]
        %v8499 = vld [vmem:[%s18 + $0xf0] sm:$0xff]
        %v8500 = vld [vmem:[%s18 + $0xf8] sm:$0xff]
        %v8501 = vld [vmem:[%s19] sm:$0xff]
        %v8502 = vld [vmem:[%s19 + $0x8] sm:$0xff]
        %v8503 = vld [vmem:[%s19 + $0x10] sm:$0xff]
        %v8504 = vld [vmem:[%s19 + $0x18] sm:$0xff]
        %v8505 = vld [vmem:[%s19 + $0x20] sm:$0xff]
        %v8506 = vld [vmem:[%s19 + $0x28] sm:$0xff]
        %v8507 = vld [vmem:[%s19 + $0x30] sm:$0xff]
        %v8508 = vld [vmem:[%s19 + $0x38] sm:$0xff]
        %v8509 = vld [vmem:[%s19 + $0x40] sm:$0xff]
        %v8510 = vld [vmem:[%s19 + $0x48] sm:$0xff]
        %v8511 = vld [vmem:[%s19 + $0x50] sm:$0xff]
        %v8512 = vld [vmem:[%s19 + $0x58] sm:$0xff]
        %v8513 = vld [vmem:[%s19 + $0x60] sm:$0xff]
        %v8514 = vld [vmem:[%s19 + $0x68] sm:$0xff]
        %v8515 = vld [vmem:[%s19 + $0x70] sm:$0xff]
        %v8516 = vld [vmem:[%s19 + $0x78] sm:$0xff]
        %v8517 = vld [vmem:[%s19 + $0x80] sm:$0xff]
        %v8518 = vld [vmem:[%s19 + $0x88] sm:$0xff]
        %v8519 = vld [vmem:[%s19 + $0x90] sm:$0xff]
        %v8520 = vld [vmem:[%s19 + $0x98] sm:$0xff]
        %v8521 = vld [vmem:[%s19 + $0xa0] sm:$0xff]
        %v8522 = vld [vmem:[%s19 + $0xa8] sm:$0xff]
        %v8523 = vld [vmem:[%s19 + $0xb0] sm:$0xff]
        %v8524 = vld [vmem:[%s19 + $0xb8] sm:$0xff]
        %v8525 = vld [vmem:[%s19 + $0xc0] sm:$0xff]
        %v8526 = vld [vmem:[%s19 + $0xc8] sm:$0xff]
        %v8527 = vld [vmem:[%s19 + $0xd0] sm:$0xff]
        %v8528 = vld [vmem:[%s19 + $0xd8] sm:$0xff]
        %v8529 = vld [vmem:[%s19 + $0xe0] sm:$0xff]
        %v8530 = vld [vmem:[%s19 + $0xe8] sm:$0xff]
        %v8531 = vld [vmem:[%s19 + $0xf0] sm:$0xff]
        %v8532 = vld [vmem:[%s19 + $0xf8] sm:$0xff]
        %v8533 = vld [vmem:[%s20] sm:$0x1]
        %v8534 = vld [vmem:[#allocation2] sm:$0xff]
        %v8535 = vld [vmem:[#allocation2 + $0x8] sm:$0xff]
        %v8536 = vld [vmem:[#allocation2 + $0x30] sm:$0xff]
        %v8537 = vld [vmem:[#allocation2 + $0x38] sm:$0xff]
        %v8538 = vld [vmem:[#allocation2 + $0x60] sm:$0xff]
        %v8539 = vld [vmem:[#allocation2 + $0x68] sm:$0xff]
        %v8540 = vld [vmem:[#allocation2 + $0x90] sm:$0xff]
        %v8541 = vld [vmem:[#allocation2 + $0x98] sm:$0xff]
        %v8542 = vld [vmem:[#allocation2 + $0xc0] sm:$0xff]
        %v8543 = vld [vmem:[#allocation2 + $0xc8] sm:$0xff]
        %v8544 = vld [vmem:[#allocation2 + $0xf0] sm:$0xff]
        %v8545 = vld [vmem:[#allocation2 + $0xf8] sm:$0xff]
        %v8546 = vld [vmem:[#allocation2 + $0x120] sm:$0xff]
        %v8547 = vld [vmem:[#allocation2 + $0x128] sm:$0xff]
        %v8548 = vld [vmem:[#allocation2 + $0x150] sm:$0xff]
        %v8549 = vld [vmem:[#allocation2 + $0x158] sm:$0xff]
        %v8550 = vld [vmem:[#allocation2 + $0x180] sm:$0xff]
        %v8551 = vld [vmem:[#allocation2 + $0x188] sm:$0xff]
        %v8552 = vld [vmem:[#allocation2 + $0x1b0] sm:$0xff]
        %v8553 = vld [vmem:[#allocation2 + $0x1b8] sm:$0xff]
        %v8554 = vld [vmem:[#allocation2 + $0x1e0] sm:$0xff]
        %v8555 = vld [vmem:[#allocation2 + $0x1e8] sm:$0xff]
        %v8556 = vld [vmem:[#allocation2 + $0x210] sm:$0xff]
        %v8557 = vld [vmem:[#allocation2 + $0x218] sm:$0xff]
        %8558 = vmatpush.msra.mxu0 %v8516
        %8559 = vmatpush.msra.mxu0 %v8515
        %8560 = vmatpush.msra.mxu0 %v8514
        %8561 = vmatpush.msra.mxu0 %v8513
        %8562 = vmatpush.msra.mxu0 %v8512
        %8563 = vmatpush.msra.mxu0 %v8511
        %8564 = vmatpush.msra.mxu0 %v8510
        %8565 = vmatpush.msra.mxu0 %v8509
        %8566 = vmatpush.msra.mxu0 %v8508
        %8567 = vmatpush.msra.mxu0 %v8507
        %8568 = vmatpush.msra.mxu0 %v8506
        %8569 = vmatpush.msra.mxu0 %v8505
        %8570 = vmatpush.msra.mxu0 %v8504
        %8571 = vmatpush.msra.mxu0 %v8503
        %8572 = vmatpush.msra.mxu0 %v8502
        %8573 = vmatpush.msra.mxu0 %v8501
        %8574 = vmatmul.f32.gmra.mxu0 %v8534
        %v8575 = vpop.f32.mrf.mxu0
        %v8576 = vadd.f32 0.0, %v8575
        %8577 = vmatmul.f32.gmra.mxu0 %v8536
        %v8578 = vpop.f32.mrf.mxu0
        %v8579 = vadd.f32 0.0, %v8578
        %8580 = vmatmul.f32.gmra.mxu0 %v8538
        %v8581 = vpop.f32.mrf.mxu0
        %v8582 = vadd.f32 0.0, %v8581
        %8583 = vmatmul.f32.gmra.mxu0 %v8540
        %v8584 = vpop.f32.mrf.mxu0
        %v8585 = vadd.f32 0.0, %v8584
        %8586 = vmatmul.f32.gmra.mxu0 %v8542
        %v8587 = vpop.f32.mrf.mxu0
        %v8588 = vadd.f32 0.0, %v8587
        %8589 = vmatmul.f32.gmra.mxu0 %v8544
        %v8590 = vpop.f32.mrf.mxu0
        %v8591 = vadd.f32 0.0, %v8590
        %8592 = vmatmul.f32.gmra.mxu0 %v8546
        %v8593 = vpop.f32.mrf.mxu0
        %v8594 = vadd.f32 0.0, %v8593
        %8595 = vmatmul.f32.gmra.mxu0 %v8548
        %v8596 = vpop.f32.mrf.mxu0
        %v8597 = vadd.f32 0.0, %v8596
        %8598 = vmatmul.f32.gmra.mxu0 %v8550
        %v8599 = vpop.f32.mrf.mxu0
        %v8600 = vadd.f32 0.0, %v8599
        %8601 = vmatmul.f32.gmra.mxu0 %v8552
        %v8602 = vpop.f32.mrf.mxu0
        %v8603 = vadd.f32 0.0, %v8602
        %8604 = vmatmul.f32.gmra.mxu0 %v8554
        %v8605 = vpop.f32.mrf.mxu0
        %v8606 = vadd.f32 0.0, %v8605
        %8607 = vmatmul.f32.gmra.mxu0 %v8556
        %v8608 = vpop.f32.mrf.mxu0
        %v8609 = vadd.f32 0.0, %v8608
        %8610 = vdwg.mxu0
        %8611 = vmatpush.msra.mxu0 %v8532
        %8612 = vmatpush.msra.mxu0 %v8531
        %8613 = vmatpush.msra.mxu0 %v8530
        %8614 = vmatpush.msra.mxu0 %v8529
        %8615 = vmatpush.msra.mxu0 %v8528
        %8616 = vmatpush.msra.mxu0 %v8527
        %8617 = vmatpush.msra.mxu0 %v8526
        %8618 = vmatpush.msra.mxu0 %v8525
        %8619 = vmatpush.msra.mxu0 %v8524
        %8620 = vmatpush.msra.mxu0 %v8523
        %8621 = vmatpush.msra.mxu0 %v8522
        %8622 = vmatpush.msra.mxu0 %v8521
        %8623 = vmatpush.msra.mxu0 %v8520
        %8624 = vmatpush.msra.mxu0 %v8519
        %8625 = vmatpush.msra.mxu0 %v8518
        %8626 = vmatpush.msra.mxu0 %v8517
        %8627 = vmatmul.f32.gmra.mxu0 %v8535
        %v8628 = vpop.f32.mrf.mxu0
        %v8629 = vadd.f32 %v8576, %v8628
        %8630 = vmatmul.f32.gmra.mxu0 %v8537
        %v8631 = vpop.f32.mrf.mxu0
        %v8632 = vadd.f32 %v8579, %v8631
        %8633 = vmatmul.f32.gmra.mxu0 %v8539
        %v8634 = vpop.f32.mrf.mxu0
        %v8635 = vadd.f32 %v8582, %v8634
        %8636 = vmatmul.f32.gmra.mxu0 %v8541
        %v8637 = vpop.f32.mrf.mxu0
        %v8638 = vadd.f32 %v8585, %v8637
        %8639 = vmatmul.f32.gmra.mxu0 %v8543
        %v8640 = vpop.f32.mrf.mxu0
        %v8641 = vadd.f32 %v8588, %v8640
        %8642 = vmatmul.f32.gmra.mxu0 %v8545
        %v8643 = vpop.f32.mrf.mxu0
        %v8644 = vadd.f32 %v8591, %v8643
        %8645 = vmatmul.f32.gmra.mxu0 %v8547
        %v8646 = vpop.f32.mrf.mxu0
        %v8647 = vadd.f32 %v8594, %v8646
        %8648 = vmatmul.f32.gmra.mxu0 %v8549
        %v8649 = vpop.f32.mrf.mxu0
        %v8650 = vadd.f32 %v8597, %v8649
        %8651 = vmatmul.f32.gmra.mxu0 %v8551
        %v8652 = vpop.f32.mrf.mxu0
        %v8653 = vadd.f32 %v8600, %v8652
        %8654 = vmatmul.f32.gmra.mxu0 %v8553
        %v8655 = vpop.f32.mrf.mxu0
        %v8656 = vadd.f32 %v8603, %v8655
        %8657 = vmatmul.f32.gmra.mxu0 %v8555
        %v8658 = vpop.f32.mrf.mxu0
        %v8659 = vadd.f32 %v8606, %v8658
        %8660 = vmatmul.f32.gmra.mxu0 %v8557
        %v8661 = vpop.f32.mrf.mxu0
        %v8662 = vadd.f32 %v8609, %v8661
        %8663 = vdwg.mxu0
        %v8664 = vrot.slane %v8629, 1
        %v8665 = vrot.slane %v8632, 1
        %v8666 = vrot.slane %v8635, 1
        %v8667 = vrot.slane %v8638, 1
        %v8668 = vrot.slane %v8641, 1
        %v8669 = vrot.slane %v8644, 1
        %v8670 = vrot.slane %v8647, 1
        %v8671 = vrot.slane %v8650, 1
        %v8672 = vrot.slane %v8653, 1
        %v8673 = vrot.slane %v8656, 1
        %v8674 = vrot.slane %v8659, 1
        %v8675 = vrot.slane %v8662, 1
        %v8676 = vsel %vm921, %v8674, %v8675
        %v8677 = vsel %vm921, %v8673, %v8674
        %v8678 = vsel %vm921, %v8671, %v8672
        %v8679 = vsel %vm921, %v8670, %v8671
        %v8680 = vsel %vm921, %v8668, %v8669
        %v8681 = vsel %vm921, %v8667, %v8668
        %v8682 = vsel %vm921, %v8665, %v8666
        %v8683 = vsel %vm921, %v8664, %v8665
        %8684 = vmatpush.msra.mxu0 %v8484
        %8685 = vmatpush.msra.mxu0 %v8483
        %8686 = vmatpush.msra.mxu0 %v8482
        %8687 = vmatpush.msra.mxu0 %v8481
        %8688 = vmatpush.msra.mxu0 %v8480
        %8689 = vmatpush.msra.mxu0 %v8479
        %8690 = vmatpush.msra.mxu0 %v8478
        %8691 = vmatpush.msra.mxu0 %v8477
        %8692 = vmatpush.msra.mxu0 %v8476
        %8693 = vmatpush.msra.mxu0 %v8475
        %8694 = vmatpush.msra.mxu0 %v8474
        %8695 = vmatpush.msra.mxu0 %v8473
        %8696 = vmatpush.msra.mxu0 %v8472
        %8697 = vmatpush.msra.mxu0 %v8471
        %8698 = vmatpush.msra.mxu0 %v8470
        %8699 = vmatpush.msra.mxu0 %v8469
        %8700 = vmatmul.f32.gmra.mxu0 %v8534
        %v8701 = vpop.f32.mrf.mxu0
        %v8702 = vadd.f32 %v8683, %v8701
        %8703 = vmatmul.f32.gmra.mxu0 %v8536
        %v8704 = vpop.f32.mrf.mxu0
        %v8705 = vadd.f32 %v8682, %v8704
        %8706 = vmatmul.f32.gmra.mxu0 %v8538
        %v8707 = vpop.f32.mrf.mxu0
        %8708 = vmatmul.f32.gmra.mxu0 %v8540
        %v8709 = vpop.f32.mrf.mxu0
        %v8710 = vadd.f32 %v8681, %v8709
        %8711 = vmatmul.f32.gmra.mxu0 %v8542
        %v8712 = vpop.f32.mrf.mxu0
        %v8713 = vadd.f32 %v8680, %v8712
        %8714 = vmatmul.f32.gmra.mxu0 %v8544
        %v8715 = vpop.f32.mrf.mxu0
        %8716 = vmatmul.f32.gmra.mxu0 %v8546
        %v8717 = vpop.f32.mrf.mxu0
        %v8718 = vadd.f32 %v8679, %v8717
        %8719 = vmatmul.f32.gmra.mxu0 %v8548
        %v8720 = vpop.f32.mrf.mxu0
        %v8721 = vadd.f32 %v8678, %v8720
        %8722 = vmatmul.f32.gmra.mxu0 %v8550
        %v8723 = vpop.f32.mrf.mxu0
        %8724 = vmatmul.f32.gmra.mxu0 %v8552
        %v8725 = vpop.f32.mrf.mxu0
        %v8726 = vadd.f32 %v8677, %v8725
        %8727 = vmatmul.f32.gmra.mxu0 %v8554
        %v8728 = vpop.f32.mrf.mxu0
        %v8729 = vadd.f32 %v8676, %v8728
        %8730 = vmatmul.f32.gmra.mxu0 %v8556
        %v8731 = vpop.f32.mrf.mxu0
        %8732 = vdwg.mxu0
        %8733 = vmatpush.msra.mxu0 %v8500
        %8734 = vmatpush.msra.mxu0 %v8499
        %8735 = vmatpush.msra.mxu0 %v8498
        %8736 = vmatpush.msra.mxu0 %v8497
        %8737 = vmatpush.msra.mxu0 %v8496
        %8738 = vmatpush.msra.mxu0 %v8495
        %8739 = vmatpush.msra.mxu0 %v8494
        %8740 = vmatpush.msra.mxu0 %v8493
        %8741 = vmatpush.msra.mxu0 %v8492
        %8742 = vmatpush.msra.mxu0 %v8491
        %8743 = vmatpush.msra.mxu0 %v8490
        %8744 = vmatpush.msra.mxu0 %v8489
        %8745 = vmatpush.msra.mxu0 %v8488
        %8746 = vmatpush.msra.mxu0 %v8487
        %8747 = vmatpush.msra.mxu0 %v8486
        %8748 = vmatpush.msra.mxu0 %v8485
        %8749 = vmatmul.f32.gmra.mxu0 %v8535
        %v8750 = vpop.f32.mrf.mxu0
        %v8751 = vadd.f32 %v8702, %v8750
        %8752 = vmatmul.f32.gmra.mxu0 %v8537
        %v8753 = vpop.f32.mrf.mxu0
        %v8754 = vadd.f32 %v8705, %v8753
        %8755 = vmatmul.f32.gmra.mxu0 %v8539
        %v8756 = vpop.f32.mrf.mxu0
        %8757 = vmatmul.f32.gmra.mxu0 %v8541
        %v8758 = vpop.f32.mrf.mxu0
        %v8759 = vadd.f32 %v8710, %v8758
        %8760 = vmatmul.f32.gmra.mxu0 %v8543
        %v8761 = vpop.f32.mrf.mxu0
        %v8762 = vadd.f32 %v8713, %v8761
        %8763 = vmatmul.f32.gmra.mxu0 %v8545
        %v8764 = vpop.f32.mrf.mxu0
        %8765 = vmatmul.f32.gmra.mxu0 %v8547
        %v8766 = vpop.f32.mrf.mxu0
        %v8767 = vadd.f32 %v8718, %v8766
        %8768 = vmatmul.f32.gmra.mxu0 %v8549
        %v8769 = vpop.f32.mrf.mxu0
        %v8770 = vadd.f32 %v8721, %v8769
        %8771 = vmatmul.f32.gmra.mxu0 %v8551
        %v8772 = vpop.f32.mrf.mxu0
        %8773 = vmatmul.f32.gmra.mxu0 %v8553
        %v8774 = vpop.f32.mrf.mxu0
        %v8775 = vadd.f32 %v8726, %v8774
        %8776 = vmatmul.f32.gmra.mxu0 %v8555
        %v8777 = vpop.f32.mrf.mxu0
        %v8778 = vadd.f32 %v8729, %v8777
        %8779 = vmatmul.f32.gmra.mxu0 %v8557
        %v8780 = vpop.f32.mrf.mxu0
        %8781 = vdwg.mxu0
        %v8783 = vperm.slane %v8533, 0
        %v8785 = vadd.f32 %v8751, %v8783
        %v8786 = vadd.f32 %v8754, %v8783
        %v8787 = vadd.f32 %v8759, %v8783
        %v8788 = vadd.f32 %v8762, %v8783
        %v8789 = vadd.f32 %v8767, %v8783
        %v8790 = vadd.f32 %v8770, %v8783
        %v8791 = vadd.f32 %v8775, %v8783
        %v8792 = vadd.f32 %v8778, %v8783
        %v8793 = vld [vmem:[%s2] sm:$0xff]
        %8794 = vxpose.xlu0.b32.start [1/16] %v8785, 128
        %8795 = vxpose.xlu0.b32.cont [2/16] 0.0, 128
        %8796 = vxpose.xlu0.b32.cont [3/16] 0.0, 128
        %8797 = vxpose.xlu0.b32.cont [4/16] 0.0, 128
        %8798 = vxpose.xlu0.b32.cont [5/16] 0.0, 128
        %8799 = vxpose.xlu0.b32.cont [6/16] 0.0, 128
        %8800 = vxpose.xlu0.b32.cont [7/16] 0.0, 128
        %8801 = vxpose.xlu0.b32.cont [8/16] 0.0, 128
        %8802 = vxpose.xlu0.b32.cont [9/16] 0.0, 128
        %8803 = vxpose.xlu0.b32.cont [10/16] 0.0, 128
        %8804 = vxpose.xlu0.b32.cont [11/16] 0.0, 128
        %8805 = vxpose.xlu0.b32.cont [12/16] 0.0, 128
        %8806 = vxpose.xlu0.b32.cont [13/16] 0.0, 128
        %8807 = vxpose.xlu0.b32.cont [14/16] 0.0, 128
        %8808 = vxpose.xlu0.b32.cont [15/16] 0.0, 128
        %8809 = vxpose.xlu0.b32.end [16/16] 0.0, 128
        %v8810 = vpop.trf.xlu0
        %v8811 = vpop.trf.xlu0
        %v8812 = vpop.trf.xlu0
        %v8813 = vpop.trf.xlu0
        %v8814 = vpop.trf.xlu0
        %v8815 = vpop.trf.xlu0
        %v8816 = vpop.trf.xlu0
        %v8817 = vpop.trf.xlu0
        %v8818 = vpop.trf.xlu0
        %v8819 = vpop.trf.xlu0
        %v8820 = vpop.trf.xlu0
        %v8821 = vpop.trf.xlu0
        %v8822 = vpop.trf.xlu0
        %v8823 = vpop.trf.xlu0
        %v8824 = vpop.trf.xlu0
        %v8825 = vpop.trf.xlu0
        %vm8826 = vcmask 64512
        %v8828 = vsel %vm8826, %v8810, 0
        %8830 = vmatpush.msra.mxu0 0.0
        %8831 = vmatpush.msra.mxu0 0.0
        %8832 = vmatpush.msra.mxu0 0.0
        %8833 = vmatpush.msra.mxu0 0.0
        %8834 = vmatpush.msra.mxu0 0.0
        %8835 = vmatpush.msra.mxu0 0.0
        %8836 = vmatpush.msra.mxu0 0.0
        %8837 = vmatpush.msra.mxu0 0.0
        %8838 = vmatpush.msra.mxu0 0.0
        %8839 = vmatpush.msra.mxu0 0.0
        %8840 = vmatpush.msra.mxu0 0.0
        %8841 = vmatpush.msra.mxu0 0.0
        %8842 = vmatpush.msra.mxu0 0.0
        %8843 = vmatpush.msra.mxu0 0.0
        %8844 = vmatpush.msra.mxu0 0.0
        %8845 = vmatpush.msra.mxu0 %v8786
        %8846 = vmatmul.f32.gmra.mxu0 %v8828
        %v8847 = vpop.f32.mrf.mxu0
        %v8848 = vadd.f32 0.0, %v8847
        %8849 = vdwg.mxu0
        %8850 = vxpose.xlu0.b32.start [1/16] %v8786, 128
        %8851 = vxpose.xlu0.b32.cont [2/16] 0.0, 128
        %8852 = vxpose.xlu0.b32.cont [3/16] 0.0, 128
        %8853 = vxpose.xlu0.b32.cont [4/16] 0.0, 128
        %8854 = vxpose.xlu0.b32.cont [5/16] 0.0, 128
        %8855 = vxpose.xlu0.b32.cont [6/16] 0.0, 128
        %8856 = vxpose.xlu0.b32.cont [7/16] 0.0, 128
        %8857 = vxpose.xlu0.b32.cont [8/16] 0.0, 128
        %8858 = vxpose.xlu0.b32.cont [9/16] 0.0, 128
        %8859 = vxpose.xlu0.b32.cont [10/16] 0.0, 128
        %8860 = vxpose.xlu0.b32.cont [11/16] 0.0, 128
        %8861 = vxpose.xlu0.b32.cont [12/16] 0.0, 128
        %8862 = vxpose.xlu0.b32.cont [13/16] 0.0, 128
        %8863 = vxpose.xlu0.b32.cont [14/16] 0.0, 128
        %8864 = vxpose.xlu0.b32.cont [15/16] 0.0, 128
        %8865 = vxpose.xlu0.b32.end [16/16] 0.0, 128
        %v8866 = vpop.trf.xlu0
        %v8867 = vpop.trf.xlu0
        %v8868 = vpop.trf.xlu0
        %v8869 = vpop.trf.xlu0
        %v8870 = vpop.trf.xlu0
        %v8871 = vpop.trf.xlu0
        %v8872 = vpop.trf.xlu0
        %v8873 = vpop.trf.xlu0
        %v8874 = vpop.trf.xlu0
        %v8875 = vpop.trf.xlu0
        %v8876 = vpop.trf.xlu0
        %v8877 = vpop.trf.xlu0
        %v8878 = vpop.trf.xlu0
        %v8879 = vpop.trf.xlu0
        %v8880 = vpop.trf.xlu0
        %v8881 = vpop.trf.xlu0
        %v8883 = vsel %vm8826, %v8866, 0
        %8885 = vmatpush.msra.mxu0 0.0
        %8886 = vmatpush.msra.mxu0 0.0
        %8887 = vmatpush.msra.mxu0 0.0
        %8888 = vmatpush.msra.mxu0 0.0
        %8889 = vmatpush.msra.mxu0 0.0
        %8890 = vmatpush.msra.mxu0 0.0
        %8891 = vmatpush.msra.mxu0 0.0
        %8892 = vmatpush.msra.mxu0 0.0
        %8893 = vmatpush.msra.mxu0 0.0
        %8894 = vmatpush.msra.mxu0 0.0
        %8895 = vmatpush.msra.mxu0 0.0
        %8896 = vmatpush.msra.mxu0 0.0
        %8897 = vmatpush.msra.mxu0 0.0
        %8898 = vmatpush.msra.mxu0 0.0
        %8899 = vmatpush.msra.mxu0 0.0
        %8900 = vmatpush.msra.mxu0 %v8785
        %8901 = vmatmul.f32.gmra.mxu0 %v8883
        %v8902 = vpop.f32.mrf.mxu0
        %v8903 = vadd.f32 0.0, %v8902
        %8904 = vdwg.mxu0
        %8905 = vxpose.xlu0.b32.start [1/16] %v8785, 128
        %8906 = vxpose.xlu0.b32.cont [2/16] %v8786, 128
        %8907 = vxpose.xlu0.b32.cont [3/16] 0.0, 128
        %8908 = vxpose.xlu0.b32.cont [4/16] 0.0, 128
        %8909 = vxpose.xlu0.b32.cont [5/16] 0.0, 128
        %8910 = vxpose.xlu0.b32.cont [6/16] 0.0, 128
        %8911 = vxpose.xlu0.b32.cont [7/16] 0.0, 128
        %8912 = vxpose.xlu0.b32.cont [8/16] 0.0, 128
        %8913 = vxpose.xlu0.b32.cont [9/16] 0.0, 128
        %8914 = vxpose.xlu0.b32.cont [10/16] 0.0, 128
        %8915 = vxpose.xlu0.b32.cont [11/16] 0.0, 128
        %8916 = vxpose.xlu0.b32.cont [12/16] 0.0, 128
        %8917 = vxpose.xlu0.b32.cont [13/16] 0.0, 128
        %8918 = vxpose.xlu0.b32.cont [14/16] 0.0, 128
        %8919 = vxpose.xlu0.b32.cont [15/16] 0.0, 128
        %8920 = vxpose.xlu0.b32.end [16/16] 0.0, 128
        %v8921 = vpop.trf.xlu0
        %v8922 = vpop.trf.xlu0
        %v8923 = vpop.trf.xlu0
        %v8924 = vpop.trf.xlu0
        %v8925 = vpop.trf.xlu0
        %v8926 = vpop.trf.xlu0
        %v8927 = vpop.trf.xlu0
        %v8928 = vpop.trf.xlu0
        %v8929 = vpop.trf.xlu0
        %v8930 = vpop.trf.xlu0
        %v8931 = vpop.trf.xlu0
        %v8932 = vpop.trf.xlu0
        %v8933 = vpop.trf.xlu0
        %v8934 = vpop.trf.xlu0
        %v8935 = vpop.trf.xlu0
        %v8936 = vpop.trf.xlu0
        %vm8937 = vcmask 130048
        %v8939 = vsel %vm8937, %v8921, 0
        %8941 = vmatpush.msra.mxu0 0.0
        %8942 = vmatpush.msra.mxu0 0.0
        %8943 = vmatpush.msra.mxu0 0.0
        %8944 = vmatpush.msra.mxu0 0.0
        %8945 = vmatpush.msra.mxu0 0.0
        %8946 = vmatpush.msra.mxu0 0.0
        %8947 = vmatpush.msra.mxu0 0.0
        %8948 = vmatpush.msra.mxu0 0.0
        %8949 = vmatpush.msra.mxu0 0.0
        %8950 = vmatpush.msra.mxu0 0.0
        %8951 = vmatpush.msra.mxu0 0.0
        %8952 = vmatpush.msra.mxu0 0.0
        %8953 = vmatpush.msra.mxu0 0.0
        %8954 = vmatpush.msra.mxu0 0.0
        %8955 = vmatpush.msra.mxu0 %v8786
        %8956 = vmatpush.msra.mxu0 %v8785
        %8957 = vmatmul.f32.gmra.mxu0 %v8939
        %v8958 = vpop.f32.mrf.mxu0
        %v8959 = vadd.f32 %v8793, %v8958
        %8960 = vdwg.mxu0
        %8961 = vst.msk [vmem:[%s743] sm:$0xff] %vm8826, %v8959
        %v8962 = vsub.f32 %v8848, %v8903
        %8963 = vst.msk [vmem:[%s743 + $0x8] sm:$0xff] %vm8826, %v8962
        %8964 = vxpose.xlu0.b32.start [1/16] %v8787, 128
        %8965 = vxpose.xlu0.b32.cont [2/16] 0.0, 128
        %8966 = vxpose.xlu0.b32.cont [3/16] 0.0, 128
        %8967 = vxpose.xlu0.b32.cont [4/16] 0.0, 128
        %8968 = vxpose.xlu0.b32.cont [5/16] 0.0, 128
        %8969 = vxpose.xlu0.b32.cont [6/16] 0.0, 128
        %8970 = vxpose.xlu0.b32.cont [7/16] 0.0, 128
        %8971 = vxpose.xlu0.b32.cont [8/16] 0.0, 128
        %8972 = vxpose.xlu0.b32.cont [9/16] 0.0, 128
        %8973 = vxpose.xlu0.b32.cont [10/16] 0.0, 128
        %8974 = vxpose.xlu0.b32.cont [11/16] 0.0, 128
        %8975 = vxpose.xlu0.b32.cont [12/16] 0.0, 128
        %8976 = vxpose.xlu0.b32.cont [13/16] 0.0, 128
        %8977 = vxpose.xlu0.b32.cont [14/16] 0.0, 128
        %8978 = vxpose.xlu0.b32.cont [15/16] 0.0, 128
        %8979 = vxpose.xlu0.b32.end [16/16] 0.0, 128
        %v8980 = vpop.trf.xlu0
        %v8981 = vpop.trf.xlu0
        %v8982 = vpop.trf.xlu0
        %v8983 = vpop.trf.xlu0
        %v8984 = vpop.trf.xlu0
        %v8985 = vpop.trf.xlu0
        %v8986 = vpop.trf.xlu0
        %v8987 = vpop.trf.xlu0
        %v8988 = vpop.trf.xlu0
        %v8989 = vpop.trf.xlu0
        %v8990 = vpop.trf.xlu0
        %v8991 = vpop.trf.xlu0
        %v8992 = vpop.trf.xlu0
        %v8993 = vpop.trf.xlu0
        %v8994 = vpop.trf.xlu0
        %v8995 = vpop.trf.xlu0
        %v8997 = vsel %vm8826, %v8980, 0
        %8999 = vmatpush.msra.mxu0 0.0
        %9000 = vmatpush.msra.mxu0 0.0
        %9001 = vmatpush.msra.mxu0 0.0
        %9002 = vmatpush.msra.mxu0 0.0
        %9003 = vmatpush.msra.mxu0 0.0
        %9004 = vmatpush.msra.mxu0 0.0
        %9005 = vmatpush.msra.mxu0 0.0
        %9006 = vmatpush.msra.mxu0 0.0
        %9007 = vmatpush.msra.mxu0 0.0
        %9008 = vmatpush.msra.mxu0 0.0
        %9009 = vmatpush.msra.mxu0 0.0
        %9010 = vmatpush.msra.mxu0 0.0
        %9011 = vmatpush.msra.mxu0 0.0
        %9012 = vmatpush.msra.mxu0 0.0
        %9013 = vmatpush.msra.mxu0 0.0
        %9014 = vmatpush.msra.mxu0 %v8788
        %9015 = vmatmul.f32.gmra.mxu0 %v8997
        %v9016 = vpop.f32.mrf.mxu0
        %v9017 = vadd.f32 0.0, %v9016
        %9018 = vdwg.mxu0
        %9019 = vxpose.xlu0.b32.start [1/16] %v8788, 128
        %9020 = vxpose.xlu0.b32.cont [2/16] 0.0, 128
        %9021 = vxpose.xlu0.b32.cont [3/16] 0.0, 128
        %9022 = vxpose.xlu0.b32.cont [4/16] 0.0, 128
        %9023 = vxpose.xlu0.b32.cont [5/16] 0.0, 128
        %9024 = vxpose.xlu0.b32.cont [6/16] 0.0, 128
        %9025 = vxpose.xlu0.b32.cont [7/16] 0.0, 128
        %9026 = vxpose.xlu0.b32.cont [8/16] 0.0, 128
        %9027 = vxpose.xlu0.b32.cont [9/16] 0.0, 128
        %9028 = vxpose.xlu0.b32.cont [10/16] 0.0, 128
        %9029 = vxpose.xlu0.b32.cont [11/16] 0.0, 128
        %9030 = vxpose.xlu0.b32.cont [12/16] 0.0, 128
        %9031 = vxpose.xlu0.b32.cont [13/16] 0.0, 128
        %9032 = vxpose.xlu0.b32.cont [14/16] 0.0, 128
        %9033 = vxpose.xlu0.b32.cont [15/16] 0.0, 128
        %9034 = vxpose.xlu0.b32.end [16/16] 0.0, 128
        %v9035 = vpop.trf.xlu0
        %v9036 = vpop.trf.xlu0
        %v9037 = vpop.trf.xlu0
        %v9038 = vpop.trf.xlu0
        %v9039 = vpop.trf.xlu0
        %v9040 = vpop.trf.xlu0
        %v9041 = vpop.trf.xlu0
        %v9042 = vpop.trf.xlu0
        %v9043 = vpop.trf.xlu0
        %v9044 = vpop.trf.xlu0
        %v9045 = vpop.trf.xlu0
        %v9046 = vpop.trf.xlu0
        %v9047 = vpop.trf.xlu0
        %v9048 = vpop.trf.xlu0
        %v9049 = vpop.trf.xlu0
        %v9050 = vpop.trf.xlu0
        %v9052 = vsel %vm8826, %v9035, 0
        %9054 = vmatpush.msra.mxu0 0.0
        %9055 = vmatpush.msra.mxu0 0.0
        %9056 = vmatpush.msra.mxu0 0.0
        %9057 = vmatpush.msra.mxu0 0.0
        %9058 = vmatpush.msra.mxu0 0.0
        %9059 = vmatpush.msra.mxu0 0.0
        %9060 = vmatpush.msra.mxu0 0.0
        %9061 = vmatpush.msra.mxu0 0.0
        %9062 = vmatpush.msra.mxu0 0.0
        %9063 = vmatpush.msra.mxu0 0.0
        %9064 = vmatpush.msra.mxu0 0.0
        %9065 = vmatpush.msra.mxu0 0.0
        %9066 = vmatpush.msra.mxu0 0.0
        %9067 = vmatpush.msra.mxu0 0.0
        %9068 = vmatpush.msra.mxu0 0.0
        %9069 = vmatpush.msra.mxu0 %v8787
        %9070 = vmatmul.f32.gmra.mxu0 %v9052
        %v9071 = vpop.f32.mrf.mxu0
        %v9072 = vadd.f32 0.0, %v9071
        %9073 = vdwg.mxu0
        %9074 = vxpose.xlu0.b32.start [1/16] %v8787, 128
        %9075 = vxpose.xlu0.b32.cont [2/16] %v8788, 128
        %9076 = vxpose.xlu0.b32.cont [3/16] 0.0, 128
        %9077 = vxpose.xlu0.b32.cont [4/16] 0.0, 128
        %9078 = vxpose.xlu0.b32.cont [5/16] 0.0, 128
        %9079 = vxpose.xlu0.b32.cont [6/16] 0.0, 128
        %9080 = vxpose.xlu0.b32.cont [7/16] 0.0, 128
        %9081 = vxpose.xlu0.b32.cont [8/16] 0.0, 128
        %9082 = vxpose.xlu0.b32.cont [9/16] 0.0, 128
        %9083 = vxpose.xlu0.b32.cont [10/16] 0.0, 128
        %9084 = vxpose.xlu0.b32.cont [11/16] 0.0, 128
        %9085 = vxpose.xlu0.b32.cont [12/16] 0.0, 128
        %9086 = vxpose.xlu0.b32.cont [13/16] 0.0, 128
        %9087 = vxpose.xlu0.b32.cont [14/16] 0.0, 128
        %9088 = vxpose.xlu0.b32.cont [15/16] 0.0, 128
        %9089 = vxpose.xlu0.b32.end [16/16] 0.0, 128
        %v9090 = vpop.trf.xlu0
        %v9091 = vpop.trf.xlu0
        %v9092 = vpop.trf.xlu0
        %v9093 = vpop.trf.xlu0
        %v9094 = vpop.trf.xlu0
        %v9095 = vpop.trf.xlu0
        %v9096 = vpop.trf.xlu0
        %v9097 = vpop.trf.xlu0
        %v9098 = vpop.trf.xlu0
        %v9099 = vpop.trf.xlu0
        %v9100 = vpop.trf.xlu0
        %v9101 = vpop.trf.xlu0
        %v9102 = vpop.trf.xlu0
        %v9103 = vpop.trf.xlu0
        %v9104 = vpop.trf.xlu0
        %v9105 = vpop.trf.xlu0
        %v9107 = vsel %vm8937, %v9090, 0
        %9109 = vmatpush.msra.mxu0 0.0
        %9110 = vmatpush.msra.mxu0 0.0
        %9111 = vmatpush.msra.mxu0 0.0
        %9112 = vmatpush.msra.mxu0 0.0
        %9113 = vmatpush.msra.mxu0 0.0
        %9114 = vmatpush.msra.mxu0 0.0
        %9115 = vmatpush.msra.mxu0 0.0
        %9116 = vmatpush.msra.mxu0 0.0
        %9117 = vmatpush.msra.mxu0 0.0
        %9118 = vmatpush.msra.mxu0 0.0
        %9119 = vmatpush.msra.mxu0 0.0
        %9120 = vmatpush.msra.mxu0 0.0
        %9121 = vmatpush.msra.mxu0 0.0
        %9122 = vmatpush.msra.mxu0 0.0
        %9123 = vmatpush.msra.mxu0 %v8788
        %9124 = vmatpush.msra.mxu0 %v8787
        %9125 = vmatmul.f32.gmra.mxu0 %v9107
        %v9126 = vpop.f32.mrf.mxu0
        %v9127 = vadd.f32 %v8793, %v9126
        %9128 = vdwg.mxu0
        %s9129 = scalar_lea.vmem %s743, 16
        %9130 = vst.msk [vmem:[%s9129] sm:$0xff] %vm8826, %v9127
        %v9131 = vsub.f32 %v9017, %v9072
        %9132 = vst.msk [vmem:[%s9129 + $0x8] sm:$0xff] %vm8826, %v9131
        %9133 = vxpose.xlu0.b32.start [1/16] %v8789, 128
        %9134 = vxpose.xlu0.b32.cont [2/16] 0.0, 128
        %9135 = vxpose.xlu0.b32.cont [3/16] 0.0, 128
        %9136 = vxpose.xlu0.b32.cont [4/16] 0.0, 128
        %9137 = vxpose.xlu0.b32.cont [5/16] 0.0, 128
        %9138 = vxpose.xlu0.b32.cont [6/16] 0.0, 128
        %9139 = vxpose.xlu0.b32.cont [7/16] 0.0, 128
        %9140 = vxpose.xlu0.b32.cont [8/16] 0.0, 128
        %9141 = vxpose.xlu0.b32.cont [9/16] 0.0, 128
        %9142 = vxpose.xlu0.b32.cont [10/16] 0.0, 128
        %9143 = vxpose.xlu0.b32.cont [11/16] 0.0, 128
        %9144 = vxpose.xlu0.b32.cont [12/16] 0.0, 128
        %9145 = vxpose.xlu0.b32.cont [13/16] 0.0, 128
        %9146 = vxpose.xlu0.b32.cont [14/16] 0.0, 128
        %9147 = vxpose.xlu0.b32.cont [15/16] 0.0, 128
        %9148 = vxpose.xlu0.b32.end [16/16] 0.0, 128
        %v9149 = vpop.trf.xlu0
        %v9150 = vpop.trf.xlu0
        %v9151 = vpop.trf.xlu0
        %v9152 = vpop.trf.xlu0
        %v9153 = vpop.trf.xlu0
        %v9154 = vpop.trf.xlu0
        %v9155 = vpop.trf.xlu0
        %v9156 = vpop.trf.xlu0
        %v9157 = vpop.trf.xlu0
        %v9158 = vpop.trf.xlu0
        %v9159 = vpop.trf.xlu0
        %v9160 = vpop.trf.xlu0
        %v9161 = vpop.trf.xlu0
        %v9162 = vpop.trf.xlu0
        %v9163 = vpop.trf.xlu0
        %v9164 = vpop.trf.xlu0
        %v9166 = vsel %vm8826, %v9149, 0
        %9168 = vmatpush.msra.mxu0 0.0
        %9169 = vmatpush.msra.mxu0 0.0
        %9170 = vmatpush.msra.mxu0 0.0
        %9171 = vmatpush.msra.mxu0 0.0
        %9172 = vmatpush.msra.mxu0 0.0
        %9173 = vmatpush.msra.mxu0 0.0
        %9174 = vmatpush.msra.mxu0 0.0
        %9175 = vmatpush.msra.mxu0 0.0
        %9176 = vmatpush.msra.mxu0 0.0
        %9177 = vmatpush.msra.mxu0 0.0
        %9178 = vmatpush.msra.mxu0 0.0
        %9179 = vmatpush.msra.mxu0 0.0
        %9180 = vmatpush.msra.mxu0 0.0
        %9181 = vmatpush.msra.mxu0 0.0
        %9182 = vmatpush.msra.mxu0 0.0
        %9183 = vmatpush.msra.mxu0 %v8790
        %9184 = vmatmul.f32.gmra.mxu0 %v9166
        %v9185 = vpop.f32.mrf.mxu0
        %v9186 = vadd.f32 0.0, %v9185
        %9187 = vdwg.mxu0
        %9188 = vxpose.xlu0.b32.start [1/16] %v8790, 128
        %9189 = vxpose.xlu0.b32.cont [2/16] 0.0, 128
        %9190 = vxpose.xlu0.b32.cont [3/16] 0.0, 128
        %9191 = vxpose.xlu0.b32.cont [4/16] 0.0, 128
        %9192 = vxpose.xlu0.b32.cont [5/16] 0.0, 128
        %9193 = vxpose.xlu0.b32.cont [6/16] 0.0, 128
        %9194 = vxpose.xlu0.b32.cont [7/16] 0.0, 128
        %9195 = vxpose.xlu0.b32.cont [8/16] 0.0, 128
        %9196 = vxpose.xlu0.b32.cont [9/16] 0.0, 128
        %9197 = vxpose.xlu0.b32.cont [10/16] 0.0, 128
        %9198 = vxpose.xlu0.b32.cont [11/16] 0.0, 128
        %9199 = vxpose.xlu0.b32.cont [12/16] 0.0, 128
        %9200 = vxpose.xlu0.b32.cont [13/16] 0.0, 128
        %9201 = vxpose.xlu0.b32.cont [14/16] 0.0, 128
        %9202 = vxpose.xlu0.b32.cont [15/16] 0.0, 128
        %9203 = vxpose.xlu0.b32.end [16/16] 0.0, 128
        %v9204 = vpop.trf.xlu0
        %v9205 = vpop.trf.xlu0
        %v9206 = vpop.trf.xlu0
        %v9207 = vpop.trf.xlu0
        %v9208 = vpop.trf.xlu0
        %v9209 = vpop.trf.xlu0
        %v9210 = vpop.trf.xlu0
        %v9211 = vpop.trf.xlu0
        %v9212 = vpop.trf.xlu0
        %v9213 = vpop.trf.xlu0
        %v9214 = vpop.trf.xlu0
        %v9215 = vpop.trf.xlu0
        %v9216 = vpop.trf.xlu0
        %v9217 = vpop.trf.xlu0
        %v9218 = vpop.trf.xlu0
        %v9219 = vpop.trf.xlu0
        %v9221 = vsel %vm8826, %v9204, 0
        %9223 = vmatpush.msra.mxu0 0.0
        %9224 = vmatpush.msra.mxu0 0.0
        %9225 = vmatpush.msra.mxu0 0.0
        %9226 = vmatpush.msra.mxu0 0.0
        %9227 = vmatpush.msra.mxu0 0.0
        %9228 = vmatpush.msra.mxu0 0.0
        %9229 = vmatpush.msra.mxu0 0.0
        %9230 = vmatpush.msra.mxu0 0.0
        %9231 = vmatpush.msra.mxu0 0.0
        %9232 = vmatpush.msra.mxu0 0.0
        %9233 = vmatpush.msra.mxu0 0.0
        %9234 = vmatpush.msra.mxu0 0.0
        %9235 = vmatpush.msra.mxu0 0.0
        %9236 = vmatpush.msra.mxu0 0.0
        %9237 = vmatpush.msra.mxu0 0.0
        %9238 = vmatpush.msra.mxu0 %v8789
        %9239 = vmatmul.f32.gmra.mxu0 %v9221
        %v9240 = vpop.f32.mrf.mxu0
        %v9241 = vadd.f32 0.0, %v9240
        %9242 = vdwg.mxu0
        %9243 = vxpose.xlu0.b32.start [1/16] %v8789, 128
        %9244 = vxpose.xlu0.b32.cont [2/16] %v8790, 128
        %9245 = vxpose.xlu0.b32.cont [3/16] 0.0, 128
        %9246 = vxpose.xlu0.b32.cont [4/16] 0.0, 128
        %9247 = vxpose.xlu0.b32.cont [5/16] 0.0, 128
        %9248 = vxpose.xlu0.b32.cont [6/16] 0.0, 128
        %9249 = vxpose.xlu0.b32.cont [7/16] 0.0, 128
        %9250 = vxpose.xlu0.b32.cont [8/16] 0.0, 128
        %9251 = vxpose.xlu0.b32.cont [9/16] 0.0, 128
        %9252 = vxpose.xlu0.b32.cont [10/16] 0.0, 128
        %9253 = vxpose.xlu0.b32.cont [11/16] 0.0, 128
        %9254 = vxpose.xlu0.b32.cont [12/16] 0.0, 128
        %9255 = vxpose.xlu0.b32.cont [13/16] 0.0, 128
        %9256 = vxpose.xlu0.b32.cont [14/16] 0.0, 128
        %9257 = vxpose.xlu0.b32.cont [15/16] 0.0, 128
        %9258 = vxpose.xlu0.b32.end [16/16] 0.0, 128
        %v9259 = vpop.trf.xlu0
        %v9260 = vpop.trf.xlu0
        %v9261 = vpop.trf.xlu0
        %v9262 = vpop.trf.xlu0
        %v9263 = vpop.trf.xlu0
        %v9264 = vpop.trf.xlu0
        %v9265 = vpop.trf.xlu0
        %v9266 = vpop.trf.xlu0
        %v9267 = vpop.trf.xlu0
        %v9268 = vpop.trf.xlu0
        %v9269 = vpop.trf.xlu0
        %v9270 = vpop.trf.xlu0
        %v9271 = vpop.trf.xlu0
        %v9272 = vpop.trf.xlu0
        %v9273 = vpop.trf.xlu0
        %v9274 = vpop.trf.xlu0
        %v9276 = vsel %vm8937, %v9259, 0
        %9278 = vmatpush.msra.mxu0 0.0
        %9279 = vmatpush.msra.mxu0 0.0
        %9280 = vmatpush.msra.mxu0 0.0
        %9281 = vmatpush.msra.mxu0 0.0
        %9282 = vmatpush.msra.mxu0 0.0
        %9283 = vmatpush.msra.mxu0 0.0
        %9284 = vmatpush.msra.mxu0 0.0
        %9285 = vmatpush.msra.mxu0 0.0
        %9286 = vmatpush.msra.mxu0 0.0
        %9287 = vmatpush.msra.mxu0 0.0
        %9288 = vmatpush.msra.mxu0 0.0
        %9289 = vmatpush.msra.mxu0 0.0
        %9290 = vmatpush.msra.mxu0 0.0
        %9291 = vmatpush.msra.mxu0 0.0
        %9292 = vmatpush.msra.mxu0 %v8790
        %9293 = vmatpush.msra.mxu0 %v8789
        %9294 = vmatmul.f32.gmra.mxu0 %v9276
        %v9295 = vpop.f32.mrf.mxu0
        %v9296 = vadd.f32 %v8793, %v9295
        %9297 = vdwg.mxu0
        %s9298 = scalar_lea.vmem %s743, 32
        %9299 = vst.msk [vmem:[%s9298] sm:$0xff] %vm8826, %v9296
        %v9300 = vsub.f32 %v9186, %v9241
        %9301 = vst.msk [vmem:[%s9298 + $0x8] sm:$0xff] %vm8826, %v9300
        %9302 = vxpose.xlu0.b32.start [1/16] %v8791, 128
        %9303 = vxpose.xlu0.b32.cont [2/16] 0.0, 128
        %9304 = vxpose.xlu0.b32.cont [3/16] 0.0, 128
        %9305 = vxpose.xlu0.b32.cont [4/16] 0.0, 128
        %9306 = vxpose.xlu0.b32.cont [5/16] 0.0, 128
        %9307 = vxpose.xlu0.b32.cont [6/16] 0.0, 128
        %9308 = vxpose.xlu0.b32.cont [7/16] 0.0, 128
        %9309 = vxpose.xlu0.b32.cont [8/16] 0.0, 128
        %9310 = vxpose.xlu0.b32.cont [9/16] 0.0, 128
        %9311 = vxpose.xlu0.b32.cont [10/16] 0.0, 128
        %9312 = vxpose.xlu0.b32.cont [11/16] 0.0, 128
        %9313 = vxpose.xlu0.b32.cont [12/16] 0.0, 128
        %9314 = vxpose.xlu0.b32.cont [13/16] 0.0, 128
        %9315 = vxpose.xlu0.b32.cont [14/16] 0.0, 128
        %9316 = vxpose.xlu0.b32.cont [15/16] 0.0, 128
        %9317 = vxpose.xlu0.b32.end [16/16] 0.0, 128
        %v9318 = vpop.trf.xlu0
        %v9319 = vpop.trf.xlu0
        %v9320 = vpop.trf.xlu0
        %v9321 = vpop.trf.xlu0
        %v9322 = vpop.trf.xlu0
        %v9323 = vpop.trf.xlu0
        %v9324 = vpop.trf.xlu0
        %v9325 = vpop.trf.xlu0
        %v9326 = vpop.trf.xlu0
        %v9327 = vpop.trf.xlu0
        %v9328 = vpop.trf.xlu0
        %v9329 = vpop.trf.xlu0
        %v9330 = vpop.trf.xlu0
        %v9331 = vpop.trf.xlu0
        %v9332 = vpop.trf.xlu0
        %v9333 = vpop.trf.xlu0
        %v9335 = vsel %vm8826, %v9318, 0
        %9337 = vmatpush.msra.mxu0 0.0
        %9338 = vmatpush.msra.mxu0 0.0
        %9339 = vmatpush.msra.mxu0 0.0
        %9340 = vmatpush.msra.mxu0 0.0
        %9341 = vmatpush.msra.mxu0 0.0
        %9342 = vmatpush.msra.mxu0 0.0
        %9343 = vmatpush.msra.mxu0 0.0
        %9344 = vmatpush.msra.mxu0 0.0
        %9345 = vmatpush.msra.mxu0 0.0
        %9346 = vmatpush.msra.mxu0 0.0
        %9347 = vmatpush.msra.mxu0 0.0
        %9348 = vmatpush.msra.mxu0 0.0
        %9349 = vmatpush.msra.mxu0 0.0
        %9350 = vmatpush.msra.mxu0 0.0
        %9351 = vmatpush.msra.mxu0 0.0
        %9352 = vmatpush.msra.mxu0 %v8792
        %9353 = vmatmul.f32.gmra.mxu0 %v9335
        %v9354 = vpop.f32.mrf.mxu0
        %v9355 = vadd.f32 0.0, %v9354
        %9356 = vdwg.mxu0
        %9357 = vxpose.xlu0.b32.start [1/16] %v8792, 128
        %9358 = vxpose.xlu0.b32.cont [2/16] 0.0, 128
        %9359 = vxpose.xlu0.b32.cont [3/16] 0.0, 128
        %9360 = vxpose.xlu0.b32.cont [4/16] 0.0, 128
        %9361 = vxpose.xlu0.b32.cont [5/16] 0.0, 128
        %9362 = vxpose.xlu0.b32.cont [6/16] 0.0, 128
        %9363 = vxpose.xlu0.b32.cont [7/16] 0.0, 128
        %9364 = vxpose.xlu0.b32.cont [8/16] 0.0, 128
        %9365 = vxpose.xlu0.b32.cont [9/16] 0.0, 128
        %9366 = vxpose.xlu0.b32.cont [10/16] 0.0, 128
        %9367 = vxpose.xlu0.b32.cont [11/16] 0.0, 128
        %9368 = vxpose.xlu0.b32.cont [12/16] 0.0, 128
        %9369 = vxpose.xlu0.b32.cont [13/16] 0.0, 128
        %9370 = vxpose.xlu0.b32.cont [14/16] 0.0, 128
        %9371 = vxpose.xlu0.b32.cont [15/16] 0.0, 128
        %9372 = vxpose.xlu0.b32.end [16/16] 0.0, 128
        %v9373 = vpop.trf.xlu0
        %v9374 = vpop.trf.xlu0
        %v9375 = vpop.trf.xlu0
        %v9376 = vpop.trf.xlu0
        %v9377 = vpop.trf.xlu0
        %v9378 = vpop.trf.xlu0
        %v9379 = vpop.trf.xlu0
        %v9380 = vpop.trf.xlu0
        %v9381 = vpop.trf.xlu0
        %v9382 = vpop.trf.xlu0
        %v9383 = vpop.trf.xlu0
        %v9384 = vpop.trf.xlu0
        %v9385 = vpop.trf.xlu0
        %v9386 = vpop.trf.xlu0
        %v9387 = vpop.trf.xlu0
        %v9388 = vpop.trf.xlu0
        %v9390 = vsel %vm8826, %v9373, 0
        %9392 = vmatpush.msra.mxu0 0.0
        %9393 = vmatpush.msra.mxu0 0.0
        %9394 = vmatpush.msra.mxu0 0.0
        %9395 = vmatpush.msra.mxu0 0.0
        %9396 = vmatpush.msra.mxu0 0.0
        %9397 = vmatpush.msra.mxu0 0.0
        %9398 = vmatpush.msra.mxu0 0.0
        %9399 = vmatpush.msra.mxu0 0.0
        %9400 = vmatpush.msra.mxu0 0.0
        %9401 = vmatpush.msra.mxu0 0.0
        %9402 = vmatpush.msra.mxu0 0.0
        %9403 = vmatpush.msra.mxu0 0.0
        %9404 = vmatpush.msra.mxu0 0.0
        %9405 = vmatpush.msra.mxu0 0.0
        %9406 = vmatpush.msra.mxu0 0.0
        %9407 = vmatpush.msra.mxu0 %v8791
        %9408 = vmatmul.f32.gmra.mxu0 %v9390
        %v9409 = vpop.f32.mrf.mxu0
        %v9410 = vadd.f32 0.0, %v9409
        %9411 = vdwg.mxu0
        %9412 = vxpose.xlu0.b32.start [1/16] %v8791, 128
        %9413 = vxpose.xlu0.b32.cont [2/16] %v8792, 128
        %9414 = vxpose.xlu0.b32.cont [3/16] 0.0, 128
        %9415 = vxpose.xlu0.b32.cont [4/16] 0.0, 128
        %9416 = vxpose.xlu0.b32.cont [5/16] 0.0, 128
        %9417 = vxpose.xlu0.b32.cont [6/16] 0.0, 128
        %9418 = vxpose.xlu0.b32.cont [7/16] 0.0, 128
        %9419 = vxpose.xlu0.b32.cont [8/16] 0.0, 128
        %9420 = vxpose.xlu0.b32.cont [9/16] 0.0, 128
        %9421 = vxpose.xlu0.b32.cont [10/16] 0.0, 128
        %9422 = vxpose.xlu0.b32.cont [11/16] 0.0, 128
        %9423 = vxpose.xlu0.b32.cont [12/16] 0.0, 128
        %9424 = vxpose.xlu0.b32.cont [13/16] 0.0, 128
        %9425 = vxpose.xlu0.b32.cont [14/16] 0.0, 128
        %9426 = vxpose.xlu0.b32.cont [15/16] 0.0, 128
        %9427 = vxpose.xlu0.b32.end [16/16] 0.0, 128
        %v9428 = vpop.trf.xlu0
        %v9429 = vpop.trf.xlu0
        %v9430 = vpop.trf.xlu0
        %v9431 = vpop.trf.xlu0
        %v9432 = vpop.trf.xlu0
        %v9433 = vpop.trf.xlu0
        %v9434 = vpop.trf.xlu0
        %v9435 = vpop.trf.xlu0
        %v9436 = vpop.trf.xlu0
        %v9437 = vpop.trf.xlu0
        %v9438 = vpop.trf.xlu0
        %v9439 = vpop.trf.xlu0
        %v9440 = vpop.trf.xlu0
        %v9441 = vpop.trf.xlu0
        %v9442 = vpop.trf.xlu0
        %v9443 = vpop.trf.xlu0
        %v9445 = vsel %vm8937, %v9428, 0
        %9447 = vmatpush.msra.mxu0 0.0
        %9448 = vmatpush.msra.mxu0 0.0
        %9449 = vmatpush.msra.mxu0 0.0
        %9450 = vmatpush.msra.mxu0 0.0
        %9451 = vmatpush.msra.mxu0 0.0
        %9452 = vmatpush.msra.mxu0 0.0
        %9453 = vmatpush.msra.mxu0 0.0
        %9454 = vmatpush.msra.mxu0 0.0
        %9455 = vmatpush.msra.mxu0 0.0
        %9456 = vmatpush.msra.mxu0 0.0
        %9457 = vmatpush.msra.mxu0 0.0
        %9458 = vmatpush.msra.mxu0 0.0
        %9459 = vmatpush.msra.mxu0 0.0
        %9460 = vmatpush.msra.mxu0 0.0
        %9461 = vmatpush.msra.mxu0 %v8792
        %9462 = vmatpush.msra.mxu0 %v8791
        %9463 = vmatmul.f32.gmra.mxu0 %v9445
        %v9464 = vpop.f32.mrf.mxu0
        %v9465 = vadd.f32 %v8793, %v9464
        %9466 = vdwg.mxu0
        %s9467 = scalar_lea.vmem %s743, 48
        %9468 = vst.msk [vmem:[%s9467] sm:$0xff] %vm8826, %v9465
        %v9469 = vsub.f32 %v9355, %v9410
        %9470 = vst.msk [vmem:[%s9467 + $0x8] sm:$0xff] %vm8826, %v9469
        %s9471 = smul.u32 4, %s35
        %p9472 = scmp.lt.s32.totalorder %s9471, 7
        %s9473 = scalar_select %p9472, %s9471, 7
        %s9474 = smul.addr %s9473, 2
        %s9475 = smul.addr %s9474, 8
        %s9476 = scalar_lea.vmem %s21, %s9475
        // Predicated region
        $region125: #{run.1} parent=103 // pred_check
          %p9477 = pneg %p499
        $region126: #{run.1} parent=103 // pred_check_branch
          %9479 = sbr.rel (%p9477) target = $region128
        $region127: #{run.1} parent=103 // pred_region
          %s9480 = smul.u32 4, %s35
        $region128: #{run.1} parent=103 // pred_fallthru
          _
      $region104: #{run.1} parent=5 // pred_fallthru
        _
      %p9481 = scmp.le.s32.totalorder 2, %s30
      // Predicated region
      $region129: #{run.1} parent=5 // pred_check
        %p9482 = pneg %p9481
      $region130: #{run.1} parent=5 // pred_check_branch
        %9484 = sbr.rel (%p9482) target = $region132
      $region131: #{run.1} parent=5 // pred_region
        %s9485 = ssub.s32 %s30, 2
        // Predicated region
        $region133: #{run.1} parent=131 // pred_check
          %p9486 = pneg %p505
        $region134: #{run.1} parent=131 // pred_check_branch
          %9488 = sbr.rel (%p9486) target = $region136
        $region135: #{run.1} parent=131 // pred_region
          %s9489 = smul.u32 4, %s36
          %p9490 = scmp.lt.s32.totalorder %s9489, 7
          %s9491 = scalar_select %p9490, %s9489, 7
          %s9492 = smul.addr %s9491, 2
          %s9493 = smul.addr %s9492, 8
          %s9494 = scalar_lea.vmem %s21, %s9493
        $region136: #{run.1} parent=131 // pred_fallthru
          _
      $region132: #{run.1} parent=5 // pred_fallthru
        _
    $region6: #{run.1} parent=1 // loop_footer
      %s34 = sadd.s32 1, %s30
    $region7: #{run.1} parent=1 // loop_footer_branch
      %29 = sbr.rel target = $region3
    $region8: #{run.1} parent=1 // loop_exit
      _
    %9495 = vsyncpa [#allocation5], 1
    %s9496 = scalar_lea.sflag [#allocation5], 1
    %9497 = vsyncpa %s9496, 1
    %9498 = vsyncpa [#allocation7], 1
    %9499 = vsyncpa [#allocation10], 1

</llo_original>
